<compile_context>
chip_gen: v6e
topology: v6e:2x2x1
jax: 0.10.0
libtpu: 0.0.40
codegen_flags: <defaults>
</compile_context>

<pallas_src>
import jax
import jax.numpy as jnp
from jax import lax
from jax.experimental import pallas as pl
from jax.experimental.pallas import tpu as pltpu
import numpy as np

NEG_SLOPE = 0.01   # nn.LeakyReLU default
EPS = 1e-5         # nn.InstanceNorm3d default


def _make_coords(D, H, W):
    """(3, S) int32: (d, h, w) coordinates of every flattened spatial index."""
    s = np.arange(D * H * W)
    coords = np.stack([s // (H * W), (s // W) % H, s % W]).astype(np.int32)
    return jnp.asarray(coords)


def _make_enblock2_kernel(D, H, W, Cp):
    S = D * H * W
    HW = H * W

    def kernel(x_ref, w1_ref, w2_ref, coord_ref, out_ref, col_ref):
        # x_ref:     (1, Cp, S)      channels-first, spatial flattened on lanes
        # w*_ref:    (3, 9*Cp, Cp)   per-kd-group conv weights, pre-transposed
        #                             to (K, Cout) so they are the MXU-pushed
        #                             (stationary) operand
        # coord_ref: (3, S) int32    (d, h, w) of each flat spatial position
        # out_ref:   (1, Cp, S)
        # col_ref:   (9*Cp, S) f32   per-kd-group im2col VMEM scratch

        def _axis_mask(row, delta, extent):
            # (1, S) float validity mask for one axis / one kernel offset,
            # built from the coordinate row with VPU compares (no HBM masks).
            c = coord_ref[row:row + 1, :] + delta
            return jnp.where((c >= 0) & (c < extent), 1.0, 0.0)

        def conv3x3x3(act, w_ref):
            # act: (Cp, S) f32. One accumulating matmul per kd group keeps the
            # im2col scratch at (9*Cp, S) instead of (27*Cp, S).
            y = None
            for kd in range(3):
                d_mask = _axis_mask(0, kd - 1, D)
                for kh in range(3):
                    dh_mask = d_mask * _axis_mask(1, kh - 1, H)
                    for kw in range(3):
                        mask = dh_mask * _axis_mask(2, kw - 1, W)
                        off = (kd - 1) * HW + (kh - 1) * W + (kw - 1)
                        if off == 0:
                            shifted = act
                        else:
                            # shifted[c, s] = act[c, (s + off) mod S]; every
                            # wrap-around position is zeroed by `mask`.
                            shifted = pltpu.roll(act, (-off) % S, axis=1)
                        t = kh * 3 + kw
                        col_ref[t * Cp:(t + 1) * Cp, :] = shifted * mask
                # Weight-stationary matmul: the (9*Cp, Cp) RHS is pushed once
                # per group and reused across all S/8 streamed im2col slabs;
                # the result comes out transposed as (S, Cp).
                part = lax.dot_general(
                    col_ref[...], w_ref[kd],
                    dimension_numbers=(((0,), (0,)), ((), ())),
                    preferred_element_type=jnp.float32)            # (S, Cp)
                part = jnp.transpose(part)                          # (Cp, S)
                y = part if y is None else y + part
            # Conv bias intentionally omitted: InstanceNorm's mean subtraction
            # cancels a per-channel constant exactly.
            return y

        def inorm_lrelu(y):
            # One-pass InstanceNorm3d stats (biased var, no affine) + LeakyReLU.
            inv_s = 1.0 / S
            mean = jnp.sum(y, axis=1, keepdims=True) * inv_s
            var = jnp.sum(y * y, axis=1, keepdims=True) * inv_s - mean * mean
            yn = (y - mean) * lax.rsqrt(var + EPS)
            return jnp.maximum(yn, NEG_SLOPE * yn)

        y = inorm_lrelu(conv3x3x3(x_ref[0].astype(jnp.float32), w1_ref))
        y = inorm_lrelu(conv3x3x3(y, w2_ref))
        # Residual: re-read x instead of keeping it live across both convs.
        out_ref[0] = (y + x_ref[0].astype(jnp.float32)).astype(out_ref.dtype)

    return kernel


def _device_tuning():
    """Per-TPU-generation batch-axis semantics + VMEM budget."""
    try:
        kind = jax.devices()[0].device_kind.lower()
    except Exception:  # pragma: no cover - defensive only
        kind = ""
    is_v7 = ("v7" in kind) or ("7x" in kind)
    if is_v7 and hasattr(pltpu, "CORE_PARALLEL"):
        # v7x: 2 TensorCores per chip -> shard the batch grid axis across
        # cores; stay well inside the 64 MiB VMEM.
        return pltpu.CORE_PARALLEL, 48 * 1024 * 1024
    if any(t in kind for t in ("v5 lite", "v5e", "v6")):
        # v5e/v6e: 128 MiB VMEM -> do not starve the resident working set.
        return "parallel", 100 * 1024 * 1024
    return "parallel", 32 * 1024 * 1024


def enblock2_pallas(x_ncdhw, w1, b1, w2, b2):
    """x_ncdhw: (N, C, D, H, W); w*: (C, C, 3, 3, 3); b*: (C,).

    b1/b2 are accepted for interface parity with the PyTorch module but are
    unused: InstanceNorm cancels a per-channel constant bias exactly.
    """
    del b1, b2
    N, C, D, H, W = x_ncdhw.shape
    S = D * H * W
    Cp = -(-C // 8) * 8                        # sublane-aligned channel count

    # NCDHW is already channels-first: just flatten spatial -> (N, C, S).
    x_cs = x_ncdhw.reshape(N, C, S)
    if Cp != C:
        x_cs = jnp.pad(x_cs, ((0, 0), (0, Cp - C), (0, 0)))

    def prep_w(w):
        # (Cout, Cin, kd, kh, kw) -> (kd, kh, kw, Cin, Cout) -> (3, 9*Cp, Cp)
        # i.e. per-kd-group (K, Cout) matrices with K = (kh*3+kw)*Cp + cin,
        # matching the tap-major / channel-minor im2col rows built in-kernel.
        wt = jnp.transpose(w, (2, 3, 4, 1, 0))
        if Cp != C:
            wt = jnp.pad(wt, ((0, 0), (0, 0), (0, 0),
                              (0, Cp - C), (0, Cp - C)))
        return wt.reshape(3, 9 * Cp, Cp)

    coords = _make_coords(D, H, W)             # (3, S) int32
    kernel = _make_enblock2_kernel(D, H, W, Cp)
    batch_sem, vmem_limit = _device_tuning()

    out_cs = pl.pallas_call(
        kernel,
        out_shape=jax.ShapeDtypeStruct((N, Cp, S), x_ncdhw.dtype),
        grid_spec=pltpu.PrefetchScalarGridSpec(
            num_scalar_prefetch=0,
            grid=(N,),
            in_specs=[
                pl.BlockSpec((1, Cp, S), lambda n: (n, 0, 0)),        # x
                pl.BlockSpec((3, 9 * Cp, Cp), lambda n: (0, 0, 0)),   # w1
                pl.BlockSpec((3, 9 * Cp, Cp), lambda n: (0, 0, 0)),   # w2
                pl.BlockSpec((3, S), lambda n: (0, 0)),               # coords
            ],
            out_specs=pl.BlockSpec((1, Cp, S), lambda n: (n, 0, 0)),
            scratch_shapes=[pltpu.VMEM((9 * Cp, S), jnp.float32)],
        ),
        compiler_params=pltpu.CompilerParams(
            dimension_semantics=(batch_sem,),
            vmem_limit_bytes=vmem_limit,
        ),
    )(x_cs, prep_w(w1), prep_w(w2), coords)

    return out_cs[:, :C, :].reshape(N, C, D, H, W)


def enblock2_ref(x, w1, b1, w2, b2):
    """Pure-JAX reference of the PyTorch forward (NCDHW)."""
    def conv(x, w, b):
        y = lax.conv_general_dilated(
            x, w, window_strides=(1, 1, 1), padding=[(1, 1)] * 3,
            dimension_numbers=('NCDHW', 'OIDHW', 'NCDHW'))
        return y + b.reshape(1, -1, 1, 1, 1)

    def inorm(y):
        m = jnp.mean(y, axis=(2, 3, 4), keepdims=True)
        v = jnp.mean((y - m) ** 2, axis=(2, 3, 4), keepdims=True)
        return (y - m) * lax.rsqrt(v + EPS)

    def lrelu(y):
        return jnp.where(y >= 0, y, NEG_SLOPE * y)

    y = lrelu(inorm(conv(x, w1, b1)))
    y = lrelu(inorm(conv(y, w2, b2)))
    return y + x


if __name__ == "__main__":
    N, C, D, H, W = 2, 4, 8, 8, 8
    key = jax.random.PRNGKey(0)
    kx, kw1, kb1, kw2, kb2 = jax.random.split(key, 5)

    x = jax.random.normal(kx, (N, C, D, H, W), dtype=jnp.float32)

    # deterministic Conv3d-style init: uniform(-1/sqrt(fan_in), 1/sqrt(fan_in))
    fan_in = C * 3 * 3 * 3
    bound = 1.0 / np.sqrt(fan_in)
    w1 = jax.random.uniform(kw1, (C, C, 3, 3, 3), jnp.float32, -bound, bound)
    b1 = jax.random.uniform(kb1, (C,), jnp.float32, -bound, bound)
    w2 = jax.random.uniform(kw2, (C, C, 3, 3, 3), jnp.float32, -bound, bound)
    b2 = jax.random.uniform(kb2, (C,), jnp.float32, -bound, bound)

    out = jax.block_until_ready(enblock2_pallas(x, w1, b1, w2, b2))
    ref = jax.block_until_ready(enblock2_ref(x, w1, b1, w2, b2))

    assert out.shape == (N, C, D, H, W)
    np.testing.assert_allclose(np.asarray(out), np.asarray(ref),
                               rtol=2e-3, atol=2e-3)
    print("KERNEL_OK")
</pallas_src>

<mosaic_0001>
module attributes {stable_mosaic.version = 11 : i64} {
  func.func @kernel(%arg0: i32, %arg1: memref<1x8x512xf32, #tpu.memory_space<vmem>>, %arg2: memref<3x72x8xf32, #tpu.memory_space<vmem>>, %arg3: memref<3x72x8xf32, #tpu.memory_space<vmem>>, %arg4: memref<3x512xi32, #tpu.memory_space<vmem>>, %arg5: memref<1x8x512xf32, #tpu.memory_space<vmem>>, %arg6: memref<72x512xf32, #tpu.memory_space<vmem>>) attributes {dimension_semantics = [#tpu.dimension_semantics<parallel>], iteration_bounds = array<i64: 2>, scalar_prefetch = 0 : i64, scratch_operands = 1 : i64, tpu.core_type = #tpu.core_type<tc>, window_params = [{transform_indices = @transform_0, window_bounds = array<i64: 1, 8, 512>}, {pipeline_mode = #tpu.pipeline_mode<synchronous>, transform_indices = @transform_1, window_bounds = array<i64: 3, 72, 8>}, {pipeline_mode = #tpu.pipeline_mode<synchronous>, transform_indices = @transform_2, window_bounds = array<i64: 3, 72, 8>}, {pipeline_mode = #tpu.pipeline_mode<synchronous>, transform_indices = @transform_3, window_bounds = array<i64: 3, 512>}, {transform_indices = @transform_4, window_bounds = array<i64: 1, 8, 512>}]} {
    %c0 = arith.constant 0 : index
    %c0_0 = arith.constant 0 : index
    %c0_1 = arith.constant 0 : index
    %0 = vector.load %arg1[%c0, %c0_0, %c0_1] : memref<1x8x512xf32, #tpu.memory_space<vmem>>, vector<1x8x512xf32>
    %1 = vector.shape_cast %0 : vector<1x8x512xf32> to vector<8x512xf32>
    %c0_2 = arith.constant 0 : index
    %c0_3 = arith.constant 0 : index
    %2 = vector.load %arg4[%c0_2, %c0_3] : memref<3x512xi32, #tpu.memory_space<vmem>>, vector<1x512xi32>
    %c-1_i32 = arith.constant -1 : i32
    %3 = vector.broadcast %c-1_i32 : i32 to vector<1x512xi32>
    %4 = arith.addi %2, %3 : vector<1x512xi32>
    %c0_i32 = arith.constant 0 : i32
    %5 = vector.broadcast %c0_i32 : i32 to vector<1x512xi32>
    %6 = arith.cmpi sge, %4, %5 : vector<1x512xi32>
    %c8_i32 = arith.constant 8 : i32
    %7 = vector.broadcast %c8_i32 : i32 to vector<1x512xi32>
    %8 = arith.cmpi slt, %4, %7 : vector<1x512xi32>
    %9 = arith.andi %6, %8 : vector<1x512xi1>
    %cst = arith.constant 1.000000e+00 : f32
    %cst_4 = arith.constant 0.000000e+00 : f32
    %10 = vector.broadcast %cst : f32 to vector<1x512xf32>
    %11 = vector.broadcast %cst_4 : f32 to vector<1x512xf32>
    %12 = arith.select %9, %10, %11 : vector<1x512xi1>, vector<1x512xf32>
    %c1 = arith.constant 1 : index
    %c0_5 = arith.constant 0 : index
    %13 = vector.load %arg4[%c1, %c0_5] : memref<3x512xi32, #tpu.memory_space<vmem>>, vector<1x512xi32>
    %c-1_i32_6 = arith.constant -1 : i32
    %14 = vector.broadcast %c-1_i32_6 : i32 to vector<1x512xi32>
    %15 = arith.addi %13, %14 : vector<1x512xi32>
    %c0_i32_7 = arith.constant 0 : i32
    %16 = vector.broadcast %c0_i32_7 : i32 to vector<1x512xi32>
    %17 = arith.cmpi sge, %15, %16 : vector<1x512xi32>
    %c8_i32_8 = arith.constant 8 : i32
    %18 = vector.broadcast %c8_i32_8 : i32 to vector<1x512xi32>
    %19 = arith.cmpi slt, %15, %18 : vector<1x512xi32>
    %20 = arith.andi %17, %19 : vector<1x512xi1>
    %cst_9 = arith.constant 1.000000e+00 : f32
    %cst_10 = arith.constant 0.000000e+00 : f32
    %21 = vector.broadcast %cst_9 : f32 to vector<1x512xf32>
    %22 = vector.broadcast %cst_10 : f32 to vector<1x512xf32>
    %23 = arith.select %20, %21, %22 : vector<1x512xi1>, vector<1x512xf32>
    %24 = arith.mulf %12, %23 : vector<1x512xf32>
    %c2 = arith.constant 2 : index
    %c0_11 = arith.constant 0 : index
    %25 = vector.load %arg4[%c2, %c0_11] : memref<3x512xi32, #tpu.memory_space<vmem>>, vector<1x512xi32>
    %c-1_i32_12 = arith.constant -1 : i32
    %26 = vector.broadcast %c-1_i32_12 : i32 to vector<1x512xi32>
    %27 = arith.addi %25, %26 : vector<1x512xi32>
    %c0_i32_13 = arith.constant 0 : i32
    %28 = vector.broadcast %c0_i32_13 : i32 to vector<1x512xi32>
    %29 = arith.cmpi sge, %27, %28 : vector<1x512xi32>
    %c8_i32_14 = arith.constant 8 : i32
    %30 = vector.broadcast %c8_i32_14 : i32 to vector<1x512xi32>
    %31 = arith.cmpi slt, %27, %30 : vector<1x512xi32>
    %32 = arith.andi %29, %31 : vector<1x512xi1>
    %cst_15 = arith.constant 1.000000e+00 : f32
    %cst_16 = arith.constant 0.000000e+00 : f32
    %33 = vector.broadcast %cst_15 : f32 to vector<1x512xf32>
    %34 = vector.broadcast %cst_16 : f32 to vector<1x512xf32>
    %35 = arith.select %32, %33, %34 : vector<1x512xi1>, vector<1x512xf32>
    %36 = arith.mulf %24, %35 : vector<1x512xf32>
    %c73_i32 = arith.constant 73 : i32
    %37 = tpu.dynamic_rotate %1 by %c73_i32 dim 1 : vector<8x512xf32>, i32 -> vector<8x512xf32>
    %38 = vector.broadcast %36 : vector<1x512xf32> to vector<8x512xf32>
    %39 = arith.mulf %37, %38 : vector<8x512xf32>
    %c0_17 = arith.constant 0 : index
    %c0_18 = arith.constant 0 : index
    %40 = vector.load %arg6[%c0_17, %c0_18] : memref<72x512xf32, #tpu.memory_space<vmem>>, vector<8x512xf32>
    tpu.vector_store %arg6[%c0_17, %c0_18], %39 {strides = array<i32>} : memref<72x512xf32, #tpu.memory_space<vmem>>, vector<8x512xf32>,
    %c2_19 = arith.constant 2 : index
    %c0_20 = arith.constant 0 : index
    %41 = vector.load %arg4[%c2_19, %c0_20] : memref<3x512xi32, #tpu.memory_space<vmem>>, vector<1x512xi32>
    %c0_i32_21 = arith.constant 0 : i32
    %42 = vector.broadcast %c0_i32_21 : i32 to vector<1x512xi32>
    %43 = arith.addi %41, %42 : vector<1x512xi32>
    %c0_i32_22 = arith.constant 0 : i32
    %44 = vector.broadcast %c0_i32_22 : i32 to vector<1x512xi32>
    %45 = arith.cmpi sge, %43, %44 : vector<1x512xi32>
    %c8_i32_23 = arith.constant 8 : i32
    %46 = vector.broadcast %c8_i32_23 : i32 to vector<1x512xi32>
    %47 = arith.cmpi slt, %43, %46 : vector<1x512xi32>
    %48 = arith.andi %45, %47 : vector<1x512xi1>
    %cst_24 = arith.constant 1.000000e+00 : f32
    %cst_25 = arith.constant 0.000000e+00 : f32
    %49 = vector.broadcast %cst_24 : f32 to vector<1x512xf32>
    %50 = vector.broadcast %cst_25 : f32 to vector<1x512xf32>
    %51 = arith.select %48, %49, %50 : vector<1x512xi1>, vector<1x512xf32>
    %52 = arith.mulf %24, %51 : vector<1x512xf32>
    %c72_i32 = arith.constant 72 : i32
    %53 = tpu.dynamic_rotate %1 by %c72_i32 dim 1 : vector<8x512xf32>, i32 -> vector<8x512xf32>
    %54 = vector.broadcast %52 : vector<1x512xf32> to vector<8x512xf32>
    %55 = arith.mulf %53, %54 : vector<8x512xf32>
    %c8 = arith.constant 8 : index
    %c0_26 = arith.constant 0 : index
    %56 = vector.load %arg6[%c8, %c0_26] : memref<72x512xf32, #tpu.memory_space<vmem>>, vector<8x512xf32>
    tpu.vector_store %arg6[%c8, %c0_26], %55 {strides = array<i32>} : memref<72x512xf32, #tpu.memory_space<vmem>>, vector<8x512xf32>,
    %c2_27 = arith.constant 2 : index
    %c0_28 = arith.constant 0 : index
    %57 = vector.load %arg4[%c2_27, %c0_28] : memref<3x512xi32, #tpu.memory_space<vmem>>, vector<1x512xi32>
    %c1_i32 = arith.constant 1 : i32
    %58 = vector.broadcast %c1_i32 : i32 to vector<1x512xi32>
    %59 = arith.addi %57, %58 : vector<1x512xi32>
    %c0_i32_29 = arith.constant 0 : i32
    %60 = vector.broadcast %c0_i32_29 : i32 to vector<1x512xi32>
    %61 = arith.cmpi sge, %59, %60 : vector<1x512xi32>
    %c8_i32_30 = arith.constant 8 : i32
    %62 = vector.broadcast %c8_i32_30 : i32 to vector<1x512xi32>
    %63 = arith.cmpi slt, %59, %62 : vector<1x512xi32>
    %64 = arith.andi %61, %63 : vector<1x512xi1>
    %cst_31 = arith.constant 1.000000e+00 : f32
    %cst_32 = arith.constant 0.000000e+00 : f32
    %65 = vector.broadcast %cst_31 : f32 to vector<1x512xf32>
    %66 = vector.broadcast %cst_32 : f32 to vector<1x512xf32>
    %67 = arith.select %64, %65, %66 : vector<1x512xi1>, vector<1x512xf32>
    %68 = arith.mulf %24, %67 : vector<1x512xf32>
    %c71_i32 = arith.constant 71 : i32
    %69 = tpu.dynamic_rotate %1 by %c71_i32 dim 1 : vector<8x512xf32>, i32 -> vector<8x512xf32>
    %70 = vector.broadcast %68 : vector<1x512xf32> to vector<8x512xf32>
    %71 = arith.mulf %69, %70 : vector<8x512xf32>
    %c16 = arith.constant 16 : index
    %c0_33 = arith.constant 0 : index
    %72 = vector.load %arg6[%c16, %c0_33] : memref<72x512xf32, #tpu.memory_space<vmem>>, vector<8x512xf32>
    tpu.vector_store %arg6[%c16, %c0_33], %71 {strides = array<i32>} : memref<72x512xf32, #tpu.memory_space<vmem>>, vector<8x512xf32>,
    %c1_34 = arith.constant 1 : index
    %c0_35 = arith.constant 0 : index
    %73 = vector.load %arg4[%c1_34, %c0_35] : memref<3x512xi32, #tpu.memory_space<vmem>>, vector<1x512xi32>
    %c0_i32_36 = arith.constant 0 : i32
    %74 = vector.broadcast %c0_i32_36 : i32 to vector<1x512xi32>
    %75 = arith.addi %73, %74 : vector<1x512xi32>
    %c0_i32_37 = arith.constant 0 : i32
    %76 = vector.broadcast %c0_i32_37 : i32 to vector<1x512xi32>
    %77 = arith.cmpi sge, %75, %76 : vector<1x512xi32>
    %c8_i32_38 = arith.constant 8 : i32
    %78 = vector.broadcast %c8_i32_38 : i32 to vector<1x512xi32>
    %79 = arith.cmpi slt, %75, %78 : vector<1x512xi32>
    %80 = arith.andi %77, %79 : vector<1x512xi1>
    %cst_39 = arith.constant 1.000000e+00 : f32
    %cst_40 = arith.constant 0.000000e+00 : f32
    %81 = vector.broadcast %cst_39 : f32 to vector<1x512xf32>
    %82 = vector.broadcast %cst_40 : f32 to vector<1x512xf32>
    %83 = arith.select %80, %81, %82 : vector<1x512xi1>, vector<1x512xf32>
    %84 = arith.mulf %12, %83 : vector<1x512xf32>
    %c2_41 = arith.constant 2 : index
    %c0_42 = arith.constant 0 : index
    %85 = vector.load %arg4[%c2_41, %c0_42] : memref<3x512xi32, #tpu.memory_space<vmem>>, vector<1x512xi32>
    %c-1_i32_43 = arith.constant -1 : i32
    %86 = vector.broadcast %c-1_i32_43 : i32 to vector<1x512xi32>
    %87 = arith.addi %85, %86 : vector<1x512xi32>
    %c0_i32_44 = arith.constant 0 : i32
    %88 = vector.broadcast %c0_i32_44 : i32 to vector<1x512xi32>
    %89 = arith.cmpi sge, %87, %88 : vector<1x512xi32>
    %c8_i32_45 = arith.constant 8 : i32
    %90 = vector.broadcast %c8_i32_45 : i32 to vector<1x512xi32>
    %91 = arith.cmpi slt, %87, %90 : vector<1x512xi32>
    %92 = arith.andi %89, %91 : vector<1x512xi1>
    %cst_46 = arith.constant 1.000000e+00 : f32
    %cst_47 = arith.constant 0.000000e+00 : f32
    %93 = vector.broadcast %cst_46 : f32 to vector<1x512xf32>
    %94 = vector.broadcast %cst_47 : f32 to vector<1x512xf32>
    %95 = arith.select %92, %93, %94 : vector<1x512xi1>, vector<1x512xf32>
    %96 = arith.mulf %84, %95 : vector<1x512xf32>
    %c65_i32 = arith.constant 65 : i32
    %97 = tpu.dynamic_rotate %1 by %c65_i32 dim 1 : vector<8x512xf32>, i32 -> vector<8x512xf32>
    %98 = vector.broadcast %96 : vector<1x512xf32> to vector<8x512xf32>
    %99 = arith.mulf %97, %98 : vector<8x512xf32>
    %c24 = arith.constant 24 : index
    %c0_48 = arith.constant 0 : index
    %100 = vector.load %arg6[%c24, %c0_48] : memref<72x512xf32, #tpu.memory_space<vmem>>, vector<8x512xf32>
    tpu.vector_store %arg6[%c24, %c0_48], %99 {strides = array<i32>} : memref<72x512xf32, #tpu.memory_space<vmem>>, vector<8x512xf32>,
    %c2_49 = arith.constant 2 : index
    %c0_50 = arith.constant 0 : index
    %101 = vector.load %arg4[%c2_49, %c0_50] : memref<3x512xi32, #tpu.memory_space<vmem>>, vector<1x512xi32>
    %c0_i32_51 = arith.constant 0 : i32
    %102 = vector.broadcast %c0_i32_51 : i32 to vector<1x512xi32>
    %103 = arith.addi %101, %102 : vector<1x512xi32>
    %c0_i32_52 = arith.constant 0 : i32
    %104 = vector.broadcast %c0_i32_52 : i32 to vector<1x512xi32>
    %105 = arith.cmpi sge, %103, %104 : vector<1x512xi32>
    %c8_i32_53 = arith.constant 8 : i32
    %106 = vector.broadcast %c8_i32_53 : i32 to vector<1x512xi32>
    %107 = arith.cmpi slt, %103, %106 : vector<1x512xi32>
    %108 = arith.andi %105, %107 : vector<1x512xi1>
    %cst_54 = arith.constant 1.000000e+00 : f32
    %cst_55 = arith.constant 0.000000e+00 : f32
    %109 = vector.broadcast %cst_54 : f32 to vector<1x512xf32>
    %110 = vector.broadcast %cst_55 : f32 to vector<1x512xf32>
    %111 = arith.select %108, %109, %110 : vector<1x512xi1>, vector<1x512xf32>
    %112 = arith.mulf %84, %111 : vector<1x512xf32>
    %c64_i32 = arith.constant 64 : i32
    %113 = tpu.dynamic_rotate %1 by %c64_i32 dim 1 : vector<8x512xf32>, i32 -> vector<8x512xf32>
    %114 = vector.broadcast %112 : vector<1x512xf32> to vector<8x512xf32>
    %115 = arith.mulf %113, %114 : vector<8x512xf32>
    %c32 = arith.constant 32 : index
    %c0_56 = arith.constant 0 : index
    %116 = vector.load %arg6[%c32, %c0_56] : memref<72x512xf32, #tpu.memory_space<vmem>>, vector<8x512xf32>
    tpu.vector_store %arg6[%c32, %c0_56], %115 {strides = array<i32>} : memref<72x512xf32, #tpu.memory_space<vmem>>, vector<8x512xf32>,
    %c2_57 = arith.constant 2 : index
    %c0_58 = arith.constant 0 : index
    %117 = vector.load %arg4[%c2_57, %c0_58] : memref<3x512xi32, #tpu.memory_space<vmem>>, vector<1x512xi32>
    %c1_i32_59 = arith.constant 1 : i32
    %118 = vector.broadcast %c1_i32_59 : i32 to vector<1x512xi32>
    %119 = arith.addi %117, %118 : vector<1x512xi32>
    %c0_i32_60 = arith.constant 0 : i32
    %120 = vector.broadcast %c0_i32_60 : i32 to vector<1x512xi32>
    %121 = arith.cmpi sge, %119, %120 : vector<1x512xi32>
    %c8_i32_61 = arith.constant 8 : i32
    %122 = vector.broadcast %c8_i32_61 : i32 to vector<1x512xi32>
    %123 = arith.cmpi slt, %119, %122 : vector<1x512xi32>
    %124 = arith.andi %121, %123 : vector<1x512xi1>
    %cst_62 = arith.constant 1.000000e+00 : f32
    %cst_63 = arith.constant 0.000000e+00 : f32
    %125 = vector.broadcast %cst_62 : f32 to vector<1x512xf32>
    %126 = vector.broadcast %cst_63 : f32 to vector<1x512xf32>
    %127 = arith.select %124, %125, %126 : vector<1x512xi1>, vector<1x512xf32>
    %128 = arith.mulf %84, %127 : vector<1x512xf32>
    %c63_i32 = arith.constant 63 : i32
    %129 = tpu.dynamic_rotate %1 by %c63_i32 dim 1 : vector<8x512xf32>, i32 -> vector<8x512xf32>
    %130 = vector.broadcast %128 : vector<1x512xf32> to vector<8x512xf32>
    %131 = arith.mulf %129, %130 : vector<8x512xf32>
    %c40 = arith.constant 40 : index
    %c0_64 = arith.constant 0 : index
    %132 = vector.load %arg6[%c40, %c0_64] : memref<72x512xf32, #tpu.memory_space<vmem>>, vector<8x512xf32>
    tpu.vector_store %arg6[%c40, %c0_64], %131 {strides = array<i32>} : memref<72x512xf32, #tpu.memory_space<vmem>>, vector<8x512xf32>,
    %c1_65 = arith.constant 1 : index
    %c0_66 = arith.constant 0 : index
    %133 = vector.load %arg4[%c1_65, %c0_66] : memref<3x512xi32, #tpu.memory_space<vmem>>, vector<1x512xi32>
    %c1_i32_67 = arith.constant 1 : i32
    %134 = vector.broadcast %c1_i32_67 : i32 to vector<1x512xi32>
    %135 = arith.addi %133, %134 : vector<1x512xi32>
    %c0_i32_68 = arith.constant 0 : i32
    %136 = vector.broadcast %c0_i32_68 : i32 to vector<1x512xi32>
    %137 = arith.cmpi sge, %135, %136 : vector<1x512xi32>
    %c8_i32_69 = arith.constant 8 : i32
    %138 = vector.broadcast %c8_i32_69 : i32 to vector<1x512xi32>
    %139 = arith.cmpi slt, %135, %138 : vector<1x512xi32>
    %140 = arith.andi %137, %139 : vector<1x512xi1>
    %cst_70 = arith.constant 1.000000e+00 : f32
    %cst_71 = arith.constant 0.000000e+00 : f32
    %141 = vector.broadcast %cst_70 : f32 to vector<1x512xf32>
    %142 = vector.broadcast %cst_71 : f32 to vector<1x512xf32>
    %143 = arith.select %140, %141, %142 : vector<1x512xi1>, vector<1x512xf32>
    %144 = arith.mulf %12, %143 : vector<1x512xf32>
    %c2_72 = arith.constant 2 : index
    %c0_73 = arith.constant 0 : index
    %145 = vector.load %arg4[%c2_72, %c0_73] : memref<3x512xi32, #tpu.memory_space<vmem>>, vector<1x512xi32>
    %c-1_i32_74 = arith.constant -1 : i32
    %146 = vector.broadcast %c-1_i32_74 : i32 to vector<1x512xi32>
    %147 = arith.addi %145, %146 : vector<1x512xi32>
    %c0_i32_75 = arith.constant 0 : i32
    %148 = vector.broadcast %c0_i32_75 : i32 to vector<1x512xi32>
    %149 = arith.cmpi sge, %147, %148 : vector<1x512xi32>
    %c8_i32_76 = arith.constant 8 : i32
    %150 = vector.broadcast %c8_i32_76 : i32 to vector<1x512xi32>
    %151 = arith.cmpi slt, %147, %150 : vector<1x512xi32>
    %152 = arith.andi %149, %151 : vector<1x512xi1>
    %cst_77 = arith.constant 1.000000e+00 : f32
    %cst_78 = arith.constant 0.000000e+00 : f32
    %153 = vector.broadcast %cst_77 : f32 to vector<1x512xf32>
    %154 = vector.broadcast %cst_78 : f32 to vector<1x512xf32>
    %155 = arith.select %152, %153, %154 : vector<1x512xi1>, vector<1x512xf32>
    %156 = arith.mulf %144, %155 : vector<1x512xf32>
    %c57_i32 = arith.constant 57 : i32
    %157 = tpu.dynamic_rotate %1 by %c57_i32 dim 1 : vector<8x512xf32>, i32 -> vector<8x512xf32>
    %158 = vector.broadcast %156 : vector<1x512xf32> to vector<8x512xf32>
    %159 = arith.mulf %157, %158 : vector<8x512xf32>
    %c48 = arith.constant 48 : index
    %c0_79 = arith.constant 0 : index
    %160 = vector.load %arg6[%c48, %c0_79] : memref<72x512xf32, #tpu.memory_space<vmem>>, vector<8x512xf32>
    tpu.vector_store %arg6[%c48, %c0_79], %159 {strides = array<i32>} : memref<72x512xf32, #tpu.memory_space<vmem>>, vector<8x512xf32>,
    %c2_80 = arith.constant 2 : index
    %c0_81 = arith.constant 0 : index
    %161 = vector.load %arg4[%c2_80, %c0_81] : memref<3x512xi32, #tpu.memory_space<vmem>>, vector<1x512xi32>
    %c0_i32_82 = arith.constant 0 : i32
    %162 = vector.broadcast %c0_i32_82 : i32 to vector<1x512xi32>
    %163 = arith.addi %161, %162 : vector<1x512xi32>
    %c0_i32_83 = arith.constant 0 : i32
    %164 = vector.broadcast %c0_i32_83 : i32 to vector<1x512xi32>
    %165 = arith.cmpi sge, %163, %164 : vector<1x512xi32>
    %c8_i32_84 = arith.constant 8 : i32
    %166 = vector.broadcast %c8_i32_84 : i32 to vector<1x512xi32>
    %167 = arith.cmpi slt, %163, %166 : vector<1x512xi32>
    %168 = arith.andi %165, %167 : vector<1x512xi1>
    %cst_85 = arith.constant 1.000000e+00 : f32
    %cst_86 = arith.constant 0.000000e+00 : f32
    %169 = vector.broadcast %cst_85 : f32 to vector<1x512xf32>
    %170 = vector.broadcast %cst_86 : f32 to vector<1x512xf32>
    %171 = arith.select %168, %169, %170 : vector<1x512xi1>, vector<1x512xf32>
    %172 = arith.mulf %144, %171 : vector<1x512xf32>
    %c56_i32 = arith.constant 56 : i32
    %173 = tpu.dynamic_rotate %1 by %c56_i32 dim 1 : vector<8x512xf32>, i32 -> vector<8x512xf32>
    %174 = vector.broadcast %172 : vector<1x512xf32> to vector<8x512xf32>
    %175 = arith.mulf %173, %174 : vector<8x512xf32>
    %c56 = arith.constant 56 : index
    %c0_87 = arith.constant 0 : index
    %176 = vector.load %arg6[%c56, %c0_87] : memref<72x512xf32, #tpu.memory_space<vmem>>, vector<8x512xf32>
    tpu.vector_store %arg6[%c56, %c0_87], %175 {strides = array<i32>} : memref<72x512xf32, #tpu.memory_space<vmem>>, vector<8x512xf32>,
    %c2_88 = arith.constant 2 : index
    %c0_89 = arith.constant 0 : index
    %177 = vector.load %arg4[%c2_88, %c0_89] : memref<3x512xi32, #tpu.memory_space<vmem>>, vector<1x512xi32>
    %c1_i32_90 = arith.constant 1 : i32
    %178 = vector.broadcast %c1_i32_90 : i32 to vector<1x512xi32>
    %179 = arith.addi %177, %178 : vector<1x512xi32>
    %c0_i32_91 = arith.constant 0 : i32
    %180 = vector.broadcast %c0_i32_91 : i32 to vector<1x512xi32>
    %181 = arith.cmpi sge, %179, %180 : vector<1x512xi32>
    %c8_i32_92 = arith.constant 8 : i32
    %182 = vector.broadcast %c8_i32_92 : i32 to vector<1x512xi32>
    %183 = arith.cmpi slt, %179, %182 : vector<1x512xi32>
    %184 = arith.andi %181, %183 : vector<1x512xi1>
    %cst_93 = arith.constant 1.000000e+00 : f32
    %cst_94 = arith.constant 0.000000e+00 : f32
    %185 = vector.broadcast %cst_93 : f32 to vector<1x512xf32>
    %186 = vector.broadcast %cst_94 : f32 to vector<1x512xf32>
    %187 = arith.select %184, %185, %186 : vector<1x512xi1>, vector<1x512xf32>
    %188 = arith.mulf %144, %187 : vector<1x512xf32>
    %c55_i32 = arith.constant 55 : i32
    %189 = tpu.dynamic_rotate %1 by %c55_i32 dim 1 : vector<8x512xf32>, i32 -> vector<8x512xf32>
    %190 = vector.broadcast %188 : vector<1x512xf32> to vector<8x512xf32>
    %191 = arith.mulf %189, %190 : vector<8x512xf32>
    %c64 = arith.constant 64 : index
    %c0_95 = arith.constant 0 : index
    %192 = vector.load %arg6[%c64, %c0_95] : memref<72x512xf32, #tpu.memory_space<vmem>>, vector<8x512xf32>
    tpu.vector_store %arg6[%c64, %c0_95], %191 {strides = array<i32>} : memref<72x512xf32, #tpu.memory_space<vmem>>, vector<8x512xf32>,
    %c0_96 = arith.constant 0 : index
    %c0_97 = arith.constant 0 : index
    %193 = vector.load %arg6[%c0_96, %c0_97] : memref<72x512xf32, #tpu.memory_space<vmem>>, vector<72x512xf32>
    %c0_98 = arith.constant 0 : index
    %c0_99 = arith.constant 0 : index
    %c0_100 = arith.constant 0 : index
    %194 = vector.load %arg2[%c0_98, %c0_99, %c0_100] : memref<3x72x8xf32, #tpu.memory_space<vmem>>, vector<1x72x8xf32>
    %195 = vector.shape_cast %194 : vector<1x72x8xf32> to vector<72x8xf32>
    %cst_101 = arith.constant dense<0.000000e+00> : vector<512x8xf32>
    %196 = tpu.matmul %193, %195, %cst_101 {dimension_numbers = #tpu.dot_dimension_numbers<[0], [0], [1], [1], [0, 1, 1, 1], [], []>} : vector<72x512xf32>, vector<72x8xf32>, vector<512x8xf32> -> vector<512x8xf32>
    %197 = tpu.transpose %196, [1, 0] : vector<512x8xf32> -> vector<8x512xf32>
    %c0_102 = arith.constant 0 : index
    %c0_103 = arith.constant 0 : index
    %198 = vector.load %arg4[%c0_102, %c0_103] : memref<3x512xi32, #tpu.memory_space<vmem>>, vector<1x512xi32>
    %c0_i32_104 = arith.constant 0 : i32
    %199 = vector.broadcast %c0_i32_104 : i32 to vector<1x512xi32>
    %200 = arith.addi %198, %199 : vector<1x512xi32>
    %c0_i32_105 = arith.constant 0 : i32
    %201 = vector.broadcast %c0_i32_105 : i32 to vector<1x512xi32>
    %202 = arith.cmpi sge, %200, %201 : vector<1x512xi32>
    %c8_i32_106 = arith.constant 8 : i32
    %203 = vector.broadcast %c8_i32_106 : i32 to vector<1x512xi32>
    %204 = arith.cmpi slt, %200, %203 : vector<1x512xi32>
    %205 = arith.andi %202, %204 : vector<1x512xi1>
    %cst_107 = arith.constant 1.000000e+00 : f32
    %cst_108 = arith.constant 0.000000e+00 : f32
    %206 = vector.broadcast %cst_107 : f32 to vector<1x512xf32>
    %207 = vector.broadcast %cst_108 : f32 to vector<1x512xf32>
    %208 = arith.select %205, %206, %207 : vector<1x512xi1>, vector<1x512xf32>
    %c1_109 = arith.constant 1 : index
    %c0_110 = arith.constant 0 : index
    %209 = vector.load %arg4[%c1_109, %c0_110] : memref<3x512xi32, #tpu.memory_space<vmem>>, vector<1x512xi32>
    %c-1_i32_111 = arith.constant -1 : i32
    %210 = vector.broadcast %c-1_i32_111 : i32 to vector<1x512xi32>
    %211 = arith.addi %209, %210 : vector<1x512xi32>
    %c0_i32_112 = arith.constant 0 : i32
    %212 = vector.broadcast %c0_i32_112 : i32 to vector<1x512xi32>
    %213 = arith.cmpi sge, %211, %212 : vector<1x512xi32>
    %c8_i32_113 = arith.constant 8 : i32
    %214 = vector.broadcast %c8_i32_113 : i32 to vector<1x512xi32>
    %215 = arith.cmpi slt, %211, %214 : vector<1x512xi32>
    %216 = arith.andi %213, %215 : vector<1x512xi1>
    %cst_114 = arith.constant 1.000000e+00 : f32
    %cst_115 = arith.constant 0.000000e+00 : f32
    %217 = vector.broadcast %cst_114 : f32 to vector<1x512xf32>
    %218 = vector.broadcast %cst_115 : f32 to vector<1x512xf32>
    %219 = arith.select %216, %217, %218 : vector<1x512xi1>, vector<1x512xf32>
    %220 = arith.mulf %208, %219 : vector<1x512xf32>
    %c2_116 = arith.constant 2 : index
    %c0_117 = arith.constant 0 : index
    %221 = vector.load %arg4[%c2_116, %c0_117] : memref<3x512xi32, #tpu.memory_space<vmem>>, vector<1x512xi32>
    %c-1_i32_118 = arith.constant -1 : i32
    %222 = vector.broadcast %c-1_i32_118 : i32 to vector<1x512xi32>
    %223 = arith.addi %221, %222 : vector<1x512xi32>
    %c0_i32_119 = arith.constant 0 : i32
    %224 = vector.broadcast %c0_i32_119 : i32 to vector<1x512xi32>
    %225 = arith.cmpi sge, %223, %224 : vector<1x512xi32>
    %c8_i32_120 = arith.constant 8 : i32
    %226 = vector.broadcast %c8_i32_120 : i32 to vector<1x512xi32>
    %227 = arith.cmpi slt, %223, %226 : vector<1x512xi32>
    %228 = arith.andi %225, %227 : vector<1x512xi1>
    %cst_121 = arith.constant 1.000000e+00 : f32
    %cst_122 = arith.constant 0.000000e+00 : f32
    %229 = vector.broadcast %cst_121 : f32 to vector<1x512xf32>
    %230 = vector.broadcast %cst_122 : f32 to vector<1x512xf32>
    %231 = arith.select %228, %229, %230 : vector<1x512xi1>, vector<1x512xf32>
    %232 = arith.mulf %220, %231 : vector<1x512xf32>
    %c9_i32 = arith.constant 9 : i32
    %233 = tpu.dynamic_rotate %1 by %c9_i32 dim 1 : vector<8x512xf32>, i32 -> vector<8x512xf32>
    %234 = vector.broadcast %232 : vector<1x512xf32> to vector<8x512xf32>
    %235 = arith.mulf %233, %234 : vector<8x512xf32>
    %c0_123 = arith.constant 0 : index
    %c0_124 = arith.constant 0 : index
    %236 = vector.load %arg6[%c0_123, %c0_124] : memref<72x512xf32, #tpu.memory_space<vmem>>, vector<8x512xf32>
    tpu.vector_store %arg6[%c0_123, %c0_124], %235 {strides = array<i32>} : memref<72x512xf32, #tpu.memory_space<vmem>>, vector<8x512xf32>,
    %c2_125 = arith.constant 2 : index
    %c0_126 = arith.constant 0 : index
    %237 = vector.load %arg4[%c2_125, %c0_126] : memref<3x512xi32, #tpu.memory_space<vmem>>, vector<1x512xi32>
    %c0_i32_127 = arith.constant 0 : i32
    %238 = vector.broadcast %c0_i32_127 : i32 to vector<1x512xi32>
    %239 = arith.addi %237, %238 : vector<1x512xi32>
    %c0_i32_128 = arith.constant 0 : i32
    %240 = vector.broadcast %c0_i32_128 : i32 to vector<1x512xi32>
    %241 = arith.cmpi sge, %239, %240 : vector<1x512xi32>
    %c8_i32_129 = arith.constant 8 : i32
    %242 = vector.broadcast %c8_i32_129 : i32 to vector<1x512xi32>
    %243 = arith.cmpi slt, %239, %242 : vector<1x512xi32>
    %244 = arith.andi %241, %243 : vector<1x512xi1>
    %cst_130 = arith.constant 1.000000e+00 : f32
    %cst_131 = arith.constant 0.000000e+00 : f32
    %245 = vector.broadcast %cst_130 : f32 to vector<1x512xf32>
    %246 = vector.broadcast %cst_131 : f32 to vector<1x512xf32>
    %247 = arith.select %244, %245, %246 : vector<1x512xi1>, vector<1x512xf32>
    %248 = arith.mulf %220, %247 : vector<1x512xf32>
    %c8_i32_132 = arith.constant 8 : i32
    %249 = tpu.dynamic_rotate %1 by %c8_i32_132 dim 1 : vector<8x512xf32>, i32 -> vector<8x512xf32>
    %250 = vector.broadcast %248 : vector<1x512xf32> to vector<8x512xf32>
    %251 = arith.mulf %249, %250 : vector<8x512xf32>
    %c8_133 = arith.constant 8 : index
    %c0_134 = arith.constant 0 : index
    %252 = vector.load %arg6[%c8_133, %c0_134] : memref<72x512xf32, #tpu.memory_space<vmem>>, vector<8x512xf32>
    tpu.vector_store %arg6[%c8_133, %c0_134], %251 {strides = array<i32>} : memref<72x512xf32, #tpu.memory_space<vmem>>, vector<8x512xf32>,
    %c2_135 = arith.constant 2 : index
    %c0_136 = arith.constant 0 : index
    %253 = vector.load %arg4[%c2_135, %c0_136] : memref<3x512xi32, #tpu.memory_space<vmem>>, vector<1x512xi32>
    %c1_i32_137 = arith.constant 1 : i32
    %254 = vector.broadcast %c1_i32_137 : i32 to vector<1x512xi32>
    %255 = arith.addi %253, %254 : vector<1x512xi32>
    %c0_i32_138 = arith.constant 0 : i32
    %256 = vector.broadcast %c0_i32_138 : i32 to vector<1x512xi32>
    %257 = arith.cmpi sge, %255, %256 : vector<1x512xi32>
    %c8_i32_139 = arith.constant 8 : i32
    %258 = vector.broadcast %c8_i32_139 : i32 to vector<1x512xi32>
    %259 = arith.cmpi slt, %255, %258 : vector<1x512xi32>
    %260 = arith.andi %257, %259 : vector<1x512xi1>
    %cst_140 = arith.constant 1.000000e+00 : f32
    %cst_141 = arith.constant 0.000000e+00 : f32
    %261 = vector.broadcast %cst_140 : f32 to vector<1x512xf32>
    %262 = vector.broadcast %cst_141 : f32 to vector<1x512xf32>
    %263 = arith.select %260, %261, %262 : vector<1x512xi1>, vector<1x512xf32>
    %264 = arith.mulf %220, %263 : vector<1x512xf32>
    %c7_i32 = arith.constant 7 : i32
    %265 = tpu.dynamic_rotate %1 by %c7_i32 dim 1 : vector<8x512xf32>, i32 -> vector<8x512xf32>
    %266 = vector.broadcast %264 : vector<1x512xf32> to vector<8x512xf32>
    %267 = arith.mulf %265, %266 : vector<8x512xf32>
    %c16_142 = arith.constant 16 : index
    %c0_143 = arith.constant 0 : index
    %268 = vector.load %arg6[%c16_142, %c0_143] : memref<72x512xf32, #tpu.memory_space<vmem>>, vector<8x512xf32>
    tpu.vector_store %arg6[%c16_142, %c0_143], %267 {strides = array<i32>} : memref<72x512xf32, #tpu.memory_space<vmem>>, vector<8x512xf32>,
    %c1_144 = arith.constant 1 : index
    %c0_145 = arith.constant 0 : index
    %269 = vector.load %arg4[%c1_144, %c0_145] : memref<3x512xi32, #tpu.memory_space<vmem>>, vector<1x512xi32>
    %c0_i32_146 = arith.constant 0 : i32
    %270 = vector.broadcast %c0_i32_146 : i32 to vector<1x512xi32>
    %271 = arith.addi %269, %270 : vector<1x512xi32>
    %c0_i32_147 = arith.constant 0 : i32
    %272 = vector.broadcast %c0_i32_147 : i32 to vector<1x512xi32>
    %273 = arith.cmpi sge, %271, %272 : vector<1x512xi32>
    %c8_i32_148 = arith.constant 8 : i32
    %274 = vector.broadcast %c8_i32_148 : i32 to vector<1x512xi32>
    %275 = arith.cmpi slt, %271, %274 : vector<1x512xi32>
    %276 = arith.andi %273, %275 : vector<1x512xi1>
    %cst_149 = arith.constant 1.000000e+00 : f32
    %cst_150 = arith.constant 0.000000e+00 : f32
    %277 = vector.broadcast %cst_149 : f32 to vector<1x512xf32>
    %278 = vector.broadcast %cst_150 : f32 to vector<1x512xf32>
    %279 = arith.select %276, %277, %278 : vector<1x512xi1>, vector<1x512xf32>
    %280 = arith.mulf %208, %279 : vector<1x512xf32>
    %c2_151 = arith.constant 2 : index
    %c0_152 = arith.constant 0 : index
    %281 = vector.load %arg4[%c2_151, %c0_152] : memref<3x512xi32, #tpu.memory_space<vmem>>, vector<1x512xi32>
    %c-1_i32_153 = arith.constant -1 : i32
    %282 = vector.broadcast %c-1_i32_153 : i32 to vector<1x512xi32>
    %283 = arith.addi %281, %282 : vector<1x512xi32>
    %c0_i32_154 = arith.constant 0 : i32
    %284 = vector.broadcast %c0_i32_154 : i32 to vector<1x512xi32>
    %285 = arith.cmpi sge, %283, %284 : vector<1x512xi32>
    %c8_i32_155 = arith.constant 8 : i32
    %286 = vector.broadcast %c8_i32_155 : i32 to vector<1x512xi32>
    %287 = arith.cmpi slt, %283, %286 : vector<1x512xi32>
    %288 = arith.andi %285, %287 : vector<1x512xi1>
    %cst_156 = arith.constant 1.000000e+00 : f32
    %cst_157 = arith.constant 0.000000e+00 : f32
    %289 = vector.broadcast %cst_156 : f32 to vector<1x512xf32>
    %290 = vector.broadcast %cst_157 : f32 to vector<1x512xf32>
    %291 = arith.select %288, %289, %290 : vector<1x512xi1>, vector<1x512xf32>
    %292 = arith.mulf %280, %291 : vector<1x512xf32>
    %c1_i32_158 = arith.constant 1 : i32
    %293 = tpu.dynamic_rotate %1 by %c1_i32_158 dim 1 : vector<8x512xf32>, i32 -> vector<8x512xf32>
    %294 = vector.broadcast %292 : vector<1x512xf32> to vector<8x512xf32>
    %295 = arith.mulf %293, %294 : vector<8x512xf32>
    %c24_159 = arith.constant 24 : index
    %c0_160 = arith.constant 0 : index
    %296 = vector.load %arg6[%c24_159, %c0_160] : memref<72x512xf32, #tpu.memory_space<vmem>>, vector<8x512xf32>
    tpu.vector_store %arg6[%c24_159, %c0_160], %295 {strides = array<i32>} : memref<72x512xf32, #tpu.memory_space<vmem>>, vector<8x512xf32>,
    %c2_161 = arith.constant 2 : index
    %c0_162 = arith.constant 0 : index
    %297 = vector.load %arg4[%c2_161, %c0_162] : memref<3x512xi32, #tpu.memory_space<vmem>>, vector<1x512xi32>
    %c0_i32_163 = arith.constant 0 : i32
    %298 = vector.broadcast %c0_i32_163 : i32 to vector<1x512xi32>
    %299 = arith.addi %297, %298 : vector<1x512xi32>
    %c0_i32_164 = arith.constant 0 : i32
    %300 = vector.broadcast %c0_i32_164 : i32 to vector<1x512xi32>
    %301 = arith.cmpi sge, %299, %300 : vector<1x512xi32>
    %c8_i32_165 = arith.constant 8 : i32
    %302 = vector.broadcast %c8_i32_165 : i32 to vector<1x512xi32>
    %303 = arith.cmpi slt, %299, %302 : vector<1x512xi32>
    %304 = arith.andi %301, %303 : vector<1x512xi1>
    %cst_166 = arith.constant 1.000000e+00 : f32
    %cst_167 = arith.constant 0.000000e+00 : f32
    %305 = vector.broadcast %cst_166 : f32 to vector<1x512xf32>
    %306 = vector.broadcast %cst_167 : f32 to vector<1x512xf32>
    %307 = arith.select %304, %305, %306 : vector<1x512xi1>, vector<1x512xf32>
    %308 = arith.mulf %280, %307 : vector<1x512xf32>
    %309 = vector.broadcast %308 : vector<1x512xf32> to vector<8x512xf32>
    %310 = arith.mulf %1, %309 : vector<8x512xf32>
    %c32_168 = arith.constant 32 : index
    %c0_169 = arith.constant 0 : index
    %311 = vector.load %arg6[%c32_168, %c0_169] : memref<72x512xf32, #tpu.memory_space<vmem>>, vector<8x512xf32>
    tpu.vector_store %arg6[%c32_168, %c0_169], %310 {strides = array<i32>} : memref<72x512xf32, #tpu.memory_space<vmem>>, vector<8x512xf32>,
    %c2_170 = arith.constant 2 : index
    %c0_171 = arith.constant 0 : index
    %312 = vector.load %arg4[%c2_170, %c0_171] : memref<3x512xi32, #tpu.memory_space<vmem>>, vector<1x512xi32>
    %c1_i32_172 = arith.constant 1 : i32
    %313 = vector.broadcast %c1_i32_172 : i32 to vector<1x512xi32>
    %314 = arith.addi %312, %313 : vector<1x512xi32>
    %c0_i32_173 = arith.constant 0 : i32
    %315 = vector.broadcast %c0_i32_173 : i32 to vector<1x512xi32>
    %316 = arith.cmpi sge, %314, %315 : vector<1x512xi32>
    %c8_i32_174 = arith.constant 8 : i32
    %317 = vector.broadcast %c8_i32_174 : i32 to vector<1x512xi32>
    %318 = arith.cmpi slt, %314, %317 : vector<1x512xi32>
    %319 = arith.andi %316, %318 : vector<1x512xi1>
    %cst_175 = arith.constant 1.000000e+00 : f32
    %cst_176 = arith.constant 0.000000e+00 : f32
    %320 = vector.broadcast %cst_175 : f32 to vector<1x512xf32>
    %321 = vector.broadcast %cst_176 : f32 to vector<1x512xf32>
    %322 = arith.select %319, %320, %321 : vector<1x512xi1>, vector<1x512xf32>
    %323 = arith.mulf %280, %322 : vector<1x512xf32>
    %c511_i32 = arith.constant 511 : i32
    %324 = tpu.dynamic_rotate %1 by %c511_i32 dim 1 : vector<8x512xf32>, i32 -> vector<8x512xf32>
    %325 = vector.broadcast %323 : vector<1x512xf32> to vector<8x512xf32>
    %326 = arith.mulf %324, %325 : vector<8x512xf32>
    %c40_177 = arith.constant 40 : index
    %c0_178 = arith.constant 0 : index
    %327 = vector.load %arg6[%c40_177, %c0_178] : memref<72x512xf32, #tpu.memory_space<vmem>>, vector<8x512xf32>
    tpu.vector_store %arg6[%c40_177, %c0_178], %326 {strides = array<i32>} : memref<72x512xf32, #tpu.memory_space<vmem>>, vector<8x512xf32>,
    %c1_179 = arith.constant 1 : index
    %c0_180 = arith.constant 0 : index
    %328 = vector.load %arg4[%c1_179, %c0_180] : memref<3x512xi32, #tpu.memory_space<vmem>>, vector<1x512xi32>
    %c1_i32_181 = arith.constant 1 : i32
    %329 = vector.broadcast %c1_i32_181 : i32 to vector<1x512xi32>
    %330 = arith.addi %328, %329 : vector<1x512xi32>
    %c0_i32_182 = arith.constant 0 : i32
    %331 = vector.broadcast %c0_i32_182 : i32 to vector<1x512xi32>
    %332 = arith.cmpi sge, %330, %331 : vector<1x512xi32>
    %c8_i32_183 = arith.constant 8 : i32
    %333 = vector.broadcast %c8_i32_183 : i32 to vector<1x512xi32>
    %334 = arith.cmpi slt, %330, %333 : vector<1x512xi32>
    %335 = arith.andi %332, %334 : vector<1x512xi1>
    %cst_184 = arith.constant 1.000000e+00 : f32
    %cst_185 = arith.constant 0.000000e+00 : f32
    %336 = vector.broadcast %cst_184 : f32 to vector<1x512xf32>
    %337 = vector.broadcast %cst_185 : f32 to vector<1x512xf32>
    %338 = arith.select %335, %336, %337 : vector<1x512xi1>, vector<1x512xf32>
    %339 = arith.mulf %208, %338 : vector<1x512xf32>
    %c2_186 = arith.constant 2 : index
    %c0_187 = arith.constant 0 : index
    %340 = vector.load %arg4[%c2_186, %c0_187] : memref<3x512xi32, #tpu.memory_space<vmem>>, vector<1x512xi32>
    %c-1_i32_188 = arith.constant -1 : i32
    %341 = vector.broadcast %c-1_i32_188 : i32 to vector<1x512xi32>
    %342 = arith.addi %340, %341 : vector<1x512xi32>
    %c0_i32_189 = arith.constant 0 : i32
    %343 = vector.broadcast %c0_i32_189 : i32 to vector<1x512xi32>
    %344 = arith.cmpi sge, %342, %343 : vector<1x512xi32>
    %c8_i32_190 = arith.constant 8 : i32
    %345 = vector.broadcast %c8_i32_190 : i32 to vector<1x512xi32>
    %346 = arith.cmpi slt, %342, %345 : vector<1x512xi32>
    %347 = arith.andi %344, %346 : vector<1x512xi1>
    %cst_191 = arith.constant 1.000000e+00 : f32
    %cst_192 = arith.constant 0.000000e+00 : f32
    %348 = vector.broadcast %cst_191 : f32 to vector<1x512xf32>
    %349 = vector.broadcast %cst_192 : f32 to vector<1x512xf32>
    %350 = arith.select %347, %348, %349 : vector<1x512xi1>, vector<1x512xf32>
    %351 = arith.mulf %339, %350 : vector<1x512xf32>
    %c505_i32 = arith.constant 505 : i32
    %352 = tpu.dynamic_rotate %1 by %c505_i32 dim 1 : vector<8x512xf32>, i32 -> vector<8x512xf32>
    %353 = vector.broadcast %351 : vector<1x512xf32> to vector<8x512xf32>
    %354 = arith.mulf %352, %353 : vector<8x512xf32>
    %c48_193 = arith.constant 48 : index
    %c0_194 = arith.constant 0 : index
    %355 = vector.load %arg6[%c48_193, %c0_194] : memref<72x512xf32, #tpu.memory_space<vmem>>, vector<8x512xf32>
    tpu.vector_store %arg6[%c48_193, %c0_194], %354 {strides = array<i32>} : memref<72x512xf32, #tpu.memory_space<vmem>>, vector<8x512xf32>,
    %c2_195 = arith.constant 2 : index
    %c0_196 = arith.constant 0 : index
    %356 = vector.load %arg4[%c2_195, %c0_196] : memref<3x512xi32, #tpu.memory_space<vmem>>, vector<1x512xi32>
    %c0_i32_197 = arith.constant 0 : i32
    %357 = vector.broadcast %c0_i32_197 : i32 to vector<1x512xi32>
    %358 = arith.addi %356, %357 : vector<1x512xi32>
    %c0_i32_198 = arith.constant 0 : i32
    %359 = vector.broadcast %c0_i32_198 : i32 to vector<1x512xi32>
    %360 = arith.cmpi sge, %358, %359 : vector<1x512xi32>
    %c8_i32_199 = arith.constant 8 : i32
    %361 = vector.broadcast %c8_i32_199 : i32 to vector<1x512xi32>
    %362 = arith.cmpi slt, %358, %361 : vector<1x512xi32>
    %363 = arith.andi %360, %362 : vector<1x512xi1>
    %cst_200 = arith.constant 1.000000e+00 : f32
    %cst_201 = arith.constant 0.000000e+00 : f32
    %364 = vector.broadcast %cst_200 : f32 to vector<1x512xf32>
    %365 = vector.broadcast %cst_201 : f32 to vector<1x512xf32>
    %366 = arith.select %363, %364, %365 : vector<1x512xi1>, vector<1x512xf32>
    %367 = arith.mulf %339, %366 : vector<1x512xf32>
    %c504_i32 = arith.constant 504 : i32
    %368 = tpu.dynamic_rotate %1 by %c504_i32 dim 1 : vector<8x512xf32>, i32 -> vector<8x512xf32>
    %369 = vector.broadcast %367 : vector<1x512xf32> to vector<8x512xf32>
    %370 = arith.mulf %368, %369 : vector<8x512xf32>
    %c56_202 = arith.constant 56 : index
    %c0_203 = arith.constant 0 : index
    %371 = vector.load %arg6[%c56_202, %c0_203] : memref<72x512xf32, #tpu.memory_space<vmem>>, vector<8x512xf32>
    tpu.vector_store %arg6[%c56_202, %c0_203], %370 {strides = array<i32>} : memref<72x512xf32, #tpu.memory_space<vmem>>, vector<8x512xf32>,
    %c2_204 = arith.constant 2 : index
    %c0_205 = arith.constant 0 : index
    %372 = vector.load %arg4[%c2_204, %c0_205] : memref<3x512xi32, #tpu.memory_space<vmem>>, vector<1x512xi32>
    %c1_i32_206 = arith.constant 1 : i32
    %373 = vector.broadcast %c1_i32_206 : i32 to vector<1x512xi32>
    %374 = arith.addi %372, %373 : vector<1x512xi32>
    %c0_i32_207 = arith.constant 0 : i32
    %375 = vector.broadcast %c0_i32_207 : i32 to vector<1x512xi32>
    %376 = arith.cmpi sge, %374, %375 : vector<1x512xi32>
    %c8_i32_208 = arith.constant 8 : i32
    %377 = vector.broadcast %c8_i32_208 : i32 to vector<1x512xi32>
    %378 = arith.cmpi slt, %374, %377 : vector<1x512xi32>
    %379 = arith.andi %376, %378 : vector<1x512xi1>
    %cst_209 = arith.constant 1.000000e+00 : f32
    %cst_210 = arith.constant 0.000000e+00 : f32
    %380 = vector.broadcast %cst_209 : f32 to vector<1x512xf32>
    %381 = vector.broadcast %cst_210 : f32 to vector<1x512xf32>
    %382 = arith.select %379, %380, %381 : vector<1x512xi1>, vector<1x512xf32>
    %383 = arith.mulf %339, %382 : vector<1x512xf32>
    %c503_i32 = arith.constant 503 : i32
    %384 = tpu.dynamic_rotate %1 by %c503_i32 dim 1 : vector<8x512xf32>, i32 -> vector<8x512xf32>
    %385 = vector.broadcast %383 : vector<1x512xf32> to vector<8x512xf32>
    %386 = arith.mulf %384, %385 : vector<8x512xf32>
    %c64_211 = arith.constant 64 : index
    %c0_212 = arith.constant 0 : index
    %387 = vector.load %arg6[%c64_211, %c0_212] : memref<72x512xf32, #tpu.memory_space<vmem>>, vector<8x512xf32>
    tpu.vector_store %arg6[%c64_211, %c0_212], %386 {strides = array<i32>} : memref<72x512xf32, #tpu.memory_space<vmem>>, vector<8x512xf32>,
    %c0_213 = arith.constant 0 : index
    %c0_214 = arith.constant 0 : index
    %388 = vector.load %arg6[%c0_213, %c0_214] : memref<72x512xf32, #tpu.memory_space<vmem>>, vector<72x512xf32>
    %c1_215 = arith.constant 1 : index
    %c0_216 = arith.constant 0 : index
    %c0_217 = arith.constant 0 : index
    %389 = vector.load %arg2[%c1_215, %c0_216, %c0_217] : memref<3x72x8xf32, #tpu.memory_space<vmem>>, vector<1x72x8xf32>
    %390 = vector.shape_cast %389 : vector<1x72x8xf32> to vector<72x8xf32>
    %cst_218 = arith.constant dense<0.000000e+00> : vector<512x8xf32>
    %391 = tpu.matmul %388, %390, %cst_218 {dimension_numbers = #tpu.dot_dimension_numbers<[0], [0], [1], [1], [0, 1, 1, 1], [], []>} : vector<72x512xf32>, vector<72x8xf32>, vector<512x8xf32> -> vector<512x8xf32>
    %392 = tpu.transpose %391, [1, 0] : vector<512x8xf32> -> vector<8x512xf32>
    %393 = arith.addf %197, %392 : vector<8x512xf32>
    %c0_219 = arith.constant 0 : index
    %c0_220 = arith.constant 0 : index
    %394 = vector.load %arg4[%c0_219, %c0_220] : memref<3x512xi32, #tpu.memory_space<vmem>>, vector<1x512xi32>
    %c1_i32_221 = arith.constant 1 : i32
    %395 = vector.broadcast %c1_i32_221 : i32 to vector<1x512xi32>
    %396 = arith.addi %394, %395 : vector<1x512xi32>
    %c0_i32_222 = arith.constant 0 : i32
    %397 = vector.broadcast %c0_i32_222 : i32 to vector<1x512xi32>
    %398 = arith.cmpi sge, %396, %397 : vector<1x512xi32>
    %c8_i32_223 = arith.constant 8 : i32
    %399 = vector.broadcast %c8_i32_223 : i32 to vector<1x512xi32>
    %400 = arith.cmpi slt, %396, %399 : vector<1x512xi32>
    %401 = arith.andi %398, %400 : vector<1x512xi1>
    %cst_224 = arith.constant 1.000000e+00 : f32
    %cst_225 = arith.constant 0.000000e+00 : f32
    %402 = vector.broadcast %cst_224 : f32 to vector<1x512xf32>
    %403 = vector.broadcast %cst_225 : f32 to vector<1x512xf32>
    %404 = arith.select %401, %402, %403 : vector<1x512xi1>, vector<1x512xf32>
    %c1_226 = arith.constant 1 : index
    %c0_227 = arith.constant 0 : index
    %405 = vector.load %arg4[%c1_226, %c0_227] : memref<3x512xi32, #tpu.memory_space<vmem>>, vector<1x512xi32>
    %c-1_i32_228 = arith.constant -1 : i32
    %406 = vector.broadcast %c-1_i32_228 : i32 to vector<1x512xi32>
    %407 = arith.addi %405, %406 : vector<1x512xi32>
    %c0_i32_229 = arith.constant 0 : i32
    %408 = vector.broadcast %c0_i32_229 : i32 to vector<1x512xi32>
    %409 = arith.cmpi sge, %407, %408 : vector<1x512xi32>
    %c8_i32_230 = arith.constant 8 : i32
    %410 = vector.broadcast %c8_i32_230 : i32 to vector<1x512xi32>
    %411 = arith.cmpi slt, %407, %410 : vector<1x512xi32>
    %412 = arith.andi %409, %411 : vector<1x512xi1>
    %cst_231 = arith.constant 1.000000e+00 : f32
    %cst_232 = arith.constant 0.000000e+00 : f32
    %413 = vector.broadcast %cst_231 : f32 to vector<1x512xf32>
    %414 = vector.broadcast %cst_232 : f32 to vector<1x512xf32>
    %415 = arith.select %412, %413, %414 : vector<1x512xi1>, vector<1x512xf32>
    %416 = arith.mulf %404, %415 : vector<1x512xf32>
    %c2_233 = arith.constant 2 : index
    %c0_234 = arith.constant 0 : index
    %417 = vector.load %arg4[%c2_233, %c0_234] : memref<3x512xi32, #tpu.memory_space<vmem>>, vector<1x512xi32>
    %c-1_i32_235 = arith.constant -1 : i32
    %418 = vector.broadcast %c-1_i32_235 : i32 to vector<1x512xi32>
    %419 = arith.addi %417, %418 : vector<1x512xi32>
    %c0_i32_236 = arith.constant 0 : i32
    %420 = vector.broadcast %c0_i32_236 : i32 to vector<1x512xi32>
    %421 = arith.cmpi sge, %419, %420 : vector<1x512xi32>
    %c8_i32_237 = arith.constant 8 : i32
    %422 = vector.broadcast %c8_i32_237 : i32 to vector<1x512xi32>
    %423 = arith.cmpi slt, %419, %422 : vector<1x512xi32>
    %424 = arith.andi %421, %423 : vector<1x512xi1>
    %cst_238 = arith.constant 1.000000e+00 : f32
    %cst_239 = arith.constant 0.000000e+00 : f32
    %425 = vector.broadcast %cst_238 : f32 to vector<1x512xf32>
    %426 = vector.broadcast %cst_239 : f32 to vector<1x512xf32>
    %427 = arith.select %424, %425, %426 : vector<1x512xi1>, vector<1x512xf32>
    %428 = arith.mulf %416, %427 : vector<1x512xf32>
    %c457_i32 = arith.constant 457 : i32
    %429 = tpu.dynamic_rotate %1 by %c457_i32 dim 1 : vector<8x512xf32>, i32 -> vector<8x512xf32>
    %430 = vector.broadcast %428 : vector<1x512xf32> to vector<8x512xf32>
    %431 = arith.mulf %429, %430 : vector<8x512xf32>
    %c0_240 = arith.constant 0 : index
    %c0_241 = arith.constant 0 : index
    %432 = vector.load %arg6[%c0_240, %c0_241] : memref<72x512xf32, #tpu.memory_space<vmem>>, vector<8x512xf32>
    tpu.vector_store %arg6[%c0_240, %c0_241], %431 {strides = array<i32>} : memref<72x512xf32, #tpu.memory_space<vmem>>, vector<8x512xf32>,
    %c2_242 = arith.constant 2 : index
    %c0_243 = arith.constant 0 : index
    %433 = vector.load %arg4[%c2_242, %c0_243] : memref<3x512xi32, #tpu.memory_space<vmem>>, vector<1x512xi32>
    %c0_i32_244 = arith.constant 0 : i32
    %434 = vector.broadcast %c0_i32_244 : i32 to vector<1x512xi32>
    %435 = arith.addi %433, %434 : vector<1x512xi32>
    %c0_i32_245 = arith.constant 0 : i32
    %436 = vector.broadcast %c0_i32_245 : i32 to vector<1x512xi32>
    %437 = arith.cmpi sge, %435, %436 : vector<1x512xi32>
    %c8_i32_246 = arith.constant 8 : i32
    %438 = vector.broadcast %c8_i32_246 : i32 to vector<1x512xi32>
    %439 = arith.cmpi slt, %435, %438 : vector<1x512xi32>
    %440 = arith.andi %437, %439 : vector<1x512xi1>
    %cst_247 = arith.constant 1.000000e+00 : f32
    %cst_248 = arith.constant 0.000000e+00 : f32
    %441 = vector.broadcast %cst_247 : f32 to vector<1x512xf32>
    %442 = vector.broadcast %cst_248 : f32 to vector<1x512xf32>
    %443 = arith.select %440, %441, %442 : vector<1x512xi1>, vector<1x512xf32>
    %444 = arith.mulf %416, %443 : vector<1x512xf32>
    %c456_i32 = arith.constant 456 : i32
    %445 = tpu.dynamic_rotate %1 by %c456_i32 dim 1 : vector<8x512xf32>, i32 -> vector<8x512xf32>
    %446 = vector.broadcast %444 : vector<1x512xf32> to vector<8x512xf32>
    %447 = arith.mulf %445, %446 : vector<8x512xf32>
    %c8_249 = arith.constant 8 : index
    %c0_250 = arith.constant 0 : index
    %448 = vector.load %arg6[%c8_249, %c0_250] : memref<72x512xf32, #tpu.memory_space<vmem>>, vector<8x512xf32>
    tpu.vector_store %arg6[%c8_249, %c0_250], %447 {strides = array<i32>} : memref<72x512xf32, #tpu.memory_space<vmem>>, vector<8x512xf32>,
    %c2_251 = arith.constant 2 : index
    %c0_252 = arith.constant 0 : index
    %449 = vector.load %arg4[%c2_251, %c0_252] : memref<3x512xi32, #tpu.memory_space<vmem>>, vector<1x512xi32>
    %c1_i32_253 = arith.constant 1 : i32
    %450 = vector.broadcast %c1_i32_253 : i32 to vector<1x512xi32>
    %451 = arith.addi %449, %450 : vector<1x512xi32>
    %c0_i32_254 = arith.constant 0 : i32
    %452 = vector.broadcast %c0_i32_254 : i32 to vector<1x512xi32>
    %453 = arith.cmpi sge, %451, %452 : vector<1x512xi32>
    %c8_i32_255 = arith.constant 8 : i32
    %454 = vector.broadcast %c8_i32_255 : i32 to vector<1x512xi32>
    %455 = arith.cmpi slt, %451, %454 : vector<1x512xi32>
    %456 = arith.andi %453, %455 : vector<1x512xi1>
    %cst_256 = arith.constant 1.000000e+00 : f32
    %cst_257 = arith.constant 0.000000e+00 : f32
    %457 = vector.broadcast %cst_256 : f32 to vector<1x512xf32>
    %458 = vector.broadcast %cst_257 : f32 to vector<1x512xf32>
    %459 = arith.select %456, %457, %458 : vector<1x512xi1>, vector<1x512xf32>
    %460 = arith.mulf %416, %459 : vector<1x512xf32>
    %c455_i32 = arith.constant 455 : i32
    %461 = tpu.dynamic_rotate %1 by %c455_i32 dim 1 : vector<8x512xf32>, i32 -> vector<8x512xf32>
    %462 = vector.broadcast %460 : vector<1x512xf32> to vector<8x512xf32>
    %463 = arith.mulf %461, %462 : vector<8x512xf32>
    %c16_258 = arith.constant 16 : index
    %c0_259 = arith.constant 0 : index
    %464 = vector.load %arg6[%c16_258, %c0_259] : memref<72x512xf32, #tpu.memory_space<vmem>>, vector<8x512xf32>
    tpu.vector_store %arg6[%c16_258, %c0_259], %463 {strides = array<i32>} : memref<72x512xf32, #tpu.memory_space<vmem>>, vector<8x512xf32>,
    %c1_260 = arith.constant 1 : index
    %c0_261 = arith.constant 0 : index
    %465 = vector.load %arg4[%c1_260, %c0_261] : memref<3x512xi32, #tpu.memory_space<vmem>>, vector<1x512xi32>
    %c0_i32_262 = arith.constant 0 : i32
    %466 = vector.broadcast %c0_i32_262 : i32 to vector<1x512xi32>
    %467 = arith.addi %465, %466 : vector<1x512xi32>
    %c0_i32_263 = arith.constant 0 : i32
    %468 = vector.broadcast %c0_i32_263 : i32 to vector<1x512xi32>
    %469 = arith.cmpi sge, %467, %468 : vector<1x512xi32>
    %c8_i32_264 = arith.constant 8 : i32
    %470 = vector.broadcast %c8_i32_264 : i32 to vector<1x512xi32>
    %471 = arith.cmpi slt, %467, %470 : vector<1x512xi32>
    %472 = arith.andi %469, %471 : vector<1x512xi1>
    %cst_265 = arith.constant 1.000000e+00 : f32
    %cst_266 = arith.constant 0.000000e+00 : f32
    %473 = vector.broadcast %cst_265 : f32 to vector<1x512xf32>
    %474 = vector.broadcast %cst_266 : f32 to vector<1x512xf32>
    %475 = arith.select %472, %473, %474 : vector<1x512xi1>, vector<1x512xf32>
    %476 = arith.mulf %404, %475 : vector<1x512xf32>
    %c2_267 = arith.constant 2 : index
    %c0_268 = arith.constant 0 : index
    %477 = vector.load %arg4[%c2_267, %c0_268] : memref<3x512xi32, #tpu.memory_space<vmem>>, vector<1x512xi32>
    %c-1_i32_269 = arith.constant -1 : i32
    %478 = vector.broadcast %c-1_i32_269 : i32 to vector<1x512xi32>
    %479 = arith.addi %477, %478 : vector<1x512xi32>
    %c0_i32_270 = arith.constant 0 : i32
    %480 = vector.broadcast %c0_i32_270 : i32 to vector<1x512xi32>
    %481 = arith.cmpi sge, %479, %480 : vector<1x512xi32>
    %c8_i32_271 = arith.constant 8 : i32
    %482 = vector.broadcast %c8_i32_271 : i32 to vector<1x512xi32>
    %483 = arith.cmpi slt, %479, %482 : vector<1x512xi32>
    %484 = arith.andi %481, %483 : vector<1x512xi1>
    %cst_272 = arith.constant 1.000000e+00 : f32
    %cst_273 = arith.constant 0.000000e+00 : f32
    %485 = vector.broadcast %cst_272 : f32 to vector<1x512xf32>
    %486 = vector.broadcast %cst_273 : f32 to vector<1x512xf32>
    %487 = arith.select %484, %485, %486 : vector<1x512xi1>, vector<1x512xf32>
    %488 = arith.mulf %476, %487 : vector<1x512xf32>
    %c449_i32 = arith.constant 449 : i32
    %489 = tpu.dynamic_rotate %1 by %c449_i32 dim 1 : vector<8x512xf32>, i32 -> vector<8x512xf32>
    %490 = vector.broadcast %488 : vector<1x512xf32> to vector<8x512xf32>
    %491 = arith.mulf %489, %490 : vector<8x512xf32>
    %c24_274 = arith.constant 24 : index
    %c0_275 = arith.constant 0 : index
    %492 = vector.load %arg6[%c24_274, %c0_275] : memref<72x512xf32, #tpu.memory_space<vmem>>, vector<8x512xf32>
    tpu.vector_store %arg6[%c24_274, %c0_275], %491 {strides = array<i32>} : memref<72x512xf32, #tpu.memory_space<vmem>>, vector<8x512xf32>,
    %c2_276 = arith.constant 2 : index
    %c0_277 = arith.constant 0 : index
    %493 = vector.load %arg4[%c2_276, %c0_277] : memref<3x512xi32, #tpu.memory_space<vmem>>, vector<1x512xi32>
    %c0_i32_278 = arith.constant 0 : i32
    %494 = vector.broadcast %c0_i32_278 : i32 to vector<1x512xi32>
    %495 = arith.addi %493, %494 : vector<1x512xi32>
    %c0_i32_279 = arith.constant 0 : i32
    %496 = vector.broadcast %c0_i32_279 : i32 to vector<1x512xi32>
    %497 = arith.cmpi sge, %495, %496 : vector<1x512xi32>
    %c8_i32_280 = arith.constant 8 : i32
    %498 = vector.broadcast %c8_i32_280 : i32 to vector<1x512xi32>
    %499 = arith.cmpi slt, %495, %498 : vector<1x512xi32>
    %500 = arith.andi %497, %499 : vector<1x512xi1>
    %cst_281 = arith.constant 1.000000e+00 : f32
    %cst_282 = arith.constant 0.000000e+00 : f32
    %501 = vector.broadcast %cst_281 : f32 to vector<1x512xf32>
    %502 = vector.broadcast %cst_282 : f32 to vector<1x512xf32>
    %503 = arith.select %500, %501, %502 : vector<1x512xi1>, vector<1x512xf32>
    %504 = arith.mulf %476, %503 : vector<1x512xf32>
    %c448_i32 = arith.constant 448 : i32
    %505 = tpu.dynamic_rotate %1 by %c448_i32 dim 1 : vector<8x512xf32>, i32 -> vector<8x512xf32>
    %506 = vector.broadcast %504 : vector<1x512xf32> to vector<8x512xf32>
    %507 = arith.mulf %505, %506 : vector<8x512xf32>
    %c32_283 = arith.constant 32 : index
    %c0_284 = arith.constant 0 : index
    %508 = vector.load %arg6[%c32_283, %c0_284] : memref<72x512xf32, #tpu.memory_space<vmem>>, vector<8x512xf32>
    tpu.vector_store %arg6[%c32_283, %c0_284], %507 {strides = array<i32>} : memref<72x512xf32, #tpu.memory_space<vmem>>, vector<8x512xf32>,
    %c2_285 = arith.constant 2 : index
    %c0_286 = arith.constant 0 : index
    %509 = vector.load %arg4[%c2_285, %c0_286] : memref<3x512xi32, #tpu.memory_space<vmem>>, vector<1x512xi32>
    %c1_i32_287 = arith.constant 1 : i32
    %510 = vector.broadcast %c1_i32_287 : i32 to vector<1x512xi32>
    %511 = arith.addi %509, %510 : vector<1x512xi32>
    %c0_i32_288 = arith.constant 0 : i32
    %512 = vector.broadcast %c0_i32_288 : i32 to vector<1x512xi32>
    %513 = arith.cmpi sge, %511, %512 : vector<1x512xi32>
    %c8_i32_289 = arith.constant 8 : i32
    %514 = vector.broadcast %c8_i32_289 : i32 to vector<1x512xi32>
    %515 = arith.cmpi slt, %511, %514 : vector<1x512xi32>
    %516 = arith.andi %513, %515 : vector<1x512xi1>
    %cst_290 = arith.constant 1.000000e+00 : f32
    %cst_291 = arith.constant 0.000000e+00 : f32
    %517 = vector.broadcast %cst_290 : f32 to vector<1x512xf32>
    %518 = vector.broadcast %cst_291 : f32 to vector<1x512xf32>
    %519 = arith.select %516, %517, %518 : vector<1x512xi1>, vector<1x512xf32>
    %520 = arith.mulf %476, %519 : vector<1x512xf32>
    %c447_i32 = arith.constant 447 : i32
    %521 = tpu.dynamic_rotate %1 by %c447_i32 dim 1 : vector<8x512xf32>, i32 -> vector<8x512xf32>
    %522 = vector.broadcast %520 : vector<1x512xf32> to vector<8x512xf32>
    %523 = arith.mulf %521, %522 : vector<8x512xf32>
    %c40_292 = arith.constant 40 : index
    %c0_293 = arith.constant 0 : index
    %524 = vector.load %arg6[%c40_292, %c0_293] : memref<72x512xf32, #tpu.memory_space<vmem>>, vector<8x512xf32>
    tpu.vector_store %arg6[%c40_292, %c0_293], %523 {strides = array<i32>} : memref<72x512xf32, #tpu.memory_space<vmem>>, vector<8x512xf32>,
    %c1_294 = arith.constant 1 : index
    %c0_295 = arith.constant 0 : index
    %525 = vector.load %arg4[%c1_294, %c0_295] : memref<3x512xi32, #tpu.memory_space<vmem>>, vector<1x512xi32>
    %c1_i32_296 = arith.constant 1 : i32
    %526 = vector.broadcast %c1_i32_296 : i32 to vector<1x512xi32>
    %527 = arith.addi %525, %526 : vector<1x512xi32>
    %c0_i32_297 = arith.constant 0 : i32
    %528 = vector.broadcast %c0_i32_297 : i32 to vector<1x512xi32>
    %529 = arith.cmpi sge, %527, %528 : vector<1x512xi32>
    %c8_i32_298 = arith.constant 8 : i32
    %530 = vector.broadcast %c8_i32_298 : i32 to vector<1x512xi32>
    %531 = arith.cmpi slt, %527, %530 : vector<1x512xi32>
    %532 = arith.andi %529, %531 : vector<1x512xi1>
    %cst_299 = arith.constant 1.000000e+00 : f32
    %cst_300 = arith.constant 0.000000e+00 : f32
    %533 = vector.broadcast %cst_299 : f32 to vector<1x512xf32>
    %534 = vector.broadcast %cst_300 : f32 to vector<1x512xf32>
    %535 = arith.select %532, %533, %534 : vector<1x512xi1>, vector<1x512xf32>
    %536 = arith.mulf %404, %535 : vector<1x512xf32>
    %c2_301 = arith.constant 2 : index
    %c0_302 = arith.constant 0 : index
    %537 = vector.load %arg4[%c2_301, %c0_302] : memref<3x512xi32, #tpu.memory_space<vmem>>, vector<1x512xi32>
    %c-1_i32_303 = arith.constant -1 : i32
    %538 = vector.broadcast %c-1_i32_303 : i32 to vector<1x512xi32>
    %539 = arith.addi %537, %538 : vector<1x512xi32>
    %c0_i32_304 = arith.constant 0 : i32
    %540 = vector.broadcast %c0_i32_304 : i32 to vector<1x512xi32>
    %541 = arith.cmpi sge, %539, %540 : vector<1x512xi32>
    %c8_i32_305 = arith.constant 8 : i32
    %542 = vector.broadcast %c8_i32_305 : i32 to vector<1x512xi32>
    %543 = arith.cmpi slt, %539, %542 : vector<1x512xi32>
    %544 = arith.andi %541, %543 : vector<1x512xi1>
    %cst_306 = arith.constant 1.000000e+00 : f32
    %cst_307 = arith.constant 0.000000e+00 : f32
    %545 = vector.broadcast %cst_306 : f32 to vector<1x512xf32>
    %546 = vector.broadcast %cst_307 : f32 to vector<1x512xf32>
    %547 = arith.select %544, %545, %546 : vector<1x512xi1>, vector<1x512xf32>
    %548 = arith.mulf %536, %547 : vector<1x512xf32>
    %c441_i32 = arith.constant 441 : i32
    %549 = tpu.dynamic_rotate %1 by %c441_i32 dim 1 : vector<8x512xf32>, i32 -> vector<8x512xf32>
    %550 = vector.broadcast %548 : vector<1x512xf32> to vector<8x512xf32>
    %551 = arith.mulf %549, %550 : vector<8x512xf32>
    %c48_308 = arith.constant 48 : index
    %c0_309 = arith.constant 0 : index
    %552 = vector.load %arg6[%c48_308, %c0_309] : memref<72x512xf32, #tpu.memory_space<vmem>>, vector<8x512xf32>
    tpu.vector_store %arg6[%c48_308, %c0_309], %551 {strides = array<i32>} : memref<72x512xf32, #tpu.memory_space<vmem>>, vector<8x512xf32>,
    %c2_310 = arith.constant 2 : index
    %c0_311 = arith.constant 0 : index
    %553 = vector.load %arg4[%c2_310, %c0_311] : memref<3x512xi32, #tpu.memory_space<vmem>>, vector<1x512xi32>
    %c0_i32_312 = arith.constant 0 : i32
    %554 = vector.broadcast %c0_i32_312 : i32 to vector<1x512xi32>
    %555 = arith.addi %553, %554 : vector<1x512xi32>
    %c0_i32_313 = arith.constant 0 : i32
    %556 = vector.broadcast %c0_i32_313 : i32 to vector<1x512xi32>
    %557 = arith.cmpi sge, %555, %556 : vector<1x512xi32>
    %c8_i32_314 = arith.constant 8 : i32
    %558 = vector.broadcast %c8_i32_314 : i32 to vector<1x512xi32>
    %559 = arith.cmpi slt, %555, %558 : vector<1x512xi32>
    %560 = arith.andi %557, %559 : vector<1x512xi1>
    %cst_315 = arith.constant 1.000000e+00 : f32
    %cst_316 = arith.constant 0.000000e+00 : f32
    %561 = vector.broadcast %cst_315 : f32 to vector<1x512xf32>
    %562 = vector.broadcast %cst_316 : f32 to vector<1x512xf32>
    %563 = arith.select %560, %561, %562 : vector<1x512xi1>, vector<1x512xf32>
    %564 = arith.mulf %536, %563 : vector<1x512xf32>
    %c440_i32 = arith.constant 440 : i32
    %565 = tpu.dynamic_rotate %1 by %c440_i32 dim 1 : vector<8x512xf32>, i32 -> vector<8x512xf32>
    %566 = vector.broadcast %564 : vector<1x512xf32> to vector<8x512xf32>
    %567 = arith.mulf %565, %566 : vector<8x512xf32>
    %c56_317 = arith.constant 56 : index
    %c0_318 = arith.constant 0 : index
    %568 = vector.load %arg6[%c56_317, %c0_318] : memref<72x512xf32, #tpu.memory_space<vmem>>, vector<8x512xf32>
    tpu.vector_store %arg6[%c56_317, %c0_318], %567 {strides = array<i32>} : memref<72x512xf32, #tpu.memory_space<vmem>>, vector<8x512xf32>,
    %c2_319 = arith.constant 2 : index
    %c0_320 = arith.constant 0 : index
    %569 = vector.load %arg4[%c2_319, %c0_320] : memref<3x512xi32, #tpu.memory_space<vmem>>, vector<1x512xi32>
    %c1_i32_321 = arith.constant 1 : i32
    %570 = vector.broadcast %c1_i32_321 : i32 to vector<1x512xi32>
    %571 = arith.addi %569, %570 : vector<1x512xi32>
    %c0_i32_322 = arith.constant 0 : i32
    %572 = vector.broadcast %c0_i32_322 : i32 to vector<1x512xi32>
    %573 = arith.cmpi sge, %571, %572 : vector<1x512xi32>
    %c8_i32_323 = arith.constant 8 : i32
    %574 = vector.broadcast %c8_i32_323 : i32 to vector<1x512xi32>
    %575 = arith.cmpi slt, %571, %574 : vector<1x512xi32>
    %576 = arith.andi %573, %575 : vector<1x512xi1>
    %cst_324 = arith.constant 1.000000e+00 : f32
    %cst_325 = arith.constant 0.000000e+00 : f32
    %577 = vector.broadcast %cst_324 : f32 to vector<1x512xf32>
    %578 = vector.broadcast %cst_325 : f32 to vector<1x512xf32>
    %579 = arith.select %576, %577, %578 : vector<1x512xi1>, vector<1x512xf32>
    %580 = arith.mulf %536, %579 : vector<1x512xf32>
    %c439_i32 = arith.constant 439 : i32
    %581 = tpu.dynamic_rotate %1 by %c439_i32 dim 1 : vector<8x512xf32>, i32 -> vector<8x512xf32>
    %582 = vector.broadcast %580 : vector<1x512xf32> to vector<8x512xf32>
    %583 = arith.mulf %581, %582 : vector<8x512xf32>
    %c64_326 = arith.constant 64 : index
    %c0_327 = arith.constant 0 : index
    %584 = vector.load %arg6[%c64_326, %c0_327] : memref<72x512xf32, #tpu.memory_space<vmem>>, vector<8x512xf32>
    tpu.vector_store %arg6[%c64_326, %c0_327], %583 {strides = array<i32>} : memref<72x512xf32, #tpu.memory_space<vmem>>, vector<8x512xf32>,
    %c0_328 = arith.constant 0 : index
    %c0_329 = arith.constant 0 : index
    %585 = vector.load %arg6[%c0_328, %c0_329] : memref<72x512xf32, #tpu.memory_space<vmem>>, vector<72x512xf32>
    %c2_330 = arith.constant 2 : index
    %c0_331 = arith.constant 0 : index
    %c0_332 = arith.constant 0 : index
    %586 = vector.load %arg2[%c2_330, %c0_331, %c0_332] : memref<3x72x8xf32, #tpu.memory_space<vmem>>, vector<1x72x8xf32>
    %587 = vector.shape_cast %586 : vector<1x72x8xf32> to vector<72x8xf32>
    %cst_333 = arith.constant dense<0.000000e+00> : vector<512x8xf32>
    %588 = tpu.matmul %585, %587, %cst_333 {dimension_numbers = #tpu.dot_dimension_numbers<[0], [0], [1], [1], [0, 1, 1, 1], [], []>} : vector<72x512xf32>, vector<72x8xf32>, vector<512x8xf32> -> vector<512x8xf32>
    %589 = tpu.transpose %588, [1, 0] : vector<512x8xf32> -> vector<8x512xf32>
    %590 = arith.addf %393, %589 : vector<8x512xf32>
    %cst_334 = arith.constant dense<0.000000e+00> : vector<8xf32>
    %591 = vector.multi_reduction <add>, %590, %cst_334 [1] : vector<8x512xf32> to vector<8xf32>
    %592 = vector.shape_cast %591 : vector<8xf32> to vector<8x1xf32>
    %cst_335 = arith.constant 0.001953125 : f32
    %593 = vector.broadcast %cst_335 : f32 to vector<8x1xf32>
    %594 = arith.mulf %592, %593 : vector<8x1xf32>
    %595 = arith.mulf %590, %590 : vector<8x512xf32>
    %cst_336 = arith.constant dense<0.000000e+00> : vector<8xf32>
    %596 = vector.multi_reduction <add>, %595, %cst_336 [1] : vector<8x512xf32> to vector<8xf32>
    %597 = vector.shape_cast %596 : vector<8xf32> to vector<8x1xf32>
    %cst_337 = arith.constant 0.001953125 : f32
    %598 = vector.broadcast %cst_337 : f32 to vector<8x1xf32>
    %599 = arith.mulf %597, %598 : vector<8x1xf32>
    %600 = arith.mulf %594, %594 : vector<8x1xf32>
    %601 = arith.subf %599, %600 : vector<8x1xf32>
    %602 = vector.broadcast %594 : vector<8x1xf32> to vector<8x512xf32>
    %603 = arith.subf %590, %602 : vector<8x512xf32>
    %cst_338 = arith.constant 9.99999974E-6 : f32
    %604 = vector.broadcast %cst_338 : f32 to vector<8x1xf32>
    %605 = arith.addf %601, %604 : vector<8x1xf32>
    %606 = math.rsqrt %605 : vector<8x1xf32>
    %607 = vector.broadcast %606 : vector<8x1xf32> to vector<8x512xf32>
    %608 = arith.mulf %603, %607 : vector<8x512xf32>
    %cst_339 = arith.constant 0.00999999977 : f32
    %609 = vector.broadcast %cst_339 : f32 to vector<8x512xf32>
    %610 = arith.mulf %609, %608 : vector<8x512xf32>
    %611 = arith.maximumf %608, %610 : vector<8x512xf32>
    %c0_340 = arith.constant 0 : index
    %c0_341 = arith.constant 0 : index
    %612 = vector.load %arg4[%c0_340, %c0_341] : memref<3x512xi32, #tpu.memory_space<vmem>>, vector<1x512xi32>
    %c-1_i32_342 = arith.constant -1 : i32
    %613 = vector.broadcast %c-1_i32_342 : i32 to vector<1x512xi32>
    %614 = arith.addi %612, %613 : vector<1x512xi32>
    %c0_i32_343 = arith.constant 0 : i32
    %615 = vector.broadcast %c0_i32_343 : i32 to vector<1x512xi32>
    %616 = arith.cmpi sge, %614, %615 : vector<1x512xi32>
    %c8_i32_344 = arith.constant 8 : i32
    %617 = vector.broadcast %c8_i32_344 : i32 to vector<1x512xi32>
    %618 = arith.cmpi slt, %614, %617 : vector<1x512xi32>
    %619 = arith.andi %616, %618 : vector<1x512xi1>
    %cst_345 = arith.constant 1.000000e+00 : f32
    %cst_346 = arith.constant 0.000000e+00 : f32
    %620 = vector.broadcast %cst_345 : f32 to vector<1x512xf32>
    %621 = vector.broadcast %cst_346 : f32 to vector<1x512xf32>
    %622 = arith.select %619, %620, %621 : vector<1x512xi1>, vector<1x512xf32>
    %c1_347 = arith.constant 1 : index
    %c0_348 = arith.constant 0 : index
    %623 = vector.load %arg4[%c1_347, %c0_348] : memref<3x512xi32, #tpu.memory_space<vmem>>, vector<1x512xi32>
    %c-1_i32_349 = arith.constant -1 : i32
    %624 = vector.broadcast %c-1_i32_349 : i32 to vector<1x512xi32>
    %625 = arith.addi %623, %624 : vector<1x512xi32>
    %c0_i32_350 = arith.constant 0 : i32
    %626 = vector.broadcast %c0_i32_350 : i32 to vector<1x512xi32>
    %627 = arith.cmpi sge, %625, %626 : vector<1x512xi32>
    %c8_i32_351 = arith.constant 8 : i32
    %628 = vector.broadcast %c8_i32_351 : i32 to vector<1x512xi32>
    %629 = arith.cmpi slt, %625, %628 : vector<1x512xi32>
    %630 = arith.andi %627, %629 : vector<1x512xi1>
    %cst_352 = arith.constant 1.000000e+00 : f32
    %cst_353 = arith.constant 0.000000e+00 : f32
    %631 = vector.broadcast %cst_352 : f32 to vector<1x512xf32>
    %632 = vector.broadcast %cst_353 : f32 to vector<1x512xf32>
    %633 = arith.select %630, %631, %632 : vector<1x512xi1>, vector<1x512xf32>
    %634 = arith.mulf %622, %633 : vector<1x512xf32>
    %c2_354 = arith.constant 2 : index
    %c0_355 = arith.constant 0 : index
    %635 = vector.load %arg4[%c2_354, %c0_355] : memref<3x512xi32, #tpu.memory_space<vmem>>, vector<1x512xi32>
    %c-1_i32_356 = arith.constant -1 : i32
    %636 = vector.broadcast %c-1_i32_356 : i32 to vector<1x512xi32>
    %637 = arith.addi %635, %636 : vector<1x512xi32>
    %c0_i32_357 = arith.constant 0 : i32
    %638 = vector.broadcast %c0_i32_357 : i32 to vector<1x512xi32>
    %639 = arith.cmpi sge, %637, %638 : vector<1x512xi32>
    %c8_i32_358 = arith.constant 8 : i32
    %640 = vector.broadcast %c8_i32_358 : i32 to vector<1x512xi32>
    %641 = arith.cmpi slt, %637, %640 : vector<1x512xi32>
    %642 = arith.andi %639, %641 : vector<1x512xi1>
    %cst_359 = arith.constant 1.000000e+00 : f32
    %cst_360 = arith.constant 0.000000e+00 : f32
    %643 = vector.broadcast %cst_359 : f32 to vector<1x512xf32>
    %644 = vector.broadcast %cst_360 : f32 to vector<1x512xf32>
    %645 = arith.select %642, %643, %644 : vector<1x512xi1>, vector<1x512xf32>
    %646 = arith.mulf %634, %645 : vector<1x512xf32>
    %c73_i32_361 = arith.constant 73 : i32
    %647 = tpu.dynamic_rotate %611 by %c73_i32_361 dim 1 : vector<8x512xf32>, i32 -> vector<8x512xf32>
    %648 = vector.broadcast %646 : vector<1x512xf32> to vector<8x512xf32>
    %649 = arith.mulf %647, %648 : vector<8x512xf32>
    %c0_362 = arith.constant 0 : index
    %c0_363 = arith.constant 0 : index
    %650 = vector.load %arg6[%c0_362, %c0_363] : memref<72x512xf32, #tpu.memory_space<vmem>>, vector<8x512xf32>
    tpu.vector_store %arg6[%c0_362, %c0_363], %649 {strides = array<i32>} : memref<72x512xf32, #tpu.memory_space<vmem>>, vector<8x512xf32>,
    %c2_364 = arith.constant 2 : index
    %c0_365 = arith.constant 0 : index
    %651 = vector.load %arg4[%c2_364, %c0_365] : memref<3x512xi32, #tpu.memory_space<vmem>>, vector<1x512xi32>
    %c0_i32_366 = arith.constant 0 : i32
    %652 = vector.broadcast %c0_i32_366 : i32 to vector<1x512xi32>
    %653 = arith.addi %651, %652 : vector<1x512xi32>
    %c0_i32_367 = arith.constant 0 : i32
    %654 = vector.broadcast %c0_i32_367 : i32 to vector<1x512xi32>
    %655 = arith.cmpi sge, %653, %654 : vector<1x512xi32>
    %c8_i32_368 = arith.constant 8 : i32
    %656 = vector.broadcast %c8_i32_368 : i32 to vector<1x512xi32>
    %657 = arith.cmpi slt, %653, %656 : vector<1x512xi32>
    %658 = arith.andi %655, %657 : vector<1x512xi1>
    %cst_369 = arith.constant 1.000000e+00 : f32
    %cst_370 = arith.constant 0.000000e+00 : f32
    %659 = vector.broadcast %cst_369 : f32 to vector<1x512xf32>
    %660 = vector.broadcast %cst_370 : f32 to vector<1x512xf32>
    %661 = arith.select %658, %659, %660 : vector<1x512xi1>, vector<1x512xf32>
    %662 = arith.mulf %634, %661 : vector<1x512xf32>
    %c72_i32_371 = arith.constant 72 : i32
    %663 = tpu.dynamic_rotate %611 by %c72_i32_371 dim 1 : vector<8x512xf32>, i32 -> vector<8x512xf32>
    %664 = vector.broadcast %662 : vector<1x512xf32> to vector<8x512xf32>
    %665 = arith.mulf %663, %664 : vector<8x512xf32>
    %c8_372 = arith.constant 8 : index
    %c0_373 = arith.constant 0 : index
    %666 = vector.load %arg6[%c8_372, %c0_373] : memref<72x512xf32, #tpu.memory_space<vmem>>, vector<8x512xf32>
    tpu.vector_store %arg6[%c8_372, %c0_373], %665 {strides = array<i32>} : memref<72x512xf32, #tpu.memory_space<vmem>>, vector<8x512xf32>,
    %c2_374 = arith.constant 2 : index
    %c0_375 = arith.constant 0 : index
    %667 = vector.load %arg4[%c2_374, %c0_375] : memref<3x512xi32, #tpu.memory_space<vmem>>, vector<1x512xi32>
    %c1_i32_376 = arith.constant 1 : i32
    %668 = vector.broadcast %c1_i32_376 : i32 to vector<1x512xi32>
    %669 = arith.addi %667, %668 : vector<1x512xi32>
    %c0_i32_377 = arith.constant 0 : i32
    %670 = vector.broadcast %c0_i32_377 : i32 to vector<1x512xi32>
    %671 = arith.cmpi sge, %669, %670 : vector<1x512xi32>
    %c8_i32_378 = arith.constant 8 : i32
    %672 = vector.broadcast %c8_i32_378 : i32 to vector<1x512xi32>
    %673 = arith.cmpi slt, %669, %672 : vector<1x512xi32>
    %674 = arith.andi %671, %673 : vector<1x512xi1>
    %cst_379 = arith.constant 1.000000e+00 : f32
    %cst_380 = arith.constant 0.000000e+00 : f32
    %675 = vector.broadcast %cst_379 : f32 to vector<1x512xf32>
    %676 = vector.broadcast %cst_380 : f32 to vector<1x512xf32>
    %677 = arith.select %674, %675, %676 : vector<1x512xi1>, vector<1x512xf32>
    %678 = arith.mulf %634, %677 : vector<1x512xf32>
    %c71_i32_381 = arith.constant 71 : i32
    %679 = tpu.dynamic_rotate %611 by %c71_i32_381 dim 1 : vector<8x512xf32>, i32 -> vector<8x512xf32>
    %680 = vector.broadcast %678 : vector<1x512xf32> to vector<8x512xf32>
    %681 = arith.mulf %679, %680 : vector<8x512xf32>
    %c16_382 = arith.constant 16 : index
    %c0_383 = arith.constant 0 : index
    %682 = vector.load %arg6[%c16_382, %c0_383] : memref<72x512xf32, #tpu.memory_space<vmem>>, vector<8x512xf32>
    tpu.vector_store %arg6[%c16_382, %c0_383], %681 {strides = array<i32>} : memref<72x512xf32, #tpu.memory_space<vmem>>, vector<8x512xf32>,
    %c1_384 = arith.constant 1 : index
    %c0_385 = arith.constant 0 : index
    %683 = vector.load %arg4[%c1_384, %c0_385] : memref<3x512xi32, #tpu.memory_space<vmem>>, vector<1x512xi32>
    %c0_i32_386 = arith.constant 0 : i32
    %684 = vector.broadcast %c0_i32_386 : i32 to vector<1x512xi32>
    %685 = arith.addi %683, %684 : vector<1x512xi32>
    %c0_i32_387 = arith.constant 0 : i32
    %686 = vector.broadcast %c0_i32_387 : i32 to vector<1x512xi32>
    %687 = arith.cmpi sge, %685, %686 : vector<1x512xi32>
    %c8_i32_388 = arith.constant 8 : i32
    %688 = vector.broadcast %c8_i32_388 : i32 to vector<1x512xi32>
    %689 = arith.cmpi slt, %685, %688 : vector<1x512xi32>
    %690 = arith.andi %687, %689 : vector<1x512xi1>
    %cst_389 = arith.constant 1.000000e+00 : f32
    %cst_390 = arith.constant 0.000000e+00 : f32
    %691 = vector.broadcast %cst_389 : f32 to vector<1x512xf32>
    %692 = vector.broadcast %cst_390 : f32 to vector<1x512xf32>
    %693 = arith.select %690, %691, %692 : vector<1x512xi1>, vector<1x512xf32>
    %694 = arith.mulf %622, %693 : vector<1x512xf32>
    %c2_391 = arith.constant 2 : index
    %c0_392 = arith.constant 0 : index
    %695 = vector.load %arg4[%c2_391, %c0_392] : memref<3x512xi32, #tpu.memory_space<vmem>>, vector<1x512xi32>
    %c-1_i32_393 = arith.constant -1 : i32
    %696 = vector.broadcast %c-1_i32_393 : i32 to vector<1x512xi32>
    %697 = arith.addi %695, %696 : vector<1x512xi32>
    %c0_i32_394 = arith.constant 0 : i32
    %698 = vector.broadcast %c0_i32_394 : i32 to vector<1x512xi32>
    %699 = arith.cmpi sge, %697, %698 : vector<1x512xi32>
    %c8_i32_395 = arith.constant 8 : i32
    %700 = vector.broadcast %c8_i32_395 : i32 to vector<1x512xi32>
    %701 = arith.cmpi slt, %697, %700 : vector<1x512xi32>
    %702 = arith.andi %699, %701 : vector<1x512xi1>
    %cst_396 = arith.constant 1.000000e+00 : f32
    %cst_397 = arith.constant 0.000000e+00 : f32
    %703 = vector.broadcast %cst_396 : f32 to vector<1x512xf32>
    %704 = vector.broadcast %cst_397 : f32 to vector<1x512xf32>
    %705 = arith.select %702, %703, %704 : vector<1x512xi1>, vector<1x512xf32>
    %706 = arith.mulf %694, %705 : vector<1x512xf32>
    %c65_i32_398 = arith.constant 65 : i32
    %707 = tpu.dynamic_rotate %611 by %c65_i32_398 dim 1 : vector<8x512xf32>, i32 -> vector<8x512xf32>
    %708 = vector.broadcast %706 : vector<1x512xf32> to vector<8x512xf32>
    %709 = arith.mulf %707, %708 : vector<8x512xf32>
    %c24_399 = arith.constant 24 : index
    %c0_400 = arith.constant 0 : index
    %710 = vector.load %arg6[%c24_399, %c0_400] : memref<72x512xf32, #tpu.memory_space<vmem>>, vector<8x512xf32>
    tpu.vector_store %arg6[%c24_399, %c0_400], %709 {strides = array<i32>} : memref<72x512xf32, #tpu.memory_space<vmem>>, vector<8x512xf32>,
    %c2_401 = arith.constant 2 : index
    %c0_402 = arith.constant 0 : index
    %711 = vector.load %arg4[%c2_401, %c0_402] : memref<3x512xi32, #tpu.memory_space<vmem>>, vector<1x512xi32>
    %c0_i32_403 = arith.constant 0 : i32
    %712 = vector.broadcast %c0_i32_403 : i32 to vector<1x512xi32>
    %713 = arith.addi %711, %712 : vector<1x512xi32>
    %c0_i32_404 = arith.constant 0 : i32
    %714 = vector.broadcast %c0_i32_404 : i32 to vector<1x512xi32>
    %715 = arith.cmpi sge, %713, %714 : vector<1x512xi32>
    %c8_i32_405 = arith.constant 8 : i32
    %716 = vector.broadcast %c8_i32_405 : i32 to vector<1x512xi32>
    %717 = arith.cmpi slt, %713, %716 : vector<1x512xi32>
    %718 = arith.andi %715, %717 : vector<1x512xi1>
    %cst_406 = arith.constant 1.000000e+00 : f32
    %cst_407 = arith.constant 0.000000e+00 : f32
    %719 = vector.broadcast %cst_406 : f32 to vector<1x512xf32>
    %720 = vector.broadcast %cst_407 : f32 to vector<1x512xf32>
    %721 = arith.select %718, %719, %720 : vector<1x512xi1>, vector<1x512xf32>
    %722 = arith.mulf %694, %721 : vector<1x512xf32>
    %c64_i32_408 = arith.constant 64 : i32
    %723 = tpu.dynamic_rotate %611 by %c64_i32_408 dim 1 : vector<8x512xf32>, i32 -> vector<8x512xf32>
    %724 = vector.broadcast %722 : vector<1x512xf32> to vector<8x512xf32>
    %725 = arith.mulf %723, %724 : vector<8x512xf32>
    %c32_409 = arith.constant 32 : index
    %c0_410 = arith.constant 0 : index
    %726 = vector.load %arg6[%c32_409, %c0_410] : memref<72x512xf32, #tpu.memory_space<vmem>>, vector<8x512xf32>
    tpu.vector_store %arg6[%c32_409, %c0_410], %725 {strides = array<i32>} : memref<72x512xf32, #tpu.memory_space<vmem>>, vector<8x512xf32>,
    %c2_411 = arith.constant 2 : index
    %c0_412 = arith.constant 0 : index
    %727 = vector.load %arg4[%c2_411, %c0_412] : memref<3x512xi32, #tpu.memory_space<vmem>>, vector<1x512xi32>
    %c1_i32_413 = arith.constant 1 : i32
    %728 = vector.broadcast %c1_i32_413 : i32 to vector<1x512xi32>
    %729 = arith.addi %727, %728 : vector<1x512xi32>
    %c0_i32_414 = arith.constant 0 : i32
    %730 = vector.broadcast %c0_i32_414 : i32 to vector<1x512xi32>
    %731 = arith.cmpi sge, %729, %730 : vector<1x512xi32>
    %c8_i32_415 = arith.constant 8 : i32
    %732 = vector.broadcast %c8_i32_415 : i32 to vector<1x512xi32>
    %733 = arith.cmpi slt, %729, %732 : vector<1x512xi32>
    %734 = arith.andi %731, %733 : vector<1x512xi1>
    %cst_416 = arith.constant 1.000000e+00 : f32
    %cst_417 = arith.constant 0.000000e+00 : f32
    %735 = vector.broadcast %cst_416 : f32 to vector<1x512xf32>
    %736 = vector.broadcast %cst_417 : f32 to vector<1x512xf32>
    %737 = arith.select %734, %735, %736 : vector<1x512xi1>, vector<1x512xf32>
    %738 = arith.mulf %694, %737 : vector<1x512xf32>
    %c63_i32_418 = arith.constant 63 : i32
    %739 = tpu.dynamic_rotate %611 by %c63_i32_418 dim 1 : vector<8x512xf32>, i32 -> vector<8x512xf32>
    %740 = vector.broadcast %738 : vector<1x512xf32> to vector<8x512xf32>
    %741 = arith.mulf %739, %740 : vector<8x512xf32>
    %c40_419 = arith.constant 40 : index
    %c0_420 = arith.constant 0 : index
    %742 = vector.load %arg6[%c40_419, %c0_420] : memref<72x512xf32, #tpu.memory_space<vmem>>, vector<8x512xf32>
    tpu.vector_store %arg6[%c40_419, %c0_420], %741 {strides = array<i32>} : memref<72x512xf32, #tpu.memory_space<vmem>>, vector<8x512xf32>,
    %c1_421 = arith.constant 1 : index
    %c0_422 = arith.constant 0 : index
    %743 = vector.load %arg4[%c1_421, %c0_422] : memref<3x512xi32, #tpu.memory_space<vmem>>, vector<1x512xi32>
    %c1_i32_423 = arith.constant 1 : i32
    %744 = vector.broadcast %c1_i32_423 : i32 to vector<1x512xi32>
    %745 = arith.addi %743, %744 : vector<1x512xi32>
    %c0_i32_424 = arith.constant 0 : i32
    %746 = vector.broadcast %c0_i32_424 : i32 to vector<1x512xi32>
    %747 = arith.cmpi sge, %745, %746 : vector<1x512xi32>
    %c8_i32_425 = arith.constant 8 : i32
    %748 = vector.broadcast %c8_i32_425 : i32 to vector<1x512xi32>
    %749 = arith.cmpi slt, %745, %748 : vector<1x512xi32>
    %750 = arith.andi %747, %749 : vector<1x512xi1>
    %cst_426 = arith.constant 1.000000e+00 : f32
    %cst_427 = arith.constant 0.000000e+00 : f32
    %751 = vector.broadcast %cst_426 : f32 to vector<1x512xf32>
    %752 = vector.broadcast %cst_427 : f32 to vector<1x512xf32>
    %753 = arith.select %750, %751, %752 : vector<1x512xi1>, vector<1x512xf32>
    %754 = arith.mulf %622, %753 : vector<1x512xf32>
    %c2_428 = arith.constant 2 : index
    %c0_429 = arith.constant 0 : index
    %755 = vector.load %arg4[%c2_428, %c0_429] : memref<3x512xi32, #tpu.memory_space<vmem>>, vector<1x512xi32>
    %c-1_i32_430 = arith.constant -1 : i32
    %756 = vector.broadcast %c-1_i32_430 : i32 to vector<1x512xi32>
    %757 = arith.addi %755, %756 : vector<1x512xi32>
    %c0_i32_431 = arith.constant 0 : i32
    %758 = vector.broadcast %c0_i32_431 : i32 to vector<1x512xi32>
    %759 = arith.cmpi sge, %757, %758 : vector<1x512xi32>
    %c8_i32_432 = arith.constant 8 : i32
    %760 = vector.broadcast %c8_i32_432 : i32 to vector<1x512xi32>
    %761 = arith.cmpi slt, %757, %760 : vector<1x512xi32>
    %762 = arith.andi %759, %761 : vector<1x512xi1>
    %cst_433 = arith.constant 1.000000e+00 : f32
    %cst_434 = arith.constant 0.000000e+00 : f32
    %763 = vector.broadcast %cst_433 : f32 to vector<1x512xf32>
    %764 = vector.broadcast %cst_434 : f32 to vector<1x512xf32>
    %765 = arith.select %762, %763, %764 : vector<1x512xi1>, vector<1x512xf32>
    %766 = arith.mulf %754, %765 : vector<1x512xf32>
    %c57_i32_435 = arith.constant 57 : i32
    %767 = tpu.dynamic_rotate %611 by %c57_i32_435 dim 1 : vector<8x512xf32>, i32 -> vector<8x512xf32>
    %768 = vector.broadcast %766 : vector<1x512xf32> to vector<8x512xf32>
    %769 = arith.mulf %767, %768 : vector<8x512xf32>
    %c48_436 = arith.constant 48 : index
    %c0_437 = arith.constant 0 : index
    %770 = vector.load %arg6[%c48_436, %c0_437] : memref<72x512xf32, #tpu.memory_space<vmem>>, vector<8x512xf32>
    tpu.vector_store %arg6[%c48_436, %c0_437], %769 {strides = array<i32>} : memref<72x512xf32, #tpu.memory_space<vmem>>, vector<8x512xf32>,
    %c2_438 = arith.constant 2 : index
    %c0_439 = arith.constant 0 : index
    %771 = vector.load %arg4[%c2_438, %c0_439] : memref<3x512xi32, #tpu.memory_space<vmem>>, vector<1x512xi32>
    %c0_i32_440 = arith.constant 0 : i32
    %772 = vector.broadcast %c0_i32_440 : i32 to vector<1x512xi32>
    %773 = arith.addi %771, %772 : vector<1x512xi32>
    %c0_i32_441 = arith.constant 0 : i32
    %774 = vector.broadcast %c0_i32_441 : i32 to vector<1x512xi32>
    %775 = arith.cmpi sge, %773, %774 : vector<1x512xi32>
    %c8_i32_442 = arith.constant 8 : i32
    %776 = vector.broadcast %c8_i32_442 : i32 to vector<1x512xi32>
    %777 = arith.cmpi slt, %773, %776 : vector<1x512xi32>
    %778 = arith.andi %775, %777 : vector<1x512xi1>
    %cst_443 = arith.constant 1.000000e+00 : f32
    %cst_444 = arith.constant 0.000000e+00 : f32
    %779 = vector.broadcast %cst_443 : f32 to vector<1x512xf32>
    %780 = vector.broadcast %cst_444 : f32 to vector<1x512xf32>
    %781 = arith.select %778, %779, %780 : vector<1x512xi1>, vector<1x512xf32>
    %782 = arith.mulf %754, %781 : vector<1x512xf32>
    %c56_i32_445 = arith.constant 56 : i32
    %783 = tpu.dynamic_rotate %611 by %c56_i32_445 dim 1 : vector<8x512xf32>, i32 -> vector<8x512xf32>
    %784 = vector.broadcast %782 : vector<1x512xf32> to vector<8x512xf32>
    %785 = arith.mulf %783, %784 : vector<8x512xf32>
    %c56_446 = arith.constant 56 : index
    %c0_447 = arith.constant 0 : index
    %786 = vector.load %arg6[%c56_446, %c0_447] : memref<72x512xf32, #tpu.memory_space<vmem>>, vector<8x512xf32>
    tpu.vector_store %arg6[%c56_446, %c0_447], %785 {strides = array<i32>} : memref<72x512xf32, #tpu.memory_space<vmem>>, vector<8x512xf32>,
    %c2_448 = arith.constant 2 : index
    %c0_449 = arith.constant 0 : index
    %787 = vector.load %arg4[%c2_448, %c0_449] : memref<3x512xi32, #tpu.memory_space<vmem>>, vector<1x512xi32>
    %c1_i32_450 = arith.constant 1 : i32
    %788 = vector.broadcast %c1_i32_450 : i32 to vector<1x512xi32>
    %789 = arith.addi %787, %788 : vector<1x512xi32>
    %c0_i32_451 = arith.constant 0 : i32
    %790 = vector.broadcast %c0_i32_451 : i32 to vector<1x512xi32>
    %791 = arith.cmpi sge, %789, %790 : vector<1x512xi32>
    %c8_i32_452 = arith.constant 8 : i32
    %792 = vector.broadcast %c8_i32_452 : i32 to vector<1x512xi32>
    %793 = arith.cmpi slt, %789, %792 : vector<1x512xi32>
    %794 = arith.andi %791, %793 : vector<1x512xi1>
    %cst_453 = arith.constant 1.000000e+00 : f32
    %cst_454 = arith.constant 0.000000e+00 : f32
    %795 = vector.broadcast %cst_453 : f32 to vector<1x512xf32>
    %796 = vector.broadcast %cst_454 : f32 to vector<1x512xf32>
    %797 = arith.select %794, %795, %796 : vector<1x512xi1>, vector<1x512xf32>
    %798 = arith.mulf %754, %797 : vector<1x512xf32>
    %c55_i32_455 = arith.constant 55 : i32
    %799 = tpu.dynamic_rotate %611 by %c55_i32_455 dim 1 : vector<8x512xf32>, i32 -> vector<8x512xf32>
    %800 = vector.broadcast %798 : vector<1x512xf32> to vector<8x512xf32>
    %801 = arith.mulf %799, %800 : vector<8x512xf32>
    %c64_456 = arith.constant 64 : index
    %c0_457 = arith.constant 0 : index
    %802 = vector.load %arg6[%c64_456, %c0_457] : memref<72x512xf32, #tpu.memory_space<vmem>>, vector<8x512xf32>
    tpu.vector_store %arg6[%c64_456, %c0_457], %801 {strides = array<i32>} : memref<72x512xf32, #tpu.memory_space<vmem>>, vector<8x512xf32>,
    %c0_458 = arith.constant 0 : index
    %c0_459 = arith.constant 0 : index
    %803 = vector.load %arg6[%c0_458, %c0_459] : memref<72x512xf32, #tpu.memory_space<vmem>>, vector<72x512xf32>
    %c0_460 = arith.constant 0 : index
    %c0_461 = arith.constant 0 : index
    %c0_462 = arith.constant 0 : index
    %804 = vector.load %arg3[%c0_460, %c0_461, %c0_462] : memref<3x72x8xf32, #tpu.memory_space<vmem>>, vector<1x72x8xf32>
    %805 = vector.shape_cast %804 : vector<1x72x8xf32> to vector<72x8xf32>
    %cst_463 = arith.constant dense<0.000000e+00> : vector<512x8xf32>
    %806 = tpu.matmul %803, %805, %cst_463 {dimension_numbers = #tpu.dot_dimension_numbers<[0], [0], [1], [1], [0, 1, 1, 1], [], []>} : vector<72x512xf32>, vector<72x8xf32>, vector<512x8xf32> -> vector<512x8xf32>
    %807 = tpu.transpose %806, [1, 0] : vector<512x8xf32> -> vector<8x512xf32>
    %c0_464 = arith.constant 0 : index
    %c0_465 = arith.constant 0 : index
    %808 = vector.load %arg4[%c0_464, %c0_465] : memref<3x512xi32, #tpu.memory_space<vmem>>, vector<1x512xi32>
    %c0_i32_466 = arith.constant 0 : i32
    %809 = vector.broadcast %c0_i32_466 : i32 to vector<1x512xi32>
    %810 = arith.addi %808, %809 : vector<1x512xi32>
    %c0_i32_467 = arith.constant 0 : i32
    %811 = vector.broadcast %c0_i32_467 : i32 to vector<1x512xi32>
    %812 = arith.cmpi sge, %810, %811 : vector<1x512xi32>
    %c8_i32_468 = arith.constant 8 : i32
    %813 = vector.broadcast %c8_i32_468 : i32 to vector<1x512xi32>
    %814 = arith.cmpi slt, %810, %813 : vector<1x512xi32>
    %815 = arith.andi %812, %814 : vector<1x512xi1>
    %cst_469 = arith.constant 1.000000e+00 : f32
    %cst_470 = arith.constant 0.000000e+00 : f32
    %816 = vector.broadcast %cst_469 : f32 to vector<1x512xf32>
    %817 = vector.broadcast %cst_470 : f32 to vector<1x512xf32>
    %818 = arith.select %815, %816, %817 : vector<1x512xi1>, vector<1x512xf32>
    %c1_471 = arith.constant 1 : index
    %c0_472 = arith.constant 0 : index
    %819 = vector.load %arg4[%c1_471, %c0_472] : memref<3x512xi32, #tpu.memory_space<vmem>>, vector<1x512xi32>
    %c-1_i32_473 = arith.constant -1 : i32
    %820 = vector.broadcast %c-1_i32_473 : i32 to vector<1x512xi32>
    %821 = arith.addi %819, %820 : vector<1x512xi32>
    %c0_i32_474 = arith.constant 0 : i32
    %822 = vector.broadcast %c0_i32_474 : i32 to vector<1x512xi32>
    %823 = arith.cmpi sge, %821, %822 : vector<1x512xi32>
    %c8_i32_475 = arith.constant 8 : i32
    %824 = vector.broadcast %c8_i32_475 : i32 to vector<1x512xi32>
    %825 = arith.cmpi slt, %821, %824 : vector<1x512xi32>
    %826 = arith.andi %823, %825 : vector<1x512xi1>
    %cst_476 = arith.constant 1.000000e+00 : f32
    %cst_477 = arith.constant 0.000000e+00 : f32
    %827 = vector.broadcast %cst_476 : f32 to vector<1x512xf32>
    %828 = vector.broadcast %cst_477 : f32 to vector<1x512xf32>
    %829 = arith.select %826, %827, %828 : vector<1x512xi1>, vector<1x512xf32>
    %830 = arith.mulf %818, %829 : vector<1x512xf32>
    %c2_478 = arith.constant 2 : index
    %c0_479 = arith.constant 0 : index
    %831 = vector.load %arg4[%c2_478, %c0_479] : memref<3x512xi32, #tpu.memory_space<vmem>>, vector<1x512xi32>
    %c-1_i32_480 = arith.constant -1 : i32
    %832 = vector.broadcast %c-1_i32_480 : i32 to vector<1x512xi32>
    %833 = arith.addi %831, %832 : vector<1x512xi32>
    %c0_i32_481 = arith.constant 0 : i32
    %834 = vector.broadcast %c0_i32_481 : i32 to vector<1x512xi32>
    %835 = arith.cmpi sge, %833, %834 : vector<1x512xi32>
    %c8_i32_482 = arith.constant 8 : i32
    %836 = vector.broadcast %c8_i32_482 : i32 to vector<1x512xi32>
    %837 = arith.cmpi slt, %833, %836 : vector<1x512xi32>
    %838 = arith.andi %835, %837 : vector<1x512xi1>
    %cst_483 = arith.constant 1.000000e+00 : f32
    %cst_484 = arith.constant 0.000000e+00 : f32
    %839 = vector.broadcast %cst_483 : f32 to vector<1x512xf32>
    %840 = vector.broadcast %cst_484 : f32 to vector<1x512xf32>
    %841 = arith.select %838, %839, %840 : vector<1x512xi1>, vector<1x512xf32>
    %842 = arith.mulf %830, %841 : vector<1x512xf32>
    %c9_i32_485 = arith.constant 9 : i32
    %843 = tpu.dynamic_rotate %611 by %c9_i32_485 dim 1 : vector<8x512xf32>, i32 -> vector<8x512xf32>
    %844 = vector.broadcast %842 : vector<1x512xf32> to vector<8x512xf32>
    %845 = arith.mulf %843, %844 : vector<8x512xf32>
    %c0_486 = arith.constant 0 : index
    %c0_487 = arith.constant 0 : index
    %846 = vector.load %arg6[%c0_486, %c0_487] : memref<72x512xf32, #tpu.memory_space<vmem>>, vector<8x512xf32>
    tpu.vector_store %arg6[%c0_486, %c0_487], %845 {strides = array<i32>} : memref<72x512xf32, #tpu.memory_space<vmem>>, vector<8x512xf32>,
    %c2_488 = arith.constant 2 : index
    %c0_489 = arith.constant 0 : index
    %847 = vector.load %arg4[%c2_488, %c0_489] : memref<3x512xi32, #tpu.memory_space<vmem>>, vector<1x512xi32>
    %c0_i32_490 = arith.constant 0 : i32
    %848 = vector.broadcast %c0_i32_490 : i32 to vector<1x512xi32>
    %849 = arith.addi %847, %848 : vector<1x512xi32>
    %c0_i32_491 = arith.constant 0 : i32
    %850 = vector.broadcast %c0_i32_491 : i32 to vector<1x512xi32>
    %851 = arith.cmpi sge, %849, %850 : vector<1x512xi32>
    %c8_i32_492 = arith.constant 8 : i32
    %852 = vector.broadcast %c8_i32_492 : i32 to vector<1x512xi32>
    %853 = arith.cmpi slt, %849, %852 : vector<1x512xi32>
    %854 = arith.andi %851, %853 : vector<1x512xi1>
    %cst_493 = arith.constant 1.000000e+00 : f32
    %cst_494 = arith.constant 0.000000e+00 : f32
    %855 = vector.broadcast %cst_493 : f32 to vector<1x512xf32>
    %856 = vector.broadcast %cst_494 : f32 to vector<1x512xf32>
    %857 = arith.select %854, %855, %856 : vector<1x512xi1>, vector<1x512xf32>
    %858 = arith.mulf %830, %857 : vector<1x512xf32>
    %c8_i32_495 = arith.constant 8 : i32
    %859 = tpu.dynamic_rotate %611 by %c8_i32_495 dim 1 : vector<8x512xf32>, i32 -> vector<8x512xf32>
    %860 = vector.broadcast %858 : vector<1x512xf32> to vector<8x512xf32>
    %861 = arith.mulf %859, %860 : vector<8x512xf32>
    %c8_496 = arith.constant 8 : index
    %c0_497 = arith.constant 0 : index
    %862 = vector.load %arg6[%c8_496, %c0_497] : memref<72x512xf32, #tpu.memory_space<vmem>>, vector<8x512xf32>
    tpu.vector_store %arg6[%c8_496, %c0_497], %861 {strides = array<i32>} : memref<72x512xf32, #tpu.memory_space<vmem>>, vector<8x512xf32>,
    %c2_498 = arith.constant 2 : index
    %c0_499 = arith.constant 0 : index
    %863 = vector.load %arg4[%c2_498, %c0_499] : memref<3x512xi32, #tpu.memory_space<vmem>>, vector<1x512xi32>
    %c1_i32_500 = arith.constant 1 : i32
    %864 = vector.broadcast %c1_i32_500 : i32 to vector<1x512xi32>
    %865 = arith.addi %863, %864 : vector<1x512xi32>
    %c0_i32_501 = arith.constant 0 : i32
    %866 = vector.broadcast %c0_i32_501 : i32 to vector<1x512xi32>
    %867 = arith.cmpi sge, %865, %866 : vector<1x512xi32>
    %c8_i32_502 = arith.constant 8 : i32
    %868 = vector.broadcast %c8_i32_502 : i32 to vector<1x512xi32>
    %869 = arith.cmpi slt, %865, %868 : vector<1x512xi32>
    %870 = arith.andi %867, %869 : vector<1x512xi1>
    %cst_503 = arith.constant 1.000000e+00 : f32
    %cst_504 = arith.constant 0.000000e+00 : f32
    %871 = vector.broadcast %cst_503 : f32 to vector<1x512xf32>
    %872 = vector.broadcast %cst_504 : f32 to vector<1x512xf32>
    %873 = arith.select %870, %871, %872 : vector<1x512xi1>, vector<1x512xf32>
    %874 = arith.mulf %830, %873 : vector<1x512xf32>
    %c7_i32_505 = arith.constant 7 : i32
    %875 = tpu.dynamic_rotate %611 by %c7_i32_505 dim 1 : vector<8x512xf32>, i32 -> vector<8x512xf32>
    %876 = vector.broadcast %874 : vector<1x512xf32> to vector<8x512xf32>
    %877 = arith.mulf %875, %876 : vector<8x512xf32>
    %c16_506 = arith.constant 16 : index
    %c0_507 = arith.constant 0 : index
    %878 = vector.load %arg6[%c16_506, %c0_507] : memref<72x512xf32, #tpu.memory_space<vmem>>, vector<8x512xf32>
    tpu.vector_store %arg6[%c16_506, %c0_507], %877 {strides = array<i32>} : memref<72x512xf32, #tpu.memory_space<vmem>>, vector<8x512xf32>,
    %c1_508 = arith.constant 1 : index
    %c0_509 = arith.constant 0 : index
    %879 = vector.load %arg4[%c1_508, %c0_509] : memref<3x512xi32, #tpu.memory_space<vmem>>, vector<1x512xi32>
    %c0_i32_510 = arith.constant 0 : i32
    %880 = vector.broadcast %c0_i32_510 : i32 to vector<1x512xi32>
    %881 = arith.addi %879, %880 : vector<1x512xi32>
    %c0_i32_511 = arith.constant 0 : i32
    %882 = vector.broadcast %c0_i32_511 : i32 to vector<1x512xi32>
    %883 = arith.cmpi sge, %881, %882 : vector<1x512xi32>
    %c8_i32_512 = arith.constant 8 : i32
    %884 = vector.broadcast %c8_i32_512 : i32 to vector<1x512xi32>
    %885 = arith.cmpi slt, %881, %884 : vector<1x512xi32>
    %886 = arith.andi %883, %885 : vector<1x512xi1>
    %cst_513 = arith.constant 1.000000e+00 : f32
    %cst_514 = arith.constant 0.000000e+00 : f32
    %887 = vector.broadcast %cst_513 : f32 to vector<1x512xf32>
    %888 = vector.broadcast %cst_514 : f32 to vector<1x512xf32>
    %889 = arith.select %886, %887, %888 : vector<1x512xi1>, vector<1x512xf32>
    %890 = arith.mulf %818, %889 : vector<1x512xf32>
    %c2_515 = arith.constant 2 : index
    %c0_516 = arith.constant 0 : index
    %891 = vector.load %arg4[%c2_515, %c0_516] : memref<3x512xi32, #tpu.memory_space<vmem>>, vector<1x512xi32>
    %c-1_i32_517 = arith.constant -1 : i32
    %892 = vector.broadcast %c-1_i32_517 : i32 to vector<1x512xi32>
    %893 = arith.addi %891, %892 : vector<1x512xi32>
    %c0_i32_518 = arith.constant 0 : i32
    %894 = vector.broadcast %c0_i32_518 : i32 to vector<1x512xi32>
    %895 = arith.cmpi sge, %893, %894 : vector<1x512xi32>
    %c8_i32_519 = arith.constant 8 : i32
    %896 = vector.broadcast %c8_i32_519 : i32 to vector<1x512xi32>
    %897 = arith.cmpi slt, %893, %896 : vector<1x512xi32>
    %898 = arith.andi %895, %897 : vector<1x512xi1>
    %cst_520 = arith.constant 1.000000e+00 : f32
    %cst_521 = arith.constant 0.000000e+00 : f32
    %899 = vector.broadcast %cst_520 : f32 to vector<1x512xf32>
    %900 = vector.broadcast %cst_521 : f32 to vector<1x512xf32>
    %901 = arith.select %898, %899, %900 : vector<1x512xi1>, vector<1x512xf32>
    %902 = arith.mulf %890, %901 : vector<1x512xf32>
    %c1_i32_522 = arith.constant 1 : i32
    %903 = tpu.dynamic_rotate %611 by %c1_i32_522 dim 1 : vector<8x512xf32>, i32 -> vector<8x512xf32>
    %904 = vector.broadcast %902 : vector<1x512xf32> to vector<8x512xf32>
    %905 = arith.mulf %903, %904 : vector<8x512xf32>
    %c24_523 = arith.constant 24 : index
    %c0_524 = arith.constant 0 : index
    %906 = vector.load %arg6[%c24_523, %c0_524] : memref<72x512xf32, #tpu.memory_space<vmem>>, vector<8x512xf32>
    tpu.vector_store %arg6[%c24_523, %c0_524], %905 {strides = array<i32>} : memref<72x512xf32, #tpu.memory_space<vmem>>, vector<8x512xf32>,
    %c2_525 = arith.constant 2 : index
    %c0_526 = arith.constant 0 : index
    %907 = vector.load %arg4[%c2_525, %c0_526] : memref<3x512xi32, #tpu.memory_space<vmem>>, vector<1x512xi32>
    %c0_i32_527 = arith.constant 0 : i32
    %908 = vector.broadcast %c0_i32_527 : i32 to vector<1x512xi32>
    %909 = arith.addi %907, %908 : vector<1x512xi32>
    %c0_i32_528 = arith.constant 0 : i32
    %910 = vector.broadcast %c0_i32_528 : i32 to vector<1x512xi32>
    %911 = arith.cmpi sge, %909, %910 : vector<1x512xi32>
    %c8_i32_529 = arith.constant 8 : i32
    %912 = vector.broadcast %c8_i32_529 : i32 to vector<1x512xi32>
    %913 = arith.cmpi slt, %909, %912 : vector<1x512xi32>
    %914 = arith.andi %911, %913 : vector<1x512xi1>
    %cst_530 = arith.constant 1.000000e+00 : f32
    %cst_531 = arith.constant 0.000000e+00 : f32
    %915 = vector.broadcast %cst_530 : f32 to vector<1x512xf32>
    %916 = vector.broadcast %cst_531 : f32 to vector<1x512xf32>
    %917 = arith.select %914, %915, %916 : vector<1x512xi1>, vector<1x512xf32>
    %918 = arith.mulf %890, %917 : vector<1x512xf32>
    %919 = vector.broadcast %918 : vector<1x512xf32> to vector<8x512xf32>
    %920 = arith.mulf %611, %919 : vector<8x512xf32>
    %c32_532 = arith.constant 32 : index
    %c0_533 = arith.constant 0 : index
    %921 = vector.load %arg6[%c32_532, %c0_533] : memref<72x512xf32, #tpu.memory_space<vmem>>, vector<8x512xf32>
    tpu.vector_store %arg6[%c32_532, %c0_533], %920 {strides = array<i32>} : memref<72x512xf32, #tpu.memory_space<vmem>>, vector<8x512xf32>,
    %c2_534 = arith.constant 2 : index
    %c0_535 = arith.constant 0 : index
    %922 = vector.load %arg4[%c2_534, %c0_535] : memref<3x512xi32, #tpu.memory_space<vmem>>, vector<1x512xi32>
    %c1_i32_536 = arith.constant 1 : i32
    %923 = vector.broadcast %c1_i32_536 : i32 to vector<1x512xi32>
    %924 = arith.addi %922, %923 : vector<1x512xi32>
    %c0_i32_537 = arith.constant 0 : i32
    %925 = vector.broadcast %c0_i32_537 : i32 to vector<1x512xi32>
    %926 = arith.cmpi sge, %924, %925 : vector<1x512xi32>
    %c8_i32_538 = arith.constant 8 : i32
    %927 = vector.broadcast %c8_i32_538 : i32 to vector<1x512xi32>
    %928 = arith.cmpi slt, %924, %927 : vector<1x512xi32>
    %929 = arith.andi %926, %928 : vector<1x512xi1>
    %cst_539 = arith.constant 1.000000e+00 : f32
    %cst_540 = arith.constant 0.000000e+00 : f32
    %930 = vector.broadcast %cst_539 : f32 to vector<1x512xf32>
    %931 = vector.broadcast %cst_540 : f32 to vector<1x512xf32>
    %932 = arith.select %929, %930, %931 : vector<1x512xi1>, vector<1x512xf32>
    %933 = arith.mulf %890, %932 : vector<1x512xf32>
    %c511_i32_541 = arith.constant 511 : i32
    %934 = tpu.dynamic_rotate %611 by %c511_i32_541 dim 1 : vector<8x512xf32>, i32 -> vector<8x512xf32>
    %935 = vector.broadcast %933 : vector<1x512xf32> to vector<8x512xf32>
    %936 = arith.mulf %934, %935 : vector<8x512xf32>
    %c40_542 = arith.constant 40 : index
    %c0_543 = arith.constant 0 : index
    %937 = vector.load %arg6[%c40_542, %c0_543] : memref<72x512xf32, #tpu.memory_space<vmem>>, vector<8x512xf32>
    tpu.vector_store %arg6[%c40_542, %c0_543], %936 {strides = array<i32>} : memref<72x512xf32, #tpu.memory_space<vmem>>, vector<8x512xf32>,
    %c1_544 = arith.constant 1 : index
    %c0_545 = arith.constant 0 : index
    %938 = vector.load %arg4[%c1_544, %c0_545] : memref<3x512xi32, #tpu.memory_space<vmem>>, vector<1x512xi32>
    %c1_i32_546 = arith.constant 1 : i32
    %939 = vector.broadcast %c1_i32_546 : i32 to vector<1x512xi32>
    %940 = arith.addi %938, %939 : vector<1x512xi32>
    %c0_i32_547 = arith.constant 0 : i32
    %941 = vector.broadcast %c0_i32_547 : i32 to vector<1x512xi32>
    %942 = arith.cmpi sge, %940, %941 : vector<1x512xi32>
    %c8_i32_548 = arith.constant 8 : i32
    %943 = vector.broadcast %c8_i32_548 : i32 to vector<1x512xi32>
    %944 = arith.cmpi slt, %940, %943 : vector<1x512xi32>
    %945 = arith.andi %942, %944 : vector<1x512xi1>
    %cst_549 = arith.constant 1.000000e+00 : f32
    %cst_550 = arith.constant 0.000000e+00 : f32
    %946 = vector.broadcast %cst_549 : f32 to vector<1x512xf32>
    %947 = vector.broadcast %cst_550 : f32 to vector<1x512xf32>
    %948 = arith.select %945, %946, %947 : vector<1x512xi1>, vector<1x512xf32>
    %949 = arith.mulf %818, %948 : vector<1x512xf32>
    %c2_551 = arith.constant 2 : index
    %c0_552 = arith.constant 0 : index
    %950 = vector.load %arg4[%c2_551, %c0_552] : memref<3x512xi32, #tpu.memory_space<vmem>>, vector<1x512xi32>
    %c-1_i32_553 = arith.constant -1 : i32
    %951 = vector.broadcast %c-1_i32_553 : i32 to vector<1x512xi32>
    %952 = arith.addi %950, %951 : vector<1x512xi32>
    %c0_i32_554 = arith.constant 0 : i32
    %953 = vector.broadcast %c0_i32_554 : i32 to vector<1x512xi32>
    %954 = arith.cmpi sge, %952, %953 : vector<1x512xi32>
    %c8_i32_555 = arith.constant 8 : i32
    %955 = vector.broadcast %c8_i32_555 : i32 to vector<1x512xi32>
    %956 = arith.cmpi slt, %952, %955 : vector<1x512xi32>
    %957 = arith.andi %954, %956 : vector<1x512xi1>
    %cst_556 = arith.constant 1.000000e+00 : f32
    %cst_557 = arith.constant 0.000000e+00 : f32
    %958 = vector.broadcast %cst_556 : f32 to vector<1x512xf32>
    %959 = vector.broadcast %cst_557 : f32 to vector<1x512xf32>
    %960 = arith.select %957, %958, %959 : vector<1x512xi1>, vector<1x512xf32>
    %961 = arith.mulf %949, %960 : vector<1x512xf32>
    %c505_i32_558 = arith.constant 505 : i32
    %962 = tpu.dynamic_rotate %611 by %c505_i32_558 dim 1 : vector<8x512xf32>, i32 -> vector<8x512xf32>
    %963 = vector.broadcast %961 : vector<1x512xf32> to vector<8x512xf32>
    %964 = arith.mulf %962, %963 : vector<8x512xf32>
    %c48_559 = arith.constant 48 : index
    %c0_560 = arith.constant 0 : index
    %965 = vector.load %arg6[%c48_559, %c0_560] : memref<72x512xf32, #tpu.memory_space<vmem>>, vector<8x512xf32>
    tpu.vector_store %arg6[%c48_559, %c0_560], %964 {strides = array<i32>} : memref<72x512xf32, #tpu.memory_space<vmem>>, vector<8x512xf32>,
    %c2_561 = arith.constant 2 : index
    %c0_562 = arith.constant 0 : index
    %966 = vector.load %arg4[%c2_561, %c0_562] : memref<3x512xi32, #tpu.memory_space<vmem>>, vector<1x512xi32>
    %c0_i32_563 = arith.constant 0 : i32
    %967 = vector.broadcast %c0_i32_563 : i32 to vector<1x512xi32>
    %968 = arith.addi %966, %967 : vector<1x512xi32>
    %c0_i32_564 = arith.constant 0 : i32
    %969 = vector.broadcast %c0_i32_564 : i32 to vector<1x512xi32>
    %970 = arith.cmpi sge, %968, %969 : vector<1x512xi32>
    %c8_i32_565 = arith.constant 8 : i32
    %971 = vector.broadcast %c8_i32_565 : i32 to vector<1x512xi32>
    %972 = arith.cmpi slt, %968, %971 : vector<1x512xi32>
    %973 = arith.andi %970, %972 : vector<1x512xi1>
    %cst_566 = arith.constant 1.000000e+00 : f32
    %cst_567 = arith.constant 0.000000e+00 : f32
    %974 = vector.broadcast %cst_566 : f32 to vector<1x512xf32>
    %975 = vector.broadcast %cst_567 : f32 to vector<1x512xf32>
    %976 = arith.select %973, %974, %975 : vector<1x512xi1>, vector<1x512xf32>
    %977 = arith.mulf %949, %976 : vector<1x512xf32>
    %c504_i32_568 = arith.constant 504 : i32
    %978 = tpu.dynamic_rotate %611 by %c504_i32_568 dim 1 : vector<8x512xf32>, i32 -> vector<8x512xf32>
    %979 = vector.broadcast %977 : vector<1x512xf32> to vector<8x512xf32>
    %980 = arith.mulf %978, %979 : vector<8x512xf32>
    %c56_569 = arith.constant 56 : index
    %c0_570 = arith.constant 0 : index
    %981 = vector.load %arg6[%c56_569, %c0_570] : memref<72x512xf32, #tpu.memory_space<vmem>>, vector<8x512xf32>
    tpu.vector_store %arg6[%c56_569, %c0_570], %980 {strides = array<i32>} : memref<72x512xf32, #tpu.memory_space<vmem>>, vector<8x512xf32>,
    %c2_571 = arith.constant 2 : index
    %c0_572 = arith.constant 0 : index
    %982 = vector.load %arg4[%c2_571, %c0_572] : memref<3x512xi32, #tpu.memory_space<vmem>>, vector<1x512xi32>
    %c1_i32_573 = arith.constant 1 : i32
    %983 = vector.broadcast %c1_i32_573 : i32 to vector<1x512xi32>
    %984 = arith.addi %982, %983 : vector<1x512xi32>
    %c0_i32_574 = arith.constant 0 : i32
    %985 = vector.broadcast %c0_i32_574 : i32 to vector<1x512xi32>
    %986 = arith.cmpi sge, %984, %985 : vector<1x512xi32>
    %c8_i32_575 = arith.constant 8 : i32
    %987 = vector.broadcast %c8_i32_575 : i32 to vector<1x512xi32>
    %988 = arith.cmpi slt, %984, %987 : vector<1x512xi32>
    %989 = arith.andi %986, %988 : vector<1x512xi1>
    %cst_576 = arith.constant 1.000000e+00 : f32
    %cst_577 = arith.constant 0.000000e+00 : f32
    %990 = vector.broadcast %cst_576 : f32 to vector<1x512xf32>
    %991 = vector.broadcast %cst_577 : f32 to vector<1x512xf32>
    %992 = arith.select %989, %990, %991 : vector<1x512xi1>, vector<1x512xf32>
    %993 = arith.mulf %949, %992 : vector<1x512xf32>
    %c503_i32_578 = arith.constant 503 : i32
    %994 = tpu.dynamic_rotate %611 by %c503_i32_578 dim 1 : vector<8x512xf32>, i32 -> vector<8x512xf32>
    %995 = vector.broadcast %993 : vector<1x512xf32> to vector<8x512xf32>
    %996 = arith.mulf %994, %995 : vector<8x512xf32>
    %c64_579 = arith.constant 64 : index
    %c0_580 = arith.constant 0 : index
    %997 = vector.load %arg6[%c64_579, %c0_580] : memref<72x512xf32, #tpu.memory_space<vmem>>, vector<8x512xf32>
    tpu.vector_store %arg6[%c64_579, %c0_580], %996 {strides = array<i32>} : memref<72x512xf32, #tpu.memory_space<vmem>>, vector<8x512xf32>,
    %c0_581 = arith.constant 0 : index
    %c0_582 = arith.constant 0 : index
    %998 = vector.load %arg6[%c0_581, %c0_582] : memref<72x512xf32, #tpu.memory_space<vmem>>, vector<72x512xf32>
    %c1_583 = arith.constant 1 : index
    %c0_584 = arith.constant 0 : index
    %c0_585 = arith.constant 0 : index
    %999 = vector.load %arg3[%c1_583, %c0_584, %c0_585] : memref<3x72x8xf32, #tpu.memory_space<vmem>>, vector<1x72x8xf32>
    %1000 = vector.shape_cast %999 : vector<1x72x8xf32> to vector<72x8xf32>
    %cst_586 = arith.constant dense<0.000000e+00> : vector<512x8xf32>
    %1001 = tpu.matmul %998, %1000, %cst_586 {dimension_numbers = #tpu.dot_dimension_numbers<[0], [0], [1], [1], [0, 1, 1, 1], [], []>} : vector<72x512xf32>, vector<72x8xf32>, vector<512x8xf32> -> vector<512x8xf32>
    %1002 = tpu.transpose %1001, [1, 0] : vector<512x8xf32> -> vector<8x512xf32>
    %1003 = arith.addf %807, %1002 : vector<8x512xf32>
    %c0_587 = arith.constant 0 : index
    %c0_588 = arith.constant 0 : index
    %1004 = vector.load %arg4[%c0_587, %c0_588] : memref<3x512xi32, #tpu.memory_space<vmem>>, vector<1x512xi32>
    %c1_i32_589 = arith.constant 1 : i32
    %1005 = vector.broadcast %c1_i32_589 : i32 to vector<1x512xi32>
    %1006 = arith.addi %1004, %1005 : vector<1x512xi32>
    %c0_i32_590 = arith.constant 0 : i32
    %1007 = vector.broadcast %c0_i32_590 : i32 to vector<1x512xi32>
    %1008 = arith.cmpi sge, %1006, %1007 : vector<1x512xi32>
    %c8_i32_591 = arith.constant 8 : i32
    %1009 = vector.broadcast %c8_i32_591 : i32 to vector<1x512xi32>
    %1010 = arith.cmpi slt, %1006, %1009 : vector<1x512xi32>
    %1011 = arith.andi %1008, %1010 : vector<1x512xi1>
    %cst_592 = arith.constant 1.000000e+00 : f32
    %cst_593 = arith.constant 0.000000e+00 : f32
    %1012 = vector.broadcast %cst_592 : f32 to vector<1x512xf32>
    %1013 = vector.broadcast %cst_593 : f32 to vector<1x512xf32>
    %1014 = arith.select %1011, %1012, %1013 : vector<1x512xi1>, vector<1x512xf32>
    %c1_594 = arith.constant 1 : index
    %c0_595 = arith.constant 0 : index
    %1015 = vector.load %arg4[%c1_594, %c0_595] : memref<3x512xi32, #tpu.memory_space<vmem>>, vector<1x512xi32>
    %c-1_i32_596 = arith.constant -1 : i32
    %1016 = vector.broadcast %c-1_i32_596 : i32 to vector<1x512xi32>
    %1017 = arith.addi %1015, %1016 : vector<1x512xi32>
    %c0_i32_597 = arith.constant 0 : i32
    %1018 = vector.broadcast %c0_i32_597 : i32 to vector<1x512xi32>
    %1019 = arith.cmpi sge, %1017, %1018 : vector<1x512xi32>
    %c8_i32_598 = arith.constant 8 : i32
    %1020 = vector.broadcast %c8_i32_598 : i32 to vector<1x512xi32>
    %1021 = arith.cmpi slt, %1017, %1020 : vector<1x512xi32>
    %1022 = arith.andi %1019, %1021 : vector<1x512xi1>
    %cst_599 = arith.constant 1.000000e+00 : f32
    %cst_600 = arith.constant 0.000000e+00 : f32
    %1023 = vector.broadcast %cst_599 : f32 to vector<1x512xf32>
    %1024 = vector.broadcast %cst_600 : f32 to vector<1x512xf32>
    %1025 = arith.select %1022, %1023, %1024 : vector<1x512xi1>, vector<1x512xf32>
    %1026 = arith.mulf %1014, %1025 : vector<1x512xf32>
    %c2_601 = arith.constant 2 : index
    %c0_602 = arith.constant 0 : index
    %1027 = vector.load %arg4[%c2_601, %c0_602] : memref<3x512xi32, #tpu.memory_space<vmem>>, vector<1x512xi32>
    %c-1_i32_603 = arith.constant -1 : i32
    %1028 = vector.broadcast %c-1_i32_603 : i32 to vector<1x512xi32>
    %1029 = arith.addi %1027, %1028 : vector<1x512xi32>
    %c0_i32_604 = arith.constant 0 : i32
    %1030 = vector.broadcast %c0_i32_604 : i32 to vector<1x512xi32>
    %1031 = arith.cmpi sge, %1029, %1030 : vector<1x512xi32>
    %c8_i32_605 = arith.constant 8 : i32
    %1032 = vector.broadcast %c8_i32_605 : i32 to vector<1x512xi32>
    %1033 = arith.cmpi slt, %1029, %1032 : vector<1x512xi32>
    %1034 = arith.andi %1031, %1033 : vector<1x512xi1>
    %cst_606 = arith.constant 1.000000e+00 : f32
    %cst_607 = arith.constant 0.000000e+00 : f32
    %1035 = vector.broadcast %cst_606 : f32 to vector<1x512xf32>
    %1036 = vector.broadcast %cst_607 : f32 to vector<1x512xf32>
    %1037 = arith.select %1034, %1035, %1036 : vector<1x512xi1>, vector<1x512xf32>
    %1038 = arith.mulf %1026, %1037 : vector<1x512xf32>
    %c457_i32_608 = arith.constant 457 : i32
    %1039 = tpu.dynamic_rotate %611 by %c457_i32_608 dim 1 : vector<8x512xf32>, i32 -> vector<8x512xf32>
    %1040 = vector.broadcast %1038 : vector<1x512xf32> to vector<8x512xf32>
    %1041 = arith.mulf %1039, %1040 : vector<8x512xf32>
    %c0_609 = arith.constant 0 : index
    %c0_610 = arith.constant 0 : index
    %1042 = vector.load %arg6[%c0_609, %c0_610] : memref<72x512xf32, #tpu.memory_space<vmem>>, vector<8x512xf32>
    tpu.vector_store %arg6[%c0_609, %c0_610], %1041 {strides = array<i32>} : memref<72x512xf32, #tpu.memory_space<vmem>>, vector<8x512xf32>,
    %c2_611 = arith.constant 2 : index
    %c0_612 = arith.constant 0 : index
    %1043 = vector.load %arg4[%c2_611, %c0_612] : memref<3x512xi32, #tpu.memory_space<vmem>>, vector<1x512xi32>
    %c0_i32_613 = arith.constant 0 : i32
    %1044 = vector.broadcast %c0_i32_613 : i32 to vector<1x512xi32>
    %1045 = arith.addi %1043, %1044 : vector<1x512xi32>
    %c0_i32_614 = arith.constant 0 : i32
    %1046 = vector.broadcast %c0_i32_614 : i32 to vector<1x512xi32>
    %1047 = arith.cmpi sge, %1045, %1046 : vector<1x512xi32>
    %c8_i32_615 = arith.constant 8 : i32
    %1048 = vector.broadcast %c8_i32_615 : i32 to vector<1x512xi32>
    %1049 = arith.cmpi slt, %1045, %1048 : vector<1x512xi32>
    %1050 = arith.andi %1047, %1049 : vector<1x512xi1>
    %cst_616 = arith.constant 1.000000e+00 : f32
    %cst_617 = arith.constant 0.000000e+00 : f32
    %1051 = vector.broadcast %cst_616 : f32 to vector<1x512xf32>
    %1052 = vector.broadcast %cst_617 : f32 to vector<1x512xf32>
    %1053 = arith.select %1050, %1051, %1052 : vector<1x512xi1>, vector<1x512xf32>
    %1054 = arith.mulf %1026, %1053 : vector<1x512xf32>
    %c456_i32_618 = arith.constant 456 : i32
    %1055 = tpu.dynamic_rotate %611 by %c456_i32_618 dim 1 : vector<8x512xf32>, i32 -> vector<8x512xf32>
    %1056 = vector.broadcast %1054 : vector<1x512xf32> to vector<8x512xf32>
    %1057 = arith.mulf %1055, %1056 : vector<8x512xf32>
    %c8_619 = arith.constant 8 : index
    %c0_620 = arith.constant 0 : index
    %1058 = vector.load %arg6[%c8_619, %c0_620] : memref<72x512xf32, #tpu.memory_space<vmem>>, vector<8x512xf32>
    tpu.vector_store %arg6[%c8_619, %c0_620], %1057 {strides = array<i32>} : memref<72x512xf32, #tpu.memory_space<vmem>>, vector<8x512xf32>,
    %c2_621 = arith.constant 2 : index
    %c0_622 = arith.constant 0 : index
    %1059 = vector.load %arg4[%c2_621, %c0_622] : memref<3x512xi32, #tpu.memory_space<vmem>>, vector<1x512xi32>
    %c1_i32_623 = arith.constant 1 : i32
    %1060 = vector.broadcast %c1_i32_623 : i32 to vector<1x512xi32>
    %1061 = arith.addi %1059, %1060 : vector<1x512xi32>
    %c0_i32_624 = arith.constant 0 : i32
    %1062 = vector.broadcast %c0_i32_624 : i32 to vector<1x512xi32>
    %1063 = arith.cmpi sge, %1061, %1062 : vector<1x512xi32>
    %c8_i32_625 = arith.constant 8 : i32
    %1064 = vector.broadcast %c8_i32_625 : i32 to vector<1x512xi32>
    %1065 = arith.cmpi slt, %1061, %1064 : vector<1x512xi32>
    %1066 = arith.andi %1063, %1065 : vector<1x512xi1>
    %cst_626 = arith.constant 1.000000e+00 : f32
    %cst_627 = arith.constant 0.000000e+00 : f32
    %1067 = vector.broadcast %cst_626 : f32 to vector<1x512xf32>
    %1068 = vector.broadcast %cst_627 : f32 to vector<1x512xf32>
    %1069 = arith.select %1066, %1067, %1068 : vector<1x512xi1>, vector<1x512xf32>
    %1070 = arith.mulf %1026, %1069 : vector<1x512xf32>
    %c455_i32_628 = arith.constant 455 : i32
    %1071 = tpu.dynamic_rotate %611 by %c455_i32_628 dim 1 : vector<8x512xf32>, i32 -> vector<8x512xf32>
    %1072 = vector.broadcast %1070 : vector<1x512xf32> to vector<8x512xf32>
    %1073 = arith.mulf %1071, %1072 : vector<8x512xf32>
    %c16_629 = arith.constant 16 : index
    %c0_630 = arith.constant 0 : index
    %1074 = vector.load %arg6[%c16_629, %c0_630] : memref<72x512xf32, #tpu.memory_space<vmem>>, vector<8x512xf32>
    tpu.vector_store %arg6[%c16_629, %c0_630], %1073 {strides = array<i32>} : memref<72x512xf32, #tpu.memory_space<vmem>>, vector<8x512xf32>,
    %c1_631 = arith.constant 1 : index
    %c0_632 = arith.constant 0 : index
    %1075 = vector.load %arg4[%c1_631, %c0_632] : memref<3x512xi32, #tpu.memory_space<vmem>>, vector<1x512xi32>
    %c0_i32_633 = arith.constant 0 : i32
    %1076 = vector.broadcast %c0_i32_633 : i32 to vector<1x512xi32>
    %1077 = arith.addi %1075, %1076 : vector<1x512xi32>
    %c0_i32_634 = arith.constant 0 : i32
    %1078 = vector.broadcast %c0_i32_634 : i32 to vector<1x512xi32>
    %1079 = arith.cmpi sge, %1077, %1078 : vector<1x512xi32>
    %c8_i32_635 = arith.constant 8 : i32
    %1080 = vector.broadcast %c8_i32_635 : i32 to vector<1x512xi32>
    %1081 = arith.cmpi slt, %1077, %1080 : vector<1x512xi32>
    %1082 = arith.andi %1079, %1081 : vector<1x512xi1>
    %cst_636 = arith.constant 1.000000e+00 : f32
    %cst_637 = arith.constant 0.000000e+00 : f32
    %1083 = vector.broadcast %cst_636 : f32 to vector<1x512xf32>
    %1084 = vector.broadcast %cst_637 : f32 to vector<1x512xf32>
    %1085 = arith.select %1082, %1083, %1084 : vector<1x512xi1>, vector<1x512xf32>
    %1086 = arith.mulf %1014, %1085 : vector<1x512xf32>
    %c2_638 = arith.constant 2 : index
    %c0_639 = arith.constant 0 : index
    %1087 = vector.load %arg4[%c2_638, %c0_639] : memref<3x512xi32, #tpu.memory_space<vmem>>, vector<1x512xi32>
    %c-1_i32_640 = arith.constant -1 : i32
    %1088 = vector.broadcast %c-1_i32_640 : i32 to vector<1x512xi32>
    %1089 = arith.addi %1087, %1088 : vector<1x512xi32>
    %c0_i32_641 = arith.constant 0 : i32
    %1090 = vector.broadcast %c0_i32_641 : i32 to vector<1x512xi32>
    %1091 = arith.cmpi sge, %1089, %1090 : vector<1x512xi32>
    %c8_i32_642 = arith.constant 8 : i32
    %1092 = vector.broadcast %c8_i32_642 : i32 to vector<1x512xi32>
    %1093 = arith.cmpi slt, %1089, %1092 : vector<1x512xi32>
    %1094 = arith.andi %1091, %1093 : vector<1x512xi1>
    %cst_643 = arith.constant 1.000000e+00 : f32
    %cst_644 = arith.constant 0.000000e+00 : f32
    %1095 = vector.broadcast %cst_643 : f32 to vector<1x512xf32>
    %1096 = vector.broadcast %cst_644 : f32 to vector<1x512xf32>
    %1097 = arith.select %1094, %1095, %1096 : vector<1x512xi1>, vector<1x512xf32>
    %1098 = arith.mulf %1086, %1097 : vector<1x512xf32>
    %c449_i32_645 = arith.constant 449 : i32
    %1099 = tpu.dynamic_rotate %611 by %c449_i32_645 dim 1 : vector<8x512xf32>, i32 -> vector<8x512xf32>
    %1100 = vector.broadcast %1098 : vector<1x512xf32> to vector<8x512xf32>
    %1101 = arith.mulf %1099, %1100 : vector<8x512xf32>
    %c24_646 = arith.constant 24 : index
    %c0_647 = arith.constant 0 : index
    %1102 = vector.load %arg6[%c24_646, %c0_647] : memref<72x512xf32, #tpu.memory_space<vmem>>, vector<8x512xf32>
    tpu.vector_store %arg6[%c24_646, %c0_647], %1101 {strides = array<i32>} : memref<72x512xf32, #tpu.memory_space<vmem>>, vector<8x512xf32>,
    %c2_648 = arith.constant 2 : index
    %c0_649 = arith.constant 0 : index
    %1103 = vector.load %arg4[%c2_648, %c0_649] : memref<3x512xi32, #tpu.memory_space<vmem>>, vector<1x512xi32>
    %c0_i32_650 = arith.constant 0 : i32
    %1104 = vector.broadcast %c0_i32_650 : i32 to vector<1x512xi32>
    %1105 = arith.addi %1103, %1104 : vector<1x512xi32>
    %c0_i32_651 = arith.constant 0 : i32
    %1106 = vector.broadcast %c0_i32_651 : i32 to vector<1x512xi32>
    %1107 = arith.cmpi sge, %1105, %1106 : vector<1x512xi32>
    %c8_i32_652 = arith.constant 8 : i32
    %1108 = vector.broadcast %c8_i32_652 : i32 to vector<1x512xi32>
    %1109 = arith.cmpi slt, %1105, %1108 : vector<1x512xi32>
    %1110 = arith.andi %1107, %1109 : vector<1x512xi1>
    %cst_653 = arith.constant 1.000000e+00 : f32
    %cst_654 = arith.constant 0.000000e+00 : f32
    %1111 = vector.broadcast %cst_653 : f32 to vector<1x512xf32>
    %1112 = vector.broadcast %cst_654 : f32 to vector<1x512xf32>
    %1113 = arith.select %1110, %1111, %1112 : vector<1x512xi1>, vector<1x512xf32>
    %1114 = arith.mulf %1086, %1113 : vector<1x512xf32>
    %c448_i32_655 = arith.constant 448 : i32
    %1115 = tpu.dynamic_rotate %611 by %c448_i32_655 dim 1 : vector<8x512xf32>, i32 -> vector<8x512xf32>
    %1116 = vector.broadcast %1114 : vector<1x512xf32> to vector<8x512xf32>
    %1117 = arith.mulf %1115, %1116 : vector<8x512xf32>
    %c32_656 = arith.constant 32 : index
    %c0_657 = arith.constant 0 : index
    %1118 = vector.load %arg6[%c32_656, %c0_657] : memref<72x512xf32, #tpu.memory_space<vmem>>, vector<8x512xf32>
    tpu.vector_store %arg6[%c32_656, %c0_657], %1117 {strides = array<i32>} : memref<72x512xf32, #tpu.memory_space<vmem>>, vector<8x512xf32>,
    %c2_658 = arith.constant 2 : index
    %c0_659 = arith.constant 0 : index
    %1119 = vector.load %arg4[%c2_658, %c0_659] : memref<3x512xi32, #tpu.memory_space<vmem>>, vector<1x512xi32>
    %c1_i32_660 = arith.constant 1 : i32
    %1120 = vector.broadcast %c1_i32_660 : i32 to vector<1x512xi32>
    %1121 = arith.addi %1119, %1120 : vector<1x512xi32>
    %c0_i32_661 = arith.constant 0 : i32
    %1122 = vector.broadcast %c0_i32_661 : i32 to vector<1x512xi32>
    %1123 = arith.cmpi sge, %1121, %1122 : vector<1x512xi32>
    %c8_i32_662 = arith.constant 8 : i32
    %1124 = vector.broadcast %c8_i32_662 : i32 to vector<1x512xi32>
    %1125 = arith.cmpi slt, %1121, %1124 : vector<1x512xi32>
    %1126 = arith.andi %1123, %1125 : vector<1x512xi1>
    %cst_663 = arith.constant 1.000000e+00 : f32
    %cst_664 = arith.constant 0.000000e+00 : f32
    %1127 = vector.broadcast %cst_663 : f32 to vector<1x512xf32>
    %1128 = vector.broadcast %cst_664 : f32 to vector<1x512xf32>
    %1129 = arith.select %1126, %1127, %1128 : vector<1x512xi1>, vector<1x512xf32>
    %1130 = arith.mulf %1086, %1129 : vector<1x512xf32>
    %c447_i32_665 = arith.constant 447 : i32
    %1131 = tpu.dynamic_rotate %611 by %c447_i32_665 dim 1 : vector<8x512xf32>, i32 -> vector<8x512xf32>
    %1132 = vector.broadcast %1130 : vector<1x512xf32> to vector<8x512xf32>
    %1133 = arith.mulf %1131, %1132 : vector<8x512xf32>
    %c40_666 = arith.constant 40 : index
    %c0_667 = arith.constant 0 : index
    %1134 = vector.load %arg6[%c40_666, %c0_667] : memref<72x512xf32, #tpu.memory_space<vmem>>, vector<8x512xf32>
    tpu.vector_store %arg6[%c40_666, %c0_667], %1133 {strides = array<i32>} : memref<72x512xf32, #tpu.memory_space<vmem>>, vector<8x512xf32>,
    %c1_668 = arith.constant 1 : index
    %c0_669 = arith.constant 0 : index
    %1135 = vector.load %arg4[%c1_668, %c0_669] : memref<3x512xi32, #tpu.memory_space<vmem>>, vector<1x512xi32>
    %c1_i32_670 = arith.constant 1 : i32
    %1136 = vector.broadcast %c1_i32_670 : i32 to vector<1x512xi32>
    %1137 = arith.addi %1135, %1136 : vector<1x512xi32>
    %c0_i32_671 = arith.constant 0 : i32
    %1138 = vector.broadcast %c0_i32_671 : i32 to vector<1x512xi32>
    %1139 = arith.cmpi sge, %1137, %1138 : vector<1x512xi32>
    %c8_i32_672 = arith.constant 8 : i32
    %1140 = vector.broadcast %c8_i32_672 : i32 to vector<1x512xi32>
    %1141 = arith.cmpi slt, %1137, %1140 : vector<1x512xi32>
    %1142 = arith.andi %1139, %1141 : vector<1x512xi1>
    %cst_673 = arith.constant 1.000000e+00 : f32
    %cst_674 = arith.constant 0.000000e+00 : f32
    %1143 = vector.broadcast %cst_673 : f32 to vector<1x512xf32>
    %1144 = vector.broadcast %cst_674 : f32 to vector<1x512xf32>
    %1145 = arith.select %1142, %1143, %1144 : vector<1x512xi1>, vector<1x512xf32>
    %1146 = arith.mulf %1014, %1145 : vector<1x512xf32>
    %c2_675 = arith.constant 2 : index
    %c0_676 = arith.constant 0 : index
    %1147 = vector.load %arg4[%c2_675, %c0_676] : memref<3x512xi32, #tpu.memory_space<vmem>>, vector<1x512xi32>
    %c-1_i32_677 = arith.constant -1 : i32
    %1148 = vector.broadcast %c-1_i32_677 : i32 to vector<1x512xi32>
    %1149 = arith.addi %1147, %1148 : vector<1x512xi32>
    %c0_i32_678 = arith.constant 0 : i32
    %1150 = vector.broadcast %c0_i32_678 : i32 to vector<1x512xi32>
    %1151 = arith.cmpi sge, %1149, %1150 : vector<1x512xi32>
    %c8_i32_679 = arith.constant 8 : i32
    %1152 = vector.broadcast %c8_i32_679 : i32 to vector<1x512xi32>
    %1153 = arith.cmpi slt, %1149, %1152 : vector<1x512xi32>
    %1154 = arith.andi %1151, %1153 : vector<1x512xi1>
    %cst_680 = arith.constant 1.000000e+00 : f32
    %cst_681 = arith.constant 0.000000e+00 : f32
    %1155 = vector.broadcast %cst_680 : f32 to vector<1x512xf32>
    %1156 = vector.broadcast %cst_681 : f32 to vector<1x512xf32>
    %1157 = arith.select %1154, %1155, %1156 : vector<1x512xi1>, vector<1x512xf32>
    %1158 = arith.mulf %1146, %1157 : vector<1x512xf32>
    %c441_i32_682 = arith.constant 441 : i32
    %1159 = tpu.dynamic_rotate %611 by %c441_i32_682 dim 1 : vector<8x512xf32>, i32 -> vector<8x512xf32>
    %1160 = vector.broadcast %1158 : vector<1x512xf32> to vector<8x512xf32>
    %1161 = arith.mulf %1159, %1160 : vector<8x512xf32>
    %c48_683 = arith.constant 48 : index
    %c0_684 = arith.constant 0 : index
    %1162 = vector.load %arg6[%c48_683, %c0_684] : memref<72x512xf32, #tpu.memory_space<vmem>>, vector<8x512xf32>
    tpu.vector_store %arg6[%c48_683, %c0_684], %1161 {strides = array<i32>} : memref<72x512xf32, #tpu.memory_space<vmem>>, vector<8x512xf32>,
    %c2_685 = arith.constant 2 : index
    %c0_686 = arith.constant 0 : index
    %1163 = vector.load %arg4[%c2_685, %c0_686] : memref<3x512xi32, #tpu.memory_space<vmem>>, vector<1x512xi32>
    %c0_i32_687 = arith.constant 0 : i32
    %1164 = vector.broadcast %c0_i32_687 : i32 to vector<1x512xi32>
    %1165 = arith.addi %1163, %1164 : vector<1x512xi32>
    %c0_i32_688 = arith.constant 0 : i32
    %1166 = vector.broadcast %c0_i32_688 : i32 to vector<1x512xi32>
    %1167 = arith.cmpi sge, %1165, %1166 : vector<1x512xi32>
    %c8_i32_689 = arith.constant 8 : i32
    %1168 = vector.broadcast %c8_i32_689 : i32 to vector<1x512xi32>
    %1169 = arith.cmpi slt, %1165, %1168 : vector<1x512xi32>
    %1170 = arith.andi %1167, %1169 : vector<1x512xi1>
    %cst_690 = arith.constant 1.000000e+00 : f32
    %cst_691 = arith.constant 0.000000e+00 : f32
    %1171 = vector.broadcast %cst_690 : f32 to vector<1x512xf32>
    %1172 = vector.broadcast %cst_691 : f32 to vector<1x512xf32>
    %1173 = arith.select %1170, %1171, %1172 : vector<1x512xi1>, vector<1x512xf32>
    %1174 = arith.mulf %1146, %1173 : vector<1x512xf32>
    %c440_i32_692 = arith.constant 440 : i32
    %1175 = tpu.dynamic_rotate %611 by %c440_i32_692 dim 1 : vector<8x512xf32>, i32 -> vector<8x512xf32>
    %1176 = vector.broadcast %1174 : vector<1x512xf32> to vector<8x512xf32>
    %1177 = arith.mulf %1175, %1176 : vector<8x512xf32>
    %c56_693 = arith.constant 56 : index
    %c0_694 = arith.constant 0 : index
    %1178 = vector.load %arg6[%c56_693, %c0_694] : memref<72x512xf32, #tpu.memory_space<vmem>>, vector<8x512xf32>
    tpu.vector_store %arg6[%c56_693, %c0_694], %1177 {strides = array<i32>} : memref<72x512xf32, #tpu.memory_space<vmem>>, vector<8x512xf32>,
    %c2_695 = arith.constant 2 : index
    %c0_696 = arith.constant 0 : index
    %1179 = vector.load %arg4[%c2_695, %c0_696] : memref<3x512xi32, #tpu.memory_space<vmem>>, vector<1x512xi32>
    %c1_i32_697 = arith.constant 1 : i32
    %1180 = vector.broadcast %c1_i32_697 : i32 to vector<1x512xi32>
    %1181 = arith.addi %1179, %1180 : vector<1x512xi32>
    %c0_i32_698 = arith.constant 0 : i32
    %1182 = vector.broadcast %c0_i32_698 : i32 to vector<1x512xi32>
    %1183 = arith.cmpi sge, %1181, %1182 : vector<1x512xi32>
    %c8_i32_699 = arith.constant 8 : i32
    %1184 = vector.broadcast %c8_i32_699 : i32 to vector<1x512xi32>
    %1185 = arith.cmpi slt, %1181, %1184 : vector<1x512xi32>
    %1186 = arith.andi %1183, %1185 : vector<1x512xi1>
    %cst_700 = arith.constant 1.000000e+00 : f32
    %cst_701 = arith.constant 0.000000e+00 : f32
    %1187 = vector.broadcast %cst_700 : f32 to vector<1x512xf32>
    %1188 = vector.broadcast %cst_701 : f32 to vector<1x512xf32>
    %1189 = arith.select %1186, %1187, %1188 : vector<1x512xi1>, vector<1x512xf32>
    %1190 = arith.mulf %1146, %1189 : vector<1x512xf32>
    %c439_i32_702 = arith.constant 439 : i32
    %1191 = tpu.dynamic_rotate %611 by %c439_i32_702 dim 1 : vector<8x512xf32>, i32 -> vector<8x512xf32>
    %1192 = vector.broadcast %1190 : vector<1x512xf32> to vector<8x512xf32>
    %1193 = arith.mulf %1191, %1192 : vector<8x512xf32>
    %c64_703 = arith.constant 64 : index
    %c0_704 = arith.constant 0 : index
    %1194 = vector.load %arg6[%c64_703, %c0_704] : memref<72x512xf32, #tpu.memory_space<vmem>>, vector<8x512xf32>
    tpu.vector_store %arg6[%c64_703, %c0_704], %1193 {strides = array<i32>} : memref<72x512xf32, #tpu.memory_space<vmem>>, vector<8x512xf32>,
    %c0_705 = arith.constant 0 : index
    %c0_706 = arith.constant 0 : index
    %1195 = vector.load %arg6[%c0_705, %c0_706] : memref<72x512xf32, #tpu.memory_space<vmem>>, vector<72x512xf32>
    %c2_707 = arith.constant 2 : index
    %c0_708 = arith.constant 0 : index
    %c0_709 = arith.constant 0 : index
    %1196 = vector.load %arg3[%c2_707, %c0_708, %c0_709] : memref<3x72x8xf32, #tpu.memory_space<vmem>>, vector<1x72x8xf32>
    %1197 = vector.shape_cast %1196 : vector<1x72x8xf32> to vector<72x8xf32>
    %cst_710 = arith.constant dense<0.000000e+00> : vector<512x8xf32>
    %1198 = tpu.matmul %1195, %1197, %cst_710 {dimension_numbers = #tpu.dot_dimension_numbers<[0], [0], [1], [1], [0, 1, 1, 1], [], []>} : vector<72x512xf32>, vector<72x8xf32>, vector<512x8xf32> -> vector<512x8xf32>
    %1199 = tpu.transpose %1198, [1, 0] : vector<512x8xf32> -> vector<8x512xf32>
    %1200 = arith.addf %1003, %1199 : vector<8x512xf32>
    %cst_711 = arith.constant dense<0.000000e+00> : vector<8xf32>
    %1201 = vector.multi_reduction <add>, %1200, %cst_711 [1] : vector<8x512xf32> to vector<8xf32>
    %1202 = vector.shape_cast %1201 : vector<8xf32> to vector<8x1xf32>
    %cst_712 = arith.constant 0.001953125 : f32
    %1203 = vector.broadcast %cst_712 : f32 to vector<8x1xf32>
    %1204 = arith.mulf %1202, %1203 : vector<8x1xf32>
    %1205 = arith.mulf %1200, %1200 : vector<8x512xf32>
    %cst_713 = arith.constant dense<0.000000e+00> : vector<8xf32>
    %1206 = vector.multi_reduction <add>, %1205, %cst_713 [1] : vector<8x512xf32> to vector<8xf32>
    %1207 = vector.shape_cast %1206 : vector<8xf32> to vector<8x1xf32>
    %cst_714 = arith.constant 0.001953125 : f32
    %1208 = vector.broadcast %cst_714 : f32 to vector<8x1xf32>
    %1209 = arith.mulf %1207, %1208 : vector<8x1xf32>
    %1210 = arith.mulf %1204, %1204 : vector<8x1xf32>
    %1211 = arith.subf %1209, %1210 : vector<8x1xf32>
    %1212 = vector.broadcast %1204 : vector<8x1xf32> to vector<8x512xf32>
    %1213 = arith.subf %1200, %1212 : vector<8x512xf32>
    %cst_715 = arith.constant 9.99999974E-6 : f32
    %1214 = vector.broadcast %cst_715 : f32 to vector<8x1xf32>
    %1215 = arith.addf %1211, %1214 : vector<8x1xf32>
    %1216 = math.rsqrt %1215 : vector<8x1xf32>
    %1217 = vector.broadcast %1216 : vector<8x1xf32> to vector<8x512xf32>
    %1218 = arith.mulf %1213, %1217 : vector<8x512xf32>
    %cst_716 = arith.constant 0.00999999977 : f32
    %1219 = vector.broadcast %cst_716 : f32 to vector<8x512xf32>
    %1220 = arith.mulf %1219, %1218 : vector<8x512xf32>
    %1221 = arith.maximumf %1218, %1220 : vector<8x512xf32>
    %c0_717 = arith.constant 0 : index
    %c0_718 = arith.constant 0 : index
    %c0_719 = arith.constant 0 : index
    %1222 = vector.load %arg1[%c0_717, %c0_718, %c0_719] : memref<1x8x512xf32, #tpu.memory_space<vmem>>, vector<1x8x512xf32>
    %1223 = vector.shape_cast %1222 : vector<1x8x512xf32> to vector<8x512xf32>
    %1224 = arith.addf %1221, %1223 : vector<8x512xf32>
    %c0_720 = arith.constant 0 : index
    %c0_721 = arith.constant 0 : index
    %c0_722 = arith.constant 0 : index
    %1225 = vector.load %arg5[%c0_720, %c0_721, %c0_722] : memref<1x8x512xf32, #tpu.memory_space<vmem>>, vector<1x8x512xf32>
    %1226 = vector.shape_cast %1225 : vector<1x8x512xf32> to vector<8x512xf32>
    %1227 = vector.shape_cast %1224 : vector<8x512xf32> to vector<1x8x512xf32>
    tpu.vector_store %arg5[%c0_720, %c0_721, %c0_722], %1227 {strides = array<i32>} : memref<1x8x512xf32, #tpu.memory_space<vmem>>, vector<1x8x512xf32>,
    return
  }
  func.func @transform_0(%arg0: i32) -> (i32, i32, i32) {
    %c0_i32 = arith.constant 0 : i32
    %c0_i32_0 = arith.constant 0 : i32
    %c0_i32_1 = arith.constant 0 : i32
    return %arg0, %c0_i32, %c0_i32_0 : i32, i32, i32
  }
  func.func @transform_1(%arg0: i32) -> (i32, i32, i32) {
    %c0_i32 = arith.constant 0 : i32
    %c0_i32_0 = arith.constant 0 : i32
    %c0_i32_1 = arith.constant 0 : i32
    %c0_i32_2 = arith.constant 0 : i32
    return %c0_i32, %c0_i32_0, %c0_i32_1 : i32, i32, i32
  }
  func.func @transform_2(%arg0: i32) -> (i32, i32, i32) {
    %c0_i32 = arith.constant 0 : i32
    %c0_i32_0 = arith.constant 0 : i32
    %c0_i32_1 = arith.constant 0 : i32
    %c0_i32_2 = arith.constant 0 : i32
    return %c0_i32, %c0_i32_0, %c0_i32_1 : i32, i32, i32
  }
  func.func @transform_3(%arg0: i32) -> (i32, i32) {
    %c0_i32 = arith.constant 0 : i32
    %c0_i32_0 = arith.constant 0 : i32
    %c0_i32_1 = arith.constant 0 : i32
    return %c0_i32, %c0_i32_0 : i32, i32
  }
  func.func @transform_4(%arg0: i32) -> (i32, i32, i32) {
    %c0_i32 = arith.constant 0 : i32
    %c0_i32_0 = arith.constant 0 : i32
    %c0_i32_1 = arith.constant 0 : i32
    return %arg0, %c0_i32, %c0_i32_0 : i32, i32, i32
  }
}

</mosaic_0001>

<llo_original>
// kernel: tpu_custom_call.1
$region0: #{tpu_custom_call.1}
  #allocation0 [shape = 'u32[]', space=smem, size = 0x4, offset = 0x4, fixed_abs, tag = 'smem constant byte address 0x4 - core index']
  #allocation1 [shape = 'u32[144,128]{1,0:T(1,128)}', space=vmem, size = 0x12000, scoped, tag = 'internal scratch']
  #allocation2 [shape = 'f32[72,512]{1,0:T(8,128)}', space=vmem, size = 0x24000, scoped, tag = 'scratch operand']
  %s0 = inlined_call_operand.vmem [shape: f32[2,8,512], index: 0, kind: input, shape index: {}]
  %s1 = inlined_call_operand.vmem [shape: f32[3,72,8], index: 1, kind: input, shape index: {}]
  %s2 = inlined_call_operand.vmem [shape: f32[3,72,8], index: 2, kind: input, shape index: {}]
  %s3 = inlined_call_operand.vmem [shape: s32[3,512], index: 3, kind: input, shape index: {}]
  %s4 = inlined_call_operand.hbm [shape: f32[2,8,512], index: 4, kind: output, shape index: {}]
  %s5 = sld [smem:[#allocation0]]
  $region49: #{tpu_custom_call.1} parent=0
    _
  %s7 = ssub.s32 1, %s5
  %s8 = scalar_select 0, %s7, %s5
  $region1: #{tpu_custom_call.1} parent=0
    #allocation3 [shape = 'u8[32768]{0}', space=vmem, size = 0x8000, scoped, tag = 'output window, operand 0']
    #allocation4 [shape = 's32[2]{0}', space=sflag, size = 0x8, scoped, tag = 'scoped memory for tpu_custom_call.1']
    %9 = vsyncpa [#allocation4], 0
    %s10 = scalar_lea.sflag [#allocation4], 1
    %11 = vsyncpa %s10, 0
    loop: start=0, step=1, limit=4
    $region2: #{tpu_custom_call.1} parent=1 // loop_pre_header
      _
    $region3: #{tpu_custom_call.1} parent=1 // loop_header
      %s13 = sphi 0, %s17
      %p14 = scmp.ge.s32.totalorder %s13, 4
      %s23 = sphi 0, %s25
      %s26 = sphi 0, %s23
      %s27 = sphi 0, %s26
      %s43 = sphi 0, %s27
      %s47 = sphi 0, %s47
      %s49 = sphi 0, %s47
      %s50 = sphi 0, %s49
      %s64 = sphi 0, %s50
      %s68 = sphi 0, %s68
      %s70 = sphi 0, %s68
      %s71 = sphi 0, %s70
      %s85 = sphi 0, %s71
      %s89 = sphi 0, %s89
      %s91 = sphi 0, %s89
      %s92 = sphi 0, %s91
      %s106 = sphi 0, %s92
      %s112 = sphi 0, %s114
      %s115 = sphi 0, %s112
      %s116 = sphi 0, %s115
      %s132 = sphi 0, %s116
    $region4: #{tpu_custom_call.1} parent=1 // loop_header_branch
      %16 = sbr.rel (%p14) target = $region8
    $region5: #{tpu_custom_call.1} parent=1 // loop_body
      %s18 = ssub.s32 %s13, 1
      %s19 = ssub.s32 %s13, 2
      %s20 = sadd.s32 %s13, 1
      %s21 = ssub.s32 %s13, %s20
      %p22 = scmp.eq.s32.totalorder %s21, 0
      %s24 = sadd.s32 %s23, 1
      %s25 = scalar_select %p22, %s23, %s24
      %p28 = pneg %p22
      %p29 = scmp.eq.s32.totalorder %s13, 1
      %p30 = por %p28, %p29
      %p31 = scmp.ne.s32.totalorder %s23, %s26
      %p32 = scmp.eq.s32.totalorder %s13, 0
      %p33 = por %p31, %p32
      %p34 = scmp.ne.s32.totalorder %s23, %s26
      %p35 = scmp.eq.s32.totalorder %s18, 1
      %p36 = por %p34, %p35
      %p37 = scmp.ne.s32.totalorder %s26, %s27
      %p38 = scmp.eq.s32.totalorder %s18, 0
      %p39 = por %p37, %p38
      %p40 = scmp.ne.s32.totalorder %s26, %s27
      %p41 = scmp.eq.s32.totalorder %s19, 1
      %p42 = por %p40, %p41
      %p44 = scmp.ne.s32.totalorder %s27, %s43
      %p45 = scmp.eq.s32.totalorder %s19, 0
      %p46 = por %p44, %p45
      %s48 = sadd.s32 %s47, 1
      %p51 = scmp.eq.s32.totalorder %s13, 1
      %p52 = scmp.ne.s32.totalorder %s47, %s49
      %p53 = scmp.eq.s32.totalorder %s13, 0
      %p54 = por %p52, %p53
      %p55 = scmp.ne.s32.totalorder %s47, %s49
      %p56 = scmp.eq.s32.totalorder %s18, 1
      %p57 = por %p55, %p56
      %p58 = scmp.ne.s32.totalorder %s49, %s50
      %p59 = scmp.eq.s32.totalorder %s18, 0
      %p60 = por %p58, %p59
      %p61 = scmp.ne.s32.totalorder %s49, %s50
      %p62 = scmp.eq.s32.totalorder %s19, 1
      %p63 = por %p61, %p62
      %p65 = scmp.ne.s32.totalorder %s50, %s64
      %p66 = scmp.eq.s32.totalorder %s19, 0
      %p67 = por %p65, %p66
      %s69 = sadd.s32 %s68, 1
      %p72 = scmp.eq.s32.totalorder %s13, 1
      %p73 = scmp.ne.s32.totalorder %s68, %s70
      %p74 = scmp.eq.s32.totalorder %s13, 0
      %p75 = por %p73, %p74
      %p76 = scmp.ne.s32.totalorder %s68, %s70
      %p77 = scmp.eq.s32.totalorder %s18, 1
      %p78 = por %p76, %p77
      %p79 = scmp.ne.s32.totalorder %s70, %s71
      %p80 = scmp.eq.s32.totalorder %s18, 0
      %p81 = por %p79, %p80
      %p82 = scmp.ne.s32.totalorder %s70, %s71
      %p83 = scmp.eq.s32.totalorder %s19, 1
      %p84 = por %p82, %p83
      %p86 = scmp.ne.s32.totalorder %s71, %s85
      %p87 = scmp.eq.s32.totalorder %s19, 0
      %p88 = por %p86, %p87
      %s90 = sadd.s32 %s89, 1
      %p93 = scmp.eq.s32.totalorder %s13, 1
      %p94 = scmp.ne.s32.totalorder %s89, %s91
      %p95 = scmp.eq.s32.totalorder %s13, 0
      %p96 = por %p94, %p95
      %p97 = scmp.ne.s32.totalorder %s89, %s91
      %p98 = scmp.eq.s32.totalorder %s18, 1
      %p99 = por %p97, %p98
      %p100 = scmp.ne.s32.totalorder %s91, %s92
      %p101 = scmp.eq.s32.totalorder %s18, 0
      %p102 = por %p100, %p101
      %p103 = scmp.ne.s32.totalorder %s91, %s92
      %p104 = scmp.eq.s32.totalorder %s19, 1
      %p105 = por %p103, %p104
      %p107 = scmp.ne.s32.totalorder %s92, %s106
      %p108 = scmp.eq.s32.totalorder %s19, 0
      %p109 = por %p107, %p108
      %s110 = ssub.s32 %s13, %s20
      %p111 = scmp.eq.s32.totalorder %s110, 0
      %s113 = sadd.s32 %s112, 1
      %s114 = scalar_select %p111, %s112, %s113
      %p117 = pneg %p111
      %p118 = scmp.eq.s32.totalorder %s13, 1
      %p119 = por %p117, %p118
      %p120 = scmp.ne.s32.totalorder %s112, %s115
      %p121 = scmp.eq.s32.totalorder %s13, 0
      %p122 = por %p120, %p121
      %p123 = scmp.ne.s32.totalorder %s112, %s115
      %p124 = scmp.eq.s32.totalorder %s18, 1
      %p125 = por %p123, %p124
      %p126 = scmp.ne.s32.totalorder %s115, %s116
      %p127 = scmp.eq.s32.totalorder %s18, 0
      %p128 = por %p126, %p127
      %p129 = scmp.ne.s32.totalorder %s115, %s116
      %p130 = scmp.eq.s32.totalorder %s19, 1
      %p131 = por %p129, %p130
      %p133 = scmp.ne.s32.totalorder %s116, %s132
      %p134 = scmp.eq.s32.totalorder %s19, 0
      %p135 = por %p133, %p134
      %p136 = scmp.le.s32.totalorder 1, %s13
      %p137 = scmp.lt.s32.totalorder %s13, 3
      %p138 = pnand %p136, %p137
      %p139 = pneg %p138
      // Predicated region
      $region9: #{tpu_custom_call.1} parent=5 // pred_check
        _
      $region10: #{tpu_custom_call.1} parent=5 // pred_check_branch
        %141 = sbr.rel (%p138) target = $region12
      $region11: #{tpu_custom_call.1} parent=5 // pred_region
        %s142 = ssub.s32 %s13, 1
        // Predicated region
        $region13: #{tpu_custom_call.1} parent=11 // pred_check
          %p143 = pneg %p60
        $region14: #{tpu_custom_call.1} parent=11 // pred_check_branch
          %145 = sbr.rel (%p143) target = $region16
        $region15: #{tpu_custom_call.1} parent=11 // pred_region
          _
        $region16: #{tpu_custom_call.1} parent=11 // pred_fallthru
          _
        // Predicated region
        $region17: #{tpu_custom_call.1} parent=11 // pred_check
          %p146 = pneg %p81
        $region18: #{tpu_custom_call.1} parent=11 // pred_check_branch
          %148 = sbr.rel (%p146) target = $region20
        $region19: #{tpu_custom_call.1} parent=11 // pred_region
          _
        $region20: #{tpu_custom_call.1} parent=11 // pred_fallthru
          _
        // Predicated region
        $region21: #{tpu_custom_call.1} parent=11 // pred_check
          %p149 = pneg %p102
        $region22: #{tpu_custom_call.1} parent=11 // pred_check_branch
          %151 = sbr.rel (%p149) target = $region24
        $region23: #{tpu_custom_call.1} parent=11 // pred_region
          _
        $region24: #{tpu_custom_call.1} parent=11 // pred_fallthru
          _
      $region12: #{tpu_custom_call.1} parent=5 // pred_fallthru
        _
      %p152 = scmp.lt.s32.totalorder %s13, 2
      // Predicated region
      $region25: #{tpu_custom_call.1} parent=5 // pred_check
        %p153 = pneg %p152
      $region26: #{tpu_custom_call.1} parent=5 // pred_check_branch
        %155 = sbr.rel (%p153) target = $region28
      $region27: #{tpu_custom_call.1} parent=5 // pred_region
        // Predicated region
        $region29: #{tpu_custom_call.1} parent=27 // pred_check
          %p156 = pneg %p33
        $region30: #{tpu_custom_call.1} parent=27 // pred_check_branch
          %158 = sbr.rel (%p156) target = $region32
        $region31: #{tpu_custom_call.1} parent=27 // pred_region
          %p159 = scmp.lt.s32.totalorder %s13, 1
          %s160 = scalar_select %p159, %s13, 1
          %s161 = smul.addr %s160, 4
          %s162 = smul.addr %s161, 8
          %s163 = scalar_lea.vmem %s0, %s162
        $region32: #{tpu_custom_call.1} parent=27 // pred_fallthru
          _
      $region28: #{tpu_custom_call.1} parent=5 // pred_fallthru
        _
      %p164 = scmp.le.s32.totalorder 1, %s13
      %p165 = scmp.lt.s32.totalorder %s13, 3
      %p166 = pnand %p164, %p165
      %p167 = pneg %p166
      // Predicated region
      $region33: #{tpu_custom_call.1} parent=5 // pred_check
        _
      $region34: #{tpu_custom_call.1} parent=5 // pred_check_branch
        %169 = sbr.rel (%p166) target = $region36
      $region35: #{tpu_custom_call.1} parent=5 // pred_region
        %s170 = ssub.s32 %s13, 1
        %p171 = scmp.lt.s32.totalorder %s18, 1
        %s172 = scalar_select %p171, %s18, 1
        %s173 = smul.addr %s172, 4
        %s174 = smul.addr %s173, 8
        %s175 = scalar_lea.vmem %s0, %s174
        %p176 = pneg %p39
        %p177 = pneg %p36
        %p178 = pneg %p60
        %p179 = pneg %p57
        %p180 = pneg %p81
        %p181 = pneg %p78
        %p182 = pneg %p102
        %p183 = pneg %p99
        %p184 = pneg %p128
        %p185 = pneg %p125
        %s186 = sand.u32 %s115, 1
        %s187 = scalar_lea.sflag [#allocation4], %s186
        %s188 = sand.u32 %s115, 1
        %s189 = smul.addr %s188, 32
        %s190 = scalar_lea.vmem [#allocation3], %s189
        %p191 = scmp.lt.s32.totalorder %s18, 1
        %s192 = scalar_select %p191, %s18, 1
        %s193 = smul.addr %s192, 4
        %s194 = smul.addr %s193, 8
        %s195 = scalar_lea.vmem %s0, %s194
        %v196 = vld [vmem:[%s195] sm:$0xff]
        %v197 = vld [vmem:[%s195 + $0x8] sm:$0xff]
        %v198 = vld [vmem:[%s195 + $0x10] sm:$0xff]
        %v199 = vld [vmem:[%s195 + $0x18] sm:$0xff]
        %v200 = vld [vmem:[%s3] ss:$4 sm:$0xf]
        %v201 = vadd.s32 %v200, 4294967295
        %vm202 = vcmp.ge.s32.totalorder %v201, 0
        %vm203 = vcmp.lt.s32.totalorder %v201, 8
        %vm204 = vmand %vm202, %vm203
        %v205 = vsel %vm204, 1.0, 0.0
        %s206 = scalar_lea.vmem %s3, 1
        %v207 = vld [vmem:[%s206] ss:$4 sm:$0xf]
        %v208 = vadd.s32 %v207, 4294967295
        %vm209 = vcmp.ge.s32.totalorder %v208, 0
        %vm210 = vcmp.lt.s32.totalorder %v208, 8
        %vm211 = vmand %vm209, %vm210
        %v212 = vsel %vm211, 1.0, 0.0
        %v213 = vmul.f32 %v205, %v212
        %s214 = scalar_lea.vmem %s3, 2
        %v215 = vld [vmem:[%s214] ss:$4 sm:$0xf]
        %v216 = vadd.s32 %v215, 4294967295
        %vm217 = vcmp.ge.s32.totalorder %v216, 0
        %vm218 = vcmp.lt.s32.totalorder %v216, 8
        %vm219 = vmand %vm217, %vm218
        %v220 = vsel %vm219, 1.0, 0.0
        %v221 = vmul.f32 %v213, %v220
        %222 = vrot.lane.b32.xlu0 %v196, 73
        %v223 = vpop.permute.xlu0 %222
        %224 = vrot.lane.b32.xlu0 %v197, 73
        %v225 = vpop.permute.xlu0 %224
        %226 = vrot.lane.b32.xlu0 %v198, 73
        %v227 = vpop.permute.xlu0 %226
        %228 = vrot.lane.b32.xlu0 %v199, 73
        %v229 = vpop.permute.xlu0 %228
        %v230 = vlaneseq
        %v231 = vand.u32 %v230, 127
        %vm232 = vcmp.lt.s32.totalorder %v231, 73
        %v233 = vsel %vm232, %v227, %v229
        %v234 = vsel %vm232, %v225, %v227
        %v235 = vsel %vm232, %v223, %v225
        %v236 = vsel %vm232, %v229, %v223
        %v238 = vlaneseq
        %v239 = vshrl.u32 %v238, 7
        %v240 = vsub.s32 0, %v239
        %v241 = vrot.slane %v221, %v240
        %v242 = vlaneseq
        %v243 = vshrl.u32 %v242, 7
        %v244 = vsub.s32 1, %v243
        %v245 = vrot.slane %v221, %v244
        %v246 = vlaneseq
        %v247 = vshrl.u32 %v246, 7
        %v248 = vsub.s32 2, %v247
        %v249 = vrot.slane %v221, %v248
        %v250 = vlaneseq
        %v251 = vshrl.u32 %v250, 7
        %v252 = vsub.s32 3, %v251
        %v253 = vrot.slane %v221, %v252
        %v258 = vmul.f32 %v236, %v241
        %v259 = vmul.f32 %v235, %v245
        %v260 = vmul.f32 %v234, %v249
        %v261 = vmul.f32 %v233, %v253
        %262 = vst [vmem:[#allocation2] sm:$0xff] %v258
        %263 = vst [vmem:[#allocation2 + $0x8] sm:$0xff] %v259
        %264 = vst [vmem:[#allocation2 + $0x10] sm:$0xff] %v260
        %265 = vst [vmem:[#allocation2 + $0x18] sm:$0xff] %v261
        %v266 = vld [vmem:[%s214] ss:$4 sm:$0xf]
        %vm267 = vcmp.ge.s32.totalorder %v266, 0
        %vm268 = vcmp.lt.s32.totalorder %v266, 8
        %vm269 = vmand %vm267, %vm268
        %v270 = vsel %vm269, 1.0, 0.0
        %v271 = vmul.f32 %v213, %v270
        %272 = vrot.lane.b32.xlu0 %v196, 72
        %v273 = vpop.permute.xlu0 %272
        %274 = vrot.lane.b32.xlu0 %v197, 72
        %v275 = vpop.permute.xlu0 %274
        %276 = vrot.lane.b32.xlu0 %v198, 72
        %v277 = vpop.permute.xlu0 %276
        %278 = vrot.lane.b32.xlu0 %v199, 72
        %v279 = vpop.permute.xlu0 %278
        %vm280 = vcmp.lt.s32.totalorder %v231, 72
        %v281 = vsel %vm280, %v277, %v279
        %v282 = vsel %vm280, %v275, %v277
        %v283 = vsel %vm280, %v273, %v275
        %v284 = vsel %vm280, %v279, %v273
        %v286 = vlaneseq
        %v287 = vshrl.u32 %v286, 7
        %v288 = vsub.s32 0, %v287
        %v289 = vrot.slane %v271, %v288
        %v290 = vlaneseq
        %v291 = vshrl.u32 %v290, 7
        %v292 = vsub.s32 1, %v291
        %v293 = vrot.slane %v271, %v292
        %v294 = vlaneseq
        %v295 = vshrl.u32 %v294, 7
        %v296 = vsub.s32 2, %v295
        %v297 = vrot.slane %v271, %v296
        %v298 = vlaneseq
        %v299 = vshrl.u32 %v298, 7
        %v300 = vsub.s32 3, %v299
        %v301 = vrot.slane %v271, %v300
        %v306 = vmul.f32 %v284, %v289
        %v307 = vmul.f32 %v283, %v293
        %v308 = vmul.f32 %v282, %v297
        %v309 = vmul.f32 %v281, %v301
        %310 = vst [vmem:[#allocation2 + $0x20] sm:$0xff] %v306
        %311 = vst [vmem:[#allocation2 + $0x28] sm:$0xff] %v307
        %312 = vst [vmem:[#allocation2 + $0x30] sm:$0xff] %v308
        %313 = vst [vmem:[#allocation2 + $0x38] sm:$0xff] %v309
        %v314 = vld [vmem:[%s214] ss:$4 sm:$0xf]
        %v315 = vadd.s32 %v314, 1
        %vm316 = vcmp.ge.s32.totalorder %v315, 0
        %vm317 = vcmp.lt.s32.totalorder %v315, 8
        %vm318 = vmand %vm316, %vm317
        %v319 = vsel %vm318, 1.0, 0.0
        %v320 = vmul.f32 %v213, %v319
        %321 = vrot.lane.b32.xlu0 %v196, 71
        %v322 = vpop.permute.xlu0 %321
        %323 = vrot.lane.b32.xlu0 %v197, 71
        %v324 = vpop.permute.xlu0 %323
        %325 = vrot.lane.b32.xlu0 %v198, 71
        %v326 = vpop.permute.xlu0 %325
        %327 = vrot.lane.b32.xlu0 %v199, 71
        %v328 = vpop.permute.xlu0 %327
        %vm329 = vcmp.lt.s32.totalorder %v231, 71
        %v330 = vsel %vm329, %v326, %v328
        %v331 = vsel %vm329, %v324, %v326
        %v332 = vsel %vm329, %v322, %v324
        %v333 = vsel %vm329, %v328, %v322
        %v335 = vlaneseq
        %v336 = vshrl.u32 %v335, 7
        %v337 = vsub.s32 0, %v336
        %v338 = vrot.slane %v320, %v337
        %v339 = vlaneseq
        %v340 = vshrl.u32 %v339, 7
        %v341 = vsub.s32 1, %v340
        %v342 = vrot.slane %v320, %v341
        %v343 = vlaneseq
        %v344 = vshrl.u32 %v343, 7
        %v345 = vsub.s32 2, %v344
        %v346 = vrot.slane %v320, %v345
        %v347 = vlaneseq
        %v348 = vshrl.u32 %v347, 7
        %v349 = vsub.s32 3, %v348
        %v350 = vrot.slane %v320, %v349
        %v355 = vmul.f32 %v333, %v338
        %v356 = vmul.f32 %v332, %v342
        %v357 = vmul.f32 %v331, %v346
        %v358 = vmul.f32 %v330, %v350
        %359 = vst [vmem:[#allocation2 + $0x40] sm:$0xff] %v355
        %360 = vst [vmem:[#allocation2 + $0x48] sm:$0xff] %v356
        %361 = vst [vmem:[#allocation2 + $0x50] sm:$0xff] %v357
        %362 = vst [vmem:[#allocation2 + $0x58] sm:$0xff] %v358
        %v363 = vld [vmem:[%s206] ss:$4 sm:$0xf]
        %vm364 = vcmp.ge.s32.totalorder %v363, 0
        %vm365 = vcmp.lt.s32.totalorder %v363, 8
        %vm366 = vmand %vm364, %vm365
        %v367 = vsel %vm366, 1.0, 0.0
        %v368 = vmul.f32 %v205, %v367
        %v369 = vld [vmem:[%s214] ss:$4 sm:$0xf]
        %v370 = vadd.s32 %v369, 4294967295
        %vm371 = vcmp.ge.s32.totalorder %v370, 0
        %vm372 = vcmp.lt.s32.totalorder %v370, 8
        %vm373 = vmand %vm371, %vm372
        %v374 = vsel %vm373, 1.0, 0.0
        %v375 = vmul.f32 %v368, %v374
        %376 = vrot.lane.b32.xlu0 %v196, 65
        %v377 = vpop.permute.xlu0 %376
        %378 = vrot.lane.b32.xlu0 %v197, 65
        %v379 = vpop.permute.xlu0 %378
        %380 = vrot.lane.b32.xlu0 %v198, 65
        %v381 = vpop.permute.xlu0 %380
        %382 = vrot.lane.b32.xlu0 %v199, 65
        %v383 = vpop.permute.xlu0 %382
        %vm384 = vcmp.lt.s32.totalorder %v231, 65
        %v385 = vsel %vm384, %v381, %v383
        %v386 = vsel %vm384, %v379, %v381
        %v387 = vsel %vm384, %v377, %v379
        %v388 = vsel %vm384, %v383, %v377
        %v390 = vlaneseq
        %v391 = vshrl.u32 %v390, 7
        %v392 = vsub.s32 0, %v391
        %v393 = vrot.slane %v375, %v392
        %v394 = vlaneseq
        %v395 = vshrl.u32 %v394, 7
        %v396 = vsub.s32 1, %v395
        %v397 = vrot.slane %v375, %v396
        %v398 = vlaneseq
        %v399 = vshrl.u32 %v398, 7
        %v400 = vsub.s32 2, %v399
        %v401 = vrot.slane %v375, %v400
        %v402 = vlaneseq
        %v403 = vshrl.u32 %v402, 7
        %v404 = vsub.s32 3, %v403
        %v405 = vrot.slane %v375, %v404
        %v410 = vmul.f32 %v388, %v393
        %v411 = vmul.f32 %v387, %v397
        %v412 = vmul.f32 %v386, %v401
        %v413 = vmul.f32 %v385, %v405
        %414 = vst [vmem:[#allocation2 + $0x60] sm:$0xff] %v410
        %415 = vst [vmem:[#allocation2 + $0x68] sm:$0xff] %v411
        %416 = vst [vmem:[#allocation2 + $0x70] sm:$0xff] %v412
        %417 = vst [vmem:[#allocation2 + $0x78] sm:$0xff] %v413
        %v418 = vld [vmem:[%s214] ss:$4 sm:$0xf]
        %vm419 = vcmp.ge.s32.totalorder %v418, 0
        %vm420 = vcmp.lt.s32.totalorder %v418, 8
        %vm421 = vmand %vm419, %vm420
        %v422 = vsel %vm421, 1.0, 0.0
        %v423 = vmul.f32 %v368, %v422
        %424 = vrot.lane.b32.xlu0 %v196, 64
        %v425 = vpop.permute.xlu0 %424
        %426 = vrot.lane.b32.xlu0 %v197, 64
        %v427 = vpop.permute.xlu0 %426
        %428 = vrot.lane.b32.xlu0 %v198, 64
        %v429 = vpop.permute.xlu0 %428
        %430 = vrot.lane.b32.xlu0 %v199, 64
        %v431 = vpop.permute.xlu0 %430
        %vm432 = vcmp.lt.s32.totalorder %v231, 64
        %v433 = vsel %vm432, %v429, %v431
        %v434 = vsel %vm432, %v427, %v429
        %v435 = vsel %vm432, %v425, %v427
        %v436 = vsel %vm432, %v431, %v425
        %v438 = vlaneseq
        %v439 = vshrl.u32 %v438, 7
        %v440 = vsub.s32 0, %v439
        %v441 = vrot.slane %v423, %v440
        %v442 = vlaneseq
        %v443 = vshrl.u32 %v442, 7
        %v444 = vsub.s32 1, %v443
        %v445 = vrot.slane %v423, %v444
        %v446 = vlaneseq
        %v447 = vshrl.u32 %v446, 7
        %v448 = vsub.s32 2, %v447
        %v449 = vrot.slane %v423, %v448
        %v450 = vlaneseq
        %v451 = vshrl.u32 %v450, 7
        %v452 = vsub.s32 3, %v451
        %v453 = vrot.slane %v423, %v452
        %v458 = vmul.f32 %v436, %v441
        %v459 = vmul.f32 %v435, %v445
        %v460 = vmul.f32 %v434, %v449
        %v461 = vmul.f32 %v433, %v453
        %462 = vst [vmem:[#allocation2 + $0x80] sm:$0xff] %v458
        %463 = vst [vmem:[#allocation2 + $0x88] sm:$0xff] %v459
        %464 = vst [vmem:[#allocation2 + $0x90] sm:$0xff] %v460
        %465 = vst [vmem:[#allocation2 + $0x98] sm:$0xff] %v461
        %v466 = vld [vmem:[%s214] ss:$4 sm:$0xf]
        %v467 = vadd.s32 %v466, 1
        %vm468 = vcmp.ge.s32.totalorder %v467, 0
        %vm469 = vcmp.lt.s32.totalorder %v467, 8
        %vm470 = vmand %vm468, %vm469
        %v471 = vsel %vm470, 1.0, 0.0
        %v472 = vmul.f32 %v368, %v471
        %473 = vrot.lane.b32.xlu0 %v196, 63
        %v474 = vpop.permute.xlu0 %473
        %475 = vrot.lane.b32.xlu0 %v197, 63
        %v476 = vpop.permute.xlu0 %475
        %477 = vrot.lane.b32.xlu0 %v198, 63
        %v478 = vpop.permute.xlu0 %477
        %479 = vrot.lane.b32.xlu0 %v199, 63
        %v480 = vpop.permute.xlu0 %479
        %vm481 = vcmp.lt.s32.totalorder %v231, 63
        %v482 = vsel %vm481, %v478, %v480
        %v483 = vsel %vm481, %v476, %v478
        %v484 = vsel %vm481, %v474, %v476
        %v485 = vsel %vm481, %v480, %v474
        %v487 = vlaneseq
        %v488 = vshrl.u32 %v487, 7
        %v489 = vsub.s32 0, %v488
        %v490 = vrot.slane %v472, %v489
        %v491 = vlaneseq
        %v492 = vshrl.u32 %v491, 7
        %v493 = vsub.s32 1, %v492
        %v494 = vrot.slane %v472, %v493
        %v495 = vlaneseq
        %v496 = vshrl.u32 %v495, 7
        %v497 = vsub.s32 2, %v496
        %v498 = vrot.slane %v472, %v497
        %v499 = vlaneseq
        %v500 = vshrl.u32 %v499, 7
        %v501 = vsub.s32 3, %v500
        %v502 = vrot.slane %v472, %v501
        %v507 = vmul.f32 %v485, %v490
        %v508 = vmul.f32 %v484, %v494
        %v509 = vmul.f32 %v483, %v498
        %v510 = vmul.f32 %v482, %v502
        %511 = vst [vmem:[#allocation2 + $0xa0] sm:$0xff] %v507
        %512 = vst [vmem:[#allocation2 + $0xa8] sm:$0xff] %v508
        %513 = vst [vmem:[#allocation2 + $0xb0] sm:$0xff] %v509
        %514 = vst [vmem:[#allocation2 + $0xb8] sm:$0xff] %v510
        %v515 = vld [vmem:[%s206] ss:$4 sm:$0xf]
        %v516 = vadd.s32 %v515, 1
        %vm517 = vcmp.ge.s32.totalorder %v516, 0
        %vm518 = vcmp.lt.s32.totalorder %v516, 8
        %vm519 = vmand %vm517, %vm518
        %v520 = vsel %vm519, 1.0, 0.0
        %v521 = vmul.f32 %v205, %v520
        %v522 = vld [vmem:[%s214] ss:$4 sm:$0xf]
        %v523 = vadd.s32 %v522, 4294967295
        %vm524 = vcmp.ge.s32.totalorder %v523, 0
        %vm525 = vcmp.lt.s32.totalorder %v523, 8
        %vm526 = vmand %vm524, %vm525
        %v527 = vsel %vm526, 1.0, 0.0
        %v528 = vmul.f32 %v521, %v527
        %529 = vrot.lane.b32.xlu0 %v196, 57
        %v530 = vpop.permute.xlu0 %529
        %531 = vrot.lane.b32.xlu0 %v197, 57
        %v532 = vpop.permute.xlu0 %531
        %533 = vrot.lane.b32.xlu0 %v198, 57
        %v534 = vpop.permute.xlu0 %533
        %535 = vrot.lane.b32.xlu0 %v199, 57
        %v536 = vpop.permute.xlu0 %535
        %vm537 = vcmp.lt.s32.totalorder %v231, 57
        %v538 = vsel %vm537, %v534, %v536
        %v539 = vsel %vm537, %v532, %v534
        %v540 = vsel %vm537, %v530, %v532
        %v541 = vsel %vm537, %v536, %v530
        %v543 = vlaneseq
        %v544 = vshrl.u32 %v543, 7
        %v545 = vsub.s32 0, %v544
        %v546 = vrot.slane %v528, %v545
        %v547 = vlaneseq
        %v548 = vshrl.u32 %v547, 7
        %v549 = vsub.s32 1, %v548
        %v550 = vrot.slane %v528, %v549
        %v551 = vlaneseq
        %v552 = vshrl.u32 %v551, 7
        %v553 = vsub.s32 2, %v552
        %v554 = vrot.slane %v528, %v553
        %v555 = vlaneseq
        %v556 = vshrl.u32 %v555, 7
        %v557 = vsub.s32 3, %v556
        %v558 = vrot.slane %v528, %v557
        %v563 = vmul.f32 %v541, %v546
        %v564 = vmul.f32 %v540, %v550
        %v565 = vmul.f32 %v539, %v554
        %v566 = vmul.f32 %v538, %v558
        %567 = vst [vmem:[#allocation2 + $0xc0] sm:$0xff] %v563
        %568 = vst [vmem:[#allocation2 + $0xc8] sm:$0xff] %v564
        %569 = vst [vmem:[#allocation2 + $0xd0] sm:$0xff] %v565
        %570 = vst [vmem:[#allocation2 + $0xd8] sm:$0xff] %v566
        %v571 = vld [vmem:[%s214] ss:$4 sm:$0xf]
        %vm572 = vcmp.ge.s32.totalorder %v571, 0
        %vm573 = vcmp.lt.s32.totalorder %v571, 8
        %vm574 = vmand %vm572, %vm573
        %v575 = vsel %vm574, 1.0, 0.0
        %v576 = vmul.f32 %v521, %v575
        %577 = vrot.lane.b32.xlu0 %v196, 56
        %v578 = vpop.permute.xlu0 %577
        %579 = vrot.lane.b32.xlu0 %v197, 56
        %v580 = vpop.permute.xlu0 %579
        %581 = vrot.lane.b32.xlu0 %v198, 56
        %v582 = vpop.permute.xlu0 %581
        %583 = vrot.lane.b32.xlu0 %v199, 56
        %v584 = vpop.permute.xlu0 %583
        %vm585 = vcmp.lt.s32.totalorder %v231, 56
        %v586 = vsel %vm585, %v582, %v584
        %v587 = vsel %vm585, %v580, %v582
        %v588 = vsel %vm585, %v578, %v580
        %v589 = vsel %vm585, %v584, %v578
        %v591 = vlaneseq
        %v592 = vshrl.u32 %v591, 7
        %v593 = vsub.s32 0, %v592
        %v594 = vrot.slane %v576, %v593
        %v595 = vlaneseq
        %v596 = vshrl.u32 %v595, 7
        %v597 = vsub.s32 1, %v596
        %v598 = vrot.slane %v576, %v597
        %v599 = vlaneseq
        %v600 = vshrl.u32 %v599, 7
        %v601 = vsub.s32 2, %v600
        %v602 = vrot.slane %v576, %v601
        %v603 = vlaneseq
        %v604 = vshrl.u32 %v603, 7
        %v605 = vsub.s32 3, %v604
        %v606 = vrot.slane %v576, %v605
        %v611 = vmul.f32 %v589, %v594
        %v612 = vmul.f32 %v588, %v598
        %v613 = vmul.f32 %v587, %v602
        %v614 = vmul.f32 %v586, %v606
        %615 = vst [vmem:[#allocation2 + $0xe0] sm:$0xff] %v611
        %616 = vst [vmem:[#allocation2 + $0xe8] sm:$0xff] %v612
        %617 = vst [vmem:[#allocation2 + $0xf0] sm:$0xff] %v613
        %618 = vst [vmem:[#allocation2 + $0xf8] sm:$0xff] %v614
        %v619 = vld [vmem:[%s214] ss:$4 sm:$0xf]
        %v620 = vadd.s32 %v619, 1
        %vm621 = vcmp.ge.s32.totalorder %v620, 0
        %vm622 = vcmp.lt.s32.totalorder %v620, 8
        %vm623 = vmand %vm621, %vm622
        %v624 = vsel %vm623, 1.0, 0.0
        %v625 = vmul.f32 %v521, %v624
        %626 = vrot.lane.b32.xlu0 %v196, 55
        %v627 = vpop.permute.xlu0 %626
        %628 = vrot.lane.b32.xlu0 %v197, 55
        %v629 = vpop.permute.xlu0 %628
        %630 = vrot.lane.b32.xlu0 %v198, 55
        %v631 = vpop.permute.xlu0 %630
        %632 = vrot.lane.b32.xlu0 %v199, 55
        %v633 = vpop.permute.xlu0 %632
        %vm634 = vcmp.lt.s32.totalorder %v231, 55
        %v635 = vsel %vm634, %v631, %v633
        %v636 = vsel %vm634, %v629, %v631
        %v637 = vsel %vm634, %v627, %v629
        %v638 = vsel %vm634, %v633, %v627
        %v640 = vlaneseq
        %v641 = vshrl.u32 %v640, 7
        %v642 = vsub.s32 0, %v641
        %v643 = vrot.slane %v625, %v642
        %v644 = vlaneseq
        %v645 = vshrl.u32 %v644, 7
        %v646 = vsub.s32 1, %v645
        %v647 = vrot.slane %v625, %v646
        %v648 = vlaneseq
        %v649 = vshrl.u32 %v648, 7
        %v650 = vsub.s32 2, %v649
        %v651 = vrot.slane %v625, %v650
        %v652 = vlaneseq
        %v653 = vshrl.u32 %v652, 7
        %v654 = vsub.s32 3, %v653
        %v655 = vrot.slane %v625, %v654
        %v660 = vmul.f32 %v638, %v643
        %v661 = vmul.f32 %v637, %v647
        %v662 = vmul.f32 %v636, %v651
        %v663 = vmul.f32 %v635, %v655
        %664 = vst [vmem:[#allocation2 + $0x100] sm:$0xff] %v660
        %665 = vst [vmem:[#allocation2 + $0x108] sm:$0xff] %v661
        %666 = vst [vmem:[#allocation2 + $0x110] sm:$0xff] %v662
        %667 = vst [vmem:[#allocation2 + $0x118] sm:$0xff] %v663
        %v668 = vld [vmem:[#allocation2] sm:$0xff]
        %v669 = vld [vmem:[#allocation2 + $0x8] sm:$0xff]
        %v670 = vld [vmem:[#allocation2 + $0x10] sm:$0xff]
        %v671 = vld [vmem:[#allocation2 + $0x18] sm:$0xff]
        %v672 = vld [vmem:[#allocation2 + $0x20] sm:$0xff]
        %v673 = vld [vmem:[#allocation2 + $0x28] sm:$0xff]
        %v674 = vld [vmem:[#allocation2 + $0x30] sm:$0xff]
        %v675 = vld [vmem:[#allocation2 + $0x38] sm:$0xff]
        %v676 = vld [vmem:[#allocation2 + $0x40] sm:$0xff]
        %v677 = vld [vmem:[#allocation2 + $0x48] sm:$0xff]
        %v678 = vld [vmem:[#allocation2 + $0x50] sm:$0xff]
        %v679 = vld [vmem:[#allocation2 + $0x58] sm:$0xff]
        %v680 = vld [vmem:[#allocation2 + $0x60] sm:$0xff]
        %v681 = vld [vmem:[#allocation2 + $0x68] sm:$0xff]
        %v682 = vld [vmem:[#allocation2 + $0x70] sm:$0xff]
        %v683 = vld [vmem:[#allocation2 + $0x78] sm:$0xff]
        %v684 = vld [vmem:[#allocation2 + $0x80] sm:$0xff]
        %v685 = vld [vmem:[#allocation2 + $0x88] sm:$0xff]
        %v686 = vld [vmem:[#allocation2 + $0x90] sm:$0xff]
        %v687 = vld [vmem:[#allocation2 + $0x98] sm:$0xff]
        %v688 = vld [vmem:[#allocation2 + $0xa0] sm:$0xff]
        %v689 = vld [vmem:[#allocation2 + $0xa8] sm:$0xff]
        %v690 = vld [vmem:[#allocation2 + $0xb0] sm:$0xff]
        %v691 = vld [vmem:[#allocation2 + $0xb8] sm:$0xff]
        %v692 = vld [vmem:[#allocation2 + $0xc0] sm:$0xff]
        %v693 = vld [vmem:[#allocation2 + $0xc8] sm:$0xff]
        %v694 = vld [vmem:[#allocation2 + $0xd0] sm:$0xff]
        %v695 = vld [vmem:[#allocation2 + $0xd8] sm:$0xff]
        %v696 = vld [vmem:[#allocation2 + $0xe0] sm:$0xff]
        %v697 = vld [vmem:[#allocation2 + $0xe8] sm:$0xff]
        %v698 = vld [vmem:[#allocation2 + $0xf0] sm:$0xff]
        %v699 = vld [vmem:[#allocation2 + $0xf8] sm:$0xff]
        %v700 = vld [vmem:[#allocation2 + $0x100] sm:$0xff]
        %v701 = vld [vmem:[#allocation2 + $0x108] sm:$0xff]
        %v702 = vld [vmem:[#allocation2 + $0x110] sm:$0xff]
        %v703 = vld [vmem:[#allocation2 + $0x118] sm:$0xff]
        %v704 = vld [vmem:[%s1] sm:$0xff]
        %v705 = vld [vmem:[%s1 + $0x8] sm:$0xff]
        %v706 = vld [vmem:[%s1 + $0x10] sm:$0xff]
        %v707 = vld [vmem:[%s1 + $0x18] sm:$0xff]
        %v708 = vld [vmem:[%s1 + $0x20] sm:$0xff]
        %v709 = vld [vmem:[%s1 + $0x28] sm:$0xff]
        %v710 = vld [vmem:[%s1 + $0x30] sm:$0xff]
        %v711 = vld [vmem:[%s1 + $0x38] sm:$0xff]
        %v712 = vld [vmem:[%s1 + $0x40] sm:$0xff]
        %713 = vxpose.xlu0.b32.start [1/16] %v668, 128
        %714 = vxpose.xlu0.b32.cont [2/16] %v672, 128
        %715 = vxpose.xlu0.b32.cont [3/16] %v676, 128
        %716 = vxpose.xlu0.b32.cont [4/16] %v680, 128
        %717 = vxpose.xlu0.b32.cont [5/16] %v684, 128
        %718 = vxpose.xlu0.b32.cont [6/16] %v688, 128
        %719 = vxpose.xlu0.b32.cont [7/16] %v692, 128
        %720 = vxpose.xlu0.b32.cont [8/16] %v696, 128
        %721 = vxpose.xlu0.b32.cont [9/16] %v700, 128
        %722 = vxpose.xlu0.b32.cont [10/16] 0.0, 128
        %723 = vxpose.xlu0.b32.cont [11/16] 0.0, 128
        %724 = vxpose.xlu0.b32.cont [12/16] 0.0, 128
        %725 = vxpose.xlu0.b32.cont [13/16] 0.0, 128
        %726 = vxpose.xlu0.b32.cont [14/16] 0.0, 128
        %727 = vxpose.xlu0.b32.cont [15/16] 0.0, 128
        %728 = vxpose.xlu0.b32.end [16/16] 0.0, 128
        %v729 = vpop.trf.xlu0
        %v730 = vpop.trf.xlu0
        %v731 = vpop.trf.xlu0
        %v732 = vpop.trf.xlu0
        %v733 = vpop.trf.xlu0
        %v734 = vpop.trf.xlu0
        %v735 = vpop.trf.xlu0
        %v736 = vpop.trf.xlu0
        %v737 = vpop.trf.xlu0
        %v738 = vpop.trf.xlu0
        %v739 = vpop.trf.xlu0
        %v740 = vpop.trf.xlu0
        %v741 = vpop.trf.xlu0
        %v742 = vpop.trf.xlu0
        %v743 = vpop.trf.xlu0
        %v744 = vpop.trf.xlu0
        %745 = vxpose.xlu0.b32.start [1/16] %v669, 128
        %746 = vxpose.xlu0.b32.cont [2/16] %v673, 128
        %747 = vxpose.xlu0.b32.cont [3/16] %v677, 128
        %748 = vxpose.xlu0.b32.cont [4/16] %v681, 128
        %749 = vxpose.xlu0.b32.cont [5/16] %v685, 128
        %750 = vxpose.xlu0.b32.cont [6/16] %v689, 128
        %751 = vxpose.xlu0.b32.cont [7/16] %v693, 128
        %752 = vxpose.xlu0.b32.cont [8/16] %v697, 128
        %753 = vxpose.xlu0.b32.cont [9/16] %v701, 128
        %754 = vxpose.xlu0.b32.cont [10/16] 0.0, 128
        %755 = vxpose.xlu0.b32.cont [11/16] 0.0, 128
        %756 = vxpose.xlu0.b32.cont [12/16] 0.0, 128
        %757 = vxpose.xlu0.b32.cont [13/16] 0.0, 128
        %758 = vxpose.xlu0.b32.cont [14/16] 0.0, 128
        %759 = vxpose.xlu0.b32.cont [15/16] 0.0, 128
        %760 = vxpose.xlu0.b32.end [16/16] 0.0, 128
        %v761 = vpop.trf.xlu0
        %v762 = vpop.trf.xlu0
        %v763 = vpop.trf.xlu0
        %v764 = vpop.trf.xlu0
        %v765 = vpop.trf.xlu0
        %v766 = vpop.trf.xlu0
        %v767 = vpop.trf.xlu0
        %v768 = vpop.trf.xlu0
        %v769 = vpop.trf.xlu0
        %v770 = vpop.trf.xlu0
        %v771 = vpop.trf.xlu0
        %v772 = vpop.trf.xlu0
        %v773 = vpop.trf.xlu0
        %v774 = vpop.trf.xlu0
        %v775 = vpop.trf.xlu0
        %v776 = vpop.trf.xlu0
        %777 = vxpose.xlu0.b32.start [1/16] %v670, 128
        %778 = vxpose.xlu0.b32.cont [2/16] %v674, 128
        %779 = vxpose.xlu0.b32.cont [3/16] %v678, 128
        %780 = vxpose.xlu0.b32.cont [4/16] %v682, 128
        %781 = vxpose.xlu0.b32.cont [5/16] %v686, 128
        %782 = vxpose.xlu0.b32.cont [6/16] %v690, 128
        %783 = vxpose.xlu0.b32.cont [7/16] %v694, 128
        %784 = vxpose.xlu0.b32.cont [8/16] %v698, 128
        %785 = vxpose.xlu0.b32.cont [9/16] %v702, 128
        %786 = vxpose.xlu0.b32.cont [10/16] 0.0, 128
        %787 = vxpose.xlu0.b32.cont [11/16] 0.0, 128
        %788 = vxpose.xlu0.b32.cont [12/16] 0.0, 128
        %789 = vxpose.xlu0.b32.cont [13/16] 0.0, 128
        %790 = vxpose.xlu0.b32.cont [14/16] 0.0, 128
        %791 = vxpose.xlu0.b32.cont [15/16] 0.0, 128
        %792 = vxpose.xlu0.b32.end [16/16] 0.0, 128
        %v793 = vpop.trf.xlu0
        %v794 = vpop.trf.xlu0
        %v795 = vpop.trf.xlu0
        %v796 = vpop.trf.xlu0
        %v797 = vpop.trf.xlu0
        %v798 = vpop.trf.xlu0
        %v799 = vpop.trf.xlu0
        %v800 = vpop.trf.xlu0
        %v801 = vpop.trf.xlu0
        %v802 = vpop.trf.xlu0
        %v803 = vpop.trf.xlu0
        %v804 = vpop.trf.xlu0
        %v805 = vpop.trf.xlu0
        %v806 = vpop.trf.xlu0
        %v807 = vpop.trf.xlu0
        %v808 = vpop.trf.xlu0
        %809 = vxpose.xlu0.b32.start [1/16] %v671, 128
        %810 = vxpose.xlu0.b32.cont [2/16] %v675, 128
        %811 = vxpose.xlu0.b32.cont [3/16] %v679, 128
        %812 = vxpose.xlu0.b32.cont [4/16] %v683, 128
        %813 = vxpose.xlu0.b32.cont [5/16] %v687, 128
        %814 = vxpose.xlu0.b32.cont [6/16] %v691, 128
        %815 = vxpose.xlu0.b32.cont [7/16] %v695, 128
        %816 = vxpose.xlu0.b32.cont [8/16] %v699, 128
        %817 = vxpose.xlu0.b32.cont [9/16] %v703, 128
        %818 = vxpose.xlu0.b32.cont [10/16] 0.0, 128
        %819 = vxpose.xlu0.b32.cont [11/16] 0.0, 128
        %820 = vxpose.xlu0.b32.cont [12/16] 0.0, 128
        %821 = vxpose.xlu0.b32.cont [13/16] 0.0, 128
        %822 = vxpose.xlu0.b32.cont [14/16] 0.0, 128
        %823 = vxpose.xlu0.b32.cont [15/16] 0.0, 128
        %824 = vxpose.xlu0.b32.end [16/16] 0.0, 128
        %v825 = vpop.trf.xlu0
        %v826 = vpop.trf.xlu0
        %v827 = vpop.trf.xlu0
        %v828 = vpop.trf.xlu0
        %v829 = vpop.trf.xlu0
        %v830 = vpop.trf.xlu0
        %v831 = vpop.trf.xlu0
        %v832 = vpop.trf.xlu0
        %v833 = vpop.trf.xlu0
        %v834 = vpop.trf.xlu0
        %v835 = vpop.trf.xlu0
        %v836 = vpop.trf.xlu0
        %v837 = vpop.trf.xlu0
        %v838 = vpop.trf.xlu0
        %v839 = vpop.trf.xlu0
        %v840 = vpop.trf.xlu0
        %vm841 = vcmask 588800
        %v843 = vsel %vm841, %v729, 0
        %v846 = vsel %vm841, %v730, 0
        %v849 = vsel %vm841, %v731, 0
        %v852 = vsel %vm841, %v732, 0
        %v855 = vsel %vm841, %v733, 0
        %v858 = vsel %vm841, %v734, 0
        %v861 = vsel %vm841, %v735, 0
        %v864 = vsel %vm841, %v736, 0
        %v867 = vsel %vm841, %v737, 0
        %v870 = vsel %vm841, %v738, 0
        %v873 = vsel %vm841, %v739, 0
        %v876 = vsel %vm841, %v740, 0
        %v879 = vsel %vm841, %v741, 0
        %v882 = vsel %vm841, %v742, 0
        %v885 = vsel %vm841, %v743, 0
        %v888 = vsel %vm841, %v744, 0
        %v891 = vsel %vm841, %v761, 0
        %v894 = vsel %vm841, %v762, 0
        %v897 = vsel %vm841, %v763, 0
        %v900 = vsel %vm841, %v764, 0
        %v903 = vsel %vm841, %v765, 0
        %v906 = vsel %vm841, %v766, 0
        %v909 = vsel %vm841, %v767, 0
        %v912 = vsel %vm841, %v768, 0
        %v915 = vsel %vm841, %v769, 0
        %v918 = vsel %vm841, %v770, 0
        %v921 = vsel %vm841, %v771, 0
        %v924 = vsel %vm841, %v772, 0
        %v927 = vsel %vm841, %v773, 0
        %v930 = vsel %vm841, %v774, 0
        %v933 = vsel %vm841, %v775, 0
        %v936 = vsel %vm841, %v776, 0
        %v939 = vsel %vm841, %v793, 0
        %v942 = vsel %vm841, %v794, 0
        %v945 = vsel %vm841, %v795, 0
        %v948 = vsel %vm841, %v796, 0
        %v951 = vsel %vm841, %v797, 0
        %v954 = vsel %vm841, %v798, 0
        %v957 = vsel %vm841, %v799, 0
        %v960 = vsel %vm841, %v800, 0
        %v963 = vsel %vm841, %v801, 0
        %v966 = vsel %vm841, %v802, 0
        %v969 = vsel %vm841, %v803, 0
        %v972 = vsel %vm841, %v804, 0
        %v975 = vsel %vm841, %v805, 0
        %v978 = vsel %vm841, %v806, 0
        %v981 = vsel %vm841, %v807, 0
        %v984 = vsel %vm841, %v808, 0
        %v987 = vsel %vm841, %v825, 0
        %v990 = vsel %vm841, %v826, 0
        %v993 = vsel %vm841, %v827, 0
        %v996 = vsel %vm841, %v828, 0
        %v999 = vsel %vm841, %v829, 0
        %v1002 = vsel %vm841, %v830, 0
        %v1005 = vsel %vm841, %v831, 0
        %v1008 = vsel %vm841, %v832, 0
        %v1011 = vsel %vm841, %v833, 0
        %v1014 = vsel %vm841, %v834, 0
        %v1017 = vsel %vm841, %v835, 0
        %v1020 = vsel %vm841, %v836, 0
        %v1023 = vsel %vm841, %v837, 0
        %v1026 = vsel %vm841, %v838, 0
        %v1029 = vsel %vm841, %v839, 0
        %v1032 = vsel %vm841, %v840, 0
        %1034 = vmatprep.subr.mxu0 0.0
        %1035 = vmatpush1.msra.mxu0 0.0
        %1036 = vmatprep.subr.mxu0 0.0
        %1037 = vmatpush1.msra.mxu0 0.0
        %1038 = vmatprep.subr.mxu0 0.0
        %1039 = vmatpush1.msra.mxu0 0.0
        %1040 = vmatprep.subr.mxu0 0.0
        %1041 = vmatpush1.msra.mxu0 0.0
        %1042 = vmatprep.subr.mxu0 0.0
        %1043 = vmatpush1.msra.mxu0 0.0
        %1044 = vmatprep.subr.mxu0 0.0
        %1045 = vmatpush1.msra.mxu0 0.0
        %1046 = vmatprep.subr.mxu0 0.0
        %1047 = vmatpush1.msra.mxu0 0.0
        %1048 = vmatprep.subr.mxu0 0.0
        %1049 = vmatpush1.msra.mxu0 %v712
        %1050 = vmatprep.subr.mxu0 0.0
        %1051 = vmatpush1.msra.mxu0 %v711
        %1052 = vmatprep.subr.mxu0 0.0
        %1053 = vmatpush1.msra.mxu0 %v710
        %1054 = vmatprep.subr.mxu0 0.0
        %1055 = vmatpush1.msra.mxu0 %v709
        %1056 = vmatprep.subr.mxu0 0.0
        %1057 = vmatpush1.msra.mxu0 %v708
        %1058 = vmatprep.subr.mxu0 0.0
        %1059 = vmatpush1.msra.mxu0 %v707
        %1060 = vmatprep.subr.mxu0 0.0
        %1061 = vmatpush1.msra.mxu0 %v706
        %1062 = vmatprep.subr.mxu0 0.0
        %1063 = vmatpush1.msra.mxu0 %v705
        %1064 = vmatprep.subr.mxu0 0.0
        %1065 = vmatpush1.msra.mxu0 %v704
        %1066 = vmatprep.subr.mxu0 0.0
        %1067 = vmatpush2.msra.mxu0 0.0
        %1068 = vmatprep.subr.mxu0 0.0
        %1069 = vmatpush2.msra.mxu0 0.0
        %1070 = vmatprep.subr.mxu0 0.0
        %1071 = vmatpush2.msra.mxu0 0.0
        %1072 = vmatprep.subr.mxu0 0.0
        %1073 = vmatpush2.msra.mxu0 0.0
        %1074 = vmatprep.subr.mxu0 0.0
        %1075 = vmatpush2.msra.mxu0 0.0
        %1076 = vmatprep.subr.mxu0 0.0
        %1077 = vmatpush2.msra.mxu0 0.0
        %1078 = vmatprep.subr.mxu0 0.0
        %1079 = vmatpush2.msra.mxu0 0.0
        %1080 = vmatprep.subr.mxu0 0.0
        %1081 = vmatpush2.msra.mxu0 0.0
        %1082 = vmatprep.subr.mxu0 0.0
        %1083 = vmatpush2.msra.mxu0 0.0
        %1084 = vmatprep.subr.mxu0 0.0
        %1085 = vmatpush2.msra.mxu0 0.0
        %1086 = vmatprep.subr.mxu0 0.0
        %1087 = vmatpush2.msra.mxu0 0.0
        %1088 = vmatprep.subr.mxu0 0.0
        %1089 = vmatpush2.msra.mxu0 0.0
        %1090 = vmatprep.subr.mxu0 0.0
        %1091 = vmatpush2.msra.mxu0 0.0
        %1092 = vmatprep.subr.mxu0 0.0
        %1093 = vmatpush2.msra.mxu0 0.0
        %1094 = vmatprep.subr.mxu0 0.0
        %1095 = vmatpush2.msra.mxu0 0.0
        %1096 = vmatprep.subr.mxu0 0.0
        %1097 = vmatpush2.msra.mxu0 0.0
        %1098 = vmatprep.mubr.f32.mxu0 0.0
        %1099 = vmatmul.mubr.f32.gmra.mxu0 %v843
        %v1100 = vpop.f32.mrf.mxu0
        %v1101 = vadd.f32 0.0, %v1100
        %v1102 = vpop.f32.mrf.mxu0
        %1103 = vmatprep.mubr.f32.mxu0 0.0
        %1104 = vmatmul.mubr.f32.gmra.mxu0 %v846
        %v1105 = vpop.f32.mrf.mxu0
        %v1106 = vadd.f32 0.0, %v1105
        %v1107 = vpop.f32.mrf.mxu0
        %1108 = vmatprep.mubr.f32.mxu0 0.0
        %1109 = vmatmul.mubr.f32.gmra.mxu0 %v849
        %v1110 = vpop.f32.mrf.mxu0
        %v1111 = vadd.f32 0.0, %v1110
        %v1112 = vpop.f32.mrf.mxu0
        %1113 = vmatprep.mubr.f32.mxu0 0.0
        %1114 = vmatmul.mubr.f32.gmra.mxu0 %v852
        %v1115 = vpop.f32.mrf.mxu0
        %v1116 = vadd.f32 0.0, %v1115
        %v1117 = vpop.f32.mrf.mxu0
        %1118 = vmatprep.mubr.f32.mxu0 0.0
        %1119 = vmatmul.mubr.f32.gmra.mxu0 %v855
        %v1120 = vpop.f32.mrf.mxu0
        %v1121 = vadd.f32 0.0, %v1120
        %v1122 = vpop.f32.mrf.mxu0
        %1123 = vmatprep.mubr.f32.mxu0 0.0
        %1124 = vmatmul.mubr.f32.gmra.mxu0 %v858
        %v1125 = vpop.f32.mrf.mxu0
        %v1126 = vadd.f32 0.0, %v1125
        %v1127 = vpop.f32.mrf.mxu0
        %1128 = vmatprep.mubr.f32.mxu0 0.0
        %1129 = vmatmul.mubr.f32.gmra.mxu0 %v861
        %v1130 = vpop.f32.mrf.mxu0
        %v1131 = vadd.f32 0.0, %v1130
        %v1132 = vpop.f32.mrf.mxu0
        %1133 = vmatprep.mubr.f32.mxu0 0.0
        %1134 = vmatmul.mubr.f32.gmra.mxu0 %v864
        %v1135 = vpop.f32.mrf.mxu0
        %v1136 = vadd.f32 0.0, %v1135
        %v1137 = vpop.f32.mrf.mxu0
        %1138 = vmatprep.mubr.f32.mxu0 0.0
        %1139 = vmatmul.mubr.f32.gmra.mxu0 %v867
        %v1140 = vpop.f32.mrf.mxu0
        %v1141 = vadd.f32 0.0, %v1140
        %v1142 = vpop.f32.mrf.mxu0
        %1143 = vmatprep.mubr.f32.mxu0 0.0
        %1144 = vmatmul.mubr.f32.gmra.mxu0 %v870
        %v1145 = vpop.f32.mrf.mxu0
        %v1146 = vadd.f32 0.0, %v1145
        %v1147 = vpop.f32.mrf.mxu0
        %1148 = vmatprep.mubr.f32.mxu0 0.0
        %1149 = vmatmul.mubr.f32.gmra.mxu0 %v873
        %v1150 = vpop.f32.mrf.mxu0
        %v1151 = vadd.f32 0.0, %v1150
        %v1152 = vpop.f32.mrf.mxu0
        %1153 = vmatprep.mubr.f32.mxu0 0.0
        %1154 = vmatmul.mubr.f32.gmra.mxu0 %v876
        %v1155 = vpop.f32.mrf.mxu0
        %v1156 = vadd.f32 0.0, %v1155
        %v1157 = vpop.f32.mrf.mxu0
        %1158 = vmatprep.mubr.f32.mxu0 0.0
        %1159 = vmatmul.mubr.f32.gmra.mxu0 %v879
        %v1160 = vpop.f32.mrf.mxu0
        %v1161 = vadd.f32 0.0, %v1160
        %v1162 = vpop.f32.mrf.mxu0
        %1163 = vmatprep.mubr.f32.mxu0 0.0
        %1164 = vmatmul.mubr.f32.gmra.mxu0 %v882
        %v1165 = vpop.f32.mrf.mxu0
        %v1166 = vadd.f32 0.0, %v1165
        %v1167 = vpop.f32.mrf.mxu0
        %1168 = vmatprep.mubr.f32.mxu0 0.0
        %1169 = vmatmul.mubr.f32.gmra.mxu0 %v885
        %v1170 = vpop.f32.mrf.mxu0
        %v1171 = vadd.f32 0.0, %v1170
        %v1172 = vpop.f32.mrf.mxu0
        %1173 = vmatprep.mubr.f32.mxu0 0.0
        %1174 = vmatmul.mubr.f32.gmra.mxu0 %v888
        %v1175 = vpop.f32.mrf.mxu0
        %v1176 = vadd.f32 0.0, %v1175
        %v1177 = vpop.f32.mrf.mxu0
        %1178 = vmatprep.mubr.f32.mxu0 0.0
        %1179 = vmatmul.mubr.f32.gmra.mxu0 %v891
        %v1180 = vpop.f32.mrf.mxu0
        %v1181 = vadd.f32 0.0, %v1180
        %v1182 = vpop.f32.mrf.mxu0
        %1183 = vmatprep.mubr.f32.mxu0 0.0
        %1184 = vmatmul.mubr.f32.gmra.mxu0 %v894
        %v1185 = vpop.f32.mrf.mxu0
        %v1186 = vadd.f32 0.0, %v1185
        %v1187 = vpop.f32.mrf.mxu0
        %1188 = vmatprep.mubr.f32.mxu0 0.0
        %1189 = vmatmul.mubr.f32.gmra.mxu0 %v897
        %v1190 = vpop.f32.mrf.mxu0
        %v1191 = vadd.f32 0.0, %v1190
        %v1192 = vpop.f32.mrf.mxu0
        %1193 = vmatprep.mubr.f32.mxu0 0.0
        %1194 = vmatmul.mubr.f32.gmra.mxu0 %v900
        %v1195 = vpop.f32.mrf.mxu0
        %v1196 = vadd.f32 0.0, %v1195
        %v1197 = vpop.f32.mrf.mxu0
        %1198 = vmatprep.mubr.f32.mxu0 0.0
        %1199 = vmatmul.mubr.f32.gmra.mxu0 %v903
        %v1200 = vpop.f32.mrf.mxu0
        %v1201 = vadd.f32 0.0, %v1200
        %v1202 = vpop.f32.mrf.mxu0
        %1203 = vmatprep.mubr.f32.mxu0 0.0
        %1204 = vmatmul.mubr.f32.gmra.mxu0 %v906
        %v1205 = vpop.f32.mrf.mxu0
        %v1206 = vadd.f32 0.0, %v1205
        %v1207 = vpop.f32.mrf.mxu0
        %1208 = vmatprep.mubr.f32.mxu0 0.0
        %1209 = vmatmul.mubr.f32.gmra.mxu0 %v909
        %v1210 = vpop.f32.mrf.mxu0
        %v1211 = vadd.f32 0.0, %v1210
        %v1212 = vpop.f32.mrf.mxu0
        %1213 = vmatprep.mubr.f32.mxu0 0.0
        %1214 = vmatmul.mubr.f32.gmra.mxu0 %v912
        %v1215 = vpop.f32.mrf.mxu0
        %v1216 = vadd.f32 0.0, %v1215
        %v1217 = vpop.f32.mrf.mxu0
        %1218 = vmatprep.mubr.f32.mxu0 0.0
        %1219 = vmatmul.mubr.f32.gmra.mxu0 %v915
        %v1220 = vpop.f32.mrf.mxu0
        %v1221 = vadd.f32 0.0, %v1220
        %v1222 = vpop.f32.mrf.mxu0
        %1223 = vmatprep.mubr.f32.mxu0 0.0
        %1224 = vmatmul.mubr.f32.gmra.mxu0 %v918
        %v1225 = vpop.f32.mrf.mxu0
        %v1226 = vadd.f32 0.0, %v1225
        %v1227 = vpop.f32.mrf.mxu0
        %1228 = vmatprep.mubr.f32.mxu0 0.0
        %1229 = vmatmul.mubr.f32.gmra.mxu0 %v921
        %v1230 = vpop.f32.mrf.mxu0
        %v1231 = vadd.f32 0.0, %v1230
        %v1232 = vpop.f32.mrf.mxu0
        %1233 = vmatprep.mubr.f32.mxu0 0.0
        %1234 = vmatmul.mubr.f32.gmra.mxu0 %v924
        %v1235 = vpop.f32.mrf.mxu0
        %v1236 = vadd.f32 0.0, %v1235
        %v1237 = vpop.f32.mrf.mxu0
        %1238 = vmatprep.mubr.f32.mxu0 0.0
        %1239 = vmatmul.mubr.f32.gmra.mxu0 %v927
        %v1240 = vpop.f32.mrf.mxu0
        %v1241 = vadd.f32 0.0, %v1240
        %v1242 = vpop.f32.mrf.mxu0
        %1243 = vmatprep.mubr.f32.mxu0 0.0
        %1244 = vmatmul.mubr.f32.gmra.mxu0 %v930
        %v1245 = vpop.f32.mrf.mxu0
        %v1246 = vadd.f32 0.0, %v1245
        %v1247 = vpop.f32.mrf.mxu0
        %1248 = vmatprep.mubr.f32.mxu0 0.0
        %1249 = vmatmul.mubr.f32.gmra.mxu0 %v933
        %v1250 = vpop.f32.mrf.mxu0
        %v1251 = vadd.f32 0.0, %v1250
        %v1252 = vpop.f32.mrf.mxu0
        %1253 = vmatprep.mubr.f32.mxu0 0.0
        %1254 = vmatmul.mubr.f32.gmra.mxu0 %v936
        %v1255 = vpop.f32.mrf.mxu0
        %v1256 = vadd.f32 0.0, %v1255
        %v1257 = vpop.f32.mrf.mxu0
        %1258 = vmatprep.mubr.f32.mxu0 0.0
        %1259 = vmatmul.mubr.f32.gmra.mxu0 %v939
        %v1260 = vpop.f32.mrf.mxu0
        %v1261 = vadd.f32 0.0, %v1260
        %v1262 = vpop.f32.mrf.mxu0
        %1263 = vmatprep.mubr.f32.mxu0 0.0
        %1264 = vmatmul.mubr.f32.gmra.mxu0 %v942
        %v1265 = vpop.f32.mrf.mxu0
        %v1266 = vadd.f32 0.0, %v1265
        %v1267 = vpop.f32.mrf.mxu0
        %1268 = vmatprep.mubr.f32.mxu0 0.0
        %1269 = vmatmul.mubr.f32.gmra.mxu0 %v945
        %v1270 = vpop.f32.mrf.mxu0
        %v1271 = vadd.f32 0.0, %v1270
        %v1272 = vpop.f32.mrf.mxu0
        %1273 = vmatprep.mubr.f32.mxu0 0.0
        %1274 = vmatmul.mubr.f32.gmra.mxu0 %v948
        %v1275 = vpop.f32.mrf.mxu0
        %v1276 = vadd.f32 0.0, %v1275
        %v1277 = vpop.f32.mrf.mxu0
        %1278 = vmatprep.mubr.f32.mxu0 0.0
        %1279 = vmatmul.mubr.f32.gmra.mxu0 %v951
        %v1280 = vpop.f32.mrf.mxu0
        %v1281 = vadd.f32 0.0, %v1280
        %v1282 = vpop.f32.mrf.mxu0
        %1283 = vmatprep.mubr.f32.mxu0 0.0
        %1284 = vmatmul.mubr.f32.gmra.mxu0 %v954
        %v1285 = vpop.f32.mrf.mxu0
        %v1286 = vadd.f32 0.0, %v1285
        %v1287 = vpop.f32.mrf.mxu0
        %1288 = vmatprep.mubr.f32.mxu0 0.0
        %1289 = vmatmul.mubr.f32.gmra.mxu0 %v957
        %v1290 = vpop.f32.mrf.mxu0
        %v1291 = vadd.f32 0.0, %v1290
        %v1292 = vpop.f32.mrf.mxu0
        %1293 = vmatprep.mubr.f32.mxu0 0.0
        %1294 = vmatmul.mubr.f32.gmra.mxu0 %v960
        %v1295 = vpop.f32.mrf.mxu0
        %v1296 = vadd.f32 0.0, %v1295
        %v1297 = vpop.f32.mrf.mxu0
        %1298 = vmatprep.mubr.f32.mxu0 0.0
        %1299 = vmatmul.mubr.f32.gmra.mxu0 %v963
        %v1300 = vpop.f32.mrf.mxu0
        %v1301 = vadd.f32 0.0, %v1300
        %v1302 = vpop.f32.mrf.mxu0
        %1303 = vmatprep.mubr.f32.mxu0 0.0
        %1304 = vmatmul.mubr.f32.gmra.mxu0 %v966
        %v1305 = vpop.f32.mrf.mxu0
        %v1306 = vadd.f32 0.0, %v1305
        %v1307 = vpop.f32.mrf.mxu0
        %1308 = vmatprep.mubr.f32.mxu0 0.0
        %1309 = vmatmul.mubr.f32.gmra.mxu0 %v969
        %v1310 = vpop.f32.mrf.mxu0
        %v1311 = vadd.f32 0.0, %v1310
        %v1312 = vpop.f32.mrf.mxu0
        %1313 = vmatprep.mubr.f32.mxu0 0.0
        %1314 = vmatmul.mubr.f32.gmra.mxu0 %v972
        %v1315 = vpop.f32.mrf.mxu0
        %v1316 = vadd.f32 0.0, %v1315
        %v1317 = vpop.f32.mrf.mxu0
        %1318 = vmatprep.mubr.f32.mxu0 0.0
        %1319 = vmatmul.mubr.f32.gmra.mxu0 %v975
        %v1320 = vpop.f32.mrf.mxu0
        %v1321 = vadd.f32 0.0, %v1320
        %v1322 = vpop.f32.mrf.mxu0
        %1323 = vmatprep.mubr.f32.mxu0 0.0
        %1324 = vmatmul.mubr.f32.gmra.mxu0 %v978
        %v1325 = vpop.f32.mrf.mxu0
        %v1326 = vadd.f32 0.0, %v1325
        %v1327 = vpop.f32.mrf.mxu0
        %1328 = vmatprep.mubr.f32.mxu0 0.0
        %1329 = vmatmul.mubr.f32.gmra.mxu0 %v981
        %v1330 = vpop.f32.mrf.mxu0
        %v1331 = vadd.f32 0.0, %v1330
        %v1332 = vpop.f32.mrf.mxu0
        %1333 = vmatprep.mubr.f32.mxu0 0.0
        %1334 = vmatmul.mubr.f32.gmra.mxu0 %v984
        %v1335 = vpop.f32.mrf.mxu0
        %v1336 = vadd.f32 0.0, %v1335
        %v1337 = vpop.f32.mrf.mxu0
        %1338 = vmatprep.mubr.f32.mxu0 0.0
        %1339 = vmatmul.mubr.f32.gmra.mxu0 %v987
        %v1340 = vpop.f32.mrf.mxu0
        %v1341 = vadd.f32 0.0, %v1340
        %v1342 = vpop.f32.mrf.mxu0
        %1343 = vmatprep.mubr.f32.mxu0 0.0
        %1344 = vmatmul.mubr.f32.gmra.mxu0 %v990
        %v1345 = vpop.f32.mrf.mxu0
        %v1346 = vadd.f32 0.0, %v1345
        %v1347 = vpop.f32.mrf.mxu0
        %1348 = vmatprep.mubr.f32.mxu0 0.0
        %1349 = vmatmul.mubr.f32.gmra.mxu0 %v993
        %v1350 = vpop.f32.mrf.mxu0
        %v1351 = vadd.f32 0.0, %v1350
        %v1352 = vpop.f32.mrf.mxu0
        %1353 = vmatprep.mubr.f32.mxu0 0.0
        %1354 = vmatmul.mubr.f32.gmra.mxu0 %v996
        %v1355 = vpop.f32.mrf.mxu0
        %v1356 = vadd.f32 0.0, %v1355
        %v1357 = vpop.f32.mrf.mxu0
        %1358 = vmatprep.mubr.f32.mxu0 0.0
        %1359 = vmatmul.mubr.f32.gmra.mxu0 %v999
        %v1360 = vpop.f32.mrf.mxu0
        %v1361 = vadd.f32 0.0, %v1360
        %v1362 = vpop.f32.mrf.mxu0
        %1363 = vmatprep.mubr.f32.mxu0 0.0
        %1364 = vmatmul.mubr.f32.gmra.mxu0 %v1002
        %v1365 = vpop.f32.mrf.mxu0
        %v1366 = vadd.f32 0.0, %v1365
        %v1367 = vpop.f32.mrf.mxu0
        %1368 = vmatprep.mubr.f32.mxu0 0.0
        %1369 = vmatmul.mubr.f32.gmra.mxu0 %v1005
        %v1370 = vpop.f32.mrf.mxu0
        %v1371 = vadd.f32 0.0, %v1370
        %v1372 = vpop.f32.mrf.mxu0
        %1373 = vmatprep.mubr.f32.mxu0 0.0
        %1374 = vmatmul.mubr.f32.gmra.mxu0 %v1008
        %v1375 = vpop.f32.mrf.mxu0
        %v1376 = vadd.f32 0.0, %v1375
        %v1377 = vpop.f32.mrf.mxu0
        %1378 = vmatprep.mubr.f32.mxu0 0.0
        %1379 = vmatmul.mubr.f32.gmra.mxu0 %v1011
        %v1380 = vpop.f32.mrf.mxu0
        %v1381 = vadd.f32 0.0, %v1380
        %v1382 = vpop.f32.mrf.mxu0
        %1383 = vmatprep.mubr.f32.mxu0 0.0
        %1384 = vmatmul.mubr.f32.gmra.mxu0 %v1014
        %v1385 = vpop.f32.mrf.mxu0
        %v1386 = vadd.f32 0.0, %v1385
        %v1387 = vpop.f32.mrf.mxu0
        %1388 = vmatprep.mubr.f32.mxu0 0.0
        %1389 = vmatmul.mubr.f32.gmra.mxu0 %v1017
        %v1390 = vpop.f32.mrf.mxu0
        %v1391 = vadd.f32 0.0, %v1390
        %v1392 = vpop.f32.mrf.mxu0
        %1393 = vmatprep.mubr.f32.mxu0 0.0
        %1394 = vmatmul.mubr.f32.gmra.mxu0 %v1020
        %v1395 = vpop.f32.mrf.mxu0
        %v1396 = vadd.f32 0.0, %v1395
        %v1397 = vpop.f32.mrf.mxu0
        %1398 = vmatprep.mubr.f32.mxu0 0.0
        %1399 = vmatmul.mubr.f32.gmra.mxu0 %v1023
        %v1400 = vpop.f32.mrf.mxu0
        %v1401 = vadd.f32 0.0, %v1400
        %v1402 = vpop.f32.mrf.mxu0
        %1403 = vmatprep.mubr.f32.mxu0 0.0
        %1404 = vmatmul.mubr.f32.gmra.mxu0 %v1026
        %v1405 = vpop.f32.mrf.mxu0
        %v1406 = vadd.f32 0.0, %v1405
        %v1407 = vpop.f32.mrf.mxu0
        %1408 = vmatprep.mubr.f32.mxu0 0.0
        %1409 = vmatmul.mubr.f32.gmra.mxu0 %v1029
        %v1410 = vpop.f32.mrf.mxu0
        %v1411 = vadd.f32 0.0, %v1410
        %v1412 = vpop.f32.mrf.mxu0
        %1413 = vmatprep.mubr.f32.mxu0 0.0
        %1414 = vmatmul.mubr.f32.gmra.mxu0 %v1032
        %v1415 = vpop.f32.mrf.mxu0
        %v1416 = vadd.f32 0.0, %v1415
        %v1417 = vpop.f32.mrf.mxu0
        %1418 = vdwg.mxu0
        %1419 = vxpose.xlu0.b32.start [1/16] %v1101, 128
        %1420 = vxpose.xlu0.b32.cont [2/16] %v1106, 128
        %1421 = vxpose.xlu0.b32.cont [3/16] %v1111, 128
        %1422 = vxpose.xlu0.b32.cont [4/16] %v1116, 128
        %1423 = vxpose.xlu0.b32.cont [5/16] %v1121, 128
        %1424 = vxpose.xlu0.b32.cont [6/16] %v1126, 128
        %1425 = vxpose.xlu0.b32.cont [7/16] %v1131, 128
        %1426 = vxpose.xlu0.b32.cont [8/16] %v1136, 128
        %1427 = vxpose.xlu0.b32.cont [9/16] %v1141, 128
        %1428 = vxpose.xlu0.b32.cont [10/16] %v1146, 128
        %1429 = vxpose.xlu0.b32.cont [11/16] %v1151, 128
        %1430 = vxpose.xlu0.b32.cont [12/16] %v1156, 128
        %1431 = vxpose.xlu0.b32.cont [13/16] %v1161, 128
        %1432 = vxpose.xlu0.b32.cont [14/16] %v1166, 128
        %1433 = vxpose.xlu0.b32.cont [15/16] %v1171, 128
        %1434 = vxpose.xlu0.b32.end [16/16] %v1176, 128
        %v1435 = vpop.trf.xlu0
        %v1436 = vpop.trf.xlu0
        %v1437 = vpop.trf.xlu0
        %v1438 = vpop.trf.xlu0
        %v1439 = vpop.trf.xlu0
        %v1440 = vpop.trf.xlu0
        %v1441 = vpop.trf.xlu0
        %v1442 = vpop.trf.xlu0
        %v1443 = vpop.trf.xlu0
        %v1444 = vpop.trf.xlu0
        %v1445 = vpop.trf.xlu0
        %v1446 = vpop.trf.xlu0
        %v1447 = vpop.trf.xlu0
        %v1448 = vpop.trf.xlu0
        %v1449 = vpop.trf.xlu0
        %v1450 = vpop.trf.xlu0
        %1451 = vxpose.xlu0.b32.start [1/16] %v1181, 128
        %1452 = vxpose.xlu0.b32.cont [2/16] %v1186, 128
        %1453 = vxpose.xlu0.b32.cont [3/16] %v1191, 128
        %1454 = vxpose.xlu0.b32.cont [4/16] %v1196, 128
        %1455 = vxpose.xlu0.b32.cont [5/16] %v1201, 128
        %1456 = vxpose.xlu0.b32.cont [6/16] %v1206, 128
        %1457 = vxpose.xlu0.b32.cont [7/16] %v1211, 128
        %1458 = vxpose.xlu0.b32.cont [8/16] %v1216, 128
        %1459 = vxpose.xlu0.b32.cont [9/16] %v1221, 128
        %1460 = vxpose.xlu0.b32.cont [10/16] %v1226, 128
        %1461 = vxpose.xlu0.b32.cont [11/16] %v1231, 128
        %1462 = vxpose.xlu0.b32.cont [12/16] %v1236, 128
        %1463 = vxpose.xlu0.b32.cont [13/16] %v1241, 128
        %1464 = vxpose.xlu0.b32.cont [14/16] %v1246, 128
        %1465 = vxpose.xlu0.b32.cont [15/16] %v1251, 128
        %1466 = vxpose.xlu0.b32.end [16/16] %v1256, 128
        %v1467 = vpop.trf.xlu0
        %v1468 = vpop.trf.xlu0
        %v1469 = vpop.trf.xlu0
        %v1470 = vpop.trf.xlu0
        %v1471 = vpop.trf.xlu0
        %v1472 = vpop.trf.xlu0
        %v1473 = vpop.trf.xlu0
        %v1474 = vpop.trf.xlu0
        %v1475 = vpop.trf.xlu0
        %v1476 = vpop.trf.xlu0
        %v1477 = vpop.trf.xlu0
        %v1478 = vpop.trf.xlu0
        %v1479 = vpop.trf.xlu0
        %v1480 = vpop.trf.xlu0
        %v1481 = vpop.trf.xlu0
        %v1482 = vpop.trf.xlu0
        %1483 = vxpose.xlu0.b32.start [1/16] %v1261, 128
        %1484 = vxpose.xlu0.b32.cont [2/16] %v1266, 128
        %1485 = vxpose.xlu0.b32.cont [3/16] %v1271, 128
        %1486 = vxpose.xlu0.b32.cont [4/16] %v1276, 128
        %1487 = vxpose.xlu0.b32.cont [5/16] %v1281, 128
        %1488 = vxpose.xlu0.b32.cont [6/16] %v1286, 128
        %1489 = vxpose.xlu0.b32.cont [7/16] %v1291, 128
        %1490 = vxpose.xlu0.b32.cont [8/16] %v1296, 128
        %1491 = vxpose.xlu0.b32.cont [9/16] %v1301, 128
        %1492 = vxpose.xlu0.b32.cont [10/16] %v1306, 128
        %1493 = vxpose.xlu0.b32.cont [11/16] %v1311, 128
        %1494 = vxpose.xlu0.b32.cont [12/16] %v1316, 128
        %1495 = vxpose.xlu0.b32.cont [13/16] %v1321, 128
        %1496 = vxpose.xlu0.b32.cont [14/16] %v1326, 128
        %1497 = vxpose.xlu0.b32.cont [15/16] %v1331, 128
        %1498 = vxpose.xlu0.b32.end [16/16] %v1336, 128
        %v1499 = vpop.trf.xlu0
        %v1500 = vpop.trf.xlu0
        %v1501 = vpop.trf.xlu0
        %v1502 = vpop.trf.xlu0
        %v1503 = vpop.trf.xlu0
        %v1504 = vpop.trf.xlu0
        %v1505 = vpop.trf.xlu0
        %v1506 = vpop.trf.xlu0
        %v1507 = vpop.trf.xlu0
        %v1508 = vpop.trf.xlu0
        %v1509 = vpop.trf.xlu0
        %v1510 = vpop.trf.xlu0
        %v1511 = vpop.trf.xlu0
        %v1512 = vpop.trf.xlu0
        %v1513 = vpop.trf.xlu0
        %v1514 = vpop.trf.xlu0
        %1515 = vxpose.xlu0.b32.start [1/16] %v1341, 128
        %1516 = vxpose.xlu0.b32.cont [2/16] %v1346, 128
        %1517 = vxpose.xlu0.b32.cont [3/16] %v1351, 128
        %1518 = vxpose.xlu0.b32.cont [4/16] %v1356, 128
        %1519 = vxpose.xlu0.b32.cont [5/16] %v1361, 128
        %1520 = vxpose.xlu0.b32.cont [6/16] %v1366, 128
        %1521 = vxpose.xlu0.b32.cont [7/16] %v1371, 128
        %1522 = vxpose.xlu0.b32.cont [8/16] %v1376, 128
        %1523 = vxpose.xlu0.b32.cont [9/16] %v1381, 128
        %1524 = vxpose.xlu0.b32.cont [10/16] %v1386, 128
        %1525 = vxpose.xlu0.b32.cont [11/16] %v1391, 128
        %1526 = vxpose.xlu0.b32.cont [12/16] %v1396, 128
        %1527 = vxpose.xlu0.b32.cont [13/16] %v1401, 128
        %1528 = vxpose.xlu0.b32.cont [14/16] %v1406, 128
        %1529 = vxpose.xlu0.b32.cont [15/16] %v1411, 128
        %1530 = vxpose.xlu0.b32.end [16/16] %v1416, 128
        %v1531 = vpop.trf.xlu0
        %v1532 = vpop.trf.xlu0
        %v1533 = vpop.trf.xlu0
        %v1534 = vpop.trf.xlu0
        %v1535 = vpop.trf.xlu0
        %v1536 = vpop.trf.xlu0
        %v1537 = vpop.trf.xlu0
        %v1538 = vpop.trf.xlu0
        %v1539 = vpop.trf.xlu0
        %v1540 = vpop.trf.xlu0
        %v1541 = vpop.trf.xlu0
        %v1542 = vpop.trf.xlu0
        %v1543 = vpop.trf.xlu0
        %v1544 = vpop.trf.xlu0
        %v1545 = vpop.trf.xlu0
        %v1546 = vpop.trf.xlu0
        %v1547 = vld [vmem:[%s3] ss:$4 sm:$0xf]
        %vm1548 = vcmp.ge.s32.totalorder %v1547, 0
        %vm1549 = vcmp.lt.s32.totalorder %v1547, 8
        %vm1550 = vmand %vm1548, %vm1549
        %v1551 = vsel %vm1550, 1.0, 0.0
        %v1552 = vld [vmem:[%s206] ss:$4 sm:$0xf]
        %v1553 = vadd.s32 %v1552, 4294967295
        %vm1554 = vcmp.ge.s32.totalorder %v1553, 0
        %vm1555 = vcmp.lt.s32.totalorder %v1553, 8
        %vm1556 = vmand %vm1554, %vm1555
        %v1557 = vsel %vm1556, 1.0, 0.0
        %v1558 = vmul.f32 %v1551, %v1557
        %v1559 = vld [vmem:[%s214] ss:$4 sm:$0xf]
        %v1560 = vadd.s32 %v1559, 4294967295
        %vm1561 = vcmp.ge.s32.totalorder %v1560, 0
        %vm1562 = vcmp.lt.s32.totalorder %v1560, 8
        %vm1563 = vmand %vm1561, %vm1562
        %v1564 = vsel %vm1563, 1.0, 0.0
        %v1565 = vmul.f32 %v1558, %v1564
        %1566 = vrot.lane.b32.xlu0 %v196, 9
        %v1567 = vpop.permute.xlu0 %1566
        %1568 = vrot.lane.b32.xlu0 %v197, 9
        %v1569 = vpop.permute.xlu0 %1568
        %1570 = vrot.lane.b32.xlu0 %v198, 9
        %v1571 = vpop.permute.xlu0 %1570
        %1572 = vrot.lane.b32.xlu0 %v199, 9
        %v1573 = vpop.permute.xlu0 %1572
        %vm1574 = vcmp.lt.s32.totalorder %v231, 9
        %v1575 = vsel %vm1574, %v1571, %v1573
        %v1576 = vsel %vm1574, %v1569, %v1571
        %v1577 = vsel %vm1574, %v1567, %v1569
        %v1578 = vsel %vm1574, %v1573, %v1567
        %v1580 = vlaneseq
        %v1581 = vshrl.u32 %v1580, 7
        %v1582 = vsub.s32 0, %v1581
        %v1583 = vrot.slane %v1565, %v1582
        %v1584 = vlaneseq
        %v1585 = vshrl.u32 %v1584, 7
        %v1586 = vsub.s32 1, %v1585
        %v1587 = vrot.slane %v1565, %v1586
        %v1588 = vlaneseq
        %v1589 = vshrl.u32 %v1588, 7
        %v1590 = vsub.s32 2, %v1589
        %v1591 = vrot.slane %v1565, %v1590
        %v1592 = vlaneseq
        %v1593 = vshrl.u32 %v1592, 7
        %v1594 = vsub.s32 3, %v1593
        %v1595 = vrot.slane %v1565, %v1594
        %v1600 = vmul.f32 %v1578, %v1583
        %v1601 = vmul.f32 %v1577, %v1587
        %v1602 = vmul.f32 %v1576, %v1591
        %v1603 = vmul.f32 %v1575, %v1595
        %1604 = vst [vmem:[#allocation2] sm:$0xff] %v1600
        %1605 = vst [vmem:[#allocation2 + $0x8] sm:$0xff] %v1601
        %1606 = vst [vmem:[#allocation2 + $0x10] sm:$0xff] %v1602
        %1607 = vst [vmem:[#allocation2 + $0x18] sm:$0xff] %v1603
        %v1608 = vld [vmem:[%s214] ss:$4 sm:$0xf]
        %vm1609 = vcmp.ge.s32.totalorder %v1608, 0
        %vm1610 = vcmp.lt.s32.totalorder %v1608, 8
        %vm1611 = vmand %vm1609, %vm1610
        %v1612 = vsel %vm1611, 1.0, 0.0
        %v1613 = vmul.f32 %v1558, %v1612
        %1614 = vrot.lane.b32.xlu0 %v196, 8
        %v1615 = vpop.permute.xlu0 %1614
        %1616 = vrot.lane.b32.xlu0 %v197, 8
        %v1617 = vpop.permute.xlu0 %1616
        %1618 = vrot.lane.b32.xlu0 %v198, 8
        %v1619 = vpop.permute.xlu0 %1618
        %1620 = vrot.lane.b32.xlu0 %v199, 8
        %v1621 = vpop.permute.xlu0 %1620
        %vm1622 = vcmp.lt.s32.totalorder %v231, 8
        %v1623 = vsel %vm1622, %v1619, %v1621
        %v1624 = vsel %vm1622, %v1617, %v1619
        %v1625 = vsel %vm1622, %v1615, %v1617
        %v1626 = vsel %vm1622, %v1621, %v1615
        %v1628 = vlaneseq
        %v1629 = vshrl.u32 %v1628, 7
        %v1630 = vsub.s32 0, %v1629
        %v1631 = vrot.slane %v1613, %v1630
        %v1632 = vlaneseq
        %v1633 = vshrl.u32 %v1632, 7
        %v1634 = vsub.s32 1, %v1633
        %v1635 = vrot.slane %v1613, %v1634
        %v1636 = vlaneseq
        %v1637 = vshrl.u32 %v1636, 7
        %v1638 = vsub.s32 2, %v1637
        %v1639 = vrot.slane %v1613, %v1638
        %v1640 = vlaneseq
        %v1641 = vshrl.u32 %v1640, 7
        %v1642 = vsub.s32 3, %v1641
        %v1643 = vrot.slane %v1613, %v1642
        %v1648 = vmul.f32 %v1626, %v1631
        %v1649 = vmul.f32 %v1625, %v1635
        %v1650 = vmul.f32 %v1624, %v1639
        %v1651 = vmul.f32 %v1623, %v1643
        %1652 = vst [vmem:[#allocation2 + $0x20] sm:$0xff] %v1648
        %1653 = vst [vmem:[#allocation2 + $0x28] sm:$0xff] %v1649
        %1654 = vst [vmem:[#allocation2 + $0x30] sm:$0xff] %v1650
        %1655 = vst [vmem:[#allocation2 + $0x38] sm:$0xff] %v1651
        %v1656 = vld [vmem:[%s214] ss:$4 sm:$0xf]
        %v1657 = vadd.s32 %v1656, 1
        %vm1658 = vcmp.ge.s32.totalorder %v1657, 0
        %vm1659 = vcmp.lt.s32.totalorder %v1657, 8
        %vm1660 = vmand %vm1658, %vm1659
        %v1661 = vsel %vm1660, 1.0, 0.0
        %v1662 = vmul.f32 %v1558, %v1661
        %1663 = vrot.lane.b32.xlu0 %v196, 7
        %v1664 = vpop.permute.xlu0 %1663
        %1665 = vrot.lane.b32.xlu0 %v197, 7
        %v1666 = vpop.permute.xlu0 %1665
        %1667 = vrot.lane.b32.xlu0 %v198, 7
        %v1668 = vpop.permute.xlu0 %1667
        %1669 = vrot.lane.b32.xlu0 %v199, 7
        %v1670 = vpop.permute.xlu0 %1669
        %vm1671 = vcmp.lt.s32.totalorder %v231, 7
        %v1672 = vsel %vm1671, %v1668, %v1670
        %v1673 = vsel %vm1671, %v1666, %v1668
        %v1674 = vsel %vm1671, %v1664, %v1666
        %v1675 = vsel %vm1671, %v1670, %v1664
        %v1677 = vlaneseq
        %v1678 = vshrl.u32 %v1677, 7
        %v1679 = vsub.s32 0, %v1678
        %v1680 = vrot.slane %v1662, %v1679
        %v1681 = vlaneseq
        %v1682 = vshrl.u32 %v1681, 7
        %v1683 = vsub.s32 1, %v1682
        %v1684 = vrot.slane %v1662, %v1683
        %v1685 = vlaneseq
        %v1686 = vshrl.u32 %v1685, 7
        %v1687 = vsub.s32 2, %v1686
        %v1688 = vrot.slane %v1662, %v1687
        %v1689 = vlaneseq
        %v1690 = vshrl.u32 %v1689, 7
        %v1691 = vsub.s32 3, %v1690
        %v1692 = vrot.slane %v1662, %v1691
        %v1697 = vmul.f32 %v1675, %v1680
        %v1698 = vmul.f32 %v1674, %v1684
        %v1699 = vmul.f32 %v1673, %v1688
        %v1700 = vmul.f32 %v1672, %v1692
        %1701 = vst [vmem:[#allocation2 + $0x40] sm:$0xff] %v1697
        %1702 = vst [vmem:[#allocation2 + $0x48] sm:$0xff] %v1698
        %1703 = vst [vmem:[#allocation2 + $0x50] sm:$0xff] %v1699
        %1704 = vst [vmem:[#allocation2 + $0x58] sm:$0xff] %v1700
        %v1705 = vld [vmem:[%s206] ss:$4 sm:$0xf]
        %vm1706 = vcmp.ge.s32.totalorder %v1705, 0
        %vm1707 = vcmp.lt.s32.totalorder %v1705, 8
        %vm1708 = vmand %vm1706, %vm1707
        %v1709 = vsel %vm1708, 1.0, 0.0
        %v1710 = vmul.f32 %v1551, %v1709
        %v1711 = vld [vmem:[%s214] ss:$4 sm:$0xf]
        %v1712 = vadd.s32 %v1711, 4294967295
        %vm1713 = vcmp.ge.s32.totalorder %v1712, 0
        %vm1714 = vcmp.lt.s32.totalorder %v1712, 8
        %vm1715 = vmand %vm1713, %vm1714
        %v1716 = vsel %vm1715, 1.0, 0.0
        %v1717 = vmul.f32 %v1710, %v1716
        %1718 = vrot.lane.b32.xlu0 %v196, 1
        %v1719 = vpop.permute.xlu0 %1718
        %1720 = vrot.lane.b32.xlu0 %v197, 1
        %v1721 = vpop.permute.xlu0 %1720
        %1722 = vrot.lane.b32.xlu0 %v198, 1
        %v1723 = vpop.permute.xlu0 %1722
        %1724 = vrot.lane.b32.xlu0 %v199, 1
        %v1725 = vpop.permute.xlu0 %1724
        %vm1726 = vcmp.lt.s32.totalorder %v231, 1
        %v1727 = vsel %vm1726, %v1723, %v1725
        %v1728 = vsel %vm1726, %v1721, %v1723
        %v1729 = vsel %vm1726, %v1719, %v1721
        %v1730 = vsel %vm1726, %v1725, %v1719
        %v1732 = vlaneseq
        %v1733 = vshrl.u32 %v1732, 7
        %v1734 = vsub.s32 0, %v1733
        %v1735 = vrot.slane %v1717, %v1734
        %v1736 = vlaneseq
        %v1737 = vshrl.u32 %v1736, 7
        %v1738 = vsub.s32 1, %v1737
        %v1739 = vrot.slane %v1717, %v1738
        %v1740 = vlaneseq
        %v1741 = vshrl.u32 %v1740, 7
        %v1742 = vsub.s32 2, %v1741
        %v1743 = vrot.slane %v1717, %v1742
        %v1744 = vlaneseq
        %v1745 = vshrl.u32 %v1744, 7
        %v1746 = vsub.s32 3, %v1745
        %v1747 = vrot.slane %v1717, %v1746
        %v1752 = vmul.f32 %v1730, %v1735
        %v1753 = vmul.f32 %v1729, %v1739
        %v1754 = vmul.f32 %v1728, %v1743
        %v1755 = vmul.f32 %v1727, %v1747
        %1756 = vst [vmem:[#allocation2 + $0x60] sm:$0xff] %v1752
        %1757 = vst [vmem:[#allocation2 + $0x68] sm:$0xff] %v1753
        %1758 = vst [vmem:[#allocation2 + $0x70] sm:$0xff] %v1754
        %1759 = vst [vmem:[#allocation2 + $0x78] sm:$0xff] %v1755
        %v1760 = vld [vmem:[%s214] ss:$4 sm:$0xf]
        %vm1761 = vcmp.ge.s32.totalorder %v1760, 0
        %vm1762 = vcmp.lt.s32.totalorder %v1760, 8
        %vm1763 = vmand %vm1761, %vm1762
        %v1764 = vsel %vm1763, 1.0, 0.0
        %v1765 = vmul.f32 %v1710, %v1764
        %v1767 = vlaneseq
        %v1768 = vshrl.u32 %v1767, 7
        %v1769 = vsub.s32 0, %v1768
        %v1770 = vrot.slane %v1765, %v1769
        %v1771 = vlaneseq
        %v1772 = vshrl.u32 %v1771, 7
        %v1773 = vsub.s32 1, %v1772
        %v1774 = vrot.slane %v1765, %v1773
        %v1775 = vlaneseq
        %v1776 = vshrl.u32 %v1775, 7
        %v1777 = vsub.s32 2, %v1776
        %v1778 = vrot.slane %v1765, %v1777
        %v1779 = vlaneseq
        %v1780 = vshrl.u32 %v1779, 7
        %v1781 = vsub.s32 3, %v1780
        %v1782 = vrot.slane %v1765, %v1781
        %v1787 = vmul.f32 %v196, %v1770
        %v1788 = vmul.f32 %v197, %v1774
        %v1789 = vmul.f32 %v198, %v1778
        %v1790 = vmul.f32 %v199, %v1782
        %1791 = vst [vmem:[#allocation2 + $0x80] sm:$0xff] %v1787
        %1792 = vst [vmem:[#allocation2 + $0x88] sm:$0xff] %v1788
        %1793 = vst [vmem:[#allocation2 + $0x90] sm:$0xff] %v1789
        %1794 = vst [vmem:[#allocation2 + $0x98] sm:$0xff] %v1790
        %v1795 = vld [vmem:[%s214] ss:$4 sm:$0xf]
        %v1796 = vadd.s32 %v1795, 1
        %vm1797 = vcmp.ge.s32.totalorder %v1796, 0
        %vm1798 = vcmp.lt.s32.totalorder %v1796, 8
        %vm1799 = vmand %vm1797, %vm1798
        %v1800 = vsel %vm1799, 1.0, 0.0
        %v1801 = vmul.f32 %v1710, %v1800
        %1802 = vrot.lane.b32.xlu0 %v196, 127
        %v1803 = vpop.permute.xlu0 %1802
        %1804 = vrot.lane.b32.xlu0 %v197, 127
        %v1805 = vpop.permute.xlu0 %1804
        %1806 = vrot.lane.b32.xlu0 %v198, 127
        %v1807 = vpop.permute.xlu0 %1806
        %1808 = vrot.lane.b32.xlu0 %v199, 127
        %v1809 = vpop.permute.xlu0 %1808
        %vm1810 = vcmp.lt.s32.totalorder %v231, 127
        %v1811 = vsel %vm1810, %v1807, %v1809
        %v1812 = vsel %vm1810, %v1805, %v1807
        %v1813 = vsel %vm1810, %v1803, %v1805
        %v1814 = vsel %vm1810, %v1809, %v1803
        %v1816 = vlaneseq
        %v1817 = vshrl.u32 %v1816, 7
        %v1818 = vsub.s32 0, %v1817
        %v1819 = vrot.slane %v1801, %v1818
        %v1820 = vlaneseq
        %v1821 = vshrl.u32 %v1820, 7
        %v1822 = vsub.s32 1, %v1821
        %v1823 = vrot.slane %v1801, %v1822
        %v1824 = vlaneseq
        %v1825 = vshrl.u32 %v1824, 7
        %v1826 = vsub.s32 2, %v1825
        %v1827 = vrot.slane %v1801, %v1826
        %v1828 = vlaneseq
        %v1829 = vshrl.u32 %v1828, 7
        %v1830 = vsub.s32 3, %v1829
        %v1831 = vrot.slane %v1801, %v1830
        %v1836 = vmul.f32 %v1813, %v1819
        %v1837 = vmul.f32 %v1812, %v1823
        %v1838 = vmul.f32 %v1811, %v1827
        %v1839 = vmul.f32 %v1814, %v1831
        %1840 = vst [vmem:[#allocation2 + $0xa0] sm:$0xff] %v1836
        %1841 = vst [vmem:[#allocation2 + $0xa8] sm:$0xff] %v1837
        %1842 = vst [vmem:[#allocation2 + $0xb0] sm:$0xff] %v1838
        %1843 = vst [vmem:[#allocation2 + $0xb8] sm:$0xff] %v1839
        %v1844 = vld [vmem:[%s206] ss:$4 sm:$0xf]
        %v1845 = vadd.s32 %v1844, 1
        %vm1846 = vcmp.ge.s32.totalorder %v1845, 0
        %vm1847 = vcmp.lt.s32.totalorder %v1845, 8
        %vm1848 = vmand %vm1846, %vm1847
        %v1849 = vsel %vm1848, 1.0, 0.0
        %v1850 = vmul.f32 %v1551, %v1849
        %v1851 = vld [vmem:[%s214] ss:$4 sm:$0xf]
        %v1852 = vadd.s32 %v1851, 4294967295
        %vm1853 = vcmp.ge.s32.totalorder %v1852, 0
        %vm1854 = vcmp.lt.s32.totalorder %v1852, 8
        %vm1855 = vmand %vm1853, %vm1854
        %v1856 = vsel %vm1855, 1.0, 0.0
        %v1857 = vmul.f32 %v1850, %v1856
        %1858 = vrot.lane.b32.xlu0 %v196, 121
        %v1859 = vpop.permute.xlu0 %1858
        %1860 = vrot.lane.b32.xlu0 %v197, 121
        %v1861 = vpop.permute.xlu0 %1860
        %1862 = vrot.lane.b32.xlu0 %v198, 121
        %v1863 = vpop.permute.xlu0 %1862
        %1864 = vrot.lane.b32.xlu0 %v199, 121
        %v1865 = vpop.permute.xlu0 %1864
        %vm1866 = vcmp.lt.s32.totalorder %v231, 121
        %v1867 = vsel %vm1866, %v1863, %v1865
        %v1868 = vsel %vm1866, %v1861, %v1863
        %v1869 = vsel %vm1866, %v1859, %v1861
        %v1870 = vsel %vm1866, %v1865, %v1859
        %v1872 = vlaneseq
        %v1873 = vshrl.u32 %v1872, 7
        %v1874 = vsub.s32 0, %v1873
        %v1875 = vrot.slane %v1857, %v1874
        %v1876 = vlaneseq
        %v1877 = vshrl.u32 %v1876, 7
        %v1878 = vsub.s32 1, %v1877
        %v1879 = vrot.slane %v1857, %v1878
        %v1880 = vlaneseq
        %v1881 = vshrl.u32 %v1880, 7
        %v1882 = vsub.s32 2, %v1881
        %v1883 = vrot.slane %v1857, %v1882
        %v1884 = vlaneseq
        %v1885 = vshrl.u32 %v1884, 7
        %v1886 = vsub.s32 3, %v1885
        %v1887 = vrot.slane %v1857, %v1886
        %v1892 = vmul.f32 %v1869, %v1875
        %v1893 = vmul.f32 %v1868, %v1879
        %v1894 = vmul.f32 %v1867, %v1883
        %v1895 = vmul.f32 %v1870, %v1887
        %1896 = vst [vmem:[#allocation2 + $0xc0] sm:$0xff] %v1892
        %1897 = vst [vmem:[#allocation2 + $0xc8] sm:$0xff] %v1893
        %1898 = vst [vmem:[#allocation2 + $0xd0] sm:$0xff] %v1894
        %1899 = vst [vmem:[#allocation2 + $0xd8] sm:$0xff] %v1895
        %v1900 = vld [vmem:[%s214] ss:$4 sm:$0xf]
        %vm1901 = vcmp.ge.s32.totalorder %v1900, 0
        %vm1902 = vcmp.lt.s32.totalorder %v1900, 8
        %vm1903 = vmand %vm1901, %vm1902
        %v1904 = vsel %vm1903, 1.0, 0.0
        %v1905 = vmul.f32 %v1850, %v1904
        %1906 = vrot.lane.b32.xlu0 %v196, 120
        %v1907 = vpop.permute.xlu0 %1906
        %1908 = vrot.lane.b32.xlu0 %v197, 120
        %v1909 = vpop.permute.xlu0 %1908
        %1910 = vrot.lane.b32.xlu0 %v198, 120
        %v1911 = vpop.permute.xlu0 %1910
        %1912 = vrot.lane.b32.xlu0 %v199, 120
        %v1913 = vpop.permute.xlu0 %1912
        %vm1914 = vcmp.lt.s32.totalorder %v231, 120
        %v1915 = vsel %vm1914, %v1911, %v1913
        %v1916 = vsel %vm1914, %v1909, %v1911
        %v1917 = vsel %vm1914, %v1907, %v1909
        %v1918 = vsel %vm1914, %v1913, %v1907
        %v1920 = vlaneseq
        %v1921 = vshrl.u32 %v1920, 7
        %v1922 = vsub.s32 0, %v1921
        %v1923 = vrot.slane %v1905, %v1922
        %v1924 = vlaneseq
        %v1925 = vshrl.u32 %v1924, 7
        %v1926 = vsub.s32 1, %v1925
        %v1927 = vrot.slane %v1905, %v1926
        %v1928 = vlaneseq
        %v1929 = vshrl.u32 %v1928, 7
        %v1930 = vsub.s32 2, %v1929
        %v1931 = vrot.slane %v1905, %v1930
        %v1932 = vlaneseq
        %v1933 = vshrl.u32 %v1932, 7
        %v1934 = vsub.s32 3, %v1933
        %v1935 = vrot.slane %v1905, %v1934
        %v1940 = vmul.f32 %v1917, %v1923
        %v1941 = vmul.f32 %v1916, %v1927
        %v1942 = vmul.f32 %v1915, %v1931
        %v1943 = vmul.f32 %v1918, %v1935
        %1944 = vst [vmem:[#allocation2 + $0xe0] sm:$0xff] %v1940
        %1945 = vst [vmem:[#allocation2 + $0xe8] sm:$0xff] %v1941
        %1946 = vst [vmem:[#allocation2 + $0xf0] sm:$0xff] %v1942
        %1947 = vst [vmem:[#allocation2 + $0xf8] sm:$0xff] %v1943
        %v1948 = vld [vmem:[%s214] ss:$4 sm:$0xf]
        %v1949 = vadd.s32 %v1948, 1
        %vm1950 = vcmp.ge.s32.totalorder %v1949, 0
        %vm1951 = vcmp.lt.s32.totalorder %v1949, 8
        %vm1952 = vmand %vm1950, %vm1951
        %v1953 = vsel %vm1952, 1.0, 0.0
        %v1954 = vmul.f32 %v1850, %v1953
        %1955 = vrot.lane.b32.xlu0 %v196, 119
        %v1956 = vpop.permute.xlu0 %1955
        %1957 = vrot.lane.b32.xlu0 %v197, 119
        %v1958 = vpop.permute.xlu0 %1957
        %1959 = vrot.lane.b32.xlu0 %v198, 119
        %v1960 = vpop.permute.xlu0 %1959
        %1961 = vrot.lane.b32.xlu0 %v199, 119
        %v1962 = vpop.permute.xlu0 %1961
        %vm1963 = vcmp.lt.s32.totalorder %v231, 119
        %v1964 = vsel %vm1963, %v1960, %v1962
        %v1965 = vsel %vm1963, %v1958, %v1960
        %v1966 = vsel %vm1963, %v1956, %v1958
        %v1967 = vsel %vm1963, %v1962, %v1956
        %v1969 = vlaneseq
        %v1970 = vshrl.u32 %v1969, 7
        %v1971 = vsub.s32 0, %v1970
        %v1972 = vrot.slane %v1954, %v1971
        %v1973 = vlaneseq
        %v1974 = vshrl.u32 %v1973, 7
        %v1975 = vsub.s32 1, %v1974
        %v1976 = vrot.slane %v1954, %v1975
        %v1977 = vlaneseq
        %v1978 = vshrl.u32 %v1977, 7
        %v1979 = vsub.s32 2, %v1978
        %v1980 = vrot.slane %v1954, %v1979
        %v1981 = vlaneseq
        %v1982 = vshrl.u32 %v1981, 7
        %v1983 = vsub.s32 3, %v1982
        %v1984 = vrot.slane %v1954, %v1983
        %v1989 = vmul.f32 %v1966, %v1972
        %v1990 = vmul.f32 %v1965, %v1976
        %v1991 = vmul.f32 %v1964, %v1980
        %v1992 = vmul.f32 %v1967, %v1984
        %1993 = vst [vmem:[#allocation2 + $0x100] sm:$0xff] %v1989
        %1994 = vst [vmem:[#allocation2 + $0x108] sm:$0xff] %v1990
        %1995 = vst [vmem:[#allocation2 + $0x110] sm:$0xff] %v1991
        %1996 = vst [vmem:[#allocation2 + $0x118] sm:$0xff] %v1992
        %v1997 = vld [vmem:[#allocation2] sm:$0xff]
        %v1998 = vld [vmem:[#allocation2 + $0x8] sm:$0xff]
        %v1999 = vld [vmem:[#allocation2 + $0x10] sm:$0xff]
        %v2000 = vld [vmem:[#allocation2 + $0x18] sm:$0xff]
        %v2001 = vld [vmem:[#allocation2 + $0x20] sm:$0xff]
        %v2002 = vld [vmem:[#allocation2 + $0x28] sm:$0xff]
        %v2003 = vld [vmem:[#allocation2 + $0x30] sm:$0xff]
        %v2004 = vld [vmem:[#allocation2 + $0x38] sm:$0xff]
        %v2005 = vld [vmem:[#allocation2 + $0x40] sm:$0xff]
        %v2006 = vld [vmem:[#allocation2 + $0x48] sm:$0xff]
        %v2007 = vld [vmem:[#allocation2 + $0x50] sm:$0xff]
        %v2008 = vld [vmem:[#allocation2 + $0x58] sm:$0xff]
        %v2009 = vld [vmem:[#allocation2 + $0x60] sm:$0xff]
        %v2010 = vld [vmem:[#allocation2 + $0x68] sm:$0xff]
        %v2011 = vld [vmem:[#allocation2 + $0x70] sm:$0xff]
        %v2012 = vld [vmem:[#allocation2 + $0x78] sm:$0xff]
        %v2013 = vld [vmem:[#allocation2 + $0x80] sm:$0xff]
        %v2014 = vld [vmem:[#allocation2 + $0x88] sm:$0xff]
        %v2015 = vld [vmem:[#allocation2 + $0x90] sm:$0xff]
        %v2016 = vld [vmem:[#allocation2 + $0x98] sm:$0xff]
        %v2017 = vld [vmem:[#allocation2 + $0xa0] sm:$0xff]
        %v2018 = vld [vmem:[#allocation2 + $0xa8] sm:$0xff]
        %v2019 = vld [vmem:[#allocation2 + $0xb0] sm:$0xff]
        %v2020 = vld [vmem:[#allocation2 + $0xb8] sm:$0xff]
        %v2021 = vld [vmem:[#allocation2 + $0xc0] sm:$0xff]
        %v2022 = vld [vmem:[#allocation2 + $0xc8] sm:$0xff]
        %v2023 = vld [vmem:[#allocation2 + $0xd0] sm:$0xff]
        %v2024 = vld [vmem:[#allocation2 + $0xd8] sm:$0xff]
        %v2025 = vld [vmem:[#allocation2 + $0xe0] sm:$0xff]
        %v2026 = vld [vmem:[#allocation2 + $0xe8] sm:$0xff]
        %v2027 = vld [vmem:[#allocation2 + $0xf0] sm:$0xff]
        %v2028 = vld [vmem:[#allocation2 + $0xf8] sm:$0xff]
        %v2029 = vld [vmem:[#allocation2 + $0x100] sm:$0xff]
        %v2030 = vld [vmem:[#allocation2 + $0x108] sm:$0xff]
        %v2031 = vld [vmem:[#allocation2 + $0x110] sm:$0xff]
        %v2032 = vld [vmem:[#allocation2 + $0x118] sm:$0xff]
        %s2033 = scalar_lea.vmem %s1, 72
        %v2034 = vld [vmem:[%s2033] sm:$0xff]
        %v2035 = vld [vmem:[%s2033 + $0x8] sm:$0xff]
        %v2036 = vld [vmem:[%s2033 + $0x10] sm:$0xff]
        %v2037 = vld [vmem:[%s2033 + $0x18] sm:$0xff]
        %v2038 = vld [vmem:[%s2033 + $0x20] sm:$0xff]
        %v2039 = vld [vmem:[%s2033 + $0x28] sm:$0xff]
        %v2040 = vld [vmem:[%s2033 + $0x30] sm:$0xff]
        %v2041 = vld [vmem:[%s2033 + $0x38] sm:$0xff]
        %v2042 = vld [vmem:[%s2033 + $0x40] sm:$0xff]
        %2043 = vxpose.xlu0.b32.start [1/16] %v1997, 128
        %2044 = vxpose.xlu0.b32.cont [2/16] %v2001, 128
        %2045 = vxpose.xlu0.b32.cont [3/16] %v2005, 128
        %2046 = vxpose.xlu0.b32.cont [4/16] %v2009, 128
        %2047 = vxpose.xlu0.b32.cont [5/16] %v2013, 128
        %2048 = vxpose.xlu0.b32.cont [6/16] %v2017, 128
        %2049 = vxpose.xlu0.b32.cont [7/16] %v2021, 128
        %2050 = vxpose.xlu0.b32.cont [8/16] %v2025, 128
        %2051 = vxpose.xlu0.b32.cont [9/16] %v2029, 128
        %2052 = vxpose.xlu0.b32.cont [10/16] 0.0, 128
        %2053 = vxpose.xlu0.b32.cont [11/16] 0.0, 128
        %2054 = vxpose.xlu0.b32.cont [12/16] 0.0, 128
        %2055 = vxpose.xlu0.b32.cont [13/16] 0.0, 128
        %2056 = vxpose.xlu0.b32.cont [14/16] 0.0, 128
        %2057 = vxpose.xlu0.b32.cont [15/16] 0.0, 128
        %2058 = vxpose.xlu0.b32.end [16/16] 0.0, 128
        %v2059 = vpop.trf.xlu0
        %v2060 = vpop.trf.xlu0
        %v2061 = vpop.trf.xlu0
        %v2062 = vpop.trf.xlu0
        %v2063 = vpop.trf.xlu0
        %v2064 = vpop.trf.xlu0
        %v2065 = vpop.trf.xlu0
        %v2066 = vpop.trf.xlu0
        %v2067 = vpop.trf.xlu0
        %v2068 = vpop.trf.xlu0
        %v2069 = vpop.trf.xlu0
        %v2070 = vpop.trf.xlu0
        %v2071 = vpop.trf.xlu0
        %v2072 = vpop.trf.xlu0
        %v2073 = vpop.trf.xlu0
        %v2074 = vpop.trf.xlu0
        %2075 = vxpose.xlu0.b32.start [1/16] %v1998, 128
        %2076 = vxpose.xlu0.b32.cont [2/16] %v2002, 128
        %2077 = vxpose.xlu0.b32.cont [3/16] %v2006, 128
        %2078 = vxpose.xlu0.b32.cont [4/16] %v2010, 128
        %2079 = vxpose.xlu0.b32.cont [5/16] %v2014, 128
        %2080 = vxpose.xlu0.b32.cont [6/16] %v2018, 128
        %2081 = vxpose.xlu0.b32.cont [7/16] %v2022, 128
        %2082 = vxpose.xlu0.b32.cont [8/16] %v2026, 128
        %2083 = vxpose.xlu0.b32.cont [9/16] %v2030, 128
        %2084 = vxpose.xlu0.b32.cont [10/16] 0.0, 128
        %2085 = vxpose.xlu0.b32.cont [11/16] 0.0, 128
        %2086 = vxpose.xlu0.b32.cont [12/16] 0.0, 128
        %2087 = vxpose.xlu0.b32.cont [13/16] 0.0, 128
        %2088 = vxpose.xlu0.b32.cont [14/16] 0.0, 128
        %2089 = vxpose.xlu0.b32.cont [15/16] 0.0, 128
        %2090 = vxpose.xlu0.b32.end [16/16] 0.0, 128
        %v2091 = vpop.trf.xlu0
        %v2092 = vpop.trf.xlu0
        %v2093 = vpop.trf.xlu0
        %v2094 = vpop.trf.xlu0
        %v2095 = vpop.trf.xlu0
        %v2096 = vpop.trf.xlu0
        %v2097 = vpop.trf.xlu0
        %v2098 = vpop.trf.xlu0
        %v2099 = vpop.trf.xlu0
        %v2100 = vpop.trf.xlu0
        %v2101 = vpop.trf.xlu0
        %v2102 = vpop.trf.xlu0
        %v2103 = vpop.trf.xlu0
        %v2104 = vpop.trf.xlu0
        %v2105 = vpop.trf.xlu0
        %v2106 = vpop.trf.xlu0
        %2107 = vxpose.xlu0.b32.start [1/16] %v1999, 128
        %2108 = vxpose.xlu0.b32.cont [2/16] %v2003, 128
        %2109 = vxpose.xlu0.b32.cont [3/16] %v2007, 128
        %2110 = vxpose.xlu0.b32.cont [4/16] %v2011, 128
        %2111 = vxpose.xlu0.b32.cont [5/16] %v2015, 128
        %2112 = vxpose.xlu0.b32.cont [6/16] %v2019, 128
        %2113 = vxpose.xlu0.b32.cont [7/16] %v2023, 128
        %2114 = vxpose.xlu0.b32.cont [8/16] %v2027, 128
        %2115 = vxpose.xlu0.b32.cont [9/16] %v2031, 128
        %2116 = vxpose.xlu0.b32.cont [10/16] 0.0, 128
        %2117 = vxpose.xlu0.b32.cont [11/16] 0.0, 128
        %2118 = vxpose.xlu0.b32.cont [12/16] 0.0, 128
        %2119 = vxpose.xlu0.b32.cont [13/16] 0.0, 128
        %2120 = vxpose.xlu0.b32.cont [14/16] 0.0, 128
        %2121 = vxpose.xlu0.b32.cont [15/16] 0.0, 128
        %2122 = vxpose.xlu0.b32.end [16/16] 0.0, 128
        %v2123 = vpop.trf.xlu0
        %v2124 = vpop.trf.xlu0
        %v2125 = vpop.trf.xlu0
        %v2126 = vpop.trf.xlu0
        %v2127 = vpop.trf.xlu0
        %v2128 = vpop.trf.xlu0
        %v2129 = vpop.trf.xlu0
        %v2130 = vpop.trf.xlu0
        %v2131 = vpop.trf.xlu0
        %v2132 = vpop.trf.xlu0
        %v2133 = vpop.trf.xlu0
        %v2134 = vpop.trf.xlu0
        %v2135 = vpop.trf.xlu0
        %v2136 = vpop.trf.xlu0
        %v2137 = vpop.trf.xlu0
        %v2138 = vpop.trf.xlu0
        %2139 = vxpose.xlu0.b32.start [1/16] %v2000, 128
        %2140 = vxpose.xlu0.b32.cont [2/16] %v2004, 128
        %2141 = vxpose.xlu0.b32.cont [3/16] %v2008, 128
        %2142 = vxpose.xlu0.b32.cont [4/16] %v2012, 128
        %2143 = vxpose.xlu0.b32.cont [5/16] %v2016, 128
        %2144 = vxpose.xlu0.b32.cont [6/16] %v2020, 128
        %2145 = vxpose.xlu0.b32.cont [7/16] %v2024, 128
        %2146 = vxpose.xlu0.b32.cont [8/16] %v2028, 128
        %2147 = vxpose.xlu0.b32.cont [9/16] %v2032, 128
        %2148 = vxpose.xlu0.b32.cont [10/16] 0.0, 128
        %2149 = vxpose.xlu0.b32.cont [11/16] 0.0, 128
        %2150 = vxpose.xlu0.b32.cont [12/16] 0.0, 128
        %2151 = vxpose.xlu0.b32.cont [13/16] 0.0, 128
        %2152 = vxpose.xlu0.b32.cont [14/16] 0.0, 128
        %2153 = vxpose.xlu0.b32.cont [15/16] 0.0, 128
        %2154 = vxpose.xlu0.b32.end [16/16] 0.0, 128
        %v2155 = vpop.trf.xlu0
        %v2156 = vpop.trf.xlu0
        %v2157 = vpop.trf.xlu0
        %v2158 = vpop.trf.xlu0
        %v2159 = vpop.trf.xlu0
        %v2160 = vpop.trf.xlu0
        %v2161 = vpop.trf.xlu0
        %v2162 = vpop.trf.xlu0
        %v2163 = vpop.trf.xlu0
        %v2164 = vpop.trf.xlu0
        %v2165 = vpop.trf.xlu0
        %v2166 = vpop.trf.xlu0
        %v2167 = vpop.trf.xlu0
        %v2168 = vpop.trf.xlu0
        %v2169 = vpop.trf.xlu0
        %v2170 = vpop.trf.xlu0
        %v2172 = vsel %vm841, %v2059, 0
        %v2175 = vsel %vm841, %v2060, 0
        %v2178 = vsel %vm841, %v2061, 0
        %v2181 = vsel %vm841, %v2062, 0
        %v2184 = vsel %vm841, %v2063, 0
        %v2187 = vsel %vm841, %v2064, 0
        %v2190 = vsel %vm841, %v2065, 0
        %v2193 = vsel %vm841, %v2066, 0
        %v2196 = vsel %vm841, %v2067, 0
        %v2199 = vsel %vm841, %v2068, 0
        %v2202 = vsel %vm841, %v2069, 0
        %v2205 = vsel %vm841, %v2070, 0
        %v2208 = vsel %vm841, %v2071, 0
        %v2211 = vsel %vm841, %v2072, 0
        %v2214 = vsel %vm841, %v2073, 0
        %v2217 = vsel %vm841, %v2074, 0
        %v2220 = vsel %vm841, %v2091, 0
        %v2223 = vsel %vm841, %v2092, 0
        %v2226 = vsel %vm841, %v2093, 0
        %v2229 = vsel %vm841, %v2094, 0
        %v2232 = vsel %vm841, %v2095, 0
        %v2235 = vsel %vm841, %v2096, 0
        %v2238 = vsel %vm841, %v2097, 0
        %v2241 = vsel %vm841, %v2098, 0
        %v2244 = vsel %vm841, %v2099, 0
        %v2247 = vsel %vm841, %v2100, 0
        %v2250 = vsel %vm841, %v2101, 0
        %v2253 = vsel %vm841, %v2102, 0
        %v2256 = vsel %vm841, %v2103, 0
        %v2259 = vsel %vm841, %v2104, 0
        %v2262 = vsel %vm841, %v2105, 0
        %v2265 = vsel %vm841, %v2106, 0
        %v2268 = vsel %vm841, %v2123, 0
        %v2271 = vsel %vm841, %v2124, 0
        %v2274 = vsel %vm841, %v2125, 0
        %v2277 = vsel %vm841, %v2126, 0
        %v2280 = vsel %vm841, %v2127, 0
        %v2283 = vsel %vm841, %v2128, 0
        %v2286 = vsel %vm841, %v2129, 0
        %v2289 = vsel %vm841, %v2130, 0
        %v2292 = vsel %vm841, %v2131, 0
        %v2295 = vsel %vm841, %v2132, 0
        %v2298 = vsel %vm841, %v2133, 0
        %v2301 = vsel %vm841, %v2134, 0
        %v2304 = vsel %vm841, %v2135, 0
        %v2307 = vsel %vm841, %v2136, 0
        %v2310 = vsel %vm841, %v2137, 0
        %v2313 = vsel %vm841, %v2138, 0
        %v2316 = vsel %vm841, %v2155, 0
        %v2319 = vsel %vm841, %v2156, 0
        %v2322 = vsel %vm841, %v2157, 0
        %v2325 = vsel %vm841, %v2158, 0
        %v2328 = vsel %vm841, %v2159, 0
        %v2331 = vsel %vm841, %v2160, 0
        %v2334 = vsel %vm841, %v2161, 0
        %v2337 = vsel %vm841, %v2162, 0
        %v2340 = vsel %vm841, %v2163, 0
        %v2343 = vsel %vm841, %v2164, 0
        %v2346 = vsel %vm841, %v2165, 0
        %v2349 = vsel %vm841, %v2166, 0
        %v2352 = vsel %vm841, %v2167, 0
        %v2355 = vsel %vm841, %v2168, 0
        %v2358 = vsel %vm841, %v2169, 0
        %v2361 = vsel %vm841, %v2170, 0
        %2363 = vmatprep.subr.mxu0 0.0
        %2364 = vmatpush1.msra.mxu0 0.0
        %2365 = vmatprep.subr.mxu0 0.0
        %2366 = vmatpush1.msra.mxu0 0.0
        %2367 = vmatprep.subr.mxu0 0.0
        %2368 = vmatpush1.msra.mxu0 0.0
        %2369 = vmatprep.subr.mxu0 0.0
        %2370 = vmatpush1.msra.mxu0 0.0
        %2371 = vmatprep.subr.mxu0 0.0
        %2372 = vmatpush1.msra.mxu0 0.0
        %2373 = vmatprep.subr.mxu0 0.0
        %2374 = vmatpush1.msra.mxu0 0.0
        %2375 = vmatprep.subr.mxu0 0.0
        %2376 = vmatpush1.msra.mxu0 0.0
        %2377 = vmatprep.subr.mxu0 0.0
        %2378 = vmatpush1.msra.mxu0 %v2042
        %2379 = vmatprep.subr.mxu0 0.0
        %2380 = vmatpush1.msra.mxu0 %v2041
        %2381 = vmatprep.subr.mxu0 0.0
        %2382 = vmatpush1.msra.mxu0 %v2040
        %2383 = vmatprep.subr.mxu0 0.0
        %2384 = vmatpush1.msra.mxu0 %v2039
        %2385 = vmatprep.subr.mxu0 0.0
        %2386 = vmatpush1.msra.mxu0 %v2038
        %2387 = vmatprep.subr.mxu0 0.0
        %2388 = vmatpush1.msra.mxu0 %v2037
        %2389 = vmatprep.subr.mxu0 0.0
        %2390 = vmatpush1.msra.mxu0 %v2036
        %2391 = vmatprep.subr.mxu0 0.0
        %2392 = vmatpush1.msra.mxu0 %v2035
        %2393 = vmatprep.subr.mxu0 0.0
        %2394 = vmatpush1.msra.mxu0 %v2034
        %2395 = vmatprep.subr.mxu0 0.0
        %2396 = vmatpush2.msra.mxu0 0.0
        %2397 = vmatprep.subr.mxu0 0.0
        %2398 = vmatpush2.msra.mxu0 0.0
        %2399 = vmatprep.subr.mxu0 0.0
        %2400 = vmatpush2.msra.mxu0 0.0
        %2401 = vmatprep.subr.mxu0 0.0
        %2402 = vmatpush2.msra.mxu0 0.0
        %2403 = vmatprep.subr.mxu0 0.0
        %2404 = vmatpush2.msra.mxu0 0.0
        %2405 = vmatprep.subr.mxu0 0.0
        %2406 = vmatpush2.msra.mxu0 0.0
        %2407 = vmatprep.subr.mxu0 0.0
        %2408 = vmatpush2.msra.mxu0 0.0
        %2409 = vmatprep.subr.mxu0 0.0
        %2410 = vmatpush2.msra.mxu0 0.0
        %2411 = vmatprep.subr.mxu0 0.0
        %2412 = vmatpush2.msra.mxu0 0.0
        %2413 = vmatprep.subr.mxu0 0.0
        %2414 = vmatpush2.msra.mxu0 0.0
        %2415 = vmatprep.subr.mxu0 0.0
        %2416 = vmatpush2.msra.mxu0 0.0
        %2417 = vmatprep.subr.mxu0 0.0
        %2418 = vmatpush2.msra.mxu0 0.0
        %2419 = vmatprep.subr.mxu0 0.0
        %2420 = vmatpush2.msra.mxu0 0.0
        %2421 = vmatprep.subr.mxu0 0.0
        %2422 = vmatpush2.msra.mxu0 0.0
        %2423 = vmatprep.subr.mxu0 0.0
        %2424 = vmatpush2.msra.mxu0 0.0
        %2425 = vmatprep.subr.mxu0 0.0
        %2426 = vmatpush2.msra.mxu0 0.0
        %2427 = vmatprep.mubr.f32.mxu0 0.0
        %2428 = vmatmul.mubr.f32.gmra.mxu0 %v2172
        %v2429 = vpop.f32.mrf.mxu0
        %v2430 = vadd.f32 0.0, %v2429
        %v2431 = vpop.f32.mrf.mxu0
        %2432 = vmatprep.mubr.f32.mxu0 0.0
        %2433 = vmatmul.mubr.f32.gmra.mxu0 %v2175
        %v2434 = vpop.f32.mrf.mxu0
        %v2435 = vadd.f32 0.0, %v2434
        %v2436 = vpop.f32.mrf.mxu0
        %2437 = vmatprep.mubr.f32.mxu0 0.0
        %2438 = vmatmul.mubr.f32.gmra.mxu0 %v2178
        %v2439 = vpop.f32.mrf.mxu0
        %v2440 = vadd.f32 0.0, %v2439
        %v2441 = vpop.f32.mrf.mxu0
        %2442 = vmatprep.mubr.f32.mxu0 0.0
        %2443 = vmatmul.mubr.f32.gmra.mxu0 %v2181
        %v2444 = vpop.f32.mrf.mxu0
        %v2445 = vadd.f32 0.0, %v2444
        %v2446 = vpop.f32.mrf.mxu0
        %2447 = vmatprep.mubr.f32.mxu0 0.0
        %2448 = vmatmul.mubr.f32.gmra.mxu0 %v2184
        %v2449 = vpop.f32.mrf.mxu0
        %v2450 = vadd.f32 0.0, %v2449
        %v2451 = vpop.f32.mrf.mxu0
        %2452 = vmatprep.mubr.f32.mxu0 0.0
        %2453 = vmatmul.mubr.f32.gmra.mxu0 %v2187
        %v2454 = vpop.f32.mrf.mxu0
        %v2455 = vadd.f32 0.0, %v2454
        %v2456 = vpop.f32.mrf.mxu0
        %2457 = vmatprep.mubr.f32.mxu0 0.0
        %2458 = vmatmul.mubr.f32.gmra.mxu0 %v2190
        %v2459 = vpop.f32.mrf.mxu0
        %v2460 = vadd.f32 0.0, %v2459
        %v2461 = vpop.f32.mrf.mxu0
        %2462 = vmatprep.mubr.f32.mxu0 0.0
        %2463 = vmatmul.mubr.f32.gmra.mxu0 %v2193
        %v2464 = vpop.f32.mrf.mxu0
        %v2465 = vadd.f32 0.0, %v2464
        %v2466 = vpop.f32.mrf.mxu0
        %2467 = vmatprep.mubr.f32.mxu0 0.0
        %2468 = vmatmul.mubr.f32.gmra.mxu0 %v2196
        %v2469 = vpop.f32.mrf.mxu0
        %v2470 = vadd.f32 0.0, %v2469
        %v2471 = vpop.f32.mrf.mxu0
        %2472 = vmatprep.mubr.f32.mxu0 0.0
        %2473 = vmatmul.mubr.f32.gmra.mxu0 %v2199
        %v2474 = vpop.f32.mrf.mxu0
        %v2475 = vadd.f32 0.0, %v2474
        %v2476 = vpop.f32.mrf.mxu0
        %2477 = vmatprep.mubr.f32.mxu0 0.0
        %2478 = vmatmul.mubr.f32.gmra.mxu0 %v2202
        %v2479 = vpop.f32.mrf.mxu0
        %v2480 = vadd.f32 0.0, %v2479
        %v2481 = vpop.f32.mrf.mxu0
        %2482 = vmatprep.mubr.f32.mxu0 0.0
        %2483 = vmatmul.mubr.f32.gmra.mxu0 %v2205
        %v2484 = vpop.f32.mrf.mxu0
        %v2485 = vadd.f32 0.0, %v2484
        %v2486 = vpop.f32.mrf.mxu0
        %2487 = vmatprep.mubr.f32.mxu0 0.0
        %2488 = vmatmul.mubr.f32.gmra.mxu0 %v2208
        %v2489 = vpop.f32.mrf.mxu0
        %v2490 = vadd.f32 0.0, %v2489
        %v2491 = vpop.f32.mrf.mxu0
        %2492 = vmatprep.mubr.f32.mxu0 0.0
        %2493 = vmatmul.mubr.f32.gmra.mxu0 %v2211
        %v2494 = vpop.f32.mrf.mxu0
        %v2495 = vadd.f32 0.0, %v2494
        %v2496 = vpop.f32.mrf.mxu0
        %2497 = vmatprep.mubr.f32.mxu0 0.0
        %2498 = vmatmul.mubr.f32.gmra.mxu0 %v2214
        %v2499 = vpop.f32.mrf.mxu0
        %v2500 = vadd.f32 0.0, %v2499
        %v2501 = vpop.f32.mrf.mxu0
        %2502 = vmatprep.mubr.f32.mxu0 0.0
        %2503 = vmatmul.mubr.f32.gmra.mxu0 %v2217
        %v2504 = vpop.f32.mrf.mxu0
        %v2505 = vadd.f32 0.0, %v2504
        %v2506 = vpop.f32.mrf.mxu0
        %2507 = vmatprep.mubr.f32.mxu0 0.0
        %2508 = vmatmul.mubr.f32.gmra.mxu0 %v2220
        %v2509 = vpop.f32.mrf.mxu0
        %v2510 = vadd.f32 0.0, %v2509
        %v2511 = vpop.f32.mrf.mxu0
        %2512 = vmatprep.mubr.f32.mxu0 0.0
        %2513 = vmatmul.mubr.f32.gmra.mxu0 %v2223
        %v2514 = vpop.f32.mrf.mxu0
        %v2515 = vadd.f32 0.0, %v2514
        %v2516 = vpop.f32.mrf.mxu0
        %2517 = vmatprep.mubr.f32.mxu0 0.0
        %2518 = vmatmul.mubr.f32.gmra.mxu0 %v2226
        %v2519 = vpop.f32.mrf.mxu0
        %v2520 = vadd.f32 0.0, %v2519
        %v2521 = vpop.f32.mrf.mxu0
        %2522 = vmatprep.mubr.f32.mxu0 0.0
        %2523 = vmatmul.mubr.f32.gmra.mxu0 %v2229
        %v2524 = vpop.f32.mrf.mxu0
        %v2525 = vadd.f32 0.0, %v2524
        %v2526 = vpop.f32.mrf.mxu0
        %2527 = vmatprep.mubr.f32.mxu0 0.0
        %2528 = vmatmul.mubr.f32.gmra.mxu0 %v2232
        %v2529 = vpop.f32.mrf.mxu0
        %v2530 = vadd.f32 0.0, %v2529
        %v2531 = vpop.f32.mrf.mxu0
        %2532 = vmatprep.mubr.f32.mxu0 0.0
        %2533 = vmatmul.mubr.f32.gmra.mxu0 %v2235
        %v2534 = vpop.f32.mrf.mxu0
        %v2535 = vadd.f32 0.0, %v2534
        %v2536 = vpop.f32.mrf.mxu0
        %2537 = vmatprep.mubr.f32.mxu0 0.0
        %2538 = vmatmul.mubr.f32.gmra.mxu0 %v2238
        %v2539 = vpop.f32.mrf.mxu0
        %v2540 = vadd.f32 0.0, %v2539
        %v2541 = vpop.f32.mrf.mxu0
        %2542 = vmatprep.mubr.f32.mxu0 0.0
        %2543 = vmatmul.mubr.f32.gmra.mxu0 %v2241
        %v2544 = vpop.f32.mrf.mxu0
        %v2545 = vadd.f32 0.0, %v2544
        %v2546 = vpop.f32.mrf.mxu0
        %2547 = vmatprep.mubr.f32.mxu0 0.0
        %2548 = vmatmul.mubr.f32.gmra.mxu0 %v2244
        %v2549 = vpop.f32.mrf.mxu0
        %v2550 = vadd.f32 0.0, %v2549
        %v2551 = vpop.f32.mrf.mxu0
        %2552 = vmatprep.mubr.f32.mxu0 0.0
        %2553 = vmatmul.mubr.f32.gmra.mxu0 %v2247
        %v2554 = vpop.f32.mrf.mxu0
        %v2555 = vadd.f32 0.0, %v2554
        %v2556 = vpop.f32.mrf.mxu0
        %2557 = vmatprep.mubr.f32.mxu0 0.0
        %2558 = vmatmul.mubr.f32.gmra.mxu0 %v2250
        %v2559 = vpop.f32.mrf.mxu0
        %v2560 = vadd.f32 0.0, %v2559
        %v2561 = vpop.f32.mrf.mxu0
        %2562 = vmatprep.mubr.f32.mxu0 0.0
        %2563 = vmatmul.mubr.f32.gmra.mxu0 %v2253
        %v2564 = vpop.f32.mrf.mxu0
        %v2565 = vadd.f32 0.0, %v2564
        %v2566 = vpop.f32.mrf.mxu0
        %2567 = vmatprep.mubr.f32.mxu0 0.0
        %2568 = vmatmul.mubr.f32.gmra.mxu0 %v2256
        %v2569 = vpop.f32.mrf.mxu0
        %v2570 = vadd.f32 0.0, %v2569
        %v2571 = vpop.f32.mrf.mxu0
        %2572 = vmatprep.mubr.f32.mxu0 0.0
        %2573 = vmatmul.mubr.f32.gmra.mxu0 %v2259
        %v2574 = vpop.f32.mrf.mxu0
        %v2575 = vadd.f32 0.0, %v2574
        %v2576 = vpop.f32.mrf.mxu0
        %2577 = vmatprep.mubr.f32.mxu0 0.0
        %2578 = vmatmul.mubr.f32.gmra.mxu0 %v2262
        %v2579 = vpop.f32.mrf.mxu0
        %v2580 = vadd.f32 0.0, %v2579
        %v2581 = vpop.f32.mrf.mxu0
        %2582 = vmatprep.mubr.f32.mxu0 0.0
        %2583 = vmatmul.mubr.f32.gmra.mxu0 %v2265
        %v2584 = vpop.f32.mrf.mxu0
        %v2585 = vadd.f32 0.0, %v2584
        %v2586 = vpop.f32.mrf.mxu0
        %2587 = vmatprep.mubr.f32.mxu0 0.0
        %2588 = vmatmul.mubr.f32.gmra.mxu0 %v2268
        %v2589 = vpop.f32.mrf.mxu0
        %v2590 = vadd.f32 0.0, %v2589
        %v2591 = vpop.f32.mrf.mxu0
        %2592 = vmatprep.mubr.f32.mxu0 0.0
        %2593 = vmatmul.mubr.f32.gmra.mxu0 %v2271
        %v2594 = vpop.f32.mrf.mxu0
        %v2595 = vadd.f32 0.0, %v2594
        %v2596 = vpop.f32.mrf.mxu0
        %2597 = vmatprep.mubr.f32.mxu0 0.0
        %2598 = vmatmul.mubr.f32.gmra.mxu0 %v2274
        %v2599 = vpop.f32.mrf.mxu0
        %v2600 = vadd.f32 0.0, %v2599
        %v2601 = vpop.f32.mrf.mxu0
        %2602 = vmatprep.mubr.f32.mxu0 0.0
        %2603 = vmatmul.mubr.f32.gmra.mxu0 %v2277
        %v2604 = vpop.f32.mrf.mxu0
        %v2605 = vadd.f32 0.0, %v2604
        %v2606 = vpop.f32.mrf.mxu0
        %2607 = vmatprep.mubr.f32.mxu0 0.0
        %2608 = vmatmul.mubr.f32.gmra.mxu0 %v2280
        %v2609 = vpop.f32.mrf.mxu0
        %v2610 = vadd.f32 0.0, %v2609
        %v2611 = vpop.f32.mrf.mxu0
        %2612 = vmatprep.mubr.f32.mxu0 0.0
        %2613 = vmatmul.mubr.f32.gmra.mxu0 %v2283
        %v2614 = vpop.f32.mrf.mxu0
        %v2615 = vadd.f32 0.0, %v2614
        %v2616 = vpop.f32.mrf.mxu0
        %2617 = vmatprep.mubr.f32.mxu0 0.0
        %2618 = vmatmul.mubr.f32.gmra.mxu0 %v2286
        %v2619 = vpop.f32.mrf.mxu0
        %v2620 = vadd.f32 0.0, %v2619
        %v2621 = vpop.f32.mrf.mxu0
        %2622 = vmatprep.mubr.f32.mxu0 0.0
        %2623 = vmatmul.mubr.f32.gmra.mxu0 %v2289
        %v2624 = vpop.f32.mrf.mxu0
        %v2625 = vadd.f32 0.0, %v2624
        %v2626 = vpop.f32.mrf.mxu0
        %2627 = vmatprep.mubr.f32.mxu0 0.0
        %2628 = vmatmul.mubr.f32.gmra.mxu0 %v2292
        %v2629 = vpop.f32.mrf.mxu0
        %v2630 = vadd.f32 0.0, %v2629
        %v2631 = vpop.f32.mrf.mxu0
        %2632 = vmatprep.mubr.f32.mxu0 0.0
        %2633 = vmatmul.mubr.f32.gmra.mxu0 %v2295
        %v2634 = vpop.f32.mrf.mxu0
        %v2635 = vadd.f32 0.0, %v2634
        %v2636 = vpop.f32.mrf.mxu0
        %2637 = vmatprep.mubr.f32.mxu0 0.0
        %2638 = vmatmul.mubr.f32.gmra.mxu0 %v2298
        %v2639 = vpop.f32.mrf.mxu0
        %v2640 = vadd.f32 0.0, %v2639
        %v2641 = vpop.f32.mrf.mxu0
        %2642 = vmatprep.mubr.f32.mxu0 0.0
        %2643 = vmatmul.mubr.f32.gmra.mxu0 %v2301
        %v2644 = vpop.f32.mrf.mxu0
        %v2645 = vadd.f32 0.0, %v2644
        %v2646 = vpop.f32.mrf.mxu0
        %2647 = vmatprep.mubr.f32.mxu0 0.0
        %2648 = vmatmul.mubr.f32.gmra.mxu0 %v2304
        %v2649 = vpop.f32.mrf.mxu0
        %v2650 = vadd.f32 0.0, %v2649
        %v2651 = vpop.f32.mrf.mxu0
        %2652 = vmatprep.mubr.f32.mxu0 0.0
        %2653 = vmatmul.mubr.f32.gmra.mxu0 %v2307
        %v2654 = vpop.f32.mrf.mxu0
        %v2655 = vadd.f32 0.0, %v2654
        %v2656 = vpop.f32.mrf.mxu0
        %2657 = vmatprep.mubr.f32.mxu0 0.0
        %2658 = vmatmul.mubr.f32.gmra.mxu0 %v2310
        %v2659 = vpop.f32.mrf.mxu0
        %v2660 = vadd.f32 0.0, %v2659
        %v2661 = vpop.f32.mrf.mxu0
        %2662 = vmatprep.mubr.f32.mxu0 0.0
        %2663 = vmatmul.mubr.f32.gmra.mxu0 %v2313
        %v2664 = vpop.f32.mrf.mxu0
        %v2665 = vadd.f32 0.0, %v2664
        %v2666 = vpop.f32.mrf.mxu0
        %2667 = vmatprep.mubr.f32.mxu0 0.0
        %2668 = vmatmul.mubr.f32.gmra.mxu0 %v2316
        %v2669 = vpop.f32.mrf.mxu0
        %v2670 = vadd.f32 0.0, %v2669
        %v2671 = vpop.f32.mrf.mxu0
        %2672 = vmatprep.mubr.f32.mxu0 0.0
        %2673 = vmatmul.mubr.f32.gmra.mxu0 %v2319
        %v2674 = vpop.f32.mrf.mxu0
        %v2675 = vadd.f32 0.0, %v2674
        %v2676 = vpop.f32.mrf.mxu0
        %2677 = vmatprep.mubr.f32.mxu0 0.0
        %2678 = vmatmul.mubr.f32.gmra.mxu0 %v2322
        %v2679 = vpop.f32.mrf.mxu0
        %v2680 = vadd.f32 0.0, %v2679
        %v2681 = vpop.f32.mrf.mxu0
        %2682 = vmatprep.mubr.f32.mxu0 0.0
        %2683 = vmatmul.mubr.f32.gmra.mxu0 %v2325
        %v2684 = vpop.f32.mrf.mxu0
        %v2685 = vadd.f32 0.0, %v2684
        %v2686 = vpop.f32.mrf.mxu0
        %2687 = vmatprep.mubr.f32.mxu0 0.0
        %2688 = vmatmul.mubr.f32.gmra.mxu0 %v2328
        %v2689 = vpop.f32.mrf.mxu0
        %v2690 = vadd.f32 0.0, %v2689
        %v2691 = vpop.f32.mrf.mxu0
        %2692 = vmatprep.mubr.f32.mxu0 0.0
        %2693 = vmatmul.mubr.f32.gmra.mxu0 %v2331
        %v2694 = vpop.f32.mrf.mxu0
        %v2695 = vadd.f32 0.0, %v2694
        %v2696 = vpop.f32.mrf.mxu0
        %2697 = vmatprep.mubr.f32.mxu0 0.0
        %2698 = vmatmul.mubr.f32.gmra.mxu0 %v2334
        %v2699 = vpop.f32.mrf.mxu0
        %v2700 = vadd.f32 0.0, %v2699
        %v2701 = vpop.f32.mrf.mxu0
        %2702 = vmatprep.mubr.f32.mxu0 0.0
        %2703 = vmatmul.mubr.f32.gmra.mxu0 %v2337
        %v2704 = vpop.f32.mrf.mxu0
        %v2705 = vadd.f32 0.0, %v2704
        %v2706 = vpop.f32.mrf.mxu0
        %2707 = vmatprep.mubr.f32.mxu0 0.0
        %2708 = vmatmul.mubr.f32.gmra.mxu0 %v2340
        %v2709 = vpop.f32.mrf.mxu0
        %v2710 = vadd.f32 0.0, %v2709
        %v2711 = vpop.f32.mrf.mxu0
        %2712 = vmatprep.mubr.f32.mxu0 0.0
        %2713 = vmatmul.mubr.f32.gmra.mxu0 %v2343
        %v2714 = vpop.f32.mrf.mxu0
        %v2715 = vadd.f32 0.0, %v2714
        %v2716 = vpop.f32.mrf.mxu0
        %2717 = vmatprep.mubr.f32.mxu0 0.0
        %2718 = vmatmul.mubr.f32.gmra.mxu0 %v2346
        %v2719 = vpop.f32.mrf.mxu0
        %v2720 = vadd.f32 0.0, %v2719
        %v2721 = vpop.f32.mrf.mxu0
        %2722 = vmatprep.mubr.f32.mxu0 0.0
        %2723 = vmatmul.mubr.f32.gmra.mxu0 %v2349
        %v2724 = vpop.f32.mrf.mxu0
        %v2725 = vadd.f32 0.0, %v2724
        %v2726 = vpop.f32.mrf.mxu0
        %2727 = vmatprep.mubr.f32.mxu0 0.0
        %2728 = vmatmul.mubr.f32.gmra.mxu0 %v2352
        %v2729 = vpop.f32.mrf.mxu0
        %v2730 = vadd.f32 0.0, %v2729
        %v2731 = vpop.f32.mrf.mxu0
        %2732 = vmatprep.mubr.f32.mxu0 0.0
        %2733 = vmatmul.mubr.f32.gmra.mxu0 %v2355
        %v2734 = vpop.f32.mrf.mxu0
        %v2735 = vadd.f32 0.0, %v2734
        %v2736 = vpop.f32.mrf.mxu0
        %2737 = vmatprep.mubr.f32.mxu0 0.0
        %2738 = vmatmul.mubr.f32.gmra.mxu0 %v2358
        %v2739 = vpop.f32.mrf.mxu0
        %v2740 = vadd.f32 0.0, %v2739
        %v2741 = vpop.f32.mrf.mxu0
        %2742 = vmatprep.mubr.f32.mxu0 0.0
        %2743 = vmatmul.mubr.f32.gmra.mxu0 %v2361
        %v2744 = vpop.f32.mrf.mxu0
        %v2745 = vadd.f32 0.0, %v2744
        %v2746 = vpop.f32.mrf.mxu0
        %2747 = vdwg.mxu0
        %2748 = vxpose.xlu0.b32.start [1/16] %v2430, 128
        %2749 = vxpose.xlu0.b32.cont [2/16] %v2435, 128
        %2750 = vxpose.xlu0.b32.cont [3/16] %v2440, 128
        %2751 = vxpose.xlu0.b32.cont [4/16] %v2445, 128
        %2752 = vxpose.xlu0.b32.cont [5/16] %v2450, 128
        %2753 = vxpose.xlu0.b32.cont [6/16] %v2455, 128
        %2754 = vxpose.xlu0.b32.cont [7/16] %v2460, 128
        %2755 = vxpose.xlu0.b32.cont [8/16] %v2465, 128
        %2756 = vxpose.xlu0.b32.cont [9/16] %v2470, 128
        %2757 = vxpose.xlu0.b32.cont [10/16] %v2475, 128
        %2758 = vxpose.xlu0.b32.cont [11/16] %v2480, 128
        %2759 = vxpose.xlu0.b32.cont [12/16] %v2485, 128
        %2760 = vxpose.xlu0.b32.cont [13/16] %v2490, 128
        %2761 = vxpose.xlu0.b32.cont [14/16] %v2495, 128
        %2762 = vxpose.xlu0.b32.cont [15/16] %v2500, 128
        %2763 = vxpose.xlu0.b32.end [16/16] %v2505, 128
        %v2764 = vpop.trf.xlu0
        %v2765 = vpop.trf.xlu0
        %v2766 = vpop.trf.xlu0
        %v2767 = vpop.trf.xlu0
        %v2768 = vpop.trf.xlu0
        %v2769 = vpop.trf.xlu0
        %v2770 = vpop.trf.xlu0
        %v2771 = vpop.trf.xlu0
        %v2772 = vpop.trf.xlu0
        %v2773 = vpop.trf.xlu0
        %v2774 = vpop.trf.xlu0
        %v2775 = vpop.trf.xlu0
        %v2776 = vpop.trf.xlu0
        %v2777 = vpop.trf.xlu0
        %v2778 = vpop.trf.xlu0
        %v2779 = vpop.trf.xlu0
        %2780 = vxpose.xlu0.b32.start [1/16] %v2510, 128
        %2781 = vxpose.xlu0.b32.cont [2/16] %v2515, 128
        %2782 = vxpose.xlu0.b32.cont [3/16] %v2520, 128
        %2783 = vxpose.xlu0.b32.cont [4/16] %v2525, 128
        %2784 = vxpose.xlu0.b32.cont [5/16] %v2530, 128
        %2785 = vxpose.xlu0.b32.cont [6/16] %v2535, 128
        %2786 = vxpose.xlu0.b32.cont [7/16] %v2540, 128
        %2787 = vxpose.xlu0.b32.cont [8/16] %v2545, 128
        %2788 = vxpose.xlu0.b32.cont [9/16] %v2550, 128
        %2789 = vxpose.xlu0.b32.cont [10/16] %v2555, 128
        %2790 = vxpose.xlu0.b32.cont [11/16] %v2560, 128
        %2791 = vxpose.xlu0.b32.cont [12/16] %v2565, 128
        %2792 = vxpose.xlu0.b32.cont [13/16] %v2570, 128
        %2793 = vxpose.xlu0.b32.cont [14/16] %v2575, 128
        %2794 = vxpose.xlu0.b32.cont [15/16] %v2580, 128
        %2795 = vxpose.xlu0.b32.end [16/16] %v2585, 128
        %v2796 = vpop.trf.xlu0
        %v2797 = vpop.trf.xlu0
        %v2798 = vpop.trf.xlu0
        %v2799 = vpop.trf.xlu0
        %v2800 = vpop.trf.xlu0
        %v2801 = vpop.trf.xlu0
        %v2802 = vpop.trf.xlu0
        %v2803 = vpop.trf.xlu0
        %v2804 = vpop.trf.xlu0
        %v2805 = vpop.trf.xlu0
        %v2806 = vpop.trf.xlu0
        %v2807 = vpop.trf.xlu0
        %v2808 = vpop.trf.xlu0
        %v2809 = vpop.trf.xlu0
        %v2810 = vpop.trf.xlu0
        %v2811 = vpop.trf.xlu0
        %2812 = vxpose.xlu0.b32.start [1/16] %v2590, 128
        %2813 = vxpose.xlu0.b32.cont [2/16] %v2595, 128
        %2814 = vxpose.xlu0.b32.cont [3/16] %v2600, 128
        %2815 = vxpose.xlu0.b32.cont [4/16] %v2605, 128
        %2816 = vxpose.xlu0.b32.cont [5/16] %v2610, 128
        %2817 = vxpose.xlu0.b32.cont [6/16] %v2615, 128
        %2818 = vxpose.xlu0.b32.cont [7/16] %v2620, 128
        %2819 = vxpose.xlu0.b32.cont [8/16] %v2625, 128
        %2820 = vxpose.xlu0.b32.cont [9/16] %v2630, 128
        %2821 = vxpose.xlu0.b32.cont [10/16] %v2635, 128
        %2822 = vxpose.xlu0.b32.cont [11/16] %v2640, 128
        %2823 = vxpose.xlu0.b32.cont [12/16] %v2645, 128
        %2824 = vxpose.xlu0.b32.cont [13/16] %v2650, 128
        %2825 = vxpose.xlu0.b32.cont [14/16] %v2655, 128
        %2826 = vxpose.xlu0.b32.cont [15/16] %v2660, 128
        %2827 = vxpose.xlu0.b32.end [16/16] %v2665, 128
        %v2828 = vpop.trf.xlu0
        %v2829 = vpop.trf.xlu0
        %v2830 = vpop.trf.xlu0
        %v2831 = vpop.trf.xlu0
        %v2832 = vpop.trf.xlu0
        %v2833 = vpop.trf.xlu0
        %v2834 = vpop.trf.xlu0
        %v2835 = vpop.trf.xlu0
        %v2836 = vpop.trf.xlu0
        %v2837 = vpop.trf.xlu0
        %v2838 = vpop.trf.xlu0
        %v2839 = vpop.trf.xlu0
        %v2840 = vpop.trf.xlu0
        %v2841 = vpop.trf.xlu0
        %v2842 = vpop.trf.xlu0
        %v2843 = vpop.trf.xlu0
        %2844 = vxpose.xlu0.b32.start [1/16] %v2670, 128
        %2845 = vxpose.xlu0.b32.cont [2/16] %v2675, 128
        %2846 = vxpose.xlu0.b32.cont [3/16] %v2680, 128
        %2847 = vxpose.xlu0.b32.cont [4/16] %v2685, 128
        %2848 = vxpose.xlu0.b32.cont [5/16] %v2690, 128
        %2849 = vxpose.xlu0.b32.cont [6/16] %v2695, 128
        %2850 = vxpose.xlu0.b32.cont [7/16] %v2700, 128
        %2851 = vxpose.xlu0.b32.cont [8/16] %v2705, 128
        %2852 = vxpose.xlu0.b32.cont [9/16] %v2710, 128
        %2853 = vxpose.xlu0.b32.cont [10/16] %v2715, 128
        %2854 = vxpose.xlu0.b32.cont [11/16] %v2720, 128
        %2855 = vxpose.xlu0.b32.cont [12/16] %v2725, 128
        %2856 = vxpose.xlu0.b32.cont [13/16] %v2730, 128
        %2857 = vxpose.xlu0.b32.cont [14/16] %v2735, 128
        %2858 = vxpose.xlu0.b32.cont [15/16] %v2740, 128
        %2859 = vxpose.xlu0.b32.end [16/16] %v2745, 128
        %v2860 = vpop.trf.xlu0
        %v2861 = vpop.trf.xlu0
        %v2862 = vpop.trf.xlu0
        %v2863 = vpop.trf.xlu0
        %v2864 = vpop.trf.xlu0
        %v2865 = vpop.trf.xlu0
        %v2866 = vpop.trf.xlu0
        %v2867 = vpop.trf.xlu0
        %v2868 = vpop.trf.xlu0
        %v2869 = vpop.trf.xlu0
        %v2870 = vpop.trf.xlu0
        %v2871 = vpop.trf.xlu0
        %v2872 = vpop.trf.xlu0
        %v2873 = vpop.trf.xlu0
        %v2874 = vpop.trf.xlu0
        %v2875 = vpop.trf.xlu0
        %v2876 = vadd.f32 %v1435, %v2764
        %v2877 = vadd.f32 %v1467, %v2796
        %v2878 = vadd.f32 %v1499, %v2828
        %v2879 = vadd.f32 %v1531, %v2860
        %v2880 = vld [vmem:[%s3] ss:$4 sm:$0xf]
        %v2881 = vadd.s32 %v2880, 1
        %vm2882 = vcmp.ge.s32.totalorder %v2881, 0
        %vm2883 = vcmp.lt.s32.totalorder %v2881, 8
        %vm2884 = vmand %vm2882, %vm2883
        %v2885 = vsel %vm2884, 1.0, 0.0
        %v2886 = vld [vmem:[%s206] ss:$4 sm:$0xf]
        %v2887 = vadd.s32 %v2886, 4294967295
        %vm2888 = vcmp.ge.s32.totalorder %v2887, 0
        %vm2889 = vcmp.lt.s32.totalorder %v2887, 8
        %vm2890 = vmand %vm2888, %vm2889
        %v2891 = vsel %vm2890, 1.0, 0.0
        %v2892 = vmul.f32 %v2885, %v2891
        %v2893 = vld [vmem:[%s214] ss:$4 sm:$0xf]
        %v2894 = vadd.s32 %v2893, 4294967295
        %vm2895 = vcmp.ge.s32.totalorder %v2894, 0
        %vm2896 = vcmp.lt.s32.totalorder %v2894, 8
        %vm2897 = vmand %vm2895, %vm2896
        %v2898 = vsel %vm2897, 1.0, 0.0
        %v2899 = vmul.f32 %v2892, %v2898
        %v2901 = vlaneseq
        %v2902 = vshrl.u32 %v2901, 7
        %v2903 = vsub.s32 0, %v2902
        %v2904 = vrot.slane %v2899, %v2903
        %v2905 = vlaneseq
        %v2906 = vshrl.u32 %v2905, 7
        %v2907 = vsub.s32 1, %v2906
        %v2908 = vrot.slane %v2899, %v2907
        %v2909 = vlaneseq
        %v2910 = vshrl.u32 %v2909, 7
        %v2911 = vsub.s32 2, %v2910
        %v2912 = vrot.slane %v2899, %v2911
        %v2913 = vlaneseq
        %v2914 = vshrl.u32 %v2913, 7
        %v2915 = vsub.s32 3, %v2914
        %v2916 = vrot.slane %v2899, %v2915
        %v2921 = vmul.f32 %v235, %v2904
        %v2922 = vmul.f32 %v234, %v2908
        %v2923 = vmul.f32 %v233, %v2912
        %v2924 = vmul.f32 %v236, %v2916
        %2925 = vst [vmem:[#allocation2] sm:$0xff] %v2921
        %2926 = vst [vmem:[#allocation2 + $0x8] sm:$0xff] %v2922
        %2927 = vst [vmem:[#allocation2 + $0x10] sm:$0xff] %v2923
        %2928 = vst [vmem:[#allocation2 + $0x18] sm:$0xff] %v2924
        %v2929 = vld [vmem:[%s214] ss:$4 sm:$0xf]
        %vm2930 = vcmp.ge.s32.totalorder %v2929, 0
        %vm2931 = vcmp.lt.s32.totalorder %v2929, 8
        %vm2932 = vmand %vm2930, %vm2931
        %v2933 = vsel %vm2932, 1.0, 0.0
        %v2934 = vmul.f32 %v2892, %v2933
        %v2936 = vlaneseq
        %v2937 = vshrl.u32 %v2936, 7
        %v2938 = vsub.s32 0, %v2937
        %v2939 = vrot.slane %v2934, %v2938
        %v2940 = vlaneseq
        %v2941 = vshrl.u32 %v2940, 7
        %v2942 = vsub.s32 1, %v2941
        %v2943 = vrot.slane %v2934, %v2942
        %v2944 = vlaneseq
        %v2945 = vshrl.u32 %v2944, 7
        %v2946 = vsub.s32 2, %v2945
        %v2947 = vrot.slane %v2934, %v2946
        %v2948 = vlaneseq
        %v2949 = vshrl.u32 %v2948, 7
        %v2950 = vsub.s32 3, %v2949
        %v2951 = vrot.slane %v2934, %v2950
        %v2956 = vmul.f32 %v283, %v2939
        %v2957 = vmul.f32 %v282, %v2943
        %v2958 = vmul.f32 %v281, %v2947
        %v2959 = vmul.f32 %v284, %v2951
        %2960 = vst [vmem:[#allocation2 + $0x20] sm:$0xff] %v2956
        %2961 = vst [vmem:[#allocation2 + $0x28] sm:$0xff] %v2957
        %2962 = vst [vmem:[#allocation2 + $0x30] sm:$0xff] %v2958
        %2963 = vst [vmem:[#allocation2 + $0x38] sm:$0xff] %v2959
        %v2964 = vld [vmem:[%s214] ss:$4 sm:$0xf]
        %v2965 = vadd.s32 %v2964, 1
        %vm2966 = vcmp.ge.s32.totalorder %v2965, 0
        %vm2967 = vcmp.lt.s32.totalorder %v2965, 8
        %vm2968 = vmand %vm2966, %vm2967
        %v2969 = vsel %vm2968, 1.0, 0.0
        %v2970 = vmul.f32 %v2892, %v2969
        %v2972 = vlaneseq
        %v2973 = vshrl.u32 %v2972, 7
        %v2974 = vsub.s32 0, %v2973
        %v2975 = vrot.slane %v2970, %v2974
        %v2976 = vlaneseq
        %v2977 = vshrl.u32 %v2976, 7
        %v2978 = vsub.s32 1, %v2977
        %v2979 = vrot.slane %v2970, %v2978
        %v2980 = vlaneseq
        %v2981 = vshrl.u32 %v2980, 7
        %v2982 = vsub.s32 2, %v2981
        %v2983 = vrot.slane %v2970, %v2982
        %v2984 = vlaneseq
        %v2985 = vshrl.u32 %v2984, 7
        %v2986 = vsub.s32 3, %v2985
        %v2987 = vrot.slane %v2970, %v2986
        %v2992 = vmul.f32 %v332, %v2975
        %v2993 = vmul.f32 %v331, %v2979
        %v2994 = vmul.f32 %v330, %v2983
        %v2995 = vmul.f32 %v333, %v2987
        %2996 = vst [vmem:[#allocation2 + $0x40] sm:$0xff] %v2992
        %2997 = vst [vmem:[#allocation2 + $0x48] sm:$0xff] %v2993
        %2998 = vst [vmem:[#allocation2 + $0x50] sm:$0xff] %v2994
        %2999 = vst [vmem:[#allocation2 + $0x58] sm:$0xff] %v2995
        %v3000 = vld [vmem:[%s206] ss:$4 sm:$0xf]
        %vm3001 = vcmp.ge.s32.totalorder %v3000, 0
        %vm3002 = vcmp.lt.s32.totalorder %v3000, 8
        %vm3003 = vmand %vm3001, %vm3002
        %v3004 = vsel %vm3003, 1.0, 0.0
        %v3005 = vmul.f32 %v2885, %v3004
        %v3006 = vld [vmem:[%s214] ss:$4 sm:$0xf]
        %v3007 = vadd.s32 %v3006, 4294967295
        %vm3008 = vcmp.ge.s32.totalorder %v3007, 0
        %vm3009 = vcmp.lt.s32.totalorder %v3007, 8
        %vm3010 = vmand %vm3008, %vm3009
        %v3011 = vsel %vm3010, 1.0, 0.0
        %v3012 = vmul.f32 %v3005, %v3011
        %v3014 = vlaneseq
        %v3015 = vshrl.u32 %v3014, 7
        %v3016 = vsub.s32 0, %v3015
        %v3017 = vrot.slane %v3012, %v3016
        %v3018 = vlaneseq
        %v3019 = vshrl.u32 %v3018, 7
        %v3020 = vsub.s32 1, %v3019
        %v3021 = vrot.slane %v3012, %v3020
        %v3022 = vlaneseq
        %v3023 = vshrl.u32 %v3022, 7
        %v3024 = vsub.s32 2, %v3023
        %v3025 = vrot.slane %v3012, %v3024
        %v3026 = vlaneseq
        %v3027 = vshrl.u32 %v3026, 7
        %v3028 = vsub.s32 3, %v3027
        %v3029 = vrot.slane %v3012, %v3028
        %v3034 = vmul.f32 %v387, %v3017
        %v3035 = vmul.f32 %v386, %v3021
        %v3036 = vmul.f32 %v385, %v3025
        %v3037 = vmul.f32 %v388, %v3029
        %3038 = vst [vmem:[#allocation2 + $0x60] sm:$0xff] %v3034
        %3039 = vst [vmem:[#allocation2 + $0x68] sm:$0xff] %v3035
        %3040 = vst [vmem:[#allocation2 + $0x70] sm:$0xff] %v3036
        %3041 = vst [vmem:[#allocation2 + $0x78] sm:$0xff] %v3037
        %v3042 = vld [vmem:[%s214] ss:$4 sm:$0xf]
        %vm3043 = vcmp.ge.s32.totalorder %v3042, 0
        %vm3044 = vcmp.lt.s32.totalorder %v3042, 8
        %vm3045 = vmand %vm3043, %vm3044
        %v3046 = vsel %vm3045, 1.0, 0.0
        %v3047 = vmul.f32 %v3005, %v3046
        %v3049 = vlaneseq
        %v3050 = vshrl.u32 %v3049, 7
        %v3051 = vsub.s32 0, %v3050
        %v3052 = vrot.slane %v3047, %v3051
        %v3053 = vlaneseq
        %v3054 = vshrl.u32 %v3053, 7
        %v3055 = vsub.s32 1, %v3054
        %v3056 = vrot.slane %v3047, %v3055
        %v3057 = vlaneseq
        %v3058 = vshrl.u32 %v3057, 7
        %v3059 = vsub.s32 2, %v3058
        %v3060 = vrot.slane %v3047, %v3059
        %v3061 = vlaneseq
        %v3062 = vshrl.u32 %v3061, 7
        %v3063 = vsub.s32 3, %v3062
        %v3064 = vrot.slane %v3047, %v3063
        %v3069 = vmul.f32 %v435, %v3052
        %v3070 = vmul.f32 %v434, %v3056
        %v3071 = vmul.f32 %v433, %v3060
        %v3072 = vmul.f32 %v436, %v3064
        %3073 = vst [vmem:[#allocation2 + $0x80] sm:$0xff] %v3069
        %3074 = vst [vmem:[#allocation2 + $0x88] sm:$0xff] %v3070
        %3075 = vst [vmem:[#allocation2 + $0x90] sm:$0xff] %v3071
        %3076 = vst [vmem:[#allocation2 + $0x98] sm:$0xff] %v3072
        %v3077 = vld [vmem:[%s214] ss:$4 sm:$0xf]
        %v3078 = vadd.s32 %v3077, 1
        %vm3079 = vcmp.ge.s32.totalorder %v3078, 0
        %vm3080 = vcmp.lt.s32.totalorder %v3078, 8
        %vm3081 = vmand %vm3079, %vm3080
        %v3082 = vsel %vm3081, 1.0, 0.0
        %v3083 = vmul.f32 %v3005, %v3082
        %v3085 = vlaneseq
        %v3086 = vshrl.u32 %v3085, 7
        %v3087 = vsub.s32 0, %v3086
        %v3088 = vrot.slane %v3083, %v3087
        %v3089 = vlaneseq
        %v3090 = vshrl.u32 %v3089, 7
        %v3091 = vsub.s32 1, %v3090
        %v3092 = vrot.slane %v3083, %v3091
        %v3093 = vlaneseq
        %v3094 = vshrl.u32 %v3093, 7
        %v3095 = vsub.s32 2, %v3094
        %v3096 = vrot.slane %v3083, %v3095
        %v3097 = vlaneseq
        %v3098 = vshrl.u32 %v3097, 7
        %v3099 = vsub.s32 3, %v3098
        %v3100 = vrot.slane %v3083, %v3099
        %v3105 = vmul.f32 %v484, %v3088
        %v3106 = vmul.f32 %v483, %v3092
        %v3107 = vmul.f32 %v482, %v3096
        %v3108 = vmul.f32 %v485, %v3100
        %3109 = vst [vmem:[#allocation2 + $0xa0] sm:$0xff] %v3105
        %3110 = vst [vmem:[#allocation2 + $0xa8] sm:$0xff] %v3106
        %3111 = vst [vmem:[#allocation2 + $0xb0] sm:$0xff] %v3107
        %3112 = vst [vmem:[#allocation2 + $0xb8] sm:$0xff] %v3108
        %v3113 = vld [vmem:[%s206] ss:$4 sm:$0xf]
        %v3114 = vadd.s32 %v3113, 1
        %vm3115 = vcmp.ge.s32.totalorder %v3114, 0
        %vm3116 = vcmp.lt.s32.totalorder %v3114, 8
        %vm3117 = vmand %vm3115, %vm3116
        %v3118 = vsel %vm3117, 1.0, 0.0
        %v3119 = vmul.f32 %v2885, %v3118
        %v3120 = vld [vmem:[%s214] ss:$4 sm:$0xf]
        %v3121 = vadd.s32 %v3120, 4294967295
        %vm3122 = vcmp.ge.s32.totalorder %v3121, 0
        %vm3123 = vcmp.lt.s32.totalorder %v3121, 8
        %vm3124 = vmand %vm3122, %vm3123
        %v3125 = vsel %vm3124, 1.0, 0.0
        %v3126 = vmul.f32 %v3119, %v3125
        %v3128 = vlaneseq
        %v3129 = vshrl.u32 %v3128, 7
        %v3130 = vsub.s32 0, %v3129
        %v3131 = vrot.slane %v3126, %v3130
        %v3132 = vlaneseq
        %v3133 = vshrl.u32 %v3132, 7
        %v3134 = vsub.s32 1, %v3133
        %v3135 = vrot.slane %v3126, %v3134
        %v3136 = vlaneseq
        %v3137 = vshrl.u32 %v3136, 7
        %v3138 = vsub.s32 2, %v3137
        %v3139 = vrot.slane %v3126, %v3138
        %v3140 = vlaneseq
        %v3141 = vshrl.u32 %v3140, 7
        %v3142 = vsub.s32 3, %v3141
        %v3143 = vrot.slane %v3126, %v3142
        %v3148 = vmul.f32 %v540, %v3131
        %v3149 = vmul.f32 %v539, %v3135
        %v3150 = vmul.f32 %v538, %v3139
        %v3151 = vmul.f32 %v541, %v3143
        %3152 = vst [vmem:[#allocation2 + $0xc0] sm:$0xff] %v3148
        %3153 = vst [vmem:[#allocation2 + $0xc8] sm:$0xff] %v3149
        %3154 = vst [vmem:[#allocation2 + $0xd0] sm:$0xff] %v3150
        %3155 = vst [vmem:[#allocation2 + $0xd8] sm:$0xff] %v3151
        %v3156 = vld [vmem:[%s214] ss:$4 sm:$0xf]
        %vm3157 = vcmp.ge.s32.totalorder %v3156, 0
        %vm3158 = vcmp.lt.s32.totalorder %v3156, 8
        %vm3159 = vmand %vm3157, %vm3158
        %v3160 = vsel %vm3159, 1.0, 0.0
        %v3161 = vmul.f32 %v3119, %v3160
        %v3163 = vlaneseq
        %v3164 = vshrl.u32 %v3163, 7
        %v3165 = vsub.s32 0, %v3164
        %v3166 = vrot.slane %v3161, %v3165
        %v3167 = vlaneseq
        %v3168 = vshrl.u32 %v3167, 7
        %v3169 = vsub.s32 1, %v3168
        %v3170 = vrot.slane %v3161, %v3169
        %v3171 = vlaneseq
        %v3172 = vshrl.u32 %v3171, 7
        %v3173 = vsub.s32 2, %v3172
        %v3174 = vrot.slane %v3161, %v3173
        %v3175 = vlaneseq
        %v3176 = vshrl.u32 %v3175, 7
        %v3177 = vsub.s32 3, %v3176
        %v3178 = vrot.slane %v3161, %v3177
        %v3183 = vmul.f32 %v588, %v3166
        %v3184 = vmul.f32 %v587, %v3170
        %v3185 = vmul.f32 %v586, %v3174
        %v3186 = vmul.f32 %v589, %v3178
        %3187 = vst [vmem:[#allocation2 + $0xe0] sm:$0xff] %v3183
        %3188 = vst [vmem:[#allocation2 + $0xe8] sm:$0xff] %v3184
        %3189 = vst [vmem:[#allocation2 + $0xf0] sm:$0xff] %v3185
        %3190 = vst [vmem:[#allocation2 + $0xf8] sm:$0xff] %v3186
        %v3191 = vld [vmem:[%s214] ss:$4 sm:$0xf]
        %v3192 = vadd.s32 %v3191, 1
        %vm3193 = vcmp.ge.s32.totalorder %v3192, 0
        %vm3194 = vcmp.lt.s32.totalorder %v3192, 8
        %vm3195 = vmand %vm3193, %vm3194
        %v3196 = vsel %vm3195, 1.0, 0.0
        %v3197 = vmul.f32 %v3119, %v3196
        %v3199 = vlaneseq
        %v3200 = vshrl.u32 %v3199, 7
        %v3201 = vsub.s32 0, %v3200
        %v3202 = vrot.slane %v3197, %v3201
        %v3203 = vlaneseq
        %v3204 = vshrl.u32 %v3203, 7
        %v3205 = vsub.s32 1, %v3204
        %v3206 = vrot.slane %v3197, %v3205
        %v3207 = vlaneseq
        %v3208 = vshrl.u32 %v3207, 7
        %v3209 = vsub.s32 2, %v3208
        %v3210 = vrot.slane %v3197, %v3209
        %v3211 = vlaneseq
        %v3212 = vshrl.u32 %v3211, 7
        %v3213 = vsub.s32 3, %v3212
        %v3214 = vrot.slane %v3197, %v3213
        %v3219 = vmul.f32 %v637, %v3202
        %v3220 = vmul.f32 %v636, %v3206
        %v3221 = vmul.f32 %v635, %v3210
        %v3222 = vmul.f32 %v638, %v3214
        %3223 = vst [vmem:[#allocation2 + $0x100] sm:$0xff] %v3219
        %3224 = vst [vmem:[#allocation2 + $0x108] sm:$0xff] %v3220
        %3225 = vst [vmem:[#allocation2 + $0x110] sm:$0xff] %v3221
        %3226 = vst [vmem:[#allocation2 + $0x118] sm:$0xff] %v3222
        %v3227 = vld [vmem:[#allocation2] sm:$0xff]
        %v3228 = vld [vmem:[#allocation2 + $0x8] sm:$0xff]
        %v3229 = vld [vmem:[#allocation2 + $0x10] sm:$0xff]
        %v3230 = vld [vmem:[#allocation2 + $0x18] sm:$0xff]
        %v3231 = vld [vmem:[#allocation2 + $0x20] sm:$0xff]
        %v3232 = vld [vmem:[#allocation2 + $0x28] sm:$0xff]
        %v3233 = vld [vmem:[#allocation2 + $0x30] sm:$0xff]
        %v3234 = vld [vmem:[#allocation2 + $0x38] sm:$0xff]
        %v3235 = vld [vmem:[#allocation2 + $0x40] sm:$0xff]
        %v3236 = vld [vmem:[#allocation2 + $0x48] sm:$0xff]
        %v3237 = vld [vmem:[#allocation2 + $0x50] sm:$0xff]
        %v3238 = vld [vmem:[#allocation2 + $0x58] sm:$0xff]
        %v3239 = vld [vmem:[#allocation2 + $0x60] sm:$0xff]
        %v3240 = vld [vmem:[#allocation2 + $0x68] sm:$0xff]
        %v3241 = vld [vmem:[#allocation2 + $0x70] sm:$0xff]
        %v3242 = vld [vmem:[#allocation2 + $0x78] sm:$0xff]
        %v3243 = vld [vmem:[#allocation2 + $0x80] sm:$0xff]
        %v3244 = vld [vmem:[#allocation2 + $0x88] sm:$0xff]
        %v3245 = vld [vmem:[#allocation2 + $0x90] sm:$0xff]
        %v3246 = vld [vmem:[#allocation2 + $0x98] sm:$0xff]
        %v3247 = vld [vmem:[#allocation2 + $0xa0] sm:$0xff]
        %v3248 = vld [vmem:[#allocation2 + $0xa8] sm:$0xff]
        %v3249 = vld [vmem:[#allocation2 + $0xb0] sm:$0xff]
        %v3250 = vld [vmem:[#allocation2 + $0xb8] sm:$0xff]
        %v3251 = vld [vmem:[#allocation2 + $0xc0] sm:$0xff]
        %v3252 = vld [vmem:[#allocation2 + $0xc8] sm:$0xff]
        %v3253 = vld [vmem:[#allocation2 + $0xd0] sm:$0xff]
        %v3254 = vld [vmem:[#allocation2 + $0xd8] sm:$0xff]
        %v3255 = vld [vmem:[#allocation2 + $0xe0] sm:$0xff]
        %v3256 = vld [vmem:[#allocation2 + $0xe8] sm:$0xff]
        %v3257 = vld [vmem:[#allocation2 + $0xf0] sm:$0xff]
        %v3258 = vld [vmem:[#allocation2 + $0xf8] sm:$0xff]
        %v3259 = vld [vmem:[#allocation2 + $0x100] sm:$0xff]
        %v3260 = vld [vmem:[#allocation2 + $0x108] sm:$0xff]
        %v3261 = vld [vmem:[#allocation2 + $0x110] sm:$0xff]
        %v3262 = vld [vmem:[#allocation2 + $0x118] sm:$0xff]
        %s3263 = scalar_lea.vmem %s1, 144
        %v3264 = vld [vmem:[%s3263] sm:$0xff]
        %v3265 = vld [vmem:[%s3263 + $0x8] sm:$0xff]
        %v3266 = vld [vmem:[%s3263 + $0x10] sm:$0xff]
        %v3267 = vld [vmem:[%s3263 + $0x18] sm:$0xff]
        %v3268 = vld [vmem:[%s3263 + $0x20] sm:$0xff]
        %v3269 = vld [vmem:[%s3263 + $0x28] sm:$0xff]
        %v3270 = vld [vmem:[%s3263 + $0x30] sm:$0xff]
        %v3271 = vld [vmem:[%s3263 + $0x38] sm:$0xff]
        %v3272 = vld [vmem:[%s3263 + $0x40] sm:$0xff]
        %3273 = vxpose.xlu0.b32.start [1/16] %v3227, 128
        %3274 = vxpose.xlu0.b32.cont [2/16] %v3231, 128
        %3275 = vxpose.xlu0.b32.cont [3/16] %v3235, 128
        %3276 = vxpose.xlu0.b32.cont [4/16] %v3239, 128
        %3277 = vxpose.xlu0.b32.cont [5/16] %v3243, 128
        %3278 = vxpose.xlu0.b32.cont [6/16] %v3247, 128
        %3279 = vxpose.xlu0.b32.cont [7/16] %v3251, 128
        %3280 = vxpose.xlu0.b32.cont [8/16] %v3255, 128
        %3281 = vxpose.xlu0.b32.cont [9/16] %v3259, 128
        %3282 = vxpose.xlu0.b32.cont [10/16] 0.0, 128
        %3283 = vxpose.xlu0.b32.cont [11/16] 0.0, 128
        %3284 = vxpose.xlu0.b32.cont [12/16] 0.0, 128
        %3285 = vxpose.xlu0.b32.cont [13/16] 0.0, 128
        %3286 = vxpose.xlu0.b32.cont [14/16] 0.0, 128
        %3287 = vxpose.xlu0.b32.cont [15/16] 0.0, 128
        %3288 = vxpose.xlu0.b32.end [16/16] 0.0, 128
        %v3289 = vpop.trf.xlu0
        %v3290 = vpop.trf.xlu0
        %v3291 = vpop.trf.xlu0
        %v3292 = vpop.trf.xlu0
        %v3293 = vpop.trf.xlu0
        %v3294 = vpop.trf.xlu0
        %v3295 = vpop.trf.xlu0
        %v3296 = vpop.trf.xlu0
        %v3297 = vpop.trf.xlu0
        %v3298 = vpop.trf.xlu0
        %v3299 = vpop.trf.xlu0
        %v3300 = vpop.trf.xlu0
        %v3301 = vpop.trf.xlu0
        %v3302 = vpop.trf.xlu0
        %v3303 = vpop.trf.xlu0
        %v3304 = vpop.trf.xlu0
        %3305 = vxpose.xlu0.b32.start [1/16] %v3228, 128
        %3306 = vxpose.xlu0.b32.cont [2/16] %v3232, 128
        %3307 = vxpose.xlu0.b32.cont [3/16] %v3236, 128
        %3308 = vxpose.xlu0.b32.cont [4/16] %v3240, 128
        %3309 = vxpose.xlu0.b32.cont [5/16] %v3244, 128
        %3310 = vxpose.xlu0.b32.cont [6/16] %v3248, 128
        %3311 = vxpose.xlu0.b32.cont [7/16] %v3252, 128
        %3312 = vxpose.xlu0.b32.cont [8/16] %v3256, 128
        %3313 = vxpose.xlu0.b32.cont [9/16] %v3260, 128
        %3314 = vxpose.xlu0.b32.cont [10/16] 0.0, 128
        %3315 = vxpose.xlu0.b32.cont [11/16] 0.0, 128
        %3316 = vxpose.xlu0.b32.cont [12/16] 0.0, 128
        %3317 = vxpose.xlu0.b32.cont [13/16] 0.0, 128
        %3318 = vxpose.xlu0.b32.cont [14/16] 0.0, 128
        %3319 = vxpose.xlu0.b32.cont [15/16] 0.0, 128
        %3320 = vxpose.xlu0.b32.end [16/16] 0.0, 128
        %v3321 = vpop.trf.xlu0
        %v3322 = vpop.trf.xlu0
        %v3323 = vpop.trf.xlu0
        %v3324 = vpop.trf.xlu0
        %v3325 = vpop.trf.xlu0
        %v3326 = vpop.trf.xlu0
        %v3327 = vpop.trf.xlu0
        %v3328 = vpop.trf.xlu0
        %v3329 = vpop.trf.xlu0
        %v3330 = vpop.trf.xlu0
        %v3331 = vpop.trf.xlu0
        %v3332 = vpop.trf.xlu0
        %v3333 = vpop.trf.xlu0
        %v3334 = vpop.trf.xlu0
        %v3335 = vpop.trf.xlu0
        %v3336 = vpop.trf.xlu0
        %3337 = vxpose.xlu0.b32.start [1/16] %v3229, 128
        %3338 = vxpose.xlu0.b32.cont [2/16] %v3233, 128
        %3339 = vxpose.xlu0.b32.cont [3/16] %v3237, 128
        %3340 = vxpose.xlu0.b32.cont [4/16] %v3241, 128
        %3341 = vxpose.xlu0.b32.cont [5/16] %v3245, 128
        %3342 = vxpose.xlu0.b32.cont [6/16] %v3249, 128
        %3343 = vxpose.xlu0.b32.cont [7/16] %v3253, 128
        %3344 = vxpose.xlu0.b32.cont [8/16] %v3257, 128
        %3345 = vxpose.xlu0.b32.cont [9/16] %v3261, 128
        %3346 = vxpose.xlu0.b32.cont [10/16] 0.0, 128
        %3347 = vxpose.xlu0.b32.cont [11/16] 0.0, 128
        %3348 = vxpose.xlu0.b32.cont [12/16] 0.0, 128
        %3349 = vxpose.xlu0.b32.cont [13/16] 0.0, 128
        %3350 = vxpose.xlu0.b32.cont [14/16] 0.0, 128
        %3351 = vxpose.xlu0.b32.cont [15/16] 0.0, 128
        %3352 = vxpose.xlu0.b32.end [16/16] 0.0, 128
        %v3353 = vpop.trf.xlu0
        %v3354 = vpop.trf.xlu0
        %v3355 = vpop.trf.xlu0
        %v3356 = vpop.trf.xlu0
        %v3357 = vpop.trf.xlu0
        %v3358 = vpop.trf.xlu0
        %v3359 = vpop.trf.xlu0
        %v3360 = vpop.trf.xlu0
        %v3361 = vpop.trf.xlu0
        %v3362 = vpop.trf.xlu0
        %v3363 = vpop.trf.xlu0
        %v3364 = vpop.trf.xlu0
        %v3365 = vpop.trf.xlu0
        %v3366 = vpop.trf.xlu0
        %v3367 = vpop.trf.xlu0
        %v3368 = vpop.trf.xlu0
        %3369 = vxpose.xlu0.b32.start [1/16] %v3230, 128
        %3370 = vxpose.xlu0.b32.cont [2/16] %v3234, 128
        %3371 = vxpose.xlu0.b32.cont [3/16] %v3238, 128
        %3372 = vxpose.xlu0.b32.cont [4/16] %v3242, 128
        %3373 = vxpose.xlu0.b32.cont [5/16] %v3246, 128
        %3374 = vxpose.xlu0.b32.cont [6/16] %v3250, 128
        %3375 = vxpose.xlu0.b32.cont [7/16] %v3254, 128
        %3376 = vxpose.xlu0.b32.cont [8/16] %v3258, 128
        %3377 = vxpose.xlu0.b32.cont [9/16] %v3262, 128
        %3378 = vxpose.xlu0.b32.cont [10/16] 0.0, 128
        %3379 = vxpose.xlu0.b32.cont [11/16] 0.0, 128
        %3380 = vxpose.xlu0.b32.cont [12/16] 0.0, 128
        %3381 = vxpose.xlu0.b32.cont [13/16] 0.0, 128
        %3382 = vxpose.xlu0.b32.cont [14/16] 0.0, 128
        %3383 = vxpose.xlu0.b32.cont [15/16] 0.0, 128
        %3384 = vxpose.xlu0.b32.end [16/16] 0.0, 128
        %v3385 = vpop.trf.xlu0
        %v3386 = vpop.trf.xlu0
        %v3387 = vpop.trf.xlu0
        %v3388 = vpop.trf.xlu0
        %v3389 = vpop.trf.xlu0
        %v3390 = vpop.trf.xlu0
        %v3391 = vpop.trf.xlu0
        %v3392 = vpop.trf.xlu0
        %v3393 = vpop.trf.xlu0
        %v3394 = vpop.trf.xlu0
        %v3395 = vpop.trf.xlu0
        %v3396 = vpop.trf.xlu0
        %v3397 = vpop.trf.xlu0
        %v3398 = vpop.trf.xlu0
        %v3399 = vpop.trf.xlu0
        %v3400 = vpop.trf.xlu0
        %v3402 = vsel %vm841, %v3289, 0
        %v3405 = vsel %vm841, %v3290, 0
        %v3408 = vsel %vm841, %v3291, 0
        %v3411 = vsel %vm841, %v3292, 0
        %v3414 = vsel %vm841, %v3293, 0
        %v3417 = vsel %vm841, %v3294, 0
        %v3420 = vsel %vm841, %v3295, 0
        %v3423 = vsel %vm841, %v3296, 0
        %v3426 = vsel %vm841, %v3297, 0
        %v3429 = vsel %vm841, %v3298, 0
        %v3432 = vsel %vm841, %v3299, 0
        %v3435 = vsel %vm841, %v3300, 0
        %v3438 = vsel %vm841, %v3301, 0
        %v3441 = vsel %vm841, %v3302, 0
        %v3444 = vsel %vm841, %v3303, 0
        %v3447 = vsel %vm841, %v3304, 0
        %v3450 = vsel %vm841, %v3321, 0
        %v3453 = vsel %vm841, %v3322, 0
        %v3456 = vsel %vm841, %v3323, 0
        %v3459 = vsel %vm841, %v3324, 0
        %v3462 = vsel %vm841, %v3325, 0
        %v3465 = vsel %vm841, %v3326, 0
        %v3468 = vsel %vm841, %v3327, 0
        %v3471 = vsel %vm841, %v3328, 0
        %v3474 = vsel %vm841, %v3329, 0
        %v3477 = vsel %vm841, %v3330, 0
        %v3480 = vsel %vm841, %v3331, 0
        %v3483 = vsel %vm841, %v3332, 0
        %v3486 = vsel %vm841, %v3333, 0
        %v3489 = vsel %vm841, %v3334, 0
        %v3492 = vsel %vm841, %v3335, 0
        %v3495 = vsel %vm841, %v3336, 0
        %v3498 = vsel %vm841, %v3353, 0
        %v3501 = vsel %vm841, %v3354, 0
        %v3504 = vsel %vm841, %v3355, 0
        %v3507 = vsel %vm841, %v3356, 0
        %v3510 = vsel %vm841, %v3357, 0
        %v3513 = vsel %vm841, %v3358, 0
        %v3516 = vsel %vm841, %v3359, 0
        %v3519 = vsel %vm841, %v3360, 0
        %v3522 = vsel %vm841, %v3361, 0
        %v3525 = vsel %vm841, %v3362, 0
        %v3528 = vsel %vm841, %v3363, 0
        %v3531 = vsel %vm841, %v3364, 0
        %v3534 = vsel %vm841, %v3365, 0
        %v3537 = vsel %vm841, %v3366, 0
        %v3540 = vsel %vm841, %v3367, 0
        %v3543 = vsel %vm841, %v3368, 0
        %v3546 = vsel %vm841, %v3385, 0
        %v3549 = vsel %vm841, %v3386, 0
        %v3552 = vsel %vm841, %v3387, 0
        %v3555 = vsel %vm841, %v3388, 0
        %v3558 = vsel %vm841, %v3389, 0
        %v3561 = vsel %vm841, %v3390, 0
        %v3564 = vsel %vm841, %v3391, 0
        %v3567 = vsel %vm841, %v3392, 0
        %v3570 = vsel %vm841, %v3393, 0
        %v3573 = vsel %vm841, %v3394, 0
        %v3576 = vsel %vm841, %v3395, 0
        %v3579 = vsel %vm841, %v3396, 0
        %v3582 = vsel %vm841, %v3397, 0
        %v3585 = vsel %vm841, %v3398, 0
        %v3588 = vsel %vm841, %v3399, 0
        %v3591 = vsel %vm841, %v3400, 0
        %3593 = vmatprep.subr.mxu0 0.0
        %3594 = vmatpush1.msra.mxu0 0.0
        %3595 = vmatprep.subr.mxu0 0.0
        %3596 = vmatpush1.msra.mxu0 0.0
        %3597 = vmatprep.subr.mxu0 0.0
        %3598 = vmatpush1.msra.mxu0 0.0
        %3599 = vmatprep.subr.mxu0 0.0
        %3600 = vmatpush1.msra.mxu0 0.0
        %3601 = vmatprep.subr.mxu0 0.0
        %3602 = vmatpush1.msra.mxu0 0.0
        %3603 = vmatprep.subr.mxu0 0.0
        %3604 = vmatpush1.msra.mxu0 0.0
        %3605 = vmatprep.subr.mxu0 0.0
        %3606 = vmatpush1.msra.mxu0 0.0
        %3607 = vmatprep.subr.mxu0 0.0
        %3608 = vmatpush1.msra.mxu0 %v3272
        %3609 = vmatprep.subr.mxu0 0.0
        %3610 = vmatpush1.msra.mxu0 %v3271
        %3611 = vmatprep.subr.mxu0 0.0
        %3612 = vmatpush1.msra.mxu0 %v3270
        %3613 = vmatprep.subr.mxu0 0.0
        %3614 = vmatpush1.msra.mxu0 %v3269
        %3615 = vmatprep.subr.mxu0 0.0
        %3616 = vmatpush1.msra.mxu0 %v3268
        %3617 = vmatprep.subr.mxu0 0.0
        %3618 = vmatpush1.msra.mxu0 %v3267
        %3619 = vmatprep.subr.mxu0 0.0
        %3620 = vmatpush1.msra.mxu0 %v3266
        %3621 = vmatprep.subr.mxu0 0.0
        %3622 = vmatpush1.msra.mxu0 %v3265
        %3623 = vmatprep.subr.mxu0 0.0
        %3624 = vmatpush1.msra.mxu0 %v3264
        %3625 = vmatprep.subr.mxu0 0.0
        %3626 = vmatpush2.msra.mxu0 0.0
        %3627 = vmatprep.subr.mxu0 0.0
        %3628 = vmatpush2.msra.mxu0 0.0
        %3629 = vmatprep.subr.mxu0 0.0
        %3630 = vmatpush2.msra.mxu0 0.0
        %3631 = vmatprep.subr.mxu0 0.0
        %3632 = vmatpush2.msra.mxu0 0.0
        %3633 = vmatprep.subr.mxu0 0.0
        %3634 = vmatpush2.msra.mxu0 0.0
        %3635 = vmatprep.subr.mxu0 0.0
        %3636 = vmatpush2.msra.mxu0 0.0
        %3637 = vmatprep.subr.mxu0 0.0
        %3638 = vmatpush2.msra.mxu0 0.0
        %3639 = vmatprep.subr.mxu0 0.0
        %3640 = vmatpush2.msra.mxu0 0.0
        %3641 = vmatprep.subr.mxu0 0.0
        %3642 = vmatpush2.msra.mxu0 0.0
        %3643 = vmatprep.subr.mxu0 0.0
        %3644 = vmatpush2.msra.mxu0 0.0
        %3645 = vmatprep.subr.mxu0 0.0
        %3646 = vmatpush2.msra.mxu0 0.0
        %3647 = vmatprep.subr.mxu0 0.0
        %3648 = vmatpush2.msra.mxu0 0.0
        %3649 = vmatprep.subr.mxu0 0.0
        %3650 = vmatpush2.msra.mxu0 0.0
        %3651 = vmatprep.subr.mxu0 0.0
        %3652 = vmatpush2.msra.mxu0 0.0
        %3653 = vmatprep.subr.mxu0 0.0
        %3654 = vmatpush2.msra.mxu0 0.0
        %3655 = vmatprep.subr.mxu0 0.0
        %3656 = vmatpush2.msra.mxu0 0.0
        %3657 = vmatprep.mubr.f32.mxu0 0.0
        %3658 = vmatmul.mubr.f32.gmra.mxu0 %v3402
        %v3659 = vpop.f32.mrf.mxu0
        %v3660 = vadd.f32 0.0, %v3659
        %v3661 = vpop.f32.mrf.mxu0
        %3662 = vmatprep.mubr.f32.mxu0 0.0
        %3663 = vmatmul.mubr.f32.gmra.mxu0 %v3405
        %v3664 = vpop.f32.mrf.mxu0
        %v3665 = vadd.f32 0.0, %v3664
        %v3666 = vpop.f32.mrf.mxu0
        %3667 = vmatprep.mubr.f32.mxu0 0.0
        %3668 = vmatmul.mubr.f32.gmra.mxu0 %v3408
        %v3669 = vpop.f32.mrf.mxu0
        %v3670 = vadd.f32 0.0, %v3669
        %v3671 = vpop.f32.mrf.mxu0
        %3672 = vmatprep.mubr.f32.mxu0 0.0
        %3673 = vmatmul.mubr.f32.gmra.mxu0 %v3411
        %v3674 = vpop.f32.mrf.mxu0
        %v3675 = vadd.f32 0.0, %v3674
        %v3676 = vpop.f32.mrf.mxu0
        %3677 = vmatprep.mubr.f32.mxu0 0.0
        %3678 = vmatmul.mubr.f32.gmra.mxu0 %v3414
        %v3679 = vpop.f32.mrf.mxu0
        %v3680 = vadd.f32 0.0, %v3679
        %v3681 = vpop.f32.mrf.mxu0
        %3682 = vmatprep.mubr.f32.mxu0 0.0
        %3683 = vmatmul.mubr.f32.gmra.mxu0 %v3417
        %v3684 = vpop.f32.mrf.mxu0
        %v3685 = vadd.f32 0.0, %v3684
        %v3686 = vpop.f32.mrf.mxu0
        %3687 = vmatprep.mubr.f32.mxu0 0.0
        %3688 = vmatmul.mubr.f32.gmra.mxu0 %v3420
        %v3689 = vpop.f32.mrf.mxu0
        %v3690 = vadd.f32 0.0, %v3689
        %v3691 = vpop.f32.mrf.mxu0
        %3692 = vmatprep.mubr.f32.mxu0 0.0
        %3693 = vmatmul.mubr.f32.gmra.mxu0 %v3423
        %v3694 = vpop.f32.mrf.mxu0
        %v3695 = vadd.f32 0.0, %v3694
        %v3696 = vpop.f32.mrf.mxu0
        %3697 = vmatprep.mubr.f32.mxu0 0.0
        %3698 = vmatmul.mubr.f32.gmra.mxu0 %v3426
        %v3699 = vpop.f32.mrf.mxu0
        %v3700 = vadd.f32 0.0, %v3699
        %v3701 = vpop.f32.mrf.mxu0
        %3702 = vmatprep.mubr.f32.mxu0 0.0
        %3703 = vmatmul.mubr.f32.gmra.mxu0 %v3429
        %v3704 = vpop.f32.mrf.mxu0
        %v3705 = vadd.f32 0.0, %v3704
        %v3706 = vpop.f32.mrf.mxu0
        %3707 = vmatprep.mubr.f32.mxu0 0.0
        %3708 = vmatmul.mubr.f32.gmra.mxu0 %v3432
        %v3709 = vpop.f32.mrf.mxu0
        %v3710 = vadd.f32 0.0, %v3709
        %v3711 = vpop.f32.mrf.mxu0
        %3712 = vmatprep.mubr.f32.mxu0 0.0
        %3713 = vmatmul.mubr.f32.gmra.mxu0 %v3435
        %v3714 = vpop.f32.mrf.mxu0
        %v3715 = vadd.f32 0.0, %v3714
        %v3716 = vpop.f32.mrf.mxu0
        %3717 = vmatprep.mubr.f32.mxu0 0.0
        %3718 = vmatmul.mubr.f32.gmra.mxu0 %v3438
        %v3719 = vpop.f32.mrf.mxu0
        %v3720 = vadd.f32 0.0, %v3719
        %v3721 = vpop.f32.mrf.mxu0
        %3722 = vmatprep.mubr.f32.mxu0 0.0
        %3723 = vmatmul.mubr.f32.gmra.mxu0 %v3441
        %v3724 = vpop.f32.mrf.mxu0
        %v3725 = vadd.f32 0.0, %v3724
        %v3726 = vpop.f32.mrf.mxu0
        %3727 = vmatprep.mubr.f32.mxu0 0.0
        %3728 = vmatmul.mubr.f32.gmra.mxu0 %v3444
        %v3729 = vpop.f32.mrf.mxu0
        %v3730 = vadd.f32 0.0, %v3729
        %v3731 = vpop.f32.mrf.mxu0
        %3732 = vmatprep.mubr.f32.mxu0 0.0
        %3733 = vmatmul.mubr.f32.gmra.mxu0 %v3447
        %v3734 = vpop.f32.mrf.mxu0
        %v3735 = vadd.f32 0.0, %v3734
        %v3736 = vpop.f32.mrf.mxu0
        %3737 = vmatprep.mubr.f32.mxu0 0.0
        %3738 = vmatmul.mubr.f32.gmra.mxu0 %v3450
        %v3739 = vpop.f32.mrf.mxu0
        %v3740 = vadd.f32 0.0, %v3739
        %v3741 = vpop.f32.mrf.mxu0
        %3742 = vmatprep.mubr.f32.mxu0 0.0
        %3743 = vmatmul.mubr.f32.gmra.mxu0 %v3453
        %v3744 = vpop.f32.mrf.mxu0
        %v3745 = vadd.f32 0.0, %v3744
        %v3746 = vpop.f32.mrf.mxu0
        %3747 = vmatprep.mubr.f32.mxu0 0.0
        %3748 = vmatmul.mubr.f32.gmra.mxu0 %v3456
        %v3749 = vpop.f32.mrf.mxu0
        %v3750 = vadd.f32 0.0, %v3749
        %v3751 = vpop.f32.mrf.mxu0
        %3752 = vmatprep.mubr.f32.mxu0 0.0
        %3753 = vmatmul.mubr.f32.gmra.mxu0 %v3459
        %v3754 = vpop.f32.mrf.mxu0
        %v3755 = vadd.f32 0.0, %v3754
        %v3756 = vpop.f32.mrf.mxu0
        %3757 = vmatprep.mubr.f32.mxu0 0.0
        %3758 = vmatmul.mubr.f32.gmra.mxu0 %v3462
        %v3759 = vpop.f32.mrf.mxu0
        %v3760 = vadd.f32 0.0, %v3759
        %v3761 = vpop.f32.mrf.mxu0
        %3762 = vmatprep.mubr.f32.mxu0 0.0
        %3763 = vmatmul.mubr.f32.gmra.mxu0 %v3465
        %v3764 = vpop.f32.mrf.mxu0
        %v3765 = vadd.f32 0.0, %v3764
        %v3766 = vpop.f32.mrf.mxu0
        %3767 = vmatprep.mubr.f32.mxu0 0.0
        %3768 = vmatmul.mubr.f32.gmra.mxu0 %v3468
        %v3769 = vpop.f32.mrf.mxu0
        %v3770 = vadd.f32 0.0, %v3769
        %v3771 = vpop.f32.mrf.mxu0
        %3772 = vmatprep.mubr.f32.mxu0 0.0
        %3773 = vmatmul.mubr.f32.gmra.mxu0 %v3471
        %v3774 = vpop.f32.mrf.mxu0
        %v3775 = vadd.f32 0.0, %v3774
        %v3776 = vpop.f32.mrf.mxu0
        %3777 = vmatprep.mubr.f32.mxu0 0.0
        %3778 = vmatmul.mubr.f32.gmra.mxu0 %v3474
        %v3779 = vpop.f32.mrf.mxu0
        %v3780 = vadd.f32 0.0, %v3779
        %v3781 = vpop.f32.mrf.mxu0
        %3782 = vmatprep.mubr.f32.mxu0 0.0
        %3783 = vmatmul.mubr.f32.gmra.mxu0 %v3477
        %v3784 = vpop.f32.mrf.mxu0
        %v3785 = vadd.f32 0.0, %v3784
        %v3786 = vpop.f32.mrf.mxu0
        %3787 = vmatprep.mubr.f32.mxu0 0.0
        %3788 = vmatmul.mubr.f32.gmra.mxu0 %v3480
        %v3789 = vpop.f32.mrf.mxu0
        %v3790 = vadd.f32 0.0, %v3789
        %v3791 = vpop.f32.mrf.mxu0
        %3792 = vmatprep.mubr.f32.mxu0 0.0
        %3793 = vmatmul.mubr.f32.gmra.mxu0 %v3483
        %v3794 = vpop.f32.mrf.mxu0
        %v3795 = vadd.f32 0.0, %v3794
        %v3796 = vpop.f32.mrf.mxu0
        %3797 = vmatprep.mubr.f32.mxu0 0.0
        %3798 = vmatmul.mubr.f32.gmra.mxu0 %v3486
        %v3799 = vpop.f32.mrf.mxu0
        %v3800 = vadd.f32 0.0, %v3799
        %v3801 = vpop.f32.mrf.mxu0
        %3802 = vmatprep.mubr.f32.mxu0 0.0
        %3803 = vmatmul.mubr.f32.gmra.mxu0 %v3489
        %v3804 = vpop.f32.mrf.mxu0
        %v3805 = vadd.f32 0.0, %v3804
        %v3806 = vpop.f32.mrf.mxu0
        %3807 = vmatprep.mubr.f32.mxu0 0.0
        %3808 = vmatmul.mubr.f32.gmra.mxu0 %v3492
        %v3809 = vpop.f32.mrf.mxu0
        %v3810 = vadd.f32 0.0, %v3809
        %v3811 = vpop.f32.mrf.mxu0
        %3812 = vmatprep.mubr.f32.mxu0 0.0
        %3813 = vmatmul.mubr.f32.gmra.mxu0 %v3495
        %v3814 = vpop.f32.mrf.mxu0
        %v3815 = vadd.f32 0.0, %v3814
        %v3816 = vpop.f32.mrf.mxu0
        %3817 = vmatprep.mubr.f32.mxu0 0.0
        %3818 = vmatmul.mubr.f32.gmra.mxu0 %v3498
        %v3819 = vpop.f32.mrf.mxu0
        %v3820 = vadd.f32 0.0, %v3819
        %v3821 = vpop.f32.mrf.mxu0
        %3822 = vmatprep.mubr.f32.mxu0 0.0
        %3823 = vmatmul.mubr.f32.gmra.mxu0 %v3501
        %v3824 = vpop.f32.mrf.mxu0
        %v3825 = vadd.f32 0.0, %v3824
        %v3826 = vpop.f32.mrf.mxu0
        %3827 = vmatprep.mubr.f32.mxu0 0.0
        %3828 = vmatmul.mubr.f32.gmra.mxu0 %v3504
        %v3829 = vpop.f32.mrf.mxu0
        %v3830 = vadd.f32 0.0, %v3829
        %v3831 = vpop.f32.mrf.mxu0
        %3832 = vmatprep.mubr.f32.mxu0 0.0
        %3833 = vmatmul.mubr.f32.gmra.mxu0 %v3507
        %v3834 = vpop.f32.mrf.mxu0
        %v3835 = vadd.f32 0.0, %v3834
        %v3836 = vpop.f32.mrf.mxu0
        %3837 = vmatprep.mubr.f32.mxu0 0.0
        %3838 = vmatmul.mubr.f32.gmra.mxu0 %v3510
        %v3839 = vpop.f32.mrf.mxu0
        %v3840 = vadd.f32 0.0, %v3839
        %v3841 = vpop.f32.mrf.mxu0
        %3842 = vmatprep.mubr.f32.mxu0 0.0
        %3843 = vmatmul.mubr.f32.gmra.mxu0 %v3513
        %v3844 = vpop.f32.mrf.mxu0
        %v3845 = vadd.f32 0.0, %v3844
        %v3846 = vpop.f32.mrf.mxu0
        %3847 = vmatprep.mubr.f32.mxu0 0.0
        %3848 = vmatmul.mubr.f32.gmra.mxu0 %v3516
        %v3849 = vpop.f32.mrf.mxu0
        %v3850 = vadd.f32 0.0, %v3849
        %v3851 = vpop.f32.mrf.mxu0
        %3852 = vmatprep.mubr.f32.mxu0 0.0
        %3853 = vmatmul.mubr.f32.gmra.mxu0 %v3519
        %v3854 = vpop.f32.mrf.mxu0
        %v3855 = vadd.f32 0.0, %v3854
        %v3856 = vpop.f32.mrf.mxu0
        %3857 = vmatprep.mubr.f32.mxu0 0.0
        %3858 = vmatmul.mubr.f32.gmra.mxu0 %v3522
        %v3859 = vpop.f32.mrf.mxu0
        %v3860 = vadd.f32 0.0, %v3859
        %v3861 = vpop.f32.mrf.mxu0
        %3862 = vmatprep.mubr.f32.mxu0 0.0
        %3863 = vmatmul.mubr.f32.gmra.mxu0 %v3525
        %v3864 = vpop.f32.mrf.mxu0
        %v3865 = vadd.f32 0.0, %v3864
        %v3866 = vpop.f32.mrf.mxu0
        %3867 = vmatprep.mubr.f32.mxu0 0.0
        %3868 = vmatmul.mubr.f32.gmra.mxu0 %v3528
        %v3869 = vpop.f32.mrf.mxu0
        %v3870 = vadd.f32 0.0, %v3869
        %v3871 = vpop.f32.mrf.mxu0
        %3872 = vmatprep.mubr.f32.mxu0 0.0
        %3873 = vmatmul.mubr.f32.gmra.mxu0 %v3531
        %v3874 = vpop.f32.mrf.mxu0
        %v3875 = vadd.f32 0.0, %v3874
        %v3876 = vpop.f32.mrf.mxu0
        %3877 = vmatprep.mubr.f32.mxu0 0.0
        %3878 = vmatmul.mubr.f32.gmra.mxu0 %v3534
        %v3879 = vpop.f32.mrf.mxu0
        %v3880 = vadd.f32 0.0, %v3879
        %v3881 = vpop.f32.mrf.mxu0
        %3882 = vmatprep.mubr.f32.mxu0 0.0
        %3883 = vmatmul.mubr.f32.gmra.mxu0 %v3537
        %v3884 = vpop.f32.mrf.mxu0
        %v3885 = vadd.f32 0.0, %v3884
        %v3886 = vpop.f32.mrf.mxu0
        %3887 = vmatprep.mubr.f32.mxu0 0.0
        %3888 = vmatmul.mubr.f32.gmra.mxu0 %v3540
        %v3889 = vpop.f32.mrf.mxu0
        %v3890 = vadd.f32 0.0, %v3889
        %v3891 = vpop.f32.mrf.mxu0
        %3892 = vmatprep.mubr.f32.mxu0 0.0
        %3893 = vmatmul.mubr.f32.gmra.mxu0 %v3543
        %v3894 = vpop.f32.mrf.mxu0
        %v3895 = vadd.f32 0.0, %v3894
        %v3896 = vpop.f32.mrf.mxu0
        %3897 = vmatprep.mubr.f32.mxu0 0.0
        %3898 = vmatmul.mubr.f32.gmra.mxu0 %v3546
        %v3899 = vpop.f32.mrf.mxu0
        %v3900 = vadd.f32 0.0, %v3899
        %v3901 = vpop.f32.mrf.mxu0
        %3902 = vmatprep.mubr.f32.mxu0 0.0
        %3903 = vmatmul.mubr.f32.gmra.mxu0 %v3549
        %v3904 = vpop.f32.mrf.mxu0
        %v3905 = vadd.f32 0.0, %v3904
        %v3906 = vpop.f32.mrf.mxu0
        %3907 = vmatprep.mubr.f32.mxu0 0.0
        %3908 = vmatmul.mubr.f32.gmra.mxu0 %v3552
        %v3909 = vpop.f32.mrf.mxu0
        %v3910 = vadd.f32 0.0, %v3909
        %v3911 = vpop.f32.mrf.mxu0
        %3912 = vmatprep.mubr.f32.mxu0 0.0
        %3913 = vmatmul.mubr.f32.gmra.mxu0 %v3555
        %v3914 = vpop.f32.mrf.mxu0
        %v3915 = vadd.f32 0.0, %v3914
        %v3916 = vpop.f32.mrf.mxu0
        %3917 = vmatprep.mubr.f32.mxu0 0.0
        %3918 = vmatmul.mubr.f32.gmra.mxu0 %v3558
        %v3919 = vpop.f32.mrf.mxu0
        %v3920 = vadd.f32 0.0, %v3919
        %v3921 = vpop.f32.mrf.mxu0
        %3922 = vmatprep.mubr.f32.mxu0 0.0
        %3923 = vmatmul.mubr.f32.gmra.mxu0 %v3561
        %v3924 = vpop.f32.mrf.mxu0
        %v3925 = vadd.f32 0.0, %v3924
        %v3926 = vpop.f32.mrf.mxu0
        %3927 = vmatprep.mubr.f32.mxu0 0.0
        %3928 = vmatmul.mubr.f32.gmra.mxu0 %v3564
        %v3929 = vpop.f32.mrf.mxu0
        %v3930 = vadd.f32 0.0, %v3929
        %v3931 = vpop.f32.mrf.mxu0
        %3932 = vmatprep.mubr.f32.mxu0 0.0
        %3933 = vmatmul.mubr.f32.gmra.mxu0 %v3567
        %v3934 = vpop.f32.mrf.mxu0
        %v3935 = vadd.f32 0.0, %v3934
        %v3936 = vpop.f32.mrf.mxu0
        %3937 = vmatprep.mubr.f32.mxu0 0.0
        %3938 = vmatmul.mubr.f32.gmra.mxu0 %v3570
        %v3939 = vpop.f32.mrf.mxu0
        %v3940 = vadd.f32 0.0, %v3939
        %v3941 = vpop.f32.mrf.mxu0
        %3942 = vmatprep.mubr.f32.mxu0 0.0
        %3943 = vmatmul.mubr.f32.gmra.mxu0 %v3573
        %v3944 = vpop.f32.mrf.mxu0
        %v3945 = vadd.f32 0.0, %v3944
        %v3946 = vpop.f32.mrf.mxu0
        %3947 = vmatprep.mubr.f32.mxu0 0.0
        %3948 = vmatmul.mubr.f32.gmra.mxu0 %v3576
        %v3949 = vpop.f32.mrf.mxu0
        %v3950 = vadd.f32 0.0, %v3949
        %v3951 = vpop.f32.mrf.mxu0
        %3952 = vmatprep.mubr.f32.mxu0 0.0
        %3953 = vmatmul.mubr.f32.gmra.mxu0 %v3579
        %v3954 = vpop.f32.mrf.mxu0
        %v3955 = vadd.f32 0.0, %v3954
        %v3956 = vpop.f32.mrf.mxu0
        %3957 = vmatprep.mubr.f32.mxu0 0.0
        %3958 = vmatmul.mubr.f32.gmra.mxu0 %v3582
        %v3959 = vpop.f32.mrf.mxu0
        %v3960 = vadd.f32 0.0, %v3959
        %v3961 = vpop.f32.mrf.mxu0
        %3962 = vmatprep.mubr.f32.mxu0 0.0
        %3963 = vmatmul.mubr.f32.gmra.mxu0 %v3585
        %v3964 = vpop.f32.mrf.mxu0
        %v3965 = vadd.f32 0.0, %v3964
        %v3966 = vpop.f32.mrf.mxu0
        %3967 = vmatprep.mubr.f32.mxu0 0.0
        %3968 = vmatmul.mubr.f32.gmra.mxu0 %v3588
        %v3969 = vpop.f32.mrf.mxu0
        %v3970 = vadd.f32 0.0, %v3969
        %v3971 = vpop.f32.mrf.mxu0
        %3972 = vmatprep.mubr.f32.mxu0 0.0
        %3973 = vmatmul.mubr.f32.gmra.mxu0 %v3591
        %v3974 = vpop.f32.mrf.mxu0
        %v3975 = vadd.f32 0.0, %v3974
        %v3976 = vpop.f32.mrf.mxu0
        %3977 = vdwg.mxu0
        %3978 = vxpose.xlu0.b32.start [1/16] %v3660, 128
        %3979 = vxpose.xlu0.b32.cont [2/16] %v3665, 128
        %3980 = vxpose.xlu0.b32.cont [3/16] %v3670, 128
        %3981 = vxpose.xlu0.b32.cont [4/16] %v3675, 128
        %3982 = vxpose.xlu0.b32.cont [5/16] %v3680, 128
        %3983 = vxpose.xlu0.b32.cont [6/16] %v3685, 128
        %3984 = vxpose.xlu0.b32.cont [7/16] %v3690, 128
        %3985 = vxpose.xlu0.b32.cont [8/16] %v3695, 128
        %3986 = vxpose.xlu0.b32.cont [9/16] %v3700, 128
        %3987 = vxpose.xlu0.b32.cont [10/16] %v3705, 128
        %3988 = vxpose.xlu0.b32.cont [11/16] %v3710, 128
        %3989 = vxpose.xlu0.b32.cont [12/16] %v3715, 128
        %3990 = vxpose.xlu0.b32.cont [13/16] %v3720, 128
        %3991 = vxpose.xlu0.b32.cont [14/16] %v3725, 128
        %3992 = vxpose.xlu0.b32.cont [15/16] %v3730, 128
        %3993 = vxpose.xlu0.b32.end [16/16] %v3735, 128
        %v3994 = vpop.trf.xlu0
        %v3995 = vpop.trf.xlu0
        %v3996 = vpop.trf.xlu0
        %v3997 = vpop.trf.xlu0
        %v3998 = vpop.trf.xlu0
        %v3999 = vpop.trf.xlu0
        %v4000 = vpop.trf.xlu0
        %v4001 = vpop.trf.xlu0
        %v4002 = vpop.trf.xlu0
        %v4003 = vpop.trf.xlu0
        %v4004 = vpop.trf.xlu0
        %v4005 = vpop.trf.xlu0
        %v4006 = vpop.trf.xlu0
        %v4007 = vpop.trf.xlu0
        %v4008 = vpop.trf.xlu0
        %v4009 = vpop.trf.xlu0
        %4010 = vxpose.xlu0.b32.start [1/16] %v3740, 128
        %4011 = vxpose.xlu0.b32.cont [2/16] %v3745, 128
        %4012 = vxpose.xlu0.b32.cont [3/16] %v3750, 128
        %4013 = vxpose.xlu0.b32.cont [4/16] %v3755, 128
        %4014 = vxpose.xlu0.b32.cont [5/16] %v3760, 128
        %4015 = vxpose.xlu0.b32.cont [6/16] %v3765, 128
        %4016 = vxpose.xlu0.b32.cont [7/16] %v3770, 128
        %4017 = vxpose.xlu0.b32.cont [8/16] %v3775, 128
        %4018 = vxpose.xlu0.b32.cont [9/16] %v3780, 128
        %4019 = vxpose.xlu0.b32.cont [10/16] %v3785, 128
        %4020 = vxpose.xlu0.b32.cont [11/16] %v3790, 128
        %4021 = vxpose.xlu0.b32.cont [12/16] %v3795, 128
        %4022 = vxpose.xlu0.b32.cont [13/16] %v3800, 128
        %4023 = vxpose.xlu0.b32.cont [14/16] %v3805, 128
        %4024 = vxpose.xlu0.b32.cont [15/16] %v3810, 128
        %4025 = vxpose.xlu0.b32.end [16/16] %v3815, 128
        %v4026 = vpop.trf.xlu0
        %v4027 = vpop.trf.xlu0
        %v4028 = vpop.trf.xlu0
        %v4029 = vpop.trf.xlu0
        %v4030 = vpop.trf.xlu0
        %v4031 = vpop.trf.xlu0
        %v4032 = vpop.trf.xlu0
        %v4033 = vpop.trf.xlu0
        %v4034 = vpop.trf.xlu0
        %v4035 = vpop.trf.xlu0
        %v4036 = vpop.trf.xlu0
        %v4037 = vpop.trf.xlu0
        %v4038 = vpop.trf.xlu0
        %v4039 = vpop.trf.xlu0
        %v4040 = vpop.trf.xlu0
        %v4041 = vpop.trf.xlu0
        %4042 = vxpose.xlu0.b32.start [1/16] %v3820, 128
        %4043 = vxpose.xlu0.b32.cont [2/16] %v3825, 128
        %4044 = vxpose.xlu0.b32.cont [3/16] %v3830, 128
        %4045 = vxpose.xlu0.b32.cont [4/16] %v3835, 128
        %4046 = vxpose.xlu0.b32.cont [5/16] %v3840, 128
        %4047 = vxpose.xlu0.b32.cont [6/16] %v3845, 128
        %4048 = vxpose.xlu0.b32.cont [7/16] %v3850, 128
        %4049 = vxpose.xlu0.b32.cont [8/16] %v3855, 128
        %4050 = vxpose.xlu0.b32.cont [9/16] %v3860, 128
        %4051 = vxpose.xlu0.b32.cont [10/16] %v3865, 128
        %4052 = vxpose.xlu0.b32.cont [11/16] %v3870, 128
        %4053 = vxpose.xlu0.b32.cont [12/16] %v3875, 128
        %4054 = vxpose.xlu0.b32.cont [13/16] %v3880, 128
        %4055 = vxpose.xlu0.b32.cont [14/16] %v3885, 128
        %4056 = vxpose.xlu0.b32.cont [15/16] %v3890, 128
        %4057 = vxpose.xlu0.b32.end [16/16] %v3895, 128
        %v4058 = vpop.trf.xlu0
        %v4059 = vpop.trf.xlu0
        %v4060 = vpop.trf.xlu0
        %v4061 = vpop.trf.xlu0
        %v4062 = vpop.trf.xlu0
        %v4063 = vpop.trf.xlu0
        %v4064 = vpop.trf.xlu0
        %v4065 = vpop.trf.xlu0
        %v4066 = vpop.trf.xlu0
        %v4067 = vpop.trf.xlu0
        %v4068 = vpop.trf.xlu0
        %v4069 = vpop.trf.xlu0
        %v4070 = vpop.trf.xlu0
        %v4071 = vpop.trf.xlu0
        %v4072 = vpop.trf.xlu0
        %v4073 = vpop.trf.xlu0
        %4074 = vxpose.xlu0.b32.start [1/16] %v3900, 128
        %4075 = vxpose.xlu0.b32.cont [2/16] %v3905, 128
        %4076 = vxpose.xlu0.b32.cont [3/16] %v3910, 128
        %4077 = vxpose.xlu0.b32.cont [4/16] %v3915, 128
        %4078 = vxpose.xlu0.b32.cont [5/16] %v3920, 128
        %4079 = vxpose.xlu0.b32.cont [6/16] %v3925, 128
        %4080 = vxpose.xlu0.b32.cont [7/16] %v3930, 128
        %4081 = vxpose.xlu0.b32.cont [8/16] %v3935, 128
        %4082 = vxpose.xlu0.b32.cont [9/16] %v3940, 128
        %4083 = vxpose.xlu0.b32.cont [10/16] %v3945, 128
        %4084 = vxpose.xlu0.b32.cont [11/16] %v3950, 128
        %4085 = vxpose.xlu0.b32.cont [12/16] %v3955, 128
        %4086 = vxpose.xlu0.b32.cont [13/16] %v3960, 128
        %4087 = vxpose.xlu0.b32.cont [14/16] %v3965, 128
        %4088 = vxpose.xlu0.b32.cont [15/16] %v3970, 128
        %4089 = vxpose.xlu0.b32.end [16/16] %v3975, 128
        %v4090 = vpop.trf.xlu0
        %v4091 = vpop.trf.xlu0
        %v4092 = vpop.trf.xlu0
        %v4093 = vpop.trf.xlu0
        %v4094 = vpop.trf.xlu0
        %v4095 = vpop.trf.xlu0
        %v4096 = vpop.trf.xlu0
        %v4097 = vpop.trf.xlu0
        %v4098 = vpop.trf.xlu0
        %v4099 = vpop.trf.xlu0
        %v4100 = vpop.trf.xlu0
        %v4101 = vpop.trf.xlu0
        %v4102 = vpop.trf.xlu0
        %v4103 = vpop.trf.xlu0
        %v4104 = vpop.trf.xlu0
        %v4105 = vpop.trf.xlu0
        %v4106 = vadd.f32 %v2876, %v3994
        %v4107 = vadd.f32 %v2877, %v4026
        %v4108 = vadd.f32 %v2878, %v4058
        %v4109 = vadd.f32 %v2879, %v4090
        %v4110 = vadd.f32 %v4106, %v4107
        %v4111 = vadd.f32 %v4110, %v4108
        %v4112 = vadd.f32 %v4111, %v4109
        %4113 = vadd.xlane.f32.xlu0 %v4112
        %v4114 = vpop.xlane.xlu0 %4113
        %v4115 = vmul.f32 %v4114, 0.001953125
        %v4116 = vmul.f32 %v4106, %v4106
        %v4117 = vmul.f32 %v4107, %v4107
        %v4118 = vmul.f32 %v4108, %v4108
        %v4119 = vmul.f32 %v4109, %v4109
        %v4120 = vadd.f32 %v4116, %v4117
        %v4121 = vadd.f32 %v4120, %v4118
        %v4122 = vadd.f32 %v4121, %v4119
        %4123 = vadd.xlane.f32.xlu0 %v4122
        %v4124 = vpop.xlane.xlu0 %4123
        %v4125 = vmul.f32 %v4124, 0.001953125
        %v4126 = vmul.f32 %v4115, %v4115
        %v4127 = vsub.f32 %v4125, %v4126
        %v4128 = vsub.f32 %v4106, %v4115
        %v4129 = vsub.f32 %v4107, %v4115
        %v4130 = vsub.f32 %v4108, %v4115
        %v4131 = vsub.f32 %v4109, %v4115
        %v4132 = vadd.f32 %v4127, 1e-05
        %v4133 = vrsqrt.pop %v4132
        %v4134 = vmul.f32 %v4128, %v4133
        %v4135 = vmul.f32 %v4129, %v4133
        %v4136 = vmul.f32 %v4130, %v4133
        %v4137 = vmul.f32 %v4131, %v4133
        %v4138 = vmul.f32 %v4134, 0.01
        %v4139 = vmul.f32 %v4135, 0.01
        %v4140 = vmul.f32 %v4136, 0.01
        %v4141 = vmul.f32 %v4137, 0.01
        %v4142 = vmax.f32 %v4134, %v4138
        %v4143 = vmax.f32 %v4135, %v4139
        %v4144 = vmax.f32 %v4136, %v4140
        %v4145 = vmax.f32 %v4137, %v4141
        %v4146 = vld [vmem:[%s3] ss:$4 sm:$0xf]
        %v4147 = vadd.s32 %v4146, 4294967295
        %vm4148 = vcmp.ge.s32.totalorder %v4147, 0
        %vm4149 = vcmp.lt.s32.totalorder %v4147, 8
        %vm4150 = vmand %vm4148, %vm4149
        %v4151 = vsel %vm4150, 1.0, 0.0
        %v4152 = vld [vmem:[%s206] ss:$4 sm:$0xf]
        %v4153 = vadd.s32 %v4152, 4294967295
        %vm4154 = vcmp.ge.s32.totalorder %v4153, 0
        %vm4155 = vcmp.lt.s32.totalorder %v4153, 8
        %vm4156 = vmand %vm4154, %vm4155
        %v4157 = vsel %vm4156, 1.0, 0.0
        %v4158 = vmul.f32 %v4151, %v4157
        %v4159 = vld [vmem:[%s214] ss:$4 sm:$0xf]
        %v4160 = vadd.s32 %v4159, 4294967295
        %vm4161 = vcmp.ge.s32.totalorder %v4160, 0
        %vm4162 = vcmp.lt.s32.totalorder %v4160, 8
        %vm4163 = vmand %vm4161, %vm4162
        %v4164 = vsel %vm4163, 1.0, 0.0
        %v4165 = vmul.f32 %v4158, %v4164
        %4166 = vrot.lane.b32.xlu0 %v4142, 73
        %v4167 = vpop.permute.xlu0 %4166
        %4168 = vrot.lane.b32.xlu0 %v4143, 73
        %v4169 = vpop.permute.xlu0 %4168
        %4170 = vrot.lane.b32.xlu0 %v4144, 73
        %v4171 = vpop.permute.xlu0 %4170
        %4172 = vrot.lane.b32.xlu0 %v4145, 73
        %v4173 = vpop.permute.xlu0 %4172
        %v4174 = vsel %vm232, %v4171, %v4173
        %v4175 = vsel %vm232, %v4169, %v4171
        %v4176 = vsel %vm232, %v4167, %v4169
        %v4177 = vsel %vm232, %v4173, %v4167
        %v4179 = vlaneseq
        %v4180 = vshrl.u32 %v4179, 7
        %v4181 = vsub.s32 0, %v4180
        %v4182 = vrot.slane %v4165, %v4181
        %v4183 = vlaneseq
        %v4184 = vshrl.u32 %v4183, 7
        %v4185 = vsub.s32 1, %v4184
        %v4186 = vrot.slane %v4165, %v4185
        %v4187 = vlaneseq
        %v4188 = vshrl.u32 %v4187, 7
        %v4189 = vsub.s32 2, %v4188
        %v4190 = vrot.slane %v4165, %v4189
        %v4191 = vlaneseq
        %v4192 = vshrl.u32 %v4191, 7
        %v4193 = vsub.s32 3, %v4192
        %v4194 = vrot.slane %v4165, %v4193
        %v4199 = vmul.f32 %v4177, %v4182
        %v4200 = vmul.f32 %v4176, %v4186
        %v4201 = vmul.f32 %v4175, %v4190
        %v4202 = vmul.f32 %v4174, %v4194
        %4203 = vst [vmem:[#allocation2] sm:$0xff] %v4199
        %4204 = vst [vmem:[#allocation2 + $0x8] sm:$0xff] %v4200
        %4205 = vst [vmem:[#allocation2 + $0x10] sm:$0xff] %v4201
        %4206 = vst [vmem:[#allocation2 + $0x18] sm:$0xff] %v4202
        %v4207 = vld [vmem:[%s214] ss:$4 sm:$0xf]
        %vm4208 = vcmp.ge.s32.totalorder %v4207, 0
        %vm4209 = vcmp.lt.s32.totalorder %v4207, 8
        %vm4210 = vmand %vm4208, %vm4209
        %v4211 = vsel %vm4210, 1.0, 0.0
        %v4212 = vmul.f32 %v4158, %v4211
        %4213 = vrot.lane.b32.xlu0 %v4142, 72
        %v4214 = vpop.permute.xlu0 %4213
        %4215 = vrot.lane.b32.xlu0 %v4143, 72
        %v4216 = vpop.permute.xlu0 %4215
        %4217 = vrot.lane.b32.xlu0 %v4144, 72
        %v4218 = vpop.permute.xlu0 %4217
        %4219 = vrot.lane.b32.xlu0 %v4145, 72
        %v4220 = vpop.permute.xlu0 %4219
        %v4221 = vsel %vm280, %v4218, %v4220
        %v4222 = vsel %vm280, %v4216, %v4218
        %v4223 = vsel %vm280, %v4214, %v4216
        %v4224 = vsel %vm280, %v4220, %v4214
        %v4226 = vlaneseq
        %v4227 = vshrl.u32 %v4226, 7
        %v4228 = vsub.s32 0, %v4227
        %v4229 = vrot.slane %v4212, %v4228
        %v4230 = vlaneseq
        %v4231 = vshrl.u32 %v4230, 7
        %v4232 = vsub.s32 1, %v4231
        %v4233 = vrot.slane %v4212, %v4232
        %v4234 = vlaneseq
        %v4235 = vshrl.u32 %v4234, 7
        %v4236 = vsub.s32 2, %v4235
        %v4237 = vrot.slane %v4212, %v4236
        %v4238 = vlaneseq
        %v4239 = vshrl.u32 %v4238, 7
        %v4240 = vsub.s32 3, %v4239
        %v4241 = vrot.slane %v4212, %v4240
        %v4246 = vmul.f32 %v4224, %v4229
        %v4247 = vmul.f32 %v4223, %v4233
        %v4248 = vmul.f32 %v4222, %v4237
        %v4249 = vmul.f32 %v4221, %v4241
        %4250 = vst [vmem:[#allocation2 + $0x20] sm:$0xff] %v4246
        %4251 = vst [vmem:[#allocation2 + $0x28] sm:$0xff] %v4247
        %4252 = vst [vmem:[#allocation2 + $0x30] sm:$0xff] %v4248
        %4253 = vst [vmem:[#allocation2 + $0x38] sm:$0xff] %v4249
        %v4254 = vld [vmem:[%s214] ss:$4 sm:$0xf]
        %v4255 = vadd.s32 %v4254, 1
        %vm4256 = vcmp.ge.s32.totalorder %v4255, 0
        %vm4257 = vcmp.lt.s32.totalorder %v4255, 8
        %vm4258 = vmand %vm4256, %vm4257
        %v4259 = vsel %vm4258, 1.0, 0.0
        %v4260 = vmul.f32 %v4158, %v4259
        %4261 = vrot.lane.b32.xlu0 %v4142, 71
        %v4262 = vpop.permute.xlu0 %4261
        %4263 = vrot.lane.b32.xlu0 %v4143, 71
        %v4264 = vpop.permute.xlu0 %4263
        %4265 = vrot.lane.b32.xlu0 %v4144, 71
        %v4266 = vpop.permute.xlu0 %4265
        %4267 = vrot.lane.b32.xlu0 %v4145, 71
        %v4268 = vpop.permute.xlu0 %4267
        %v4269 = vsel %vm329, %v4266, %v4268
        %v4270 = vsel %vm329, %v4264, %v4266
        %v4271 = vsel %vm329, %v4262, %v4264
        %v4272 = vsel %vm329, %v4268, %v4262
        %v4274 = vlaneseq
        %v4275 = vshrl.u32 %v4274, 7
        %v4276 = vsub.s32 0, %v4275
        %v4277 = vrot.slane %v4260, %v4276
        %v4278 = vlaneseq
        %v4279 = vshrl.u32 %v4278, 7
        %v4280 = vsub.s32 1, %v4279
        %v4281 = vrot.slane %v4260, %v4280
        %v4282 = vlaneseq
        %v4283 = vshrl.u32 %v4282, 7
        %v4284 = vsub.s32 2, %v4283
        %v4285 = vrot.slane %v4260, %v4284
        %v4286 = vlaneseq
        %v4287 = vshrl.u32 %v4286, 7
        %v4288 = vsub.s32 3, %v4287
        %v4289 = vrot.slane %v4260, %v4288
        %v4294 = vmul.f32 %v4272, %v4277
        %v4295 = vmul.f32 %v4271, %v4281
        %v4296 = vmul.f32 %v4270, %v4285
        %v4297 = vmul.f32 %v4269, %v4289
        %4298 = vst [vmem:[#allocation2 + $0x40] sm:$0xff] %v4294
        %4299 = vst [vmem:[#allocation2 + $0x48] sm:$0xff] %v4295
        %4300 = vst [vmem:[#allocation2 + $0x50] sm:$0xff] %v4296
        %4301 = vst [vmem:[#allocation2 + $0x58] sm:$0xff] %v4297
        %v4302 = vld [vmem:[%s206] ss:$4 sm:$0xf]
        %vm4303 = vcmp.ge.s32.totalorder %v4302, 0
        %vm4304 = vcmp.lt.s32.totalorder %v4302, 8
        %vm4305 = vmand %vm4303, %vm4304
        %v4306 = vsel %vm4305, 1.0, 0.0
        %v4307 = vmul.f32 %v4151, %v4306
        %v4308 = vld [vmem:[%s214] ss:$4 sm:$0xf]
        %v4309 = vadd.s32 %v4308, 4294967295
        %vm4310 = vcmp.ge.s32.totalorder %v4309, 0
        %vm4311 = vcmp.lt.s32.totalorder %v4309, 8
        %vm4312 = vmand %vm4310, %vm4311
        %v4313 = vsel %vm4312, 1.0, 0.0
        %v4314 = vmul.f32 %v4307, %v4313
        %4315 = vrot.lane.b32.xlu0 %v4142, 65
        %v4316 = vpop.permute.xlu0 %4315
        %4317 = vrot.lane.b32.xlu0 %v4143, 65
        %v4318 = vpop.permute.xlu0 %4317
        %4319 = vrot.lane.b32.xlu0 %v4144, 65
        %v4320 = vpop.permute.xlu0 %4319
        %4321 = vrot.lane.b32.xlu0 %v4145, 65
        %v4322 = vpop.permute.xlu0 %4321
        %v4323 = vsel %vm384, %v4320, %v4322
        %v4324 = vsel %vm384, %v4318, %v4320
        %v4325 = vsel %vm384, %v4316, %v4318
        %v4326 = vsel %vm384, %v4322, %v4316
        %v4328 = vlaneseq
        %v4329 = vshrl.u32 %v4328, 7
        %v4330 = vsub.s32 0, %v4329
        %v4331 = vrot.slane %v4314, %v4330
        %v4332 = vlaneseq
        %v4333 = vshrl.u32 %v4332, 7
        %v4334 = vsub.s32 1, %v4333
        %v4335 = vrot.slane %v4314, %v4334
        %v4336 = vlaneseq
        %v4337 = vshrl.u32 %v4336, 7
        %v4338 = vsub.s32 2, %v4337
        %v4339 = vrot.slane %v4314, %v4338
        %v4340 = vlaneseq
        %v4341 = vshrl.u32 %v4340, 7
        %v4342 = vsub.s32 3, %v4341
        %v4343 = vrot.slane %v4314, %v4342
        %v4348 = vmul.f32 %v4326, %v4331
        %v4349 = vmul.f32 %v4325, %v4335
        %v4350 = vmul.f32 %v4324, %v4339
        %v4351 = vmul.f32 %v4323, %v4343
        %4352 = vst [vmem:[#allocation2 + $0x60] sm:$0xff] %v4348
        %4353 = vst [vmem:[#allocation2 + $0x68] sm:$0xff] %v4349
        %4354 = vst [vmem:[#allocation2 + $0x70] sm:$0xff] %v4350
        %4355 = vst [vmem:[#allocation2 + $0x78] sm:$0xff] %v4351
        %v4356 = vld [vmem:[%s214] ss:$4 sm:$0xf]
        %vm4357 = vcmp.ge.s32.totalorder %v4356, 0
        %vm4358 = vcmp.lt.s32.totalorder %v4356, 8
        %vm4359 = vmand %vm4357, %vm4358
        %v4360 = vsel %vm4359, 1.0, 0.0
        %v4361 = vmul.f32 %v4307, %v4360
        %4362 = vrot.lane.b32.xlu0 %v4142, 64
        %v4363 = vpop.permute.xlu0 %4362
        %4364 = vrot.lane.b32.xlu0 %v4143, 64
        %v4365 = vpop.permute.xlu0 %4364
        %4366 = vrot.lane.b32.xlu0 %v4144, 64
        %v4367 = vpop.permute.xlu0 %4366
        %4368 = vrot.lane.b32.xlu0 %v4145, 64
        %v4369 = vpop.permute.xlu0 %4368
        %v4370 = vsel %vm432, %v4367, %v4369
        %v4371 = vsel %vm432, %v4365, %v4367
        %v4372 = vsel %vm432, %v4363, %v4365
        %v4373 = vsel %vm432, %v4369, %v4363
        %v4375 = vlaneseq
        %v4376 = vshrl.u32 %v4375, 7
        %v4377 = vsub.s32 0, %v4376
        %v4378 = vrot.slane %v4361, %v4377
        %v4379 = vlaneseq
        %v4380 = vshrl.u32 %v4379, 7
        %v4381 = vsub.s32 1, %v4380
        %v4382 = vrot.slane %v4361, %v4381
        %v4383 = vlaneseq
        %v4384 = vshrl.u32 %v4383, 7
        %v4385 = vsub.s32 2, %v4384
        %v4386 = vrot.slane %v4361, %v4385
        %v4387 = vlaneseq
        %v4388 = vshrl.u32 %v4387, 7
        %v4389 = vsub.s32 3, %v4388
        %v4390 = vrot.slane %v4361, %v4389
        %v4395 = vmul.f32 %v4373, %v4378
        %v4396 = vmul.f32 %v4372, %v4382
        %v4397 = vmul.f32 %v4371, %v4386
        %v4398 = vmul.f32 %v4370, %v4390
        %4399 = vst [vmem:[#allocation2 + $0x80] sm:$0xff] %v4395
        %4400 = vst [vmem:[#allocation2 + $0x88] sm:$0xff] %v4396
        %4401 = vst [vmem:[#allocation2 + $0x90] sm:$0xff] %v4397
        %4402 = vst [vmem:[#allocation2 + $0x98] sm:$0xff] %v4398
        %v4403 = vld [vmem:[%s214] ss:$4 sm:$0xf]
        %v4404 = vadd.s32 %v4403, 1
        %vm4405 = vcmp.ge.s32.totalorder %v4404, 0
        %vm4406 = vcmp.lt.s32.totalorder %v4404, 8
        %vm4407 = vmand %vm4405, %vm4406
        %v4408 = vsel %vm4407, 1.0, 0.0
        %v4409 = vmul.f32 %v4307, %v4408
        %4410 = vrot.lane.b32.xlu0 %v4142, 63
        %v4411 = vpop.permute.xlu0 %4410
        %4412 = vrot.lane.b32.xlu0 %v4143, 63
        %v4413 = vpop.permute.xlu0 %4412
        %4414 = vrot.lane.b32.xlu0 %v4144, 63
        %v4415 = vpop.permute.xlu0 %4414
        %4416 = vrot.lane.b32.xlu0 %v4145, 63
        %v4417 = vpop.permute.xlu0 %4416
        %v4418 = vsel %vm481, %v4415, %v4417
        %v4419 = vsel %vm481, %v4413, %v4415
        %v4420 = vsel %vm481, %v4411, %v4413
        %v4421 = vsel %vm481, %v4417, %v4411
        %v4423 = vlaneseq
        %v4424 = vshrl.u32 %v4423, 7
        %v4425 = vsub.s32 0, %v4424
        %v4426 = vrot.slane %v4409, %v4425
        %v4427 = vlaneseq
        %v4428 = vshrl.u32 %v4427, 7
        %v4429 = vsub.s32 1, %v4428
        %v4430 = vrot.slane %v4409, %v4429
        %v4431 = vlaneseq
        %v4432 = vshrl.u32 %v4431, 7
        %v4433 = vsub.s32 2, %v4432
        %v4434 = vrot.slane %v4409, %v4433
        %v4435 = vlaneseq
        %v4436 = vshrl.u32 %v4435, 7
        %v4437 = vsub.s32 3, %v4436
        %v4438 = vrot.slane %v4409, %v4437
        %v4443 = vmul.f32 %v4421, %v4426
        %v4444 = vmul.f32 %v4420, %v4430
        %v4445 = vmul.f32 %v4419, %v4434
        %v4446 = vmul.f32 %v4418, %v4438
        %4447 = vst [vmem:[#allocation2 + $0xa0] sm:$0xff] %v4443
        %4448 = vst [vmem:[#allocation2 + $0xa8] sm:$0xff] %v4444
        %4449 = vst [vmem:[#allocation2 + $0xb0] sm:$0xff] %v4445
        %4450 = vst [vmem:[#allocation2 + $0xb8] sm:$0xff] %v4446
        %v4451 = vld [vmem:[%s206] ss:$4 sm:$0xf]
        %v4452 = vadd.s32 %v4451, 1
        %vm4453 = vcmp.ge.s32.totalorder %v4452, 0
        %vm4454 = vcmp.lt.s32.totalorder %v4452, 8
        %vm4455 = vmand %vm4453, %vm4454
        %v4456 = vsel %vm4455, 1.0, 0.0
        %v4457 = vmul.f32 %v4151, %v4456
        %v4458 = vld [vmem:[%s214] ss:$4 sm:$0xf]
        %v4459 = vadd.s32 %v4458, 4294967295
        %vm4460 = vcmp.ge.s32.totalorder %v4459, 0
        %vm4461 = vcmp.lt.s32.totalorder %v4459, 8
        %vm4462 = vmand %vm4460, %vm4461
        %v4463 = vsel %vm4462, 1.0, 0.0
        %v4464 = vmul.f32 %v4457, %v4463
        %4465 = vrot.lane.b32.xlu0 %v4142, 57
        %v4466 = vpop.permute.xlu0 %4465
        %4467 = vrot.lane.b32.xlu0 %v4143, 57
        %v4468 = vpop.permute.xlu0 %4467
        %4469 = vrot.lane.b32.xlu0 %v4144, 57
        %v4470 = vpop.permute.xlu0 %4469
        %4471 = vrot.lane.b32.xlu0 %v4145, 57
        %v4472 = vpop.permute.xlu0 %4471
        %v4473 = vsel %vm537, %v4470, %v4472
        %v4474 = vsel %vm537, %v4468, %v4470
        %v4475 = vsel %vm537, %v4466, %v4468
        %v4476 = vsel %vm537, %v4472, %v4466
        %v4478 = vlaneseq
        %v4479 = vshrl.u32 %v4478, 7
        %v4480 = vsub.s32 0, %v4479
        %v4481 = vrot.slane %v4464, %v4480
        %v4482 = vlaneseq
        %v4483 = vshrl.u32 %v4482, 7
        %v4484 = vsub.s32 1, %v4483
        %v4485 = vrot.slane %v4464, %v4484
        %v4486 = vlaneseq
        %v4487 = vshrl.u32 %v4486, 7
        %v4488 = vsub.s32 2, %v4487
        %v4489 = vrot.slane %v4464, %v4488
        %v4490 = vlaneseq
        %v4491 = vshrl.u32 %v4490, 7
        %v4492 = vsub.s32 3, %v4491
        %v4493 = vrot.slane %v4464, %v4492
        %v4498 = vmul.f32 %v4476, %v4481
        %v4499 = vmul.f32 %v4475, %v4485
        %v4500 = vmul.f32 %v4474, %v4489
        %v4501 = vmul.f32 %v4473, %v4493
        %4502 = vst [vmem:[#allocation2 + $0xc0] sm:$0xff] %v4498
        %4503 = vst [vmem:[#allocation2 + $0xc8] sm:$0xff] %v4499
        %4504 = vst [vmem:[#allocation2 + $0xd0] sm:$0xff] %v4500
        %4505 = vst [vmem:[#allocation2 + $0xd8] sm:$0xff] %v4501
        %v4506 = vld [vmem:[%s214] ss:$4 sm:$0xf]
        %vm4507 = vcmp.ge.s32.totalorder %v4506, 0
        %vm4508 = vcmp.lt.s32.totalorder %v4506, 8
        %vm4509 = vmand %vm4507, %vm4508
        %v4510 = vsel %vm4509, 1.0, 0.0
        %v4511 = vmul.f32 %v4457, %v4510
        %4512 = vrot.lane.b32.xlu0 %v4142, 56
        %v4513 = vpop.permute.xlu0 %4512
        %4514 = vrot.lane.b32.xlu0 %v4143, 56
        %v4515 = vpop.permute.xlu0 %4514
        %4516 = vrot.lane.b32.xlu0 %v4144, 56
        %v4517 = vpop.permute.xlu0 %4516
        %4518 = vrot.lane.b32.xlu0 %v4145, 56
        %v4519 = vpop.permute.xlu0 %4518
        %v4520 = vsel %vm585, %v4517, %v4519
        %v4521 = vsel %vm585, %v4515, %v4517
        %v4522 = vsel %vm585, %v4513, %v4515
        %v4523 = vsel %vm585, %v4519, %v4513
        %v4525 = vlaneseq
        %v4526 = vshrl.u32 %v4525, 7
        %v4527 = vsub.s32 0, %v4526
        %v4528 = vrot.slane %v4511, %v4527
        %v4529 = vlaneseq
        %v4530 = vshrl.u32 %v4529, 7
        %v4531 = vsub.s32 1, %v4530
        %v4532 = vrot.slane %v4511, %v4531
        %v4533 = vlaneseq
        %v4534 = vshrl.u32 %v4533, 7
        %v4535 = vsub.s32 2, %v4534
        %v4536 = vrot.slane %v4511, %v4535
        %v4537 = vlaneseq
        %v4538 = vshrl.u32 %v4537, 7
        %v4539 = vsub.s32 3, %v4538
        %v4540 = vrot.slane %v4511, %v4539
        %v4545 = vmul.f32 %v4523, %v4528
        %v4546 = vmul.f32 %v4522, %v4532
        %v4547 = vmul.f32 %v4521, %v4536
        %v4548 = vmul.f32 %v4520, %v4540
        %4549 = vst [vmem:[#allocation2 + $0xe0] sm:$0xff] %v4545
        %4550 = vst [vmem:[#allocation2 + $0xe8] sm:$0xff] %v4546
        %4551 = vst [vmem:[#allocation2 + $0xf0] sm:$0xff] %v4547
        %4552 = vst [vmem:[#allocation2 + $0xf8] sm:$0xff] %v4548
        %v4553 = vld [vmem:[%s214] ss:$4 sm:$0xf]
        %v4554 = vadd.s32 %v4553, 1
        %vm4555 = vcmp.ge.s32.totalorder %v4554, 0
        %vm4556 = vcmp.lt.s32.totalorder %v4554, 8
        %vm4557 = vmand %vm4555, %vm4556
        %v4558 = vsel %vm4557, 1.0, 0.0
        %v4559 = vmul.f32 %v4457, %v4558
        %4560 = vrot.lane.b32.xlu0 %v4142, 55
        %v4561 = vpop.permute.xlu0 %4560
        %4562 = vrot.lane.b32.xlu0 %v4143, 55
        %v4563 = vpop.permute.xlu0 %4562
        %4564 = vrot.lane.b32.xlu0 %v4144, 55
        %v4565 = vpop.permute.xlu0 %4564
        %4566 = vrot.lane.b32.xlu0 %v4145, 55
        %v4567 = vpop.permute.xlu0 %4566
        %v4568 = vsel %vm634, %v4565, %v4567
        %v4569 = vsel %vm634, %v4563, %v4565
        %v4570 = vsel %vm634, %v4561, %v4563
        %v4571 = vsel %vm634, %v4567, %v4561
        %v4573 = vlaneseq
        %v4574 = vshrl.u32 %v4573, 7
        %v4575 = vsub.s32 0, %v4574
        %v4576 = vrot.slane %v4559, %v4575
        %v4577 = vlaneseq
        %v4578 = vshrl.u32 %v4577, 7
        %v4579 = vsub.s32 1, %v4578
        %v4580 = vrot.slane %v4559, %v4579
        %v4581 = vlaneseq
        %v4582 = vshrl.u32 %v4581, 7
        %v4583 = vsub.s32 2, %v4582
        %v4584 = vrot.slane %v4559, %v4583
        %v4585 = vlaneseq
        %v4586 = vshrl.u32 %v4585, 7
        %v4587 = vsub.s32 3, %v4586
        %v4588 = vrot.slane %v4559, %v4587
        %v4593 = vmul.f32 %v4571, %v4576
        %v4594 = vmul.f32 %v4570, %v4580
        %v4595 = vmul.f32 %v4569, %v4584
        %v4596 = vmul.f32 %v4568, %v4588
        %4597 = vst [vmem:[#allocation2 + $0x100] sm:$0xff] %v4593
        %4598 = vst [vmem:[#allocation2 + $0x108] sm:$0xff] %v4594
        %4599 = vst [vmem:[#allocation2 + $0x110] sm:$0xff] %v4595
        %4600 = vst [vmem:[#allocation2 + $0x118] sm:$0xff] %v4596
        %v4601 = vld [vmem:[#allocation2] sm:$0xff]
        %v4602 = vld [vmem:[#allocation2 + $0x8] sm:$0xff]
        %v4603 = vld [vmem:[#allocation2 + $0x10] sm:$0xff]
        %v4604 = vld [vmem:[#allocation2 + $0x18] sm:$0xff]
        %v4605 = vld [vmem:[#allocation2 + $0x20] sm:$0xff]
        %v4606 = vld [vmem:[#allocation2 + $0x28] sm:$0xff]
        %v4607 = vld [vmem:[#allocation2 + $0x30] sm:$0xff]
        %v4608 = vld [vmem:[#allocation2 + $0x38] sm:$0xff]
        %v4609 = vld [vmem:[#allocation2 + $0x40] sm:$0xff]
        %v4610 = vld [vmem:[#allocation2 + $0x48] sm:$0xff]
        %v4611 = vld [vmem:[#allocation2 + $0x50] sm:$0xff]
        %v4612 = vld [vmem:[#allocation2 + $0x58] sm:$0xff]
        %v4613 = vld [vmem:[#allocation2 + $0x60] sm:$0xff]
        %v4614 = vld [vmem:[#allocation2 + $0x68] sm:$0xff]
        %v4615 = vld [vmem:[#allocation2 + $0x70] sm:$0xff]
        %v4616 = vld [vmem:[#allocation2 + $0x78] sm:$0xff]
        %v4617 = vld [vmem:[#allocation2 + $0x80] sm:$0xff]
        %v4618 = vld [vmem:[#allocation2 + $0x88] sm:$0xff]
        %v4619 = vld [vmem:[#allocation2 + $0x90] sm:$0xff]
        %v4620 = vld [vmem:[#allocation2 + $0x98] sm:$0xff]
        %v4621 = vld [vmem:[#allocation2 + $0xa0] sm:$0xff]
        %v4622 = vld [vmem:[#allocation2 + $0xa8] sm:$0xff]
        %v4623 = vld [vmem:[#allocation2 + $0xb0] sm:$0xff]
        %v4624 = vld [vmem:[#allocation2 + $0xb8] sm:$0xff]
        %v4625 = vld [vmem:[#allocation2 + $0xc0] sm:$0xff]
        %v4626 = vld [vmem:[#allocation2 + $0xc8] sm:$0xff]
        %v4627 = vld [vmem:[#allocation2 + $0xd0] sm:$0xff]
        %v4628 = vld [vmem:[#allocation2 + $0xd8] sm:$0xff]
        %v4629 = vld [vmem:[#allocation2 + $0xe0] sm:$0xff]
        %v4630 = vld [vmem:[#allocation2 + $0xe8] sm:$0xff]
        %v4631 = vld [vmem:[#allocation2 + $0xf0] sm:$0xff]
        %v4632 = vld [vmem:[#allocation2 + $0xf8] sm:$0xff]
        %v4633 = vld [vmem:[#allocation2 + $0x100] sm:$0xff]
        %v4634 = vld [vmem:[#allocation2 + $0x108] sm:$0xff]
        %v4635 = vld [vmem:[#allocation2 + $0x110] sm:$0xff]
        %v4636 = vld [vmem:[#allocation2 + $0x118] sm:$0xff]
        %v4637 = vld [vmem:[%s2] sm:$0xff]
        %v4638 = vld [vmem:[%s2 + $0x8] sm:$0xff]
        %v4639 = vld [vmem:[%s2 + $0x10] sm:$0xff]
        %v4640 = vld [vmem:[%s2 + $0x18] sm:$0xff]
        %v4641 = vld [vmem:[%s2 + $0x20] sm:$0xff]
        %v4642 = vld [vmem:[%s2 + $0x28] sm:$0xff]
        %v4643 = vld [vmem:[%s2 + $0x30] sm:$0xff]
        %v4644 = vld [vmem:[%s2 + $0x38] sm:$0xff]
        %v4645 = vld [vmem:[%s2 + $0x40] sm:$0xff]
        %4646 = vxpose.xlu0.b32.start [1/16] %v4601, 128
        %4647 = vxpose.xlu0.b32.cont [2/16] %v4605, 128
        %4648 = vxpose.xlu0.b32.cont [3/16] %v4609, 128
        %4649 = vxpose.xlu0.b32.cont [4/16] %v4613, 128
        %4650 = vxpose.xlu0.b32.cont [5/16] %v4617, 128
        %4651 = vxpose.xlu0.b32.cont [6/16] %v4621, 128
        %4652 = vxpose.xlu0.b32.cont [7/16] %v4625, 128
        %4653 = vxpose.xlu0.b32.cont [8/16] %v4629, 128
        %4654 = vxpose.xlu0.b32.cont [9/16] %v4633, 128
        %4655 = vxpose.xlu0.b32.cont [10/16] 0.0, 128
        %4656 = vxpose.xlu0.b32.cont [11/16] 0.0, 128
        %4657 = vxpose.xlu0.b32.cont [12/16] 0.0, 128
        %4658 = vxpose.xlu0.b32.cont [13/16] 0.0, 128
        %4659 = vxpose.xlu0.b32.cont [14/16] 0.0, 128
        %4660 = vxpose.xlu0.b32.cont [15/16] 0.0, 128
        %4661 = vxpose.xlu0.b32.end [16/16] 0.0, 128
        %v4662 = vpop.trf.xlu0
        %v4663 = vpop.trf.xlu0
        %v4664 = vpop.trf.xlu0
        %v4665 = vpop.trf.xlu0
        %v4666 = vpop.trf.xlu0
        %v4667 = vpop.trf.xlu0
        %v4668 = vpop.trf.xlu0
        %v4669 = vpop.trf.xlu0
        %v4670 = vpop.trf.xlu0
        %v4671 = vpop.trf.xlu0
        %v4672 = vpop.trf.xlu0
        %v4673 = vpop.trf.xlu0
        %v4674 = vpop.trf.xlu0
        %v4675 = vpop.trf.xlu0
        %v4676 = vpop.trf.xlu0
        %v4677 = vpop.trf.xlu0
        %4678 = vxpose.xlu0.b32.start [1/16] %v4602, 128
        %4679 = vxpose.xlu0.b32.cont [2/16] %v4606, 128
        %4680 = vxpose.xlu0.b32.cont [3/16] %v4610, 128
        %4681 = vxpose.xlu0.b32.cont [4/16] %v4614, 128
        %4682 = vxpose.xlu0.b32.cont [5/16] %v4618, 128
        %4683 = vxpose.xlu0.b32.cont [6/16] %v4622, 128
        %4684 = vxpose.xlu0.b32.cont [7/16] %v4626, 128
        %4685 = vxpose.xlu0.b32.cont [8/16] %v4630, 128
        %4686 = vxpose.xlu0.b32.cont [9/16] %v4634, 128
        %4687 = vxpose.xlu0.b32.cont [10/16] 0.0, 128
        %4688 = vxpose.xlu0.b32.cont [11/16] 0.0, 128
        %4689 = vxpose.xlu0.b32.cont [12/16] 0.0, 128
        %4690 = vxpose.xlu0.b32.cont [13/16] 0.0, 128
        %4691 = vxpose.xlu0.b32.cont [14/16] 0.0, 128
        %4692 = vxpose.xlu0.b32.cont [15/16] 0.0, 128
        %4693 = vxpose.xlu0.b32.end [16/16] 0.0, 128
        %v4694 = vpop.trf.xlu0
        %v4695 = vpop.trf.xlu0
        %v4696 = vpop.trf.xlu0
        %v4697 = vpop.trf.xlu0
        %v4698 = vpop.trf.xlu0
        %v4699 = vpop.trf.xlu0
        %v4700 = vpop.trf.xlu0
        %v4701 = vpop.trf.xlu0
        %v4702 = vpop.trf.xlu0
        %v4703 = vpop.trf.xlu0
        %v4704 = vpop.trf.xlu0
        %v4705 = vpop.trf.xlu0
        %v4706 = vpop.trf.xlu0
        %v4707 = vpop.trf.xlu0
        %v4708 = vpop.trf.xlu0
        %v4709 = vpop.trf.xlu0
        %4710 = vxpose.xlu0.b32.start [1/16] %v4603, 128
        %4711 = vxpose.xlu0.b32.cont [2/16] %v4607, 128
        %4712 = vxpose.xlu0.b32.cont [3/16] %v4611, 128
        %4713 = vxpose.xlu0.b32.cont [4/16] %v4615, 128
        %4714 = vxpose.xlu0.b32.cont [5/16] %v4619, 128
        %4715 = vxpose.xlu0.b32.cont [6/16] %v4623, 128
        %4716 = vxpose.xlu0.b32.cont [7/16] %v4627, 128
        %4717 = vxpose.xlu0.b32.cont [8/16] %v4631, 128
        %4718 = vxpose.xlu0.b32.cont [9/16] %v4635, 128
        %4719 = vxpose.xlu0.b32.cont [10/16] 0.0, 128
        %4720 = vxpose.xlu0.b32.cont [11/16] 0.0, 128
        %4721 = vxpose.xlu0.b32.cont [12/16] 0.0, 128
        %4722 = vxpose.xlu0.b32.cont [13/16] 0.0, 128
        %4723 = vxpose.xlu0.b32.cont [14/16] 0.0, 128
        %4724 = vxpose.xlu0.b32.cont [15/16] 0.0, 128
        %4725 = vxpose.xlu0.b32.end [16/16] 0.0, 128
        %v4726 = vpop.trf.xlu0
        %v4727 = vpop.trf.xlu0
        %v4728 = vpop.trf.xlu0
        %v4729 = vpop.trf.xlu0
        %v4730 = vpop.trf.xlu0
        %v4731 = vpop.trf.xlu0
        %v4732 = vpop.trf.xlu0
        %v4733 = vpop.trf.xlu0
        %v4734 = vpop.trf.xlu0
        %v4735 = vpop.trf.xlu0
        %v4736 = vpop.trf.xlu0
        %v4737 = vpop.trf.xlu0
        %v4738 = vpop.trf.xlu0
        %v4739 = vpop.trf.xlu0
        %v4740 = vpop.trf.xlu0
        %v4741 = vpop.trf.xlu0
        %4742 = vxpose.xlu0.b32.start [1/16] %v4604, 128
        %4743 = vxpose.xlu0.b32.cont [2/16] %v4608, 128
        %4744 = vxpose.xlu0.b32.cont [3/16] %v4612, 128
        %4745 = vxpose.xlu0.b32.cont [4/16] %v4616, 128
        %4746 = vxpose.xlu0.b32.cont [5/16] %v4620, 128
        %4747 = vxpose.xlu0.b32.cont [6/16] %v4624, 128
        %4748 = vxpose.xlu0.b32.cont [7/16] %v4628, 128
        %4749 = vxpose.xlu0.b32.cont [8/16] %v4632, 128
        %4750 = vxpose.xlu0.b32.cont [9/16] %v4636, 128
        %4751 = vxpose.xlu0.b32.cont [10/16] 0.0, 128
        %4752 = vxpose.xlu0.b32.cont [11/16] 0.0, 128
        %4753 = vxpose.xlu0.b32.cont [12/16] 0.0, 128
        %4754 = vxpose.xlu0.b32.cont [13/16] 0.0, 128
        %4755 = vxpose.xlu0.b32.cont [14/16] 0.0, 128
        %4756 = vxpose.xlu0.b32.cont [15/16] 0.0, 128
        %4757 = vxpose.xlu0.b32.end [16/16] 0.0, 128
        %v4758 = vpop.trf.xlu0
        %v4759 = vpop.trf.xlu0
        %v4760 = vpop.trf.xlu0
        %v4761 = vpop.trf.xlu0
        %v4762 = vpop.trf.xlu0
        %v4763 = vpop.trf.xlu0
        %v4764 = vpop.trf.xlu0
        %v4765 = vpop.trf.xlu0
        %v4766 = vpop.trf.xlu0
        %v4767 = vpop.trf.xlu0
        %v4768 = vpop.trf.xlu0
        %v4769 = vpop.trf.xlu0
        %v4770 = vpop.trf.xlu0
        %v4771 = vpop.trf.xlu0
        %v4772 = vpop.trf.xlu0
        %v4773 = vpop.trf.xlu0
        %v4775 = vsel %vm841, %v4662, 0
        %v4778 = vsel %vm841, %v4663, 0
        %v4781 = vsel %vm841, %v4664, 0
        %v4784 = vsel %vm841, %v4665, 0
        %v4787 = vsel %vm841, %v4666, 0
        %v4790 = vsel %vm841, %v4667, 0
        %v4793 = vsel %vm841, %v4668, 0
        %v4796 = vsel %vm841, %v4669, 0
        %v4799 = vsel %vm841, %v4670, 0
        %v4802 = vsel %vm841, %v4671, 0
        %v4805 = vsel %vm841, %v4672, 0
        %v4808 = vsel %vm841, %v4673, 0
        %v4811 = vsel %vm841, %v4674, 0
        %v4814 = vsel %vm841, %v4675, 0
        %v4817 = vsel %vm841, %v4676, 0
        %v4820 = vsel %vm841, %v4677, 0
        %v4823 = vsel %vm841, %v4694, 0
        %v4826 = vsel %vm841, %v4695, 0
        %v4829 = vsel %vm841, %v4696, 0
        %v4832 = vsel %vm841, %v4697, 0
        %v4835 = vsel %vm841, %v4698, 0
        %v4838 = vsel %vm841, %v4699, 0
        %v4841 = vsel %vm841, %v4700, 0
        %v4844 = vsel %vm841, %v4701, 0
        %v4847 = vsel %vm841, %v4702, 0
        %v4850 = vsel %vm841, %v4703, 0
        %v4853 = vsel %vm841, %v4704, 0
        %v4856 = vsel %vm841, %v4705, 0
        %v4859 = vsel %vm841, %v4706, 0
        %v4862 = vsel %vm841, %v4707, 0
        %v4865 = vsel %vm841, %v4708, 0
        %v4868 = vsel %vm841, %v4709, 0
        %v4871 = vsel %vm841, %v4726, 0
        %v4874 = vsel %vm841, %v4727, 0
        %v4877 = vsel %vm841, %v4728, 0
        %v4880 = vsel %vm841, %v4729, 0
        %v4883 = vsel %vm841, %v4730, 0
        %v4886 = vsel %vm841, %v4731, 0
        %v4889 = vsel %vm841, %v4732, 0
        %v4892 = vsel %vm841, %v4733, 0
        %v4895 = vsel %vm841, %v4734, 0
        %v4898 = vsel %vm841, %v4735, 0
        %v4901 = vsel %vm841, %v4736, 0
        %v4904 = vsel %vm841, %v4737, 0
        %v4907 = vsel %vm841, %v4738, 0
        %v4910 = vsel %vm841, %v4739, 0
        %v4913 = vsel %vm841, %v4740, 0
        %v4916 = vsel %vm841, %v4741, 0
        %v4919 = vsel %vm841, %v4758, 0
        %v4922 = vsel %vm841, %v4759, 0
        %v4925 = vsel %vm841, %v4760, 0
        %v4928 = vsel %vm841, %v4761, 0
        %v4931 = vsel %vm841, %v4762, 0
        %v4934 = vsel %vm841, %v4763, 0
        %v4937 = vsel %vm841, %v4764, 0
        %v4940 = vsel %vm841, %v4765, 0
        %v4943 = vsel %vm841, %v4766, 0
        %v4946 = vsel %vm841, %v4767, 0
        %v4949 = vsel %vm841, %v4768, 0
        %v4952 = vsel %vm841, %v4769, 0
        %v4955 = vsel %vm841, %v4770, 0
        %v4958 = vsel %vm841, %v4771, 0
        %v4961 = vsel %vm841, %v4772, 0
        %v4964 = vsel %vm841, %v4773, 0
        %4966 = vmatprep.subr.mxu0 0.0
        %4967 = vmatpush1.msra.mxu0 0.0
        %4968 = vmatprep.subr.mxu0 0.0
        %4969 = vmatpush1.msra.mxu0 0.0
        %4970 = vmatprep.subr.mxu0 0.0
        %4971 = vmatpush1.msra.mxu0 0.0
        %4972 = vmatprep.subr.mxu0 0.0
        %4973 = vmatpush1.msra.mxu0 0.0
        %4974 = vmatprep.subr.mxu0 0.0
        %4975 = vmatpush1.msra.mxu0 0.0
        %4976 = vmatprep.subr.mxu0 0.0
        %4977 = vmatpush1.msra.mxu0 0.0
        %4978 = vmatprep.subr.mxu0 0.0
        %4979 = vmatpush1.msra.mxu0 0.0
        %4980 = vmatprep.subr.mxu0 0.0
        %4981 = vmatpush1.msra.mxu0 %v4645
        %4982 = vmatprep.subr.mxu0 0.0
        %4983 = vmatpush1.msra.mxu0 %v4644
        %4984 = vmatprep.subr.mxu0 0.0
        %4985 = vmatpush1.msra.mxu0 %v4643
        %4986 = vmatprep.subr.mxu0 0.0
        %4987 = vmatpush1.msra.mxu0 %v4642
        %4988 = vmatprep.subr.mxu0 0.0
        %4989 = vmatpush1.msra.mxu0 %v4641
        %4990 = vmatprep.subr.mxu0 0.0
        %4991 = vmatpush1.msra.mxu0 %v4640
        %4992 = vmatprep.subr.mxu0 0.0
        %4993 = vmatpush1.msra.mxu0 %v4639
        %4994 = vmatprep.subr.mxu0 0.0
        %4995 = vmatpush1.msra.mxu0 %v4638
        %4996 = vmatprep.subr.mxu0 0.0
        %4997 = vmatpush1.msra.mxu0 %v4637
        %4998 = vmatprep.subr.mxu0 0.0
        %4999 = vmatpush2.msra.mxu0 0.0
        %5000 = vmatprep.subr.mxu0 0.0
        %5001 = vmatpush2.msra.mxu0 0.0
        %5002 = vmatprep.subr.mxu0 0.0
        %5003 = vmatpush2.msra.mxu0 0.0
        %5004 = vmatprep.subr.mxu0 0.0
        %5005 = vmatpush2.msra.mxu0 0.0
        %5006 = vmatprep.subr.mxu0 0.0
        %5007 = vmatpush2.msra.mxu0 0.0
        %5008 = vmatprep.subr.mxu0 0.0
        %5009 = vmatpush2.msra.mxu0 0.0
        %5010 = vmatprep.subr.mxu0 0.0
        %5011 = vmatpush2.msra.mxu0 0.0
        %5012 = vmatprep.subr.mxu0 0.0
        %5013 = vmatpush2.msra.mxu0 0.0
        %5014 = vmatprep.subr.mxu0 0.0
        %5015 = vmatpush2.msra.mxu0 0.0
        %5016 = vmatprep.subr.mxu0 0.0
        %5017 = vmatpush2.msra.mxu0 0.0
        %5018 = vmatprep.subr.mxu0 0.0
        %5019 = vmatpush2.msra.mxu0 0.0
        %5020 = vmatprep.subr.mxu0 0.0
        %5021 = vmatpush2.msra.mxu0 0.0
        %5022 = vmatprep.subr.mxu0 0.0
        %5023 = vmatpush2.msra.mxu0 0.0
        %5024 = vmatprep.subr.mxu0 0.0
        %5025 = vmatpush2.msra.mxu0 0.0
        %5026 = vmatprep.subr.mxu0 0.0
        %5027 = vmatpush2.msra.mxu0 0.0
        %5028 = vmatprep.subr.mxu0 0.0
        %5029 = vmatpush2.msra.mxu0 0.0
        %5030 = vmatprep.mubr.f32.mxu0 0.0
        %5031 = vmatmul.mubr.f32.gmra.mxu0 %v4775
        %v5032 = vpop.f32.mrf.mxu0
        %v5033 = vadd.f32 0.0, %v5032
        %v5034 = vpop.f32.mrf.mxu0
        %5035 = vmatprep.mubr.f32.mxu0 0.0
        %5036 = vmatmul.mubr.f32.gmra.mxu0 %v4778
        %v5037 = vpop.f32.mrf.mxu0
        %v5038 = vadd.f32 0.0, %v5037
        %v5039 = vpop.f32.mrf.mxu0
        %5040 = vmatprep.mubr.f32.mxu0 0.0
        %5041 = vmatmul.mubr.f32.gmra.mxu0 %v4781
        %v5042 = vpop.f32.mrf.mxu0
        %v5043 = vadd.f32 0.0, %v5042
        %v5044 = vpop.f32.mrf.mxu0
        %5045 = vmatprep.mubr.f32.mxu0 0.0
        %5046 = vmatmul.mubr.f32.gmra.mxu0 %v4784
        %v5047 = vpop.f32.mrf.mxu0
        %v5048 = vadd.f32 0.0, %v5047
        %v5049 = vpop.f32.mrf.mxu0
        %5050 = vmatprep.mubr.f32.mxu0 0.0
        %5051 = vmatmul.mubr.f32.gmra.mxu0 %v4787
        %v5052 = vpop.f32.mrf.mxu0
        %v5053 = vadd.f32 0.0, %v5052
        %v5054 = vpop.f32.mrf.mxu0
        %5055 = vmatprep.mubr.f32.mxu0 0.0
        %5056 = vmatmul.mubr.f32.gmra.mxu0 %v4790
        %v5057 = vpop.f32.mrf.mxu0
        %v5058 = vadd.f32 0.0, %v5057
        %v5059 = vpop.f32.mrf.mxu0
        %5060 = vmatprep.mubr.f32.mxu0 0.0
        %5061 = vmatmul.mubr.f32.gmra.mxu0 %v4793
        %v5062 = vpop.f32.mrf.mxu0
        %v5063 = vadd.f32 0.0, %v5062
        %v5064 = vpop.f32.mrf.mxu0
        %5065 = vmatprep.mubr.f32.mxu0 0.0
        %5066 = vmatmul.mubr.f32.gmra.mxu0 %v4796
        %v5067 = vpop.f32.mrf.mxu0
        %v5068 = vadd.f32 0.0, %v5067
        %v5069 = vpop.f32.mrf.mxu0
        %5070 = vmatprep.mubr.f32.mxu0 0.0
        %5071 = vmatmul.mubr.f32.gmra.mxu0 %v4799
        %v5072 = vpop.f32.mrf.mxu0
        %v5073 = vadd.f32 0.0, %v5072
        %v5074 = vpop.f32.mrf.mxu0
        %5075 = vmatprep.mubr.f32.mxu0 0.0
        %5076 = vmatmul.mubr.f32.gmra.mxu0 %v4802
        %v5077 = vpop.f32.mrf.mxu0
        %v5078 = vadd.f32 0.0, %v5077
        %v5079 = vpop.f32.mrf.mxu0
        %5080 = vmatprep.mubr.f32.mxu0 0.0
        %5081 = vmatmul.mubr.f32.gmra.mxu0 %v4805
        %v5082 = vpop.f32.mrf.mxu0
        %v5083 = vadd.f32 0.0, %v5082
        %v5084 = vpop.f32.mrf.mxu0
        %5085 = vmatprep.mubr.f32.mxu0 0.0
        %5086 = vmatmul.mubr.f32.gmra.mxu0 %v4808
        %v5087 = vpop.f32.mrf.mxu0
        %v5088 = vadd.f32 0.0, %v5087
        %v5089 = vpop.f32.mrf.mxu0
        %5090 = vmatprep.mubr.f32.mxu0 0.0
        %5091 = vmatmul.mubr.f32.gmra.mxu0 %v4811
        %v5092 = vpop.f32.mrf.mxu0
        %v5093 = vadd.f32 0.0, %v5092
        %v5094 = vpop.f32.mrf.mxu0
        %5095 = vmatprep.mubr.f32.mxu0 0.0
        %5096 = vmatmul.mubr.f32.gmra.mxu0 %v4814
        %v5097 = vpop.f32.mrf.mxu0
        %v5098 = vadd.f32 0.0, %v5097
        %v5099 = vpop.f32.mrf.mxu0
        %5100 = vmatprep.mubr.f32.mxu0 0.0
        %5101 = vmatmul.mubr.f32.gmra.mxu0 %v4817
        %v5102 = vpop.f32.mrf.mxu0
        %v5103 = vadd.f32 0.0, %v5102
        %v5104 = vpop.f32.mrf.mxu0
        %5105 = vmatprep.mubr.f32.mxu0 0.0
        %5106 = vmatmul.mubr.f32.gmra.mxu0 %v4820
        %v5107 = vpop.f32.mrf.mxu0
        %v5108 = vadd.f32 0.0, %v5107
        %v5109 = vpop.f32.mrf.mxu0
        %5110 = vmatprep.mubr.f32.mxu0 0.0
        %5111 = vmatmul.mubr.f32.gmra.mxu0 %v4823
        %v5112 = vpop.f32.mrf.mxu0
        %v5113 = vadd.f32 0.0, %v5112
        %v5114 = vpop.f32.mrf.mxu0
        %5115 = vmatprep.mubr.f32.mxu0 0.0
        %5116 = vmatmul.mubr.f32.gmra.mxu0 %v4826
        %v5117 = vpop.f32.mrf.mxu0
        %v5118 = vadd.f32 0.0, %v5117
        %v5119 = vpop.f32.mrf.mxu0
        %5120 = vmatprep.mubr.f32.mxu0 0.0
        %5121 = vmatmul.mubr.f32.gmra.mxu0 %v4829
        %v5122 = vpop.f32.mrf.mxu0
        %v5123 = vadd.f32 0.0, %v5122
        %v5124 = vpop.f32.mrf.mxu0
        %5125 = vmatprep.mubr.f32.mxu0 0.0
        %5126 = vmatmul.mubr.f32.gmra.mxu0 %v4832
        %v5127 = vpop.f32.mrf.mxu0
        %v5128 = vadd.f32 0.0, %v5127
        %v5129 = vpop.f32.mrf.mxu0
        %5130 = vmatprep.mubr.f32.mxu0 0.0
        %5131 = vmatmul.mubr.f32.gmra.mxu0 %v4835
        %v5132 = vpop.f32.mrf.mxu0
        %v5133 = vadd.f32 0.0, %v5132
        %v5134 = vpop.f32.mrf.mxu0
        %5135 = vmatprep.mubr.f32.mxu0 0.0
        %5136 = vmatmul.mubr.f32.gmra.mxu0 %v4838
        %v5137 = vpop.f32.mrf.mxu0
        %v5138 = vadd.f32 0.0, %v5137
        %v5139 = vpop.f32.mrf.mxu0
        %5140 = vmatprep.mubr.f32.mxu0 0.0
        %5141 = vmatmul.mubr.f32.gmra.mxu0 %v4841
        %v5142 = vpop.f32.mrf.mxu0
        %v5143 = vadd.f32 0.0, %v5142
        %v5144 = vpop.f32.mrf.mxu0
        %5145 = vmatprep.mubr.f32.mxu0 0.0
        %5146 = vmatmul.mubr.f32.gmra.mxu0 %v4844
        %v5147 = vpop.f32.mrf.mxu0
        %v5148 = vadd.f32 0.0, %v5147
        %v5149 = vpop.f32.mrf.mxu0
        %5150 = vmatprep.mubr.f32.mxu0 0.0
        %5151 = vmatmul.mubr.f32.gmra.mxu0 %v4847
        %v5152 = vpop.f32.mrf.mxu0
        %v5153 = vadd.f32 0.0, %v5152
        %v5154 = vpop.f32.mrf.mxu0
        %5155 = vmatprep.mubr.f32.mxu0 0.0
        %5156 = vmatmul.mubr.f32.gmra.mxu0 %v4850
        %v5157 = vpop.f32.mrf.mxu0
        %v5158 = vadd.f32 0.0, %v5157
        %v5159 = vpop.f32.mrf.mxu0
        %5160 = vmatprep.mubr.f32.mxu0 0.0
        %5161 = vmatmul.mubr.f32.gmra.mxu0 %v4853
        %v5162 = vpop.f32.mrf.mxu0
        %v5163 = vadd.f32 0.0, %v5162
        %v5164 = vpop.f32.mrf.mxu0
        %5165 = vmatprep.mubr.f32.mxu0 0.0
        %5166 = vmatmul.mubr.f32.gmra.mxu0 %v4856
        %v5167 = vpop.f32.mrf.mxu0
        %v5168 = vadd.f32 0.0, %v5167
        %v5169 = vpop.f32.mrf.mxu0
        %5170 = vmatprep.mubr.f32.mxu0 0.0
        %5171 = vmatmul.mubr.f32.gmra.mxu0 %v4859
        %v5172 = vpop.f32.mrf.mxu0
        %v5173 = vadd.f32 0.0, %v5172
        %v5174 = vpop.f32.mrf.mxu0
        %5175 = vmatprep.mubr.f32.mxu0 0.0
        %5176 = vmatmul.mubr.f32.gmra.mxu0 %v4862
        %v5177 = vpop.f32.mrf.mxu0
        %v5178 = vadd.f32 0.0, %v5177
        %v5179 = vpop.f32.mrf.mxu0
        %5180 = vmatprep.mubr.f32.mxu0 0.0
        %5181 = vmatmul.mubr.f32.gmra.mxu0 %v4865
        %v5182 = vpop.f32.mrf.mxu0
        %v5183 = vadd.f32 0.0, %v5182
        %v5184 = vpop.f32.mrf.mxu0
        %5185 = vmatprep.mubr.f32.mxu0 0.0
        %5186 = vmatmul.mubr.f32.gmra.mxu0 %v4868
        %v5187 = vpop.f32.mrf.mxu0
        %v5188 = vadd.f32 0.0, %v5187
        %v5189 = vpop.f32.mrf.mxu0
        %5190 = vmatprep.mubr.f32.mxu0 0.0
        %5191 = vmatmul.mubr.f32.gmra.mxu0 %v4871
        %v5192 = vpop.f32.mrf.mxu0
        %v5193 = vadd.f32 0.0, %v5192
        %v5194 = vpop.f32.mrf.mxu0
        %5195 = vmatprep.mubr.f32.mxu0 0.0
        %5196 = vmatmul.mubr.f32.gmra.mxu0 %v4874
        %v5197 = vpop.f32.mrf.mxu0
        %v5198 = vadd.f32 0.0, %v5197
        %v5199 = vpop.f32.mrf.mxu0
        %5200 = vmatprep.mubr.f32.mxu0 0.0
        %5201 = vmatmul.mubr.f32.gmra.mxu0 %v4877
        %v5202 = vpop.f32.mrf.mxu0
        %v5203 = vadd.f32 0.0, %v5202
        %v5204 = vpop.f32.mrf.mxu0
        %5205 = vmatprep.mubr.f32.mxu0 0.0
        %5206 = vmatmul.mubr.f32.gmra.mxu0 %v4880
        %v5207 = vpop.f32.mrf.mxu0
        %v5208 = vadd.f32 0.0, %v5207
        %v5209 = vpop.f32.mrf.mxu0
        %5210 = vmatprep.mubr.f32.mxu0 0.0
        %5211 = vmatmul.mubr.f32.gmra.mxu0 %v4883
        %v5212 = vpop.f32.mrf.mxu0
        %v5213 = vadd.f32 0.0, %v5212
        %v5214 = vpop.f32.mrf.mxu0
        %5215 = vmatprep.mubr.f32.mxu0 0.0
        %5216 = vmatmul.mubr.f32.gmra.mxu0 %v4886
        %v5217 = vpop.f32.mrf.mxu0
        %v5218 = vadd.f32 0.0, %v5217
        %v5219 = vpop.f32.mrf.mxu0
        %5220 = vmatprep.mubr.f32.mxu0 0.0
        %5221 = vmatmul.mubr.f32.gmra.mxu0 %v4889
        %v5222 = vpop.f32.mrf.mxu0
        %v5223 = vadd.f32 0.0, %v5222
        %v5224 = vpop.f32.mrf.mxu0
        %5225 = vmatprep.mubr.f32.mxu0 0.0
        %5226 = vmatmul.mubr.f32.gmra.mxu0 %v4892
        %v5227 = vpop.f32.mrf.mxu0
        %v5228 = vadd.f32 0.0, %v5227
        %v5229 = vpop.f32.mrf.mxu0
        %5230 = vmatprep.mubr.f32.mxu0 0.0
        %5231 = vmatmul.mubr.f32.gmra.mxu0 %v4895
        %v5232 = vpop.f32.mrf.mxu0
        %v5233 = vadd.f32 0.0, %v5232
        %v5234 = vpop.f32.mrf.mxu0
        %5235 = vmatprep.mubr.f32.mxu0 0.0
        %5236 = vmatmul.mubr.f32.gmra.mxu0 %v4898
        %v5237 = vpop.f32.mrf.mxu0
        %v5238 = vadd.f32 0.0, %v5237
        %v5239 = vpop.f32.mrf.mxu0
        %5240 = vmatprep.mubr.f32.mxu0 0.0
        %5241 = vmatmul.mubr.f32.gmra.mxu0 %v4901
        %v5242 = vpop.f32.mrf.mxu0
        %v5243 = vadd.f32 0.0, %v5242
        %v5244 = vpop.f32.mrf.mxu0
        %5245 = vmatprep.mubr.f32.mxu0 0.0
        %5246 = vmatmul.mubr.f32.gmra.mxu0 %v4904
        %v5247 = vpop.f32.mrf.mxu0
        %v5248 = vadd.f32 0.0, %v5247
        %v5249 = vpop.f32.mrf.mxu0
        %5250 = vmatprep.mubr.f32.mxu0 0.0
        %5251 = vmatmul.mubr.f32.gmra.mxu0 %v4907
        %v5252 = vpop.f32.mrf.mxu0
        %v5253 = vadd.f32 0.0, %v5252
        %v5254 = vpop.f32.mrf.mxu0
        %5255 = vmatprep.mubr.f32.mxu0 0.0
        %5256 = vmatmul.mubr.f32.gmra.mxu0 %v4910
        %v5257 = vpop.f32.mrf.mxu0
        %v5258 = vadd.f32 0.0, %v5257
        %v5259 = vpop.f32.mrf.mxu0
        %5260 = vmatprep.mubr.f32.mxu0 0.0
        %5261 = vmatmul.mubr.f32.gmra.mxu0 %v4913
        %v5262 = vpop.f32.mrf.mxu0
        %v5263 = vadd.f32 0.0, %v5262
        %v5264 = vpop.f32.mrf.mxu0
        %5265 = vmatprep.mubr.f32.mxu0 0.0
        %5266 = vmatmul.mubr.f32.gmra.mxu0 %v4916
        %v5267 = vpop.f32.mrf.mxu0
        %v5268 = vadd.f32 0.0, %v5267
        %v5269 = vpop.f32.mrf.mxu0
        %5270 = vmatprep.mubr.f32.mxu0 0.0
        %5271 = vmatmul.mubr.f32.gmra.mxu0 %v4919
        %v5272 = vpop.f32.mrf.mxu0
        %v5273 = vadd.f32 0.0, %v5272
        %v5274 = vpop.f32.mrf.mxu0
        %5275 = vmatprep.mubr.f32.mxu0 0.0
        %5276 = vmatmul.mubr.f32.gmra.mxu0 %v4922
        %v5277 = vpop.f32.mrf.mxu0
        %v5278 = vadd.f32 0.0, %v5277
        %v5279 = vpop.f32.mrf.mxu0
        %5280 = vmatprep.mubr.f32.mxu0 0.0
        %5281 = vmatmul.mubr.f32.gmra.mxu0 %v4925
        %v5282 = vpop.f32.mrf.mxu0
        %v5283 = vadd.f32 0.0, %v5282
        %v5284 = vpop.f32.mrf.mxu0
        %5285 = vmatprep.mubr.f32.mxu0 0.0
        %5286 = vmatmul.mubr.f32.gmra.mxu0 %v4928
        %v5287 = vpop.f32.mrf.mxu0
        %v5288 = vadd.f32 0.0, %v5287
        %v5289 = vpop.f32.mrf.mxu0
        %5290 = vmatprep.mubr.f32.mxu0 0.0
        %5291 = vmatmul.mubr.f32.gmra.mxu0 %v4931
        %v5292 = vpop.f32.mrf.mxu0
        %v5293 = vadd.f32 0.0, %v5292
        %v5294 = vpop.f32.mrf.mxu0
        %5295 = vmatprep.mubr.f32.mxu0 0.0
        %5296 = vmatmul.mubr.f32.gmra.mxu0 %v4934
        %v5297 = vpop.f32.mrf.mxu0
        %v5298 = vadd.f32 0.0, %v5297
        %v5299 = vpop.f32.mrf.mxu0
        %5300 = vmatprep.mubr.f32.mxu0 0.0
        %5301 = vmatmul.mubr.f32.gmra.mxu0 %v4937
        %v5302 = vpop.f32.mrf.mxu0
        %v5303 = vadd.f32 0.0, %v5302
        %v5304 = vpop.f32.mrf.mxu0
        %5305 = vmatprep.mubr.f32.mxu0 0.0
        %5306 = vmatmul.mubr.f32.gmra.mxu0 %v4940
        %v5307 = vpop.f32.mrf.mxu0
        %v5308 = vadd.f32 0.0, %v5307
        %v5309 = vpop.f32.mrf.mxu0
        %5310 = vmatprep.mubr.f32.mxu0 0.0
        %5311 = vmatmul.mubr.f32.gmra.mxu0 %v4943
        %v5312 = vpop.f32.mrf.mxu0
        %v5313 = vadd.f32 0.0, %v5312
        %v5314 = vpop.f32.mrf.mxu0
        %5315 = vmatprep.mubr.f32.mxu0 0.0
        %5316 = vmatmul.mubr.f32.gmra.mxu0 %v4946
        %v5317 = vpop.f32.mrf.mxu0
        %v5318 = vadd.f32 0.0, %v5317
        %v5319 = vpop.f32.mrf.mxu0
        %5320 = vmatprep.mubr.f32.mxu0 0.0
        %5321 = vmatmul.mubr.f32.gmra.mxu0 %v4949
        %v5322 = vpop.f32.mrf.mxu0
        %v5323 = vadd.f32 0.0, %v5322
        %v5324 = vpop.f32.mrf.mxu0
        %5325 = vmatprep.mubr.f32.mxu0 0.0
        %5326 = vmatmul.mubr.f32.gmra.mxu0 %v4952
        %v5327 = vpop.f32.mrf.mxu0
        %v5328 = vadd.f32 0.0, %v5327
        %v5329 = vpop.f32.mrf.mxu0
        %5330 = vmatprep.mubr.f32.mxu0 0.0
        %5331 = vmatmul.mubr.f32.gmra.mxu0 %v4955
        %v5332 = vpop.f32.mrf.mxu0
        %v5333 = vadd.f32 0.0, %v5332
        %v5334 = vpop.f32.mrf.mxu0
        %5335 = vmatprep.mubr.f32.mxu0 0.0
        %5336 = vmatmul.mubr.f32.gmra.mxu0 %v4958
        %v5337 = vpop.f32.mrf.mxu0
        %v5338 = vadd.f32 0.0, %v5337
        %v5339 = vpop.f32.mrf.mxu0
        %5340 = vmatprep.mubr.f32.mxu0 0.0
        %5341 = vmatmul.mubr.f32.gmra.mxu0 %v4961
        %v5342 = vpop.f32.mrf.mxu0
        %v5343 = vadd.f32 0.0, %v5342
        %v5344 = vpop.f32.mrf.mxu0
        %5345 = vmatprep.mubr.f32.mxu0 0.0
        %5346 = vmatmul.mubr.f32.gmra.mxu0 %v4964
        %v5347 = vpop.f32.mrf.mxu0
        %v5348 = vadd.f32 0.0, %v5347
        %v5349 = vpop.f32.mrf.mxu0
        %5350 = vdwg.mxu0
        %5351 = vxpose.xlu0.b32.start [1/16] %v5033, 128
        %5352 = vxpose.xlu0.b32.cont [2/16] %v5038, 128
        %5353 = vxpose.xlu0.b32.cont [3/16] %v5043, 128
        %5354 = vxpose.xlu0.b32.cont [4/16] %v5048, 128
        %5355 = vxpose.xlu0.b32.cont [5/16] %v5053, 128
        %5356 = vxpose.xlu0.b32.cont [6/16] %v5058, 128
        %5357 = vxpose.xlu0.b32.cont [7/16] %v5063, 128
        %5358 = vxpose.xlu0.b32.cont [8/16] %v5068, 128
        %5359 = vxpose.xlu0.b32.cont [9/16] %v5073, 128
        %5360 = vxpose.xlu0.b32.cont [10/16] %v5078, 128
        %5361 = vxpose.xlu0.b32.cont [11/16] %v5083, 128
        %5362 = vxpose.xlu0.b32.cont [12/16] %v5088, 128
        %5363 = vxpose.xlu0.b32.cont [13/16] %v5093, 128
        %5364 = vxpose.xlu0.b32.cont [14/16] %v5098, 128
        %5365 = vxpose.xlu0.b32.cont [15/16] %v5103, 128
        %5366 = vxpose.xlu0.b32.end [16/16] %v5108, 128
        %v5367 = vpop.trf.xlu0
        %v5368 = vpop.trf.xlu0
        %v5369 = vpop.trf.xlu0
        %v5370 = vpop.trf.xlu0
        %v5371 = vpop.trf.xlu0
        %v5372 = vpop.trf.xlu0
        %v5373 = vpop.trf.xlu0
        %v5374 = vpop.trf.xlu0
        %v5375 = vpop.trf.xlu0
        %v5376 = vpop.trf.xlu0
        %v5377 = vpop.trf.xlu0
        %v5378 = vpop.trf.xlu0
        %v5379 = vpop.trf.xlu0
        %v5380 = vpop.trf.xlu0
        %v5381 = vpop.trf.xlu0
        %v5382 = vpop.trf.xlu0
        %5383 = vxpose.xlu0.b32.start [1/16] %v5113, 128
        %5384 = vxpose.xlu0.b32.cont [2/16] %v5118, 128
        %5385 = vxpose.xlu0.b32.cont [3/16] %v5123, 128
        %5386 = vxpose.xlu0.b32.cont [4/16] %v5128, 128
        %5387 = vxpose.xlu0.b32.cont [5/16] %v5133, 128
        %5388 = vxpose.xlu0.b32.cont [6/16] %v5138, 128
        %5389 = vxpose.xlu0.b32.cont [7/16] %v5143, 128
        %5390 = vxpose.xlu0.b32.cont [8/16] %v5148, 128
        %5391 = vxpose.xlu0.b32.cont [9/16] %v5153, 128
        %5392 = vxpose.xlu0.b32.cont [10/16] %v5158, 128
        %5393 = vxpose.xlu0.b32.cont [11/16] %v5163, 128
        %5394 = vxpose.xlu0.b32.cont [12/16] %v5168, 128
        %5395 = vxpose.xlu0.b32.cont [13/16] %v5173, 128
        %5396 = vxpose.xlu0.b32.cont [14/16] %v5178, 128
        %5397 = vxpose.xlu0.b32.cont [15/16] %v5183, 128
        %5398 = vxpose.xlu0.b32.end [16/16] %v5188, 128
        %v5399 = vpop.trf.xlu0
        %v5400 = vpop.trf.xlu0
        %v5401 = vpop.trf.xlu0
        %v5402 = vpop.trf.xlu0
        %v5403 = vpop.trf.xlu0
        %v5404 = vpop.trf.xlu0
        %v5405 = vpop.trf.xlu0
        %v5406 = vpop.trf.xlu0
        %v5407 = vpop.trf.xlu0
        %v5408 = vpop.trf.xlu0
        %v5409 = vpop.trf.xlu0
        %v5410 = vpop.trf.xlu0
        %v5411 = vpop.trf.xlu0
        %v5412 = vpop.trf.xlu0
        %v5413 = vpop.trf.xlu0
        %v5414 = vpop.trf.xlu0
        %5415 = vxpose.xlu0.b32.start [1/16] %v5193, 128
        %5416 = vxpose.xlu0.b32.cont [2/16] %v5198, 128
        %5417 = vxpose.xlu0.b32.cont [3/16] %v5203, 128
        %5418 = vxpose.xlu0.b32.cont [4/16] %v5208, 128
        %5419 = vxpose.xlu0.b32.cont [5/16] %v5213, 128
        %5420 = vxpose.xlu0.b32.cont [6/16] %v5218, 128
        %5421 = vxpose.xlu0.b32.cont [7/16] %v5223, 128
        %5422 = vxpose.xlu0.b32.cont [8/16] %v5228, 128
        %5423 = vxpose.xlu0.b32.cont [9/16] %v5233, 128
        %5424 = vxpose.xlu0.b32.cont [10/16] %v5238, 128
        %5425 = vxpose.xlu0.b32.cont [11/16] %v5243, 128
        %5426 = vxpose.xlu0.b32.cont [12/16] %v5248, 128
        %5427 = vxpose.xlu0.b32.cont [13/16] %v5253, 128
        %5428 = vxpose.xlu0.b32.cont [14/16] %v5258, 128
        %5429 = vxpose.xlu0.b32.cont [15/16] %v5263, 128
        %5430 = vxpose.xlu0.b32.end [16/16] %v5268, 128
        %v5431 = vpop.trf.xlu0
        %v5432 = vpop.trf.xlu0
        %v5433 = vpop.trf.xlu0
        %v5434 = vpop.trf.xlu0
        %v5435 = vpop.trf.xlu0
        %v5436 = vpop.trf.xlu0
        %v5437 = vpop.trf.xlu0
        %v5438 = vpop.trf.xlu0
        %v5439 = vpop.trf.xlu0
        %v5440 = vpop.trf.xlu0
        %v5441 = vpop.trf.xlu0
        %v5442 = vpop.trf.xlu0
        %v5443 = vpop.trf.xlu0
        %v5444 = vpop.trf.xlu0
        %v5445 = vpop.trf.xlu0
        %v5446 = vpop.trf.xlu0
        %5447 = vxpose.xlu0.b32.start [1/16] %v5273, 128
        %5448 = vxpose.xlu0.b32.cont [2/16] %v5278, 128
        %5449 = vxpose.xlu0.b32.cont [3/16] %v5283, 128
        %5450 = vxpose.xlu0.b32.cont [4/16] %v5288, 128
        %5451 = vxpose.xlu0.b32.cont [5/16] %v5293, 128
        %5452 = vxpose.xlu0.b32.cont [6/16] %v5298, 128
        %5453 = vxpose.xlu0.b32.cont [7/16] %v5303, 128
        %5454 = vxpose.xlu0.b32.cont [8/16] %v5308, 128
        %5455 = vxpose.xlu0.b32.cont [9/16] %v5313, 128
        %5456 = vxpose.xlu0.b32.cont [10/16] %v5318, 128
        %5457 = vxpose.xlu0.b32.cont [11/16] %v5323, 128
        %5458 = vxpose.xlu0.b32.cont [12/16] %v5328, 128
        %5459 = vxpose.xlu0.b32.cont [13/16] %v5333, 128
        %5460 = vxpose.xlu0.b32.cont [14/16] %v5338, 128
        %5461 = vxpose.xlu0.b32.cont [15/16] %v5343, 128
        %5462 = vxpose.xlu0.b32.end [16/16] %v5348, 128
        %v5463 = vpop.trf.xlu0
        %v5464 = vpop.trf.xlu0
        %v5465 = vpop.trf.xlu0
        %v5466 = vpop.trf.xlu0
        %v5467 = vpop.trf.xlu0
        %v5468 = vpop.trf.xlu0
        %v5469 = vpop.trf.xlu0
        %v5470 = vpop.trf.xlu0
        %v5471 = vpop.trf.xlu0
        %v5472 = vpop.trf.xlu0
        %v5473 = vpop.trf.xlu0
        %v5474 = vpop.trf.xlu0
        %v5475 = vpop.trf.xlu0
        %v5476 = vpop.trf.xlu0
        %v5477 = vpop.trf.xlu0
        %v5478 = vpop.trf.xlu0
        %v5479 = vld [vmem:[%s3] ss:$4 sm:$0xf]
        %vm5480 = vcmp.ge.s32.totalorder %v5479, 0
        %vm5481 = vcmp.lt.s32.totalorder %v5479, 8
        %vm5482 = vmand %vm5480, %vm5481
        %v5483 = vsel %vm5482, 1.0, 0.0
        %v5484 = vld [vmem:[%s206] ss:$4 sm:$0xf]
        %v5485 = vadd.s32 %v5484, 4294967295
        %vm5486 = vcmp.ge.s32.totalorder %v5485, 0
        %vm5487 = vcmp.lt.s32.totalorder %v5485, 8
        %vm5488 = vmand %vm5486, %vm5487
        %v5489 = vsel %vm5488, 1.0, 0.0
        %v5490 = vmul.f32 %v5483, %v5489
        %v5491 = vld [vmem:[%s214] ss:$4 sm:$0xf]
        %v5492 = vadd.s32 %v5491, 4294967295
        %vm5493 = vcmp.ge.s32.totalorder %v5492, 0
        %vm5494 = vcmp.lt.s32.totalorder %v5492, 8
        %vm5495 = vmand %vm5493, %vm5494
        %v5496 = vsel %vm5495, 1.0, 0.0
        %v5497 = vmul.f32 %v5490, %v5496
        %5498 = vrot.lane.b32.xlu0 %v4142, 9
        %v5499 = vpop.permute.xlu0 %5498
        %5500 = vrot.lane.b32.xlu0 %v4143, 9
        %v5501 = vpop.permute.xlu0 %5500
        %5502 = vrot.lane.b32.xlu0 %v4144, 9
        %v5503 = vpop.permute.xlu0 %5502
        %5504 = vrot.lane.b32.xlu0 %v4145, 9
        %v5505 = vpop.permute.xlu0 %5504
        %v5506 = vsel %vm1574, %v5503, %v5505
        %v5507 = vsel %vm1574, %v5501, %v5503
        %v5508 = vsel %vm1574, %v5499, %v5501
        %v5509 = vsel %vm1574, %v5505, %v5499
        %v5511 = vlaneseq
        %v5512 = vshrl.u32 %v5511, 7
        %v5513 = vsub.s32 0, %v5512
        %v5514 = vrot.slane %v5497, %v5513
        %v5515 = vlaneseq
        %v5516 = vshrl.u32 %v5515, 7
        %v5517 = vsub.s32 1, %v5516
        %v5518 = vrot.slane %v5497, %v5517
        %v5519 = vlaneseq
        %v5520 = vshrl.u32 %v5519, 7
        %v5521 = vsub.s32 2, %v5520
        %v5522 = vrot.slane %v5497, %v5521
        %v5523 = vlaneseq
        %v5524 = vshrl.u32 %v5523, 7
        %v5525 = vsub.s32 3, %v5524
        %v5526 = vrot.slane %v5497, %v5525
        %v5531 = vmul.f32 %v5509, %v5514
        %v5532 = vmul.f32 %v5508, %v5518
        %v5533 = vmul.f32 %v5507, %v5522
        %v5534 = vmul.f32 %v5506, %v5526
        %5535 = vst [vmem:[#allocation2] sm:$0xff] %v5531
        %5536 = vst [vmem:[#allocation2 + $0x8] sm:$0xff] %v5532
        %5537 = vst [vmem:[#allocation2 + $0x10] sm:$0xff] %v5533
        %5538 = vst [vmem:[#allocation2 + $0x18] sm:$0xff] %v5534
        %v5539 = vld [vmem:[%s214] ss:$4 sm:$0xf]
        %vm5540 = vcmp.ge.s32.totalorder %v5539, 0
        %vm5541 = vcmp.lt.s32.totalorder %v5539, 8
        %vm5542 = vmand %vm5540, %vm5541
        %v5543 = vsel %vm5542, 1.0, 0.0
        %v5544 = vmul.f32 %v5490, %v5543
        %5545 = vrot.lane.b32.xlu0 %v4142, 8
        %v5546 = vpop.permute.xlu0 %5545
        %5547 = vrot.lane.b32.xlu0 %v4143, 8
        %v5548 = vpop.permute.xlu0 %5547
        %5549 = vrot.lane.b32.xlu0 %v4144, 8
        %v5550 = vpop.permute.xlu0 %5549
        %5551 = vrot.lane.b32.xlu0 %v4145, 8
        %v5552 = vpop.permute.xlu0 %5551
        %v5553 = vsel %vm1622, %v5550, %v5552
        %v5554 = vsel %vm1622, %v5548, %v5550
        %v5555 = vsel %vm1622, %v5546, %v5548
        %v5556 = vsel %vm1622, %v5552, %v5546
        %v5558 = vlaneseq
        %v5559 = vshrl.u32 %v5558, 7
        %v5560 = vsub.s32 0, %v5559
        %v5561 = vrot.slane %v5544, %v5560
        %v5562 = vlaneseq
        %v5563 = vshrl.u32 %v5562, 7
        %v5564 = vsub.s32 1, %v5563
        %v5565 = vrot.slane %v5544, %v5564
        %v5566 = vlaneseq
        %v5567 = vshrl.u32 %v5566, 7
        %v5568 = vsub.s32 2, %v5567
        %v5569 = vrot.slane %v5544, %v5568
        %v5570 = vlaneseq
        %v5571 = vshrl.u32 %v5570, 7
        %v5572 = vsub.s32 3, %v5571
        %v5573 = vrot.slane %v5544, %v5572
        %v5578 = vmul.f32 %v5556, %v5561
        %v5579 = vmul.f32 %v5555, %v5565
        %v5580 = vmul.f32 %v5554, %v5569
        %v5581 = vmul.f32 %v5553, %v5573
        %5582 = vst [vmem:[#allocation2 + $0x20] sm:$0xff] %v5578
        %5583 = vst [vmem:[#allocation2 + $0x28] sm:$0xff] %v5579
        %5584 = vst [vmem:[#allocation2 + $0x30] sm:$0xff] %v5580
        %5585 = vst [vmem:[#allocation2 + $0x38] sm:$0xff] %v5581
        %v5586 = vld [vmem:[%s214] ss:$4 sm:$0xf]
        %v5587 = vadd.s32 %v5586, 1
        %vm5588 = vcmp.ge.s32.totalorder %v5587, 0
        %vm5589 = vcmp.lt.s32.totalorder %v5587, 8
        %vm5590 = vmand %vm5588, %vm5589
        %v5591 = vsel %vm5590, 1.0, 0.0
        %v5592 = vmul.f32 %v5490, %v5591
        %5593 = vrot.lane.b32.xlu0 %v4142, 7
        %v5594 = vpop.permute.xlu0 %5593
        %5595 = vrot.lane.b32.xlu0 %v4143, 7
        %v5596 = vpop.permute.xlu0 %5595
        %5597 = vrot.lane.b32.xlu0 %v4144, 7
        %v5598 = vpop.permute.xlu0 %5597
        %5599 = vrot.lane.b32.xlu0 %v4145, 7
        %v5600 = vpop.permute.xlu0 %5599
        %v5601 = vsel %vm1671, %v5598, %v5600
        %v5602 = vsel %vm1671, %v5596, %v5598
        %v5603 = vsel %vm1671, %v5594, %v5596
        %v5604 = vsel %vm1671, %v5600, %v5594
        %v5606 = vlaneseq
        %v5607 = vshrl.u32 %v5606, 7
        %v5608 = vsub.s32 0, %v5607
        %v5609 = vrot.slane %v5592, %v5608
        %v5610 = vlaneseq
        %v5611 = vshrl.u32 %v5610, 7
        %v5612 = vsub.s32 1, %v5611
        %v5613 = vrot.slane %v5592, %v5612
        %v5614 = vlaneseq
        %v5615 = vshrl.u32 %v5614, 7
        %v5616 = vsub.s32 2, %v5615
        %v5617 = vrot.slane %v5592, %v5616
        %v5618 = vlaneseq
        %v5619 = vshrl.u32 %v5618, 7
        %v5620 = vsub.s32 3, %v5619
        %v5621 = vrot.slane %v5592, %v5620
        %v5626 = vmul.f32 %v5604, %v5609
        %v5627 = vmul.f32 %v5603, %v5613
        %v5628 = vmul.f32 %v5602, %v5617
        %v5629 = vmul.f32 %v5601, %v5621
        %5630 = vst [vmem:[#allocation2 + $0x40] sm:$0xff] %v5626
        %5631 = vst [vmem:[#allocation2 + $0x48] sm:$0xff] %v5627
        %5632 = vst [vmem:[#allocation2 + $0x50] sm:$0xff] %v5628
        %5633 = vst [vmem:[#allocation2 + $0x58] sm:$0xff] %v5629
        %v5634 = vld [vmem:[%s206] ss:$4 sm:$0xf]
        %vm5635 = vcmp.ge.s32.totalorder %v5634, 0
        %vm5636 = vcmp.lt.s32.totalorder %v5634, 8
        %vm5637 = vmand %vm5635, %vm5636
        %v5638 = vsel %vm5637, 1.0, 0.0
        %v5639 = vmul.f32 %v5483, %v5638
        %v5640 = vld [vmem:[%s214] ss:$4 sm:$0xf]
        %v5641 = vadd.s32 %v5640, 4294967295
        %vm5642 = vcmp.ge.s32.totalorder %v5641, 0
        %vm5643 = vcmp.lt.s32.totalorder %v5641, 8
        %vm5644 = vmand %vm5642, %vm5643
        %v5645 = vsel %vm5644, 1.0, 0.0
        %v5646 = vmul.f32 %v5639, %v5645
        %5647 = vrot.lane.b32.xlu0 %v4142, 1
        %v5648 = vpop.permute.xlu0 %5647
        %5649 = vrot.lane.b32.xlu0 %v4143, 1
        %v5650 = vpop.permute.xlu0 %5649
        %5651 = vrot.lane.b32.xlu0 %v4144, 1
        %v5652 = vpop.permute.xlu0 %5651
        %5653 = vrot.lane.b32.xlu0 %v4145, 1
        %v5654 = vpop.permute.xlu0 %5653
        %v5655 = vsel %vm1726, %v5652, %v5654
        %v5656 = vsel %vm1726, %v5650, %v5652
        %v5657 = vsel %vm1726, %v5648, %v5650
        %v5658 = vsel %vm1726, %v5654, %v5648
        %v5660 = vlaneseq
        %v5661 = vshrl.u32 %v5660, 7
        %v5662 = vsub.s32 0, %v5661
        %v5663 = vrot.slane %v5646, %v5662
        %v5664 = vlaneseq
        %v5665 = vshrl.u32 %v5664, 7
        %v5666 = vsub.s32 1, %v5665
        %v5667 = vrot.slane %v5646, %v5666
        %v5668 = vlaneseq
        %v5669 = vshrl.u32 %v5668, 7
        %v5670 = vsub.s32 2, %v5669
        %v5671 = vrot.slane %v5646, %v5670
        %v5672 = vlaneseq
        %v5673 = vshrl.u32 %v5672, 7
        %v5674 = vsub.s32 3, %v5673
        %v5675 = vrot.slane %v5646, %v5674
        %v5680 = vmul.f32 %v5658, %v5663
        %v5681 = vmul.f32 %v5657, %v5667
        %v5682 = vmul.f32 %v5656, %v5671
        %v5683 = vmul.f32 %v5655, %v5675
        %5684 = vst [vmem:[#allocation2 + $0x60] sm:$0xff] %v5680
        %5685 = vst [vmem:[#allocation2 + $0x68] sm:$0xff] %v5681
        %5686 = vst [vmem:[#allocation2 + $0x70] sm:$0xff] %v5682
        %5687 = vst [vmem:[#allocation2 + $0x78] sm:$0xff] %v5683
        %v5688 = vld [vmem:[%s214] ss:$4 sm:$0xf]
        %vm5689 = vcmp.ge.s32.totalorder %v5688, 0
        %vm5690 = vcmp.lt.s32.totalorder %v5688, 8
        %vm5691 = vmand %vm5689, %vm5690
        %v5692 = vsel %vm5691, 1.0, 0.0
        %v5693 = vmul.f32 %v5639, %v5692
        %v5695 = vlaneseq
        %v5696 = vshrl.u32 %v5695, 7
        %v5697 = vsub.s32 0, %v5696
        %v5698 = vrot.slane %v5693, %v5697
        %v5699 = vlaneseq
        %v5700 = vshrl.u32 %v5699, 7
        %v5701 = vsub.s32 1, %v5700
        %v5702 = vrot.slane %v5693, %v5701
        %v5703 = vlaneseq
        %v5704 = vshrl.u32 %v5703, 7
        %v5705 = vsub.s32 2, %v5704
        %v5706 = vrot.slane %v5693, %v5705
        %v5707 = vlaneseq
        %v5708 = vshrl.u32 %v5707, 7
        %v5709 = vsub.s32 3, %v5708
        %v5710 = vrot.slane %v5693, %v5709
        %v5715 = vmul.f32 %v4142, %v5698
        %v5716 = vmul.f32 %v4143, %v5702
        %v5717 = vmul.f32 %v4144, %v5706
        %v5718 = vmul.f32 %v4145, %v5710
        %5719 = vst [vmem:[#allocation2 + $0x80] sm:$0xff] %v5715
        %5720 = vst [vmem:[#allocation2 + $0x88] sm:$0xff] %v5716
        %5721 = vst [vmem:[#allocation2 + $0x90] sm:$0xff] %v5717
        %5722 = vst [vmem:[#allocation2 + $0x98] sm:$0xff] %v5718
        %v5723 = vld [vmem:[%s214] ss:$4 sm:$0xf]
        %v5724 = vadd.s32 %v5723, 1
        %vm5725 = vcmp.ge.s32.totalorder %v5724, 0
        %vm5726 = vcmp.lt.s32.totalorder %v5724, 8
        %vm5727 = vmand %vm5725, %vm5726
        %v5728 = vsel %vm5727, 1.0, 0.0
        %v5729 = vmul.f32 %v5639, %v5728
        %5730 = vrot.lane.b32.xlu0 %v4142, 127
        %v5731 = vpop.permute.xlu0 %5730
        %5732 = vrot.lane.b32.xlu0 %v4143, 127
        %v5733 = vpop.permute.xlu0 %5732
        %5734 = vrot.lane.b32.xlu0 %v4144, 127
        %v5735 = vpop.permute.xlu0 %5734
        %5736 = vrot.lane.b32.xlu0 %v4145, 127
        %v5737 = vpop.permute.xlu0 %5736
        %v5738 = vsel %vm1810, %v5735, %v5737
        %v5739 = vsel %vm1810, %v5733, %v5735
        %v5740 = vsel %vm1810, %v5731, %v5733
        %v5741 = vsel %vm1810, %v5737, %v5731
        %v5743 = vlaneseq
        %v5744 = vshrl.u32 %v5743, 7
        %v5745 = vsub.s32 0, %v5744
        %v5746 = vrot.slane %v5729, %v5745
        %v5747 = vlaneseq
        %v5748 = vshrl.u32 %v5747, 7
        %v5749 = vsub.s32 1, %v5748
        %v5750 = vrot.slane %v5729, %v5749
        %v5751 = vlaneseq
        %v5752 = vshrl.u32 %v5751, 7
        %v5753 = vsub.s32 2, %v5752
        %v5754 = vrot.slane %v5729, %v5753
        %v5755 = vlaneseq
        %v5756 = vshrl.u32 %v5755, 7
        %v5757 = vsub.s32 3, %v5756
        %v5758 = vrot.slane %v5729, %v5757
        %v5763 = vmul.f32 %v5740, %v5746
        %v5764 = vmul.f32 %v5739, %v5750
        %v5765 = vmul.f32 %v5738, %v5754
        %v5766 = vmul.f32 %v5741, %v5758
        %5767 = vst [vmem:[#allocation2 + $0xa0] sm:$0xff] %v5763
        %5768 = vst [vmem:[#allocation2 + $0xa8] sm:$0xff] %v5764
        %5769 = vst [vmem:[#allocation2 + $0xb0] sm:$0xff] %v5765
        %5770 = vst [vmem:[#allocation2 + $0xb8] sm:$0xff] %v5766
        %v5771 = vld [vmem:[%s206] ss:$4 sm:$0xf]
        %v5772 = vadd.s32 %v5771, 1
        %vm5773 = vcmp.ge.s32.totalorder %v5772, 0
        %vm5774 = vcmp.lt.s32.totalorder %v5772, 8
        %vm5775 = vmand %vm5773, %vm5774
        %v5776 = vsel %vm5775, 1.0, 0.0
        %v5777 = vmul.f32 %v5483, %v5776
        %v5778 = vld [vmem:[%s214] ss:$4 sm:$0xf]
        %v5779 = vadd.s32 %v5778, 4294967295
        %vm5780 = vcmp.ge.s32.totalorder %v5779, 0
        %vm5781 = vcmp.lt.s32.totalorder %v5779, 8
        %vm5782 = vmand %vm5780, %vm5781
        %v5783 = vsel %vm5782, 1.0, 0.0
        %v5784 = vmul.f32 %v5777, %v5783
        %5785 = vrot.lane.b32.xlu0 %v4142, 121
        %v5786 = vpop.permute.xlu0 %5785
        %5787 = vrot.lane.b32.xlu0 %v4143, 121
        %v5788 = vpop.permute.xlu0 %5787
        %5789 = vrot.lane.b32.xlu0 %v4144, 121
        %v5790 = vpop.permute.xlu0 %5789
        %5791 = vrot.lane.b32.xlu0 %v4145, 121
        %v5792 = vpop.permute.xlu0 %5791
        %v5793 = vsel %vm1866, %v5790, %v5792
        %v5794 = vsel %vm1866, %v5788, %v5790
        %v5795 = vsel %vm1866, %v5786, %v5788
        %v5796 = vsel %vm1866, %v5792, %v5786
        %v5798 = vlaneseq
        %v5799 = vshrl.u32 %v5798, 7
        %v5800 = vsub.s32 0, %v5799
        %v5801 = vrot.slane %v5784, %v5800
        %v5802 = vlaneseq
        %v5803 = vshrl.u32 %v5802, 7
        %v5804 = vsub.s32 1, %v5803
        %v5805 = vrot.slane %v5784, %v5804
        %v5806 = vlaneseq
        %v5807 = vshrl.u32 %v5806, 7
        %v5808 = vsub.s32 2, %v5807
        %v5809 = vrot.slane %v5784, %v5808
        %v5810 = vlaneseq
        %v5811 = vshrl.u32 %v5810, 7
        %v5812 = vsub.s32 3, %v5811
        %v5813 = vrot.slane %v5784, %v5812
        %v5818 = vmul.f32 %v5795, %v5801
        %v5819 = vmul.f32 %v5794, %v5805
        %v5820 = vmul.f32 %v5793, %v5809
        %v5821 = vmul.f32 %v5796, %v5813
        %5822 = vst [vmem:[#allocation2 + $0xc0] sm:$0xff] %v5818
        %5823 = vst [vmem:[#allocation2 + $0xc8] sm:$0xff] %v5819
        %5824 = vst [vmem:[#allocation2 + $0xd0] sm:$0xff] %v5820
        %5825 = vst [vmem:[#allocation2 + $0xd8] sm:$0xff] %v5821
        %v5826 = vld [vmem:[%s214] ss:$4 sm:$0xf]
        %vm5827 = vcmp.ge.s32.totalorder %v5826, 0
        %vm5828 = vcmp.lt.s32.totalorder %v5826, 8
        %vm5829 = vmand %vm5827, %vm5828
        %v5830 = vsel %vm5829, 1.0, 0.0
        %v5831 = vmul.f32 %v5777, %v5830
        %5832 = vrot.lane.b32.xlu0 %v4142, 120
        %v5833 = vpop.permute.xlu0 %5832
        %5834 = vrot.lane.b32.xlu0 %v4143, 120
        %v5835 = vpop.permute.xlu0 %5834
        %5836 = vrot.lane.b32.xlu0 %v4144, 120
        %v5837 = vpop.permute.xlu0 %5836
        %5838 = vrot.lane.b32.xlu0 %v4145, 120
        %v5839 = vpop.permute.xlu0 %5838
        %v5840 = vsel %vm1914, %v5837, %v5839
        %v5841 = vsel %vm1914, %v5835, %v5837
        %v5842 = vsel %vm1914, %v5833, %v5835
        %v5843 = vsel %vm1914, %v5839, %v5833
        %v5845 = vlaneseq
        %v5846 = vshrl.u32 %v5845, 7
        %v5847 = vsub.s32 0, %v5846
        %v5848 = vrot.slane %v5831, %v5847
        %v5849 = vlaneseq
        %v5850 = vshrl.u32 %v5849, 7
        %v5851 = vsub.s32 1, %v5850
        %v5852 = vrot.slane %v5831, %v5851
        %v5853 = vlaneseq
        %v5854 = vshrl.u32 %v5853, 7
        %v5855 = vsub.s32 2, %v5854
        %v5856 = vrot.slane %v5831, %v5855
        %v5857 = vlaneseq
        %v5858 = vshrl.u32 %v5857, 7
        %v5859 = vsub.s32 3, %v5858
        %v5860 = vrot.slane %v5831, %v5859
        %v5865 = vmul.f32 %v5842, %v5848
        %v5866 = vmul.f32 %v5841, %v5852
        %v5867 = vmul.f32 %v5840, %v5856
        %v5868 = vmul.f32 %v5843, %v5860
        %5869 = vst [vmem:[#allocation2 + $0xe0] sm:$0xff] %v5865
        %5870 = vst [vmem:[#allocation2 + $0xe8] sm:$0xff] %v5866
        %5871 = vst [vmem:[#allocation2 + $0xf0] sm:$0xff] %v5867
        %5872 = vst [vmem:[#allocation2 + $0xf8] sm:$0xff] %v5868
        %v5873 = vld [vmem:[%s214] ss:$4 sm:$0xf]
        %v5874 = vadd.s32 %v5873, 1
        %vm5875 = vcmp.ge.s32.totalorder %v5874, 0
        %vm5876 = vcmp.lt.s32.totalorder %v5874, 8
        %vm5877 = vmand %vm5875, %vm5876
        %v5878 = vsel %vm5877, 1.0, 0.0
        %v5879 = vmul.f32 %v5777, %v5878
        %5880 = vrot.lane.b32.xlu0 %v4142, 119
        %v5881 = vpop.permute.xlu0 %5880
        %5882 = vrot.lane.b32.xlu0 %v4143, 119
        %v5883 = vpop.permute.xlu0 %5882
        %5884 = vrot.lane.b32.xlu0 %v4144, 119
        %v5885 = vpop.permute.xlu0 %5884
        %5886 = vrot.lane.b32.xlu0 %v4145, 119
        %v5887 = vpop.permute.xlu0 %5886
        %v5888 = vsel %vm1963, %v5885, %v5887
        %v5889 = vsel %vm1963, %v5883, %v5885
        %v5890 = vsel %vm1963, %v5881, %v5883
        %v5891 = vsel %vm1963, %v5887, %v5881
        %v5893 = vlaneseq
        %v5894 = vshrl.u32 %v5893, 7
        %v5895 = vsub.s32 0, %v5894
        %v5896 = vrot.slane %v5879, %v5895
        %v5897 = vlaneseq
        %v5898 = vshrl.u32 %v5897, 7
        %v5899 = vsub.s32 1, %v5898
        %v5900 = vrot.slane %v5879, %v5899
        %v5901 = vlaneseq
        %v5902 = vshrl.u32 %v5901, 7
        %v5903 = vsub.s32 2, %v5902
        %v5904 = vrot.slane %v5879, %v5903
        %v5905 = vlaneseq
        %v5906 = vshrl.u32 %v5905, 7
        %v5907 = vsub.s32 3, %v5906
        %v5908 = vrot.slane %v5879, %v5907
        %v5913 = vmul.f32 %v5890, %v5896
        %v5914 = vmul.f32 %v5889, %v5900
        %v5915 = vmul.f32 %v5888, %v5904
        %v5916 = vmul.f32 %v5891, %v5908
        %5917 = vst [vmem:[#allocation2 + $0x100] sm:$0xff] %v5913
        %5918 = vst [vmem:[#allocation2 + $0x108] sm:$0xff] %v5914
        %5919 = vst [vmem:[#allocation2 + $0x110] sm:$0xff] %v5915
        %5920 = vst [vmem:[#allocation2 + $0x118] sm:$0xff] %v5916
        %v5921 = vld [vmem:[#allocation2] sm:$0xff]
        %v5922 = vld [vmem:[#allocation2 + $0x8] sm:$0xff]
        %v5923 = vld [vmem:[#allocation2 + $0x10] sm:$0xff]
        %v5924 = vld [vmem:[#allocation2 + $0x18] sm:$0xff]
        %v5925 = vld [vmem:[#allocation2 + $0x20] sm:$0xff]
        %v5926 = vld [vmem:[#allocation2 + $0x28] sm:$0xff]
        %v5927 = vld [vmem:[#allocation2 + $0x30] sm:$0xff]
        %v5928 = vld [vmem:[#allocation2 + $0x38] sm:$0xff]
        %v5929 = vld [vmem:[#allocation2 + $0x40] sm:$0xff]
        %v5930 = vld [vmem:[#allocation2 + $0x48] sm:$0xff]
        %v5931 = vld [vmem:[#allocation2 + $0x50] sm:$0xff]
        %v5932 = vld [vmem:[#allocation2 + $0x58] sm:$0xff]
        %v5933 = vld [vmem:[#allocation2 + $0x60] sm:$0xff]
        %v5934 = vld [vmem:[#allocation2 + $0x68] sm:$0xff]
        %v5935 = vld [vmem:[#allocation2 + $0x70] sm:$0xff]
        %v5936 = vld [vmem:[#allocation2 + $0x78] sm:$0xff]
        %v5937 = vld [vmem:[#allocation2 + $0x80] sm:$0xff]
        %v5938 = vld [vmem:[#allocation2 + $0x88] sm:$0xff]
        %v5939 = vld [vmem:[#allocation2 + $0x90] sm:$0xff]
        %v5940 = vld [vmem:[#allocation2 + $0x98] sm:$0xff]
        %v5941 = vld [vmem:[#allocation2 + $0xa0] sm:$0xff]
        %v5942 = vld [vmem:[#allocation2 + $0xa8] sm:$0xff]
        %v5943 = vld [vmem:[#allocation2 + $0xb0] sm:$0xff]
        %v5944 = vld [vmem:[#allocation2 + $0xb8] sm:$0xff]
        %v5945 = vld [vmem:[#allocation2 + $0xc0] sm:$0xff]
        %v5946 = vld [vmem:[#allocation2 + $0xc8] sm:$0xff]
        %v5947 = vld [vmem:[#allocation2 + $0xd0] sm:$0xff]
        %v5948 = vld [vmem:[#allocation2 + $0xd8] sm:$0xff]
        %v5949 = vld [vmem:[#allocation2 + $0xe0] sm:$0xff]
        %v5950 = vld [vmem:[#allocation2 + $0xe8] sm:$0xff]
        %v5951 = vld [vmem:[#allocation2 + $0xf0] sm:$0xff]
        %v5952 = vld [vmem:[#allocation2 + $0xf8] sm:$0xff]
        %v5953 = vld [vmem:[#allocation2 + $0x100] sm:$0xff]
        %v5954 = vld [vmem:[#allocation2 + $0x108] sm:$0xff]
        %v5955 = vld [vmem:[#allocation2 + $0x110] sm:$0xff]
        %v5956 = vld [vmem:[#allocation2 + $0x118] sm:$0xff]
        %s5957 = scalar_lea.vmem %s2, 72
        %v5958 = vld [vmem:[%s5957] sm:$0xff]
        %v5959 = vld [vmem:[%s5957 + $0x8] sm:$0xff]
        %v5960 = vld [vmem:[%s5957 + $0x10] sm:$0xff]
        %v5961 = vld [vmem:[%s5957 + $0x18] sm:$0xff]
        %v5962 = vld [vmem:[%s5957 + $0x20] sm:$0xff]
        %v5963 = vld [vmem:[%s5957 + $0x28] sm:$0xff]
        %v5964 = vld [vmem:[%s5957 + $0x30] sm:$0xff]
        %v5965 = vld [vmem:[%s5957 + $0x38] sm:$0xff]
        %v5966 = vld [vmem:[%s5957 + $0x40] sm:$0xff]
        %5967 = vxpose.xlu0.b32.start [1/16] %v5921, 128
        %5968 = vxpose.xlu0.b32.cont [2/16] %v5925, 128
        %5969 = vxpose.xlu0.b32.cont [3/16] %v5929, 128
        %5970 = vxpose.xlu0.b32.cont [4/16] %v5933, 128
        %5971 = vxpose.xlu0.b32.cont [5/16] %v5937, 128
        %5972 = vxpose.xlu0.b32.cont [6/16] %v5941, 128
        %5973 = vxpose.xlu0.b32.cont [7/16] %v5945, 128
        %5974 = vxpose.xlu0.b32.cont [8/16] %v5949, 128
        %5975 = vxpose.xlu0.b32.cont [9/16] %v5953, 128
        %5976 = vxpose.xlu0.b32.cont [10/16] 0.0, 128
        %5977 = vxpose.xlu0.b32.cont [11/16] 0.0, 128
        %5978 = vxpose.xlu0.b32.cont [12/16] 0.0, 128
        %5979 = vxpose.xlu0.b32.cont [13/16] 0.0, 128
        %5980 = vxpose.xlu0.b32.cont [14/16] 0.0, 128
        %5981 = vxpose.xlu0.b32.cont [15/16] 0.0, 128
        %5982 = vxpose.xlu0.b32.end [16/16] 0.0, 128
        %v5983 = vpop.trf.xlu0
        %v5984 = vpop.trf.xlu0
        %v5985 = vpop.trf.xlu0
        %v5986 = vpop.trf.xlu0
        %v5987 = vpop.trf.xlu0
        %v5988 = vpop.trf.xlu0
        %v5989 = vpop.trf.xlu0
        %v5990 = vpop.trf.xlu0
        %v5991 = vpop.trf.xlu0
        %v5992 = vpop.trf.xlu0
        %v5993 = vpop.trf.xlu0
        %v5994 = vpop.trf.xlu0
        %v5995 = vpop.trf.xlu0
        %v5996 = vpop.trf.xlu0
        %v5997 = vpop.trf.xlu0
        %v5998 = vpop.trf.xlu0
        %5999 = vxpose.xlu0.b32.start [1/16] %v5922, 128
        %6000 = vxpose.xlu0.b32.cont [2/16] %v5926, 128
        %6001 = vxpose.xlu0.b32.cont [3/16] %v5930, 128
        %6002 = vxpose.xlu0.b32.cont [4/16] %v5934, 128
        %6003 = vxpose.xlu0.b32.cont [5/16] %v5938, 128
        %6004 = vxpose.xlu0.b32.cont [6/16] %v5942, 128
        %6005 = vxpose.xlu0.b32.cont [7/16] %v5946, 128
        %6006 = vxpose.xlu0.b32.cont [8/16] %v5950, 128
        %6007 = vxpose.xlu0.b32.cont [9/16] %v5954, 128
        %6008 = vxpose.xlu0.b32.cont [10/16] 0.0, 128
        %6009 = vxpose.xlu0.b32.cont [11/16] 0.0, 128
        %6010 = vxpose.xlu0.b32.cont [12/16] 0.0, 128
        %6011 = vxpose.xlu0.b32.cont [13/16] 0.0, 128
        %6012 = vxpose.xlu0.b32.cont [14/16] 0.0, 128
        %6013 = vxpose.xlu0.b32.cont [15/16] 0.0, 128
        %6014 = vxpose.xlu0.b32.end [16/16] 0.0, 128
        %v6015 = vpop.trf.xlu0
        %v6016 = vpop.trf.xlu0
        %v6017 = vpop.trf.xlu0
        %v6018 = vpop.trf.xlu0
        %v6019 = vpop.trf.xlu0
        %v6020 = vpop.trf.xlu0
        %v6021 = vpop.trf.xlu0
        %v6022 = vpop.trf.xlu0
        %v6023 = vpop.trf.xlu0
        %v6024 = vpop.trf.xlu0
        %v6025 = vpop.trf.xlu0
        %v6026 = vpop.trf.xlu0
        %v6027 = vpop.trf.xlu0
        %v6028 = vpop.trf.xlu0
        %v6029 = vpop.trf.xlu0
        %v6030 = vpop.trf.xlu0
        %6031 = vxpose.xlu0.b32.start [1/16] %v5923, 128
        %6032 = vxpose.xlu0.b32.cont [2/16] %v5927, 128
        %6033 = vxpose.xlu0.b32.cont [3/16] %v5931, 128
        %6034 = vxpose.xlu0.b32.cont [4/16] %v5935, 128
        %6035 = vxpose.xlu0.b32.cont [5/16] %v5939, 128
        %6036 = vxpose.xlu0.b32.cont [6/16] %v5943, 128
        %6037 = vxpose.xlu0.b32.cont [7/16] %v5947, 128
        %6038 = vxpose.xlu0.b32.cont [8/16] %v5951, 128
        %6039 = vxpose.xlu0.b32.cont [9/16] %v5955, 128
        %6040 = vxpose.xlu0.b32.cont [10/16] 0.0, 128
        %6041 = vxpose.xlu0.b32.cont [11/16] 0.0, 128
        %6042 = vxpose.xlu0.b32.cont [12/16] 0.0, 128
        %6043 = vxpose.xlu0.b32.cont [13/16] 0.0, 128
        %6044 = vxpose.xlu0.b32.cont [14/16] 0.0, 128
        %6045 = vxpose.xlu0.b32.cont [15/16] 0.0, 128
        %6046 = vxpose.xlu0.b32.end [16/16] 0.0, 128
        %v6047 = vpop.trf.xlu0
        %v6048 = vpop.trf.xlu0
        %v6049 = vpop.trf.xlu0
        %v6050 = vpop.trf.xlu0
        %v6051 = vpop.trf.xlu0
        %v6052 = vpop.trf.xlu0
        %v6053 = vpop.trf.xlu0
        %v6054 = vpop.trf.xlu0
        %v6055 = vpop.trf.xlu0
        %v6056 = vpop.trf.xlu0
        %v6057 = vpop.trf.xlu0
        %v6058 = vpop.trf.xlu0
        %v6059 = vpop.trf.xlu0
        %v6060 = vpop.trf.xlu0
        %v6061 = vpop.trf.xlu0
        %v6062 = vpop.trf.xlu0
        %6063 = vxpose.xlu0.b32.start [1/16] %v5924, 128
        %6064 = vxpose.xlu0.b32.cont [2/16] %v5928, 128
        %6065 = vxpose.xlu0.b32.cont [3/16] %v5932, 128
        %6066 = vxpose.xlu0.b32.cont [4/16] %v5936, 128
        %6067 = vxpose.xlu0.b32.cont [5/16] %v5940, 128
        %6068 = vxpose.xlu0.b32.cont [6/16] %v5944, 128
        %6069 = vxpose.xlu0.b32.cont [7/16] %v5948, 128
        %6070 = vxpose.xlu0.b32.cont [8/16] %v5952, 128
        %6071 = vxpose.xlu0.b32.cont [9/16] %v5956, 128
        %6072 = vxpose.xlu0.b32.cont [10/16] 0.0, 128
        %6073 = vxpose.xlu0.b32.cont [11/16] 0.0, 128
        %6074 = vxpose.xlu0.b32.cont [12/16] 0.0, 128
        %6075 = vxpose.xlu0.b32.cont [13/16] 0.0, 128
        %6076 = vxpose.xlu0.b32.cont [14/16] 0.0, 128
        %6077 = vxpose.xlu0.b32.cont [15/16] 0.0, 128
        %6078 = vxpose.xlu0.b32.end [16/16] 0.0, 128
        %v6079 = vpop.trf.xlu0
        %v6080 = vpop.trf.xlu0
        %v6081 = vpop.trf.xlu0
        %v6082 = vpop.trf.xlu0
        %v6083 = vpop.trf.xlu0
        %v6084 = vpop.trf.xlu0
        %v6085 = vpop.trf.xlu0
        %v6086 = vpop.trf.xlu0
        %v6087 = vpop.trf.xlu0
        %v6088 = vpop.trf.xlu0
        %v6089 = vpop.trf.xlu0
        %v6090 = vpop.trf.xlu0
        %v6091 = vpop.trf.xlu0
        %v6092 = vpop.trf.xlu0
        %v6093 = vpop.trf.xlu0
        %v6094 = vpop.trf.xlu0
        %v6096 = vsel %vm841, %v5983, 0
        %v6099 = vsel %vm841, %v5984, 0
        %v6102 = vsel %vm841, %v5985, 0
        %v6105 = vsel %vm841, %v5986, 0
        %v6108 = vsel %vm841, %v5987, 0
        %v6111 = vsel %vm841, %v5988, 0
        %v6114 = vsel %vm841, %v5989, 0
        %v6117 = vsel %vm841, %v5990, 0
        %v6120 = vsel %vm841, %v5991, 0
        %v6123 = vsel %vm841, %v5992, 0
        %v6126 = vsel %vm841, %v5993, 0
        %v6129 = vsel %vm841, %v5994, 0
        %v6132 = vsel %vm841, %v5995, 0
        %v6135 = vsel %vm841, %v5996, 0
        %v6138 = vsel %vm841, %v5997, 0
        %v6141 = vsel %vm841, %v5998, 0
        %v6144 = vsel %vm841, %v6015, 0
        %v6147 = vsel %vm841, %v6016, 0
        %v6150 = vsel %vm841, %v6017, 0
        %v6153 = vsel %vm841, %v6018, 0
        %v6156 = vsel %vm841, %v6019, 0
        %v6159 = vsel %vm841, %v6020, 0
        %v6162 = vsel %vm841, %v6021, 0
        %v6165 = vsel %vm841, %v6022, 0
        %v6168 = vsel %vm841, %v6023, 0
        %v6171 = vsel %vm841, %v6024, 0
        %v6174 = vsel %vm841, %v6025, 0
        %v6177 = vsel %vm841, %v6026, 0
        %v6180 = vsel %vm841, %v6027, 0
        %v6183 = vsel %vm841, %v6028, 0
        %v6186 = vsel %vm841, %v6029, 0
        %v6189 = vsel %vm841, %v6030, 0
        %v6192 = vsel %vm841, %v6047, 0
        %v6195 = vsel %vm841, %v6048, 0
        %v6198 = vsel %vm841, %v6049, 0
        %v6201 = vsel %vm841, %v6050, 0
        %v6204 = vsel %vm841, %v6051, 0
        %v6207 = vsel %vm841, %v6052, 0
        %v6210 = vsel %vm841, %v6053, 0
        %v6213 = vsel %vm841, %v6054, 0
        %v6216 = vsel %vm841, %v6055, 0
        %v6219 = vsel %vm841, %v6056, 0
        %v6222 = vsel %vm841, %v6057, 0
        %v6225 = vsel %vm841, %v6058, 0
        %v6228 = vsel %vm841, %v6059, 0
        %v6231 = vsel %vm841, %v6060, 0
        %v6234 = vsel %vm841, %v6061, 0
        %v6237 = vsel %vm841, %v6062, 0
        %v6240 = vsel %vm841, %v6079, 0
        %v6243 = vsel %vm841, %v6080, 0
        %v6246 = vsel %vm841, %v6081, 0
        %v6249 = vsel %vm841, %v6082, 0
        %v6252 = vsel %vm841, %v6083, 0
        %v6255 = vsel %vm841, %v6084, 0
        %v6258 = vsel %vm841, %v6085, 0
        %v6261 = vsel %vm841, %v6086, 0
        %v6264 = vsel %vm841, %v6087, 0
        %v6267 = vsel %vm841, %v6088, 0
        %v6270 = vsel %vm841, %v6089, 0
        %v6273 = vsel %vm841, %v6090, 0
        %v6276 = vsel %vm841, %v6091, 0
        %v6279 = vsel %vm841, %v6092, 0
        %v6282 = vsel %vm841, %v6093, 0
        %v6285 = vsel %vm841, %v6094, 0
        %6287 = vmatprep.subr.mxu0 0.0
        %6288 = vmatpush1.msra.mxu0 0.0
        %6289 = vmatprep.subr.mxu0 0.0
        %6290 = vmatpush1.msra.mxu0 0.0
        %6291 = vmatprep.subr.mxu0 0.0
        %6292 = vmatpush1.msra.mxu0 0.0
        %6293 = vmatprep.subr.mxu0 0.0
        %6294 = vmatpush1.msra.mxu0 0.0
        %6295 = vmatprep.subr.mxu0 0.0
        %6296 = vmatpush1.msra.mxu0 0.0
        %6297 = vmatprep.subr.mxu0 0.0
        %6298 = vmatpush1.msra.mxu0 0.0
        %6299 = vmatprep.subr.mxu0 0.0
        %6300 = vmatpush1.msra.mxu0 0.0
        %6301 = vmatprep.subr.mxu0 0.0
        %6302 = vmatpush1.msra.mxu0 %v5966
        %6303 = vmatprep.subr.mxu0 0.0
        %6304 = vmatpush1.msra.mxu0 %v5965
        %6305 = vmatprep.subr.mxu0 0.0
        %6306 = vmatpush1.msra.mxu0 %v5964
        %6307 = vmatprep.subr.mxu0 0.0
        %6308 = vmatpush1.msra.mxu0 %v5963
        %6309 = vmatprep.subr.mxu0 0.0
        %6310 = vmatpush1.msra.mxu0 %v5962
        %6311 = vmatprep.subr.mxu0 0.0
        %6312 = vmatpush1.msra.mxu0 %v5961
        %6313 = vmatprep.subr.mxu0 0.0
        %6314 = vmatpush1.msra.mxu0 %v5960
        %6315 = vmatprep.subr.mxu0 0.0
        %6316 = vmatpush1.msra.mxu0 %v5959
        %6317 = vmatprep.subr.mxu0 0.0
        %6318 = vmatpush1.msra.mxu0 %v5958
        %6319 = vmatprep.subr.mxu0 0.0
        %6320 = vmatpush2.msra.mxu0 0.0
        %6321 = vmatprep.subr.mxu0 0.0
        %6322 = vmatpush2.msra.mxu0 0.0
        %6323 = vmatprep.subr.mxu0 0.0
        %6324 = vmatpush2.msra.mxu0 0.0
        %6325 = vmatprep.subr.mxu0 0.0
        %6326 = vmatpush2.msra.mxu0 0.0
        %6327 = vmatprep.subr.mxu0 0.0
        %6328 = vmatpush2.msra.mxu0 0.0
        %6329 = vmatprep.subr.mxu0 0.0
        %6330 = vmatpush2.msra.mxu0 0.0
        %6331 = vmatprep.subr.mxu0 0.0
        %6332 = vmatpush2.msra.mxu0 0.0
        %6333 = vmatprep.subr.mxu0 0.0
        %6334 = vmatpush2.msra.mxu0 0.0
        %6335 = vmatprep.subr.mxu0 0.0
        %6336 = vmatpush2.msra.mxu0 0.0
        %6337 = vmatprep.subr.mxu0 0.0
        %6338 = vmatpush2.msra.mxu0 0.0
        %6339 = vmatprep.subr.mxu0 0.0
        %6340 = vmatpush2.msra.mxu0 0.0
        %6341 = vmatprep.subr.mxu0 0.0
        %6342 = vmatpush2.msra.mxu0 0.0
        %6343 = vmatprep.subr.mxu0 0.0
        %6344 = vmatpush2.msra.mxu0 0.0
        %6345 = vmatprep.subr.mxu0 0.0
        %6346 = vmatpush2.msra.mxu0 0.0
        %6347 = vmatprep.subr.mxu0 0.0
        %6348 = vmatpush2.msra.mxu0 0.0
        %6349 = vmatprep.subr.mxu0 0.0
        %6350 = vmatpush2.msra.mxu0 0.0
        %6351 = vmatprep.mubr.f32.mxu0 0.0
        %6352 = vmatmul.mubr.f32.gmra.mxu0 %v6096
        %v6353 = vpop.f32.mrf.mxu0
        %v6354 = vadd.f32 0.0, %v6353
        %v6355 = vpop.f32.mrf.mxu0
        %6356 = vmatprep.mubr.f32.mxu0 0.0
        %6357 = vmatmul.mubr.f32.gmra.mxu0 %v6099
        %v6358 = vpop.f32.mrf.mxu0
        %v6359 = vadd.f32 0.0, %v6358
        %v6360 = vpop.f32.mrf.mxu0
        %6361 = vmatprep.mubr.f32.mxu0 0.0
        %6362 = vmatmul.mubr.f32.gmra.mxu0 %v6102
        %v6363 = vpop.f32.mrf.mxu0
        %v6364 = vadd.f32 0.0, %v6363
        %v6365 = vpop.f32.mrf.mxu0
        %6366 = vmatprep.mubr.f32.mxu0 0.0
        %6367 = vmatmul.mubr.f32.gmra.mxu0 %v6105
        %v6368 = vpop.f32.mrf.mxu0
        %v6369 = vadd.f32 0.0, %v6368
        %v6370 = vpop.f32.mrf.mxu0
        %6371 = vmatprep.mubr.f32.mxu0 0.0
        %6372 = vmatmul.mubr.f32.gmra.mxu0 %v6108
        %v6373 = vpop.f32.mrf.mxu0
        %v6374 = vadd.f32 0.0, %v6373
        %v6375 = vpop.f32.mrf.mxu0
        %6376 = vmatprep.mubr.f32.mxu0 0.0
        %6377 = vmatmul.mubr.f32.gmra.mxu0 %v6111
        %v6378 = vpop.f32.mrf.mxu0
        %v6379 = vadd.f32 0.0, %v6378
        %v6380 = vpop.f32.mrf.mxu0
        %6381 = vmatprep.mubr.f32.mxu0 0.0
        %6382 = vmatmul.mubr.f32.gmra.mxu0 %v6114
        %v6383 = vpop.f32.mrf.mxu0
        %v6384 = vadd.f32 0.0, %v6383
        %v6385 = vpop.f32.mrf.mxu0
        %6386 = vmatprep.mubr.f32.mxu0 0.0
        %6387 = vmatmul.mubr.f32.gmra.mxu0 %v6117
        %v6388 = vpop.f32.mrf.mxu0
        %v6389 = vadd.f32 0.0, %v6388
        %v6390 = vpop.f32.mrf.mxu0
        %6391 = vmatprep.mubr.f32.mxu0 0.0
        %6392 = vmatmul.mubr.f32.gmra.mxu0 %v6120
        %v6393 = vpop.f32.mrf.mxu0
        %v6394 = vadd.f32 0.0, %v6393
        %v6395 = vpop.f32.mrf.mxu0
        %6396 = vmatprep.mubr.f32.mxu0 0.0
        %6397 = vmatmul.mubr.f32.gmra.mxu0 %v6123
        %v6398 = vpop.f32.mrf.mxu0
        %v6399 = vadd.f32 0.0, %v6398
        %v6400 = vpop.f32.mrf.mxu0
        %6401 = vmatprep.mubr.f32.mxu0 0.0
        %6402 = vmatmul.mubr.f32.gmra.mxu0 %v6126
        %v6403 = vpop.f32.mrf.mxu0
        %v6404 = vadd.f32 0.0, %v6403
        %v6405 = vpop.f32.mrf.mxu0
        %6406 = vmatprep.mubr.f32.mxu0 0.0
        %6407 = vmatmul.mubr.f32.gmra.mxu0 %v6129
        %v6408 = vpop.f32.mrf.mxu0
        %v6409 = vadd.f32 0.0, %v6408
        %v6410 = vpop.f32.mrf.mxu0
        %6411 = vmatprep.mubr.f32.mxu0 0.0
        %6412 = vmatmul.mubr.f32.gmra.mxu0 %v6132
        %v6413 = vpop.f32.mrf.mxu0
        %v6414 = vadd.f32 0.0, %v6413
        %v6415 = vpop.f32.mrf.mxu0
        %6416 = vmatprep.mubr.f32.mxu0 0.0
        %6417 = vmatmul.mubr.f32.gmra.mxu0 %v6135
        %v6418 = vpop.f32.mrf.mxu0
        %v6419 = vadd.f32 0.0, %v6418
        %v6420 = vpop.f32.mrf.mxu0
        %6421 = vmatprep.mubr.f32.mxu0 0.0
        %6422 = vmatmul.mubr.f32.gmra.mxu0 %v6138
        %v6423 = vpop.f32.mrf.mxu0
        %v6424 = vadd.f32 0.0, %v6423
        %v6425 = vpop.f32.mrf.mxu0
        %6426 = vmatprep.mubr.f32.mxu0 0.0
        %6427 = vmatmul.mubr.f32.gmra.mxu0 %v6141
        %v6428 = vpop.f32.mrf.mxu0
        %v6429 = vadd.f32 0.0, %v6428
        %v6430 = vpop.f32.mrf.mxu0
        %6431 = vmatprep.mubr.f32.mxu0 0.0
        %6432 = vmatmul.mubr.f32.gmra.mxu0 %v6144
        %v6433 = vpop.f32.mrf.mxu0
        %v6434 = vadd.f32 0.0, %v6433
        %v6435 = vpop.f32.mrf.mxu0
        %6436 = vmatprep.mubr.f32.mxu0 0.0
        %6437 = vmatmul.mubr.f32.gmra.mxu0 %v6147
        %v6438 = vpop.f32.mrf.mxu0
        %v6439 = vadd.f32 0.0, %v6438
        %v6440 = vpop.f32.mrf.mxu0
        %6441 = vmatprep.mubr.f32.mxu0 0.0
        %6442 = vmatmul.mubr.f32.gmra.mxu0 %v6150
        %v6443 = vpop.f32.mrf.mxu0
        %v6444 = vadd.f32 0.0, %v6443
        %v6445 = vpop.f32.mrf.mxu0
        %6446 = vmatprep.mubr.f32.mxu0 0.0
        %6447 = vmatmul.mubr.f32.gmra.mxu0 %v6153
        %v6448 = vpop.f32.mrf.mxu0
        %v6449 = vadd.f32 0.0, %v6448
        %v6450 = vpop.f32.mrf.mxu0
        %6451 = vmatprep.mubr.f32.mxu0 0.0
        %6452 = vmatmul.mubr.f32.gmra.mxu0 %v6156
        %v6453 = vpop.f32.mrf.mxu0
        %v6454 = vadd.f32 0.0, %v6453
        %v6455 = vpop.f32.mrf.mxu0
        %6456 = vmatprep.mubr.f32.mxu0 0.0
        %6457 = vmatmul.mubr.f32.gmra.mxu0 %v6159
        %v6458 = vpop.f32.mrf.mxu0
        %v6459 = vadd.f32 0.0, %v6458
        %v6460 = vpop.f32.mrf.mxu0
        %6461 = vmatprep.mubr.f32.mxu0 0.0
        %6462 = vmatmul.mubr.f32.gmra.mxu0 %v6162
        %v6463 = vpop.f32.mrf.mxu0
        %v6464 = vadd.f32 0.0, %v6463
        %v6465 = vpop.f32.mrf.mxu0
        %6466 = vmatprep.mubr.f32.mxu0 0.0
        %6467 = vmatmul.mubr.f32.gmra.mxu0 %v6165
        %v6468 = vpop.f32.mrf.mxu0
        %v6469 = vadd.f32 0.0, %v6468
        %v6470 = vpop.f32.mrf.mxu0
        %6471 = vmatprep.mubr.f32.mxu0 0.0
        %6472 = vmatmul.mubr.f32.gmra.mxu0 %v6168
        %v6473 = vpop.f32.mrf.mxu0
        %v6474 = vadd.f32 0.0, %v6473
        %v6475 = vpop.f32.mrf.mxu0
        %6476 = vmatprep.mubr.f32.mxu0 0.0
        %6477 = vmatmul.mubr.f32.gmra.mxu0 %v6171
        %v6478 = vpop.f32.mrf.mxu0
        %v6479 = vadd.f32 0.0, %v6478
        %v6480 = vpop.f32.mrf.mxu0
        %6481 = vmatprep.mubr.f32.mxu0 0.0
        %6482 = vmatmul.mubr.f32.gmra.mxu0 %v6174
        %v6483 = vpop.f32.mrf.mxu0
        %v6484 = vadd.f32 0.0, %v6483
        %v6485 = vpop.f32.mrf.mxu0
        %6486 = vmatprep.mubr.f32.mxu0 0.0
        %6487 = vmatmul.mubr.f32.gmra.mxu0 %v6177
        %v6488 = vpop.f32.mrf.mxu0
        %v6489 = vadd.f32 0.0, %v6488
        %v6490 = vpop.f32.mrf.mxu0
        %6491 = vmatprep.mubr.f32.mxu0 0.0
        %6492 = vmatmul.mubr.f32.gmra.mxu0 %v6180
        %v6493 = vpop.f32.mrf.mxu0
        %v6494 = vadd.f32 0.0, %v6493
        %v6495 = vpop.f32.mrf.mxu0
        %6496 = vmatprep.mubr.f32.mxu0 0.0
        %6497 = vmatmul.mubr.f32.gmra.mxu0 %v6183
        %v6498 = vpop.f32.mrf.mxu0
        %v6499 = vadd.f32 0.0, %v6498
        %v6500 = vpop.f32.mrf.mxu0
        %6501 = vmatprep.mubr.f32.mxu0 0.0
        %6502 = vmatmul.mubr.f32.gmra.mxu0 %v6186
        %v6503 = vpop.f32.mrf.mxu0
        %v6504 = vadd.f32 0.0, %v6503
        %v6505 = vpop.f32.mrf.mxu0
        %6506 = vmatprep.mubr.f32.mxu0 0.0
        %6507 = vmatmul.mubr.f32.gmra.mxu0 %v6189
        %v6508 = vpop.f32.mrf.mxu0
        %v6509 = vadd.f32 0.0, %v6508
        %v6510 = vpop.f32.mrf.mxu0
        %6511 = vmatprep.mubr.f32.mxu0 0.0
        %6512 = vmatmul.mubr.f32.gmra.mxu0 %v6192
        %v6513 = vpop.f32.mrf.mxu0
        %v6514 = vadd.f32 0.0, %v6513
        %v6515 = vpop.f32.mrf.mxu0
        %6516 = vmatprep.mubr.f32.mxu0 0.0
        %6517 = vmatmul.mubr.f32.gmra.mxu0 %v6195
        %v6518 = vpop.f32.mrf.mxu0
        %v6519 = vadd.f32 0.0, %v6518
        %v6520 = vpop.f32.mrf.mxu0
        %6521 = vmatprep.mubr.f32.mxu0 0.0
        %6522 = vmatmul.mubr.f32.gmra.mxu0 %v6198
        %v6523 = vpop.f32.mrf.mxu0
        %v6524 = vadd.f32 0.0, %v6523
        %v6525 = vpop.f32.mrf.mxu0
        %6526 = vmatprep.mubr.f32.mxu0 0.0
        %6527 = vmatmul.mubr.f32.gmra.mxu0 %v6201
        %v6528 = vpop.f32.mrf.mxu0
        %v6529 = vadd.f32 0.0, %v6528
        %v6530 = vpop.f32.mrf.mxu0
        %6531 = vmatprep.mubr.f32.mxu0 0.0
        %6532 = vmatmul.mubr.f32.gmra.mxu0 %v6204
        %v6533 = vpop.f32.mrf.mxu0
        %v6534 = vadd.f32 0.0, %v6533
        %v6535 = vpop.f32.mrf.mxu0
        %6536 = vmatprep.mubr.f32.mxu0 0.0
        %6537 = vmatmul.mubr.f32.gmra.mxu0 %v6207
        %v6538 = vpop.f32.mrf.mxu0
        %v6539 = vadd.f32 0.0, %v6538
        %v6540 = vpop.f32.mrf.mxu0
        %6541 = vmatprep.mubr.f32.mxu0 0.0
        %6542 = vmatmul.mubr.f32.gmra.mxu0 %v6210
        %v6543 = vpop.f32.mrf.mxu0
        %v6544 = vadd.f32 0.0, %v6543
        %v6545 = vpop.f32.mrf.mxu0
        %6546 = vmatprep.mubr.f32.mxu0 0.0
        %6547 = vmatmul.mubr.f32.gmra.mxu0 %v6213
        %v6548 = vpop.f32.mrf.mxu0
        %v6549 = vadd.f32 0.0, %v6548
        %v6550 = vpop.f32.mrf.mxu0
        %6551 = vmatprep.mubr.f32.mxu0 0.0
        %6552 = vmatmul.mubr.f32.gmra.mxu0 %v6216
        %v6553 = vpop.f32.mrf.mxu0
        %v6554 = vadd.f32 0.0, %v6553
        %v6555 = vpop.f32.mrf.mxu0
        %6556 = vmatprep.mubr.f32.mxu0 0.0
        %6557 = vmatmul.mubr.f32.gmra.mxu0 %v6219
        %v6558 = vpop.f32.mrf.mxu0
        %v6559 = vadd.f32 0.0, %v6558
        %v6560 = vpop.f32.mrf.mxu0
        %6561 = vmatprep.mubr.f32.mxu0 0.0
        %6562 = vmatmul.mubr.f32.gmra.mxu0 %v6222
        %v6563 = vpop.f32.mrf.mxu0
        %v6564 = vadd.f32 0.0, %v6563
        %v6565 = vpop.f32.mrf.mxu0
        %6566 = vmatprep.mubr.f32.mxu0 0.0
        %6567 = vmatmul.mubr.f32.gmra.mxu0 %v6225
        %v6568 = vpop.f32.mrf.mxu0
        %v6569 = vadd.f32 0.0, %v6568
        %v6570 = vpop.f32.mrf.mxu0
        %6571 = vmatprep.mubr.f32.mxu0 0.0
        %6572 = vmatmul.mubr.f32.gmra.mxu0 %v6228
        %v6573 = vpop.f32.mrf.mxu0
        %v6574 = vadd.f32 0.0, %v6573
        %v6575 = vpop.f32.mrf.mxu0
        %6576 = vmatprep.mubr.f32.mxu0 0.0
        %6577 = vmatmul.mubr.f32.gmra.mxu0 %v6231
        %v6578 = vpop.f32.mrf.mxu0
        %v6579 = vadd.f32 0.0, %v6578
        %v6580 = vpop.f32.mrf.mxu0
        %6581 = vmatprep.mubr.f32.mxu0 0.0
        %6582 = vmatmul.mubr.f32.gmra.mxu0 %v6234
        %v6583 = vpop.f32.mrf.mxu0
        %v6584 = vadd.f32 0.0, %v6583
        %v6585 = vpop.f32.mrf.mxu0
        %6586 = vmatprep.mubr.f32.mxu0 0.0
        %6587 = vmatmul.mubr.f32.gmra.mxu0 %v6237
        %v6588 = vpop.f32.mrf.mxu0
        %v6589 = vadd.f32 0.0, %v6588
        %v6590 = vpop.f32.mrf.mxu0
        %6591 = vmatprep.mubr.f32.mxu0 0.0
        %6592 = vmatmul.mubr.f32.gmra.mxu0 %v6240
        %v6593 = vpop.f32.mrf.mxu0
        %v6594 = vadd.f32 0.0, %v6593
        %v6595 = vpop.f32.mrf.mxu0
        %6596 = vmatprep.mubr.f32.mxu0 0.0
        %6597 = vmatmul.mubr.f32.gmra.mxu0 %v6243
        %v6598 = vpop.f32.mrf.mxu0
        %v6599 = vadd.f32 0.0, %v6598
        %v6600 = vpop.f32.mrf.mxu0
        %6601 = vmatprep.mubr.f32.mxu0 0.0
        %6602 = vmatmul.mubr.f32.gmra.mxu0 %v6246
        %v6603 = vpop.f32.mrf.mxu0
        %v6604 = vadd.f32 0.0, %v6603
        %v6605 = vpop.f32.mrf.mxu0
        %6606 = vmatprep.mubr.f32.mxu0 0.0
        %6607 = vmatmul.mubr.f32.gmra.mxu0 %v6249
        %v6608 = vpop.f32.mrf.mxu0
        %v6609 = vadd.f32 0.0, %v6608
        %v6610 = vpop.f32.mrf.mxu0
        %6611 = vmatprep.mubr.f32.mxu0 0.0
        %6612 = vmatmul.mubr.f32.gmra.mxu0 %v6252
        %v6613 = vpop.f32.mrf.mxu0
        %v6614 = vadd.f32 0.0, %v6613
        %v6615 = vpop.f32.mrf.mxu0
        %6616 = vmatprep.mubr.f32.mxu0 0.0
        %6617 = vmatmul.mubr.f32.gmra.mxu0 %v6255
        %v6618 = vpop.f32.mrf.mxu0
        %v6619 = vadd.f32 0.0, %v6618
        %v6620 = vpop.f32.mrf.mxu0
        %6621 = vmatprep.mubr.f32.mxu0 0.0
        %6622 = vmatmul.mubr.f32.gmra.mxu0 %v6258
        %v6623 = vpop.f32.mrf.mxu0
        %v6624 = vadd.f32 0.0, %v6623
        %v6625 = vpop.f32.mrf.mxu0
        %6626 = vmatprep.mubr.f32.mxu0 0.0
        %6627 = vmatmul.mubr.f32.gmra.mxu0 %v6261
        %v6628 = vpop.f32.mrf.mxu0
        %v6629 = vadd.f32 0.0, %v6628
        %v6630 = vpop.f32.mrf.mxu0
        %6631 = vmatprep.mubr.f32.mxu0 0.0
        %6632 = vmatmul.mubr.f32.gmra.mxu0 %v6264
        %v6633 = vpop.f32.mrf.mxu0
        %v6634 = vadd.f32 0.0, %v6633
        %v6635 = vpop.f32.mrf.mxu0
        %6636 = vmatprep.mubr.f32.mxu0 0.0
        %6637 = vmatmul.mubr.f32.gmra.mxu0 %v6267
        %v6638 = vpop.f32.mrf.mxu0
        %v6639 = vadd.f32 0.0, %v6638
        %v6640 = vpop.f32.mrf.mxu0
        %6641 = vmatprep.mubr.f32.mxu0 0.0
        %6642 = vmatmul.mubr.f32.gmra.mxu0 %v6270
        %v6643 = vpop.f32.mrf.mxu0
        %v6644 = vadd.f32 0.0, %v6643
        %v6645 = vpop.f32.mrf.mxu0
        %6646 = vmatprep.mubr.f32.mxu0 0.0
        %6647 = vmatmul.mubr.f32.gmra.mxu0 %v6273
        %v6648 = vpop.f32.mrf.mxu0
        %v6649 = vadd.f32 0.0, %v6648
        %v6650 = vpop.f32.mrf.mxu0
        %6651 = vmatprep.mubr.f32.mxu0 0.0
        %6652 = vmatmul.mubr.f32.gmra.mxu0 %v6276
        %v6653 = vpop.f32.mrf.mxu0
        %v6654 = vadd.f32 0.0, %v6653
        %v6655 = vpop.f32.mrf.mxu0
        %6656 = vmatprep.mubr.f32.mxu0 0.0
        %6657 = vmatmul.mubr.f32.gmra.mxu0 %v6279
        %v6658 = vpop.f32.mrf.mxu0
        %v6659 = vadd.f32 0.0, %v6658
        %v6660 = vpop.f32.mrf.mxu0
        %6661 = vmatprep.mubr.f32.mxu0 0.0
        %6662 = vmatmul.mubr.f32.gmra.mxu0 %v6282
        %v6663 = vpop.f32.mrf.mxu0
        %v6664 = vadd.f32 0.0, %v6663
        %v6665 = vpop.f32.mrf.mxu0
        %6666 = vmatprep.mubr.f32.mxu0 0.0
        %6667 = vmatmul.mubr.f32.gmra.mxu0 %v6285
        %v6668 = vpop.f32.mrf.mxu0
        %v6669 = vadd.f32 0.0, %v6668
        %v6670 = vpop.f32.mrf.mxu0
        %6671 = vdwg.mxu0
        %6672 = vxpose.xlu0.b32.start [1/16] %v6354, 128
        %6673 = vxpose.xlu0.b32.cont [2/16] %v6359, 128
        %6674 = vxpose.xlu0.b32.cont [3/16] %v6364, 128
        %6675 = vxpose.xlu0.b32.cont [4/16] %v6369, 128
        %6676 = vxpose.xlu0.b32.cont [5/16] %v6374, 128
        %6677 = vxpose.xlu0.b32.cont [6/16] %v6379, 128
        %6678 = vxpose.xlu0.b32.cont [7/16] %v6384, 128
        %6679 = vxpose.xlu0.b32.cont [8/16] %v6389, 128
        %6680 = vxpose.xlu0.b32.cont [9/16] %v6394, 128
        %6681 = vxpose.xlu0.b32.cont [10/16] %v6399, 128
        %6682 = vxpose.xlu0.b32.cont [11/16] %v6404, 128
        %6683 = vxpose.xlu0.b32.cont [12/16] %v6409, 128
        %6684 = vxpose.xlu0.b32.cont [13/16] %v6414, 128
        %6685 = vxpose.xlu0.b32.cont [14/16] %v6419, 128
        %6686 = vxpose.xlu0.b32.cont [15/16] %v6424, 128
        %6687 = vxpose.xlu0.b32.end [16/16] %v6429, 128
        %v6688 = vpop.trf.xlu0
        %v6689 = vpop.trf.xlu0
        %v6690 = vpop.trf.xlu0
        %v6691 = vpop.trf.xlu0
        %v6692 = vpop.trf.xlu0
        %v6693 = vpop.trf.xlu0
        %v6694 = vpop.trf.xlu0
        %v6695 = vpop.trf.xlu0
        %v6696 = vpop.trf.xlu0
        %v6697 = vpop.trf.xlu0
        %v6698 = vpop.trf.xlu0
        %v6699 = vpop.trf.xlu0
        %v6700 = vpop.trf.xlu0
        %v6701 = vpop.trf.xlu0
        %v6702 = vpop.trf.xlu0
        %v6703 = vpop.trf.xlu0
        %6704 = vxpose.xlu0.b32.start [1/16] %v6434, 128
        %6705 = vxpose.xlu0.b32.cont [2/16] %v6439, 128
        %6706 = vxpose.xlu0.b32.cont [3/16] %v6444, 128
        %6707 = vxpose.xlu0.b32.cont [4/16] %v6449, 128
        %6708 = vxpose.xlu0.b32.cont [5/16] %v6454, 128
        %6709 = vxpose.xlu0.b32.cont [6/16] %v6459, 128
        %6710 = vxpose.xlu0.b32.cont [7/16] %v6464, 128
        %6711 = vxpose.xlu0.b32.cont [8/16] %v6469, 128
        %6712 = vxpose.xlu0.b32.cont [9/16] %v6474, 128
        %6713 = vxpose.xlu0.b32.cont [10/16] %v6479, 128
        %6714 = vxpose.xlu0.b32.cont [11/16] %v6484, 128
        %6715 = vxpose.xlu0.b32.cont [12/16] %v6489, 128
        %6716 = vxpose.xlu0.b32.cont [13/16] %v6494, 128
        %6717 = vxpose.xlu0.b32.cont [14/16] %v6499, 128
        %6718 = vxpose.xlu0.b32.cont [15/16] %v6504, 128
        %6719 = vxpose.xlu0.b32.end [16/16] %v6509, 128
        %v6720 = vpop.trf.xlu0
        %v6721 = vpop.trf.xlu0
        %v6722 = vpop.trf.xlu0
        %v6723 = vpop.trf.xlu0
        %v6724 = vpop.trf.xlu0
        %v6725 = vpop.trf.xlu0
        %v6726 = vpop.trf.xlu0
        %v6727 = vpop.trf.xlu0
        %v6728 = vpop.trf.xlu0
        %v6729 = vpop.trf.xlu0
        %v6730 = vpop.trf.xlu0
        %v6731 = vpop.trf.xlu0
        %v6732 = vpop.trf.xlu0
        %v6733 = vpop.trf.xlu0
        %v6734 = vpop.trf.xlu0
        %v6735 = vpop.trf.xlu0
        %6736 = vxpose.xlu0.b32.start [1/16] %v6514, 128
        %6737 = vxpose.xlu0.b32.cont [2/16] %v6519, 128
        %6738 = vxpose.xlu0.b32.cont [3/16] %v6524, 128
        %6739 = vxpose.xlu0.b32.cont [4/16] %v6529, 128
        %6740 = vxpose.xlu0.b32.cont [5/16] %v6534, 128
        %6741 = vxpose.xlu0.b32.cont [6/16] %v6539, 128
        %6742 = vxpose.xlu0.b32.cont [7/16] %v6544, 128
        %6743 = vxpose.xlu0.b32.cont [8/16] %v6549, 128
        %6744 = vxpose.xlu0.b32.cont [9/16] %v6554, 128
        %6745 = vxpose.xlu0.b32.cont [10/16] %v6559, 128
        %6746 = vxpose.xlu0.b32.cont [11/16] %v6564, 128
        %6747 = vxpose.xlu0.b32.cont [12/16] %v6569, 128
        %6748 = vxpose.xlu0.b32.cont [13/16] %v6574, 128
        %6749 = vxpose.xlu0.b32.cont [14/16] %v6579, 128
        %6750 = vxpose.xlu0.b32.cont [15/16] %v6584, 128
        %6751 = vxpose.xlu0.b32.end [16/16] %v6589, 128
        %v6752 = vpop.trf.xlu0
        %v6753 = vpop.trf.xlu0
        %v6754 = vpop.trf.xlu0
        %v6755 = vpop.trf.xlu0
        %v6756 = vpop.trf.xlu0
        %v6757 = vpop.trf.xlu0
        %v6758 = vpop.trf.xlu0
        %v6759 = vpop.trf.xlu0
        %v6760 = vpop.trf.xlu0
        %v6761 = vpop.trf.xlu0
        %v6762 = vpop.trf.xlu0
        %v6763 = vpop.trf.xlu0
        %v6764 = vpop.trf.xlu0
        %v6765 = vpop.trf.xlu0
        %v6766 = vpop.trf.xlu0
        %v6767 = vpop.trf.xlu0
        %6768 = vxpose.xlu0.b32.start [1/16] %v6594, 128
        %6769 = vxpose.xlu0.b32.cont [2/16] %v6599, 128
        %6770 = vxpose.xlu0.b32.cont [3/16] %v6604, 128
        %6771 = vxpose.xlu0.b32.cont [4/16] %v6609, 128
        %6772 = vxpose.xlu0.b32.cont [5/16] %v6614, 128
        %6773 = vxpose.xlu0.b32.cont [6/16] %v6619, 128
        %6774 = vxpose.xlu0.b32.cont [7/16] %v6624, 128
        %6775 = vxpose.xlu0.b32.cont [8/16] %v6629, 128
        %6776 = vxpose.xlu0.b32.cont [9/16] %v6634, 128
        %6777 = vxpose.xlu0.b32.cont [10/16] %v6639, 128
        %6778 = vxpose.xlu0.b32.cont [11/16] %v6644, 128
        %6779 = vxpose.xlu0.b32.cont [12/16] %v6649, 128
        %6780 = vxpose.xlu0.b32.cont [13/16] %v6654, 128
        %6781 = vxpose.xlu0.b32.cont [14/16] %v6659, 128
        %6782 = vxpose.xlu0.b32.cont [15/16] %v6664, 128
        %6783 = vxpose.xlu0.b32.end [16/16] %v6669, 128
        %v6784 = vpop.trf.xlu0
        %v6785 = vpop.trf.xlu0
        %v6786 = vpop.trf.xlu0
        %v6787 = vpop.trf.xlu0
        %v6788 = vpop.trf.xlu0
        %v6789 = vpop.trf.xlu0
        %v6790 = vpop.trf.xlu0
        %v6791 = vpop.trf.xlu0
        %v6792 = vpop.trf.xlu0
        %v6793 = vpop.trf.xlu0
        %v6794 = vpop.trf.xlu0
        %v6795 = vpop.trf.xlu0
        %v6796 = vpop.trf.xlu0
        %v6797 = vpop.trf.xlu0
        %v6798 = vpop.trf.xlu0
        %v6799 = vpop.trf.xlu0
        %v6800 = vadd.f32 %v5367, %v6688
        %v6801 = vadd.f32 %v5399, %v6720
        %v6802 = vadd.f32 %v5431, %v6752
        %v6803 = vadd.f32 %v5463, %v6784
        %v6804 = vld [vmem:[%s3] ss:$4 sm:$0xf]
        %v6805 = vadd.s32 %v6804, 1
        %vm6806 = vcmp.ge.s32.totalorder %v6805, 0
        %vm6807 = vcmp.lt.s32.totalorder %v6805, 8
        %vm6808 = vmand %vm6806, %vm6807
        %v6809 = vsel %vm6808, 1.0, 0.0
        %v6810 = vld [vmem:[%s206] ss:$4 sm:$0xf]
        %v6811 = vadd.s32 %v6810, 4294967295
        %vm6812 = vcmp.ge.s32.totalorder %v6811, 0
        %vm6813 = vcmp.lt.s32.totalorder %v6811, 8
        %vm6814 = vmand %vm6812, %vm6813
        %v6815 = vsel %vm6814, 1.0, 0.0
        %v6816 = vmul.f32 %v6809, %v6815
        %v6817 = vld [vmem:[%s214] ss:$4 sm:$0xf]
        %v6818 = vadd.s32 %v6817, 4294967295
        %vm6819 = vcmp.ge.s32.totalorder %v6818, 0
        %vm6820 = vcmp.lt.s32.totalorder %v6818, 8
        %vm6821 = vmand %vm6819, %vm6820
        %v6822 = vsel %vm6821, 1.0, 0.0
        %v6823 = vmul.f32 %v6816, %v6822
        %v6825 = vlaneseq
        %v6826 = vshrl.u32 %v6825, 7
        %v6827 = vsub.s32 0, %v6826
        %v6828 = vrot.slane %v6823, %v6827
        %v6829 = vlaneseq
        %v6830 = vshrl.u32 %v6829, 7
        %v6831 = vsub.s32 1, %v6830
        %v6832 = vrot.slane %v6823, %v6831
        %v6833 = vlaneseq
        %v6834 = vshrl.u32 %v6833, 7
        %v6835 = vsub.s32 2, %v6834
        %v6836 = vrot.slane %v6823, %v6835
        %v6837 = vlaneseq
        %v6838 = vshrl.u32 %v6837, 7
        %v6839 = vsub.s32 3, %v6838
        %v6840 = vrot.slane %v6823, %v6839
        %v6845 = vmul.f32 %v4176, %v6828
        %v6846 = vmul.f32 %v4175, %v6832
        %v6847 = vmul.f32 %v4174, %v6836
        %v6848 = vmul.f32 %v4177, %v6840
        %6849 = vst [vmem:[#allocation2] sm:$0xff] %v6845
        %6850 = vst [vmem:[#allocation2 + $0x8] sm:$0xff] %v6846
        %6851 = vst [vmem:[#allocation2 + $0x10] sm:$0xff] %v6847
        %6852 = vst [vmem:[#allocation2 + $0x18] sm:$0xff] %v6848
        %v6853 = vld [vmem:[%s214] ss:$4 sm:$0xf]
        %vm6854 = vcmp.ge.s32.totalorder %v6853, 0
        %vm6855 = vcmp.lt.s32.totalorder %v6853, 8
        %vm6856 = vmand %vm6854, %vm6855
        %v6857 = vsel %vm6856, 1.0, 0.0
        %v6858 = vmul.f32 %v6816, %v6857
        %v6860 = vlaneseq
        %v6861 = vshrl.u32 %v6860, 7
        %v6862 = vsub.s32 0, %v6861
        %v6863 = vrot.slane %v6858, %v6862
        %v6864 = vlaneseq
        %v6865 = vshrl.u32 %v6864, 7
        %v6866 = vsub.s32 1, %v6865
        %v6867 = vrot.slane %v6858, %v6866
        %v6868 = vlaneseq
        %v6869 = vshrl.u32 %v6868, 7
        %v6870 = vsub.s32 2, %v6869
        %v6871 = vrot.slane %v6858, %v6870
        %v6872 = vlaneseq
        %v6873 = vshrl.u32 %v6872, 7
        %v6874 = vsub.s32 3, %v6873
        %v6875 = vrot.slane %v6858, %v6874
        %v6880 = vmul.f32 %v4223, %v6863
        %v6881 = vmul.f32 %v4222, %v6867
        %v6882 = vmul.f32 %v4221, %v6871
        %v6883 = vmul.f32 %v4224, %v6875
        %6884 = vst [vmem:[#allocation2 + $0x20] sm:$0xff] %v6880
        %6885 = vst [vmem:[#allocation2 + $0x28] sm:$0xff] %v6881
        %6886 = vst [vmem:[#allocation2 + $0x30] sm:$0xff] %v6882
        %6887 = vst [vmem:[#allocation2 + $0x38] sm:$0xff] %v6883
        %v6888 = vld [vmem:[%s214] ss:$4 sm:$0xf]
        %v6889 = vadd.s32 %v6888, 1
        %vm6890 = vcmp.ge.s32.totalorder %v6889, 0
        %vm6891 = vcmp.lt.s32.totalorder %v6889, 8
        %vm6892 = vmand %vm6890, %vm6891
        %v6893 = vsel %vm6892, 1.0, 0.0
        %v6894 = vmul.f32 %v6816, %v6893
        %v6896 = vlaneseq
        %v6897 = vshrl.u32 %v6896, 7
        %v6898 = vsub.s32 0, %v6897
        %v6899 = vrot.slane %v6894, %v6898
        %v6900 = vlaneseq
        %v6901 = vshrl.u32 %v6900, 7
        %v6902 = vsub.s32 1, %v6901
        %v6903 = vrot.slane %v6894, %v6902
        %v6904 = vlaneseq
        %v6905 = vshrl.u32 %v6904, 7
        %v6906 = vsub.s32 2, %v6905
        %v6907 = vrot.slane %v6894, %v6906
        %v6908 = vlaneseq
        %v6909 = vshrl.u32 %v6908, 7
        %v6910 = vsub.s32 3, %v6909
        %v6911 = vrot.slane %v6894, %v6910
        %v6916 = vmul.f32 %v4271, %v6899
        %v6917 = vmul.f32 %v4270, %v6903
        %v6918 = vmul.f32 %v4269, %v6907
        %v6919 = vmul.f32 %v4272, %v6911
        %6920 = vst [vmem:[#allocation2 + $0x40] sm:$0xff] %v6916
        %6921 = vst [vmem:[#allocation2 + $0x48] sm:$0xff] %v6917
        %6922 = vst [vmem:[#allocation2 + $0x50] sm:$0xff] %v6918
        %6923 = vst [vmem:[#allocation2 + $0x58] sm:$0xff] %v6919
        %v6924 = vld [vmem:[%s206] ss:$4 sm:$0xf]
        %vm6925 = vcmp.ge.s32.totalorder %v6924, 0
        %vm6926 = vcmp.lt.s32.totalorder %v6924, 8
        %vm6927 = vmand %vm6925, %vm6926
        %v6928 = vsel %vm6927, 1.0, 0.0
        %v6929 = vmul.f32 %v6809, %v6928
        %v6930 = vld [vmem:[%s214] ss:$4 sm:$0xf]
        %v6931 = vadd.s32 %v6930, 4294967295
        %vm6932 = vcmp.ge.s32.totalorder %v6931, 0
        %vm6933 = vcmp.lt.s32.totalorder %v6931, 8
        %vm6934 = vmand %vm6932, %vm6933
        %v6935 = vsel %vm6934, 1.0, 0.0
        %v6936 = vmul.f32 %v6929, %v6935
        %v6938 = vlaneseq
        %v6939 = vshrl.u32 %v6938, 7
        %v6940 = vsub.s32 0, %v6939
        %v6941 = vrot.slane %v6936, %v6940
        %v6942 = vlaneseq
        %v6943 = vshrl.u32 %v6942, 7
        %v6944 = vsub.s32 1, %v6943
        %v6945 = vrot.slane %v6936, %v6944
        %v6946 = vlaneseq
        %v6947 = vshrl.u32 %v6946, 7
        %v6948 = vsub.s32 2, %v6947
        %v6949 = vrot.slane %v6936, %v6948
        %v6950 = vlaneseq
        %v6951 = vshrl.u32 %v6950, 7
        %v6952 = vsub.s32 3, %v6951
        %v6953 = vrot.slane %v6936, %v6952
        %v6958 = vmul.f32 %v4325, %v6941
        %v6959 = vmul.f32 %v4324, %v6945
        %v6960 = vmul.f32 %v4323, %v6949
        %v6961 = vmul.f32 %v4326, %v6953
        %6962 = vst [vmem:[#allocation2 + $0x60] sm:$0xff] %v6958
        %6963 = vst [vmem:[#allocation2 + $0x68] sm:$0xff] %v6959
        %6964 = vst [vmem:[#allocation2 + $0x70] sm:$0xff] %v6960
        %6965 = vst [vmem:[#allocation2 + $0x78] sm:$0xff] %v6961
        %v6966 = vld [vmem:[%s214] ss:$4 sm:$0xf]
        %vm6967 = vcmp.ge.s32.totalorder %v6966, 0
        %vm6968 = vcmp.lt.s32.totalorder %v6966, 8
        %vm6969 = vmand %vm6967, %vm6968
        %v6970 = vsel %vm6969, 1.0, 0.0
        %v6971 = vmul.f32 %v6929, %v6970
        %v6973 = vlaneseq
        %v6974 = vshrl.u32 %v6973, 7
        %v6975 = vsub.s32 0, %v6974
        %v6976 = vrot.slane %v6971, %v6975
        %v6977 = vlaneseq
        %v6978 = vshrl.u32 %v6977, 7
        %v6979 = vsub.s32 1, %v6978
        %v6980 = vrot.slane %v6971, %v6979
        %v6981 = vlaneseq
        %v6982 = vshrl.u32 %v6981, 7
        %v6983 = vsub.s32 2, %v6982
        %v6984 = vrot.slane %v6971, %v6983
        %v6985 = vlaneseq
        %v6986 = vshrl.u32 %v6985, 7
        %v6987 = vsub.s32 3, %v6986
        %v6988 = vrot.slane %v6971, %v6987
        %v6993 = vmul.f32 %v4372, %v6976
        %v6994 = vmul.f32 %v4371, %v6980
        %v6995 = vmul.f32 %v4370, %v6984
        %v6996 = vmul.f32 %v4373, %v6988
        %6997 = vst [vmem:[#allocation2 + $0x80] sm:$0xff] %v6993
        %6998 = vst [vmem:[#allocation2 + $0x88] sm:$0xff] %v6994
        %6999 = vst [vmem:[#allocation2 + $0x90] sm:$0xff] %v6995
        %7000 = vst [vmem:[#allocation2 + $0x98] sm:$0xff] %v6996
        %v7001 = vld [vmem:[%s214] ss:$4 sm:$0xf]
        %v7002 = vadd.s32 %v7001, 1
        %vm7003 = vcmp.ge.s32.totalorder %v7002, 0
        %vm7004 = vcmp.lt.s32.totalorder %v7002, 8
        %vm7005 = vmand %vm7003, %vm7004
        %v7006 = vsel %vm7005, 1.0, 0.0
        %v7007 = vmul.f32 %v6929, %v7006
        %v7009 = vlaneseq
        %v7010 = vshrl.u32 %v7009, 7
        %v7011 = vsub.s32 0, %v7010
        %v7012 = vrot.slane %v7007, %v7011
        %v7013 = vlaneseq
        %v7014 = vshrl.u32 %v7013, 7
        %v7015 = vsub.s32 1, %v7014
        %v7016 = vrot.slane %v7007, %v7015
        %v7017 = vlaneseq
        %v7018 = vshrl.u32 %v7017, 7
        %v7019 = vsub.s32 2, %v7018
        %v7020 = vrot.slane %v7007, %v7019
        %v7021 = vlaneseq
        %v7022 = vshrl.u32 %v7021, 7
        %v7023 = vsub.s32 3, %v7022
        %v7024 = vrot.slane %v7007, %v7023
        %v7029 = vmul.f32 %v4420, %v7012
        %v7030 = vmul.f32 %v4419, %v7016
        %v7031 = vmul.f32 %v4418, %v7020
        %v7032 = vmul.f32 %v4421, %v7024
        %7033 = vst [vmem:[#allocation2 + $0xa0] sm:$0xff] %v7029
        %7034 = vst [vmem:[#allocation2 + $0xa8] sm:$0xff] %v7030
        %7035 = vst [vmem:[#allocation2 + $0xb0] sm:$0xff] %v7031
        %7036 = vst [vmem:[#allocation2 + $0xb8] sm:$0xff] %v7032
        %v7037 = vld [vmem:[%s206] ss:$4 sm:$0xf]
        %v7038 = vadd.s32 %v7037, 1
        %vm7039 = vcmp.ge.s32.totalorder %v7038, 0
        %vm7040 = vcmp.lt.s32.totalorder %v7038, 8
        %vm7041 = vmand %vm7039, %vm7040
        %v7042 = vsel %vm7041, 1.0, 0.0
        %v7043 = vmul.f32 %v6809, %v7042
        %v7044 = vld [vmem:[%s214] ss:$4 sm:$0xf]
        %v7045 = vadd.s32 %v7044, 4294967295
        %vm7046 = vcmp.ge.s32.totalorder %v7045, 0
        %vm7047 = vcmp.lt.s32.totalorder %v7045, 8
        %vm7048 = vmand %vm7046, %vm7047
        %v7049 = vsel %vm7048, 1.0, 0.0
        %v7050 = vmul.f32 %v7043, %v7049
        %v7052 = vlaneseq
        %v7053 = vshrl.u32 %v7052, 7
        %v7054 = vsub.s32 0, %v7053
        %v7055 = vrot.slane %v7050, %v7054
        %v7056 = vlaneseq
        %v7057 = vshrl.u32 %v7056, 7
        %v7058 = vsub.s32 1, %v7057
        %v7059 = vrot.slane %v7050, %v7058
        %v7060 = vlaneseq
        %v7061 = vshrl.u32 %v7060, 7
        %v7062 = vsub.s32 2, %v7061
        %v7063 = vrot.slane %v7050, %v7062
        %v7064 = vlaneseq
        %v7065 = vshrl.u32 %v7064, 7
        %v7066 = vsub.s32 3, %v7065
        %v7067 = vrot.slane %v7050, %v7066
        %v7072 = vmul.f32 %v4475, %v7055
        %v7073 = vmul.f32 %v4474, %v7059
        %v7074 = vmul.f32 %v4473, %v7063
        %v7075 = vmul.f32 %v4476, %v7067
        %7076 = vst [vmem:[#allocation2 + $0xc0] sm:$0xff] %v7072
        %7077 = vst [vmem:[#allocation2 + $0xc8] sm:$0xff] %v7073
        %7078 = vst [vmem:[#allocation2 + $0xd0] sm:$0xff] %v7074
        %7079 = vst [vmem:[#allocation2 + $0xd8] sm:$0xff] %v7075
        %v7080 = vld [vmem:[%s214] ss:$4 sm:$0xf]
        %vm7081 = vcmp.ge.s32.totalorder %v7080, 0
        %vm7082 = vcmp.lt.s32.totalorder %v7080, 8
        %vm7083 = vmand %vm7081, %vm7082
        %v7084 = vsel %vm7083, 1.0, 0.0
        %v7085 = vmul.f32 %v7043, %v7084
        %v7087 = vlaneseq
        %v7088 = vshrl.u32 %v7087, 7
        %v7089 = vsub.s32 0, %v7088
        %v7090 = vrot.slane %v7085, %v7089
        %v7091 = vlaneseq
        %v7092 = vshrl.u32 %v7091, 7
        %v7093 = vsub.s32 1, %v7092
        %v7094 = vrot.slane %v7085, %v7093
        %v7095 = vlaneseq
        %v7096 = vshrl.u32 %v7095, 7
        %v7097 = vsub.s32 2, %v7096
        %v7098 = vrot.slane %v7085, %v7097
        %v7099 = vlaneseq
        %v7100 = vshrl.u32 %v7099, 7
        %v7101 = vsub.s32 3, %v7100
        %v7102 = vrot.slane %v7085, %v7101
        %v7107 = vmul.f32 %v4522, %v7090
        %v7108 = vmul.f32 %v4521, %v7094
        %v7109 = vmul.f32 %v4520, %v7098
        %v7110 = vmul.f32 %v4523, %v7102
        %7111 = vst [vmem:[#allocation2 + $0xe0] sm:$0xff] %v7107
        %7112 = vst [vmem:[#allocation2 + $0xe8] sm:$0xff] %v7108
        %7113 = vst [vmem:[#allocation2 + $0xf0] sm:$0xff] %v7109
        %7114 = vst [vmem:[#allocation2 + $0xf8] sm:$0xff] %v7110
        %v7115 = vld [vmem:[%s214] ss:$4 sm:$0xf]
        %v7116 = vadd.s32 %v7115, 1
        %vm7117 = vcmp.ge.s32.totalorder %v7116, 0
        %vm7118 = vcmp.lt.s32.totalorder %v7116, 8
        %vm7119 = vmand %vm7117, %vm7118
        %v7120 = vsel %vm7119, 1.0, 0.0
        %v7121 = vmul.f32 %v7043, %v7120
        %v7123 = vlaneseq
        %v7124 = vshrl.u32 %v7123, 7
        %v7125 = vsub.s32 0, %v7124
        %v7126 = vrot.slane %v7121, %v7125
        %v7127 = vlaneseq
        %v7128 = vshrl.u32 %v7127, 7
        %v7129 = vsub.s32 1, %v7128
        %v7130 = vrot.slane %v7121, %v7129
        %v7131 = vlaneseq
        %v7132 = vshrl.u32 %v7131, 7
        %v7133 = vsub.s32 2, %v7132
        %v7134 = vrot.slane %v7121, %v7133
        %v7135 = vlaneseq
        %v7136 = vshrl.u32 %v7135, 7
        %v7137 = vsub.s32 3, %v7136
        %v7138 = vrot.slane %v7121, %v7137
        %v7143 = vmul.f32 %v4570, %v7126
        %v7144 = vmul.f32 %v4569, %v7130
        %v7145 = vmul.f32 %v4568, %v7134
        %v7146 = vmul.f32 %v4571, %v7138
        %7147 = vst [vmem:[#allocation2 + $0x100] sm:$0xff] %v7143
        %7148 = vst [vmem:[#allocation2 + $0x108] sm:$0xff] %v7144
        %7149 = vst [vmem:[#allocation2 + $0x110] sm:$0xff] %v7145
        %7150 = vst [vmem:[#allocation2 + $0x118] sm:$0xff] %v7146
        %v7151 = vld [vmem:[#allocation2] sm:$0xff]
        %v7152 = vld [vmem:[#allocation2 + $0x8] sm:$0xff]
        %v7153 = vld [vmem:[#allocation2 + $0x10] sm:$0xff]
        %v7154 = vld [vmem:[#allocation2 + $0x18] sm:$0xff]
        %v7155 = vld [vmem:[#allocation2 + $0x20] sm:$0xff]
        %v7156 = vld [vmem:[#allocation2 + $0x28] sm:$0xff]
        %v7157 = vld [vmem:[#allocation2 + $0x30] sm:$0xff]
        %v7158 = vld [vmem:[#allocation2 + $0x38] sm:$0xff]
        %v7159 = vld [vmem:[#allocation2 + $0x40] sm:$0xff]
        %v7160 = vld [vmem:[#allocation2 + $0x48] sm:$0xff]
        %v7161 = vld [vmem:[#allocation2 + $0x50] sm:$0xff]
        %v7162 = vld [vmem:[#allocation2 + $0x58] sm:$0xff]
        %v7163 = vld [vmem:[#allocation2 + $0x60] sm:$0xff]
        %v7164 = vld [vmem:[#allocation2 + $0x68] sm:$0xff]
        %v7165 = vld [vmem:[#allocation2 + $0x70] sm:$0xff]
        %v7166 = vld [vmem:[#allocation2 + $0x78] sm:$0xff]
        %v7167 = vld [vmem:[#allocation2 + $0x80] sm:$0xff]
        %v7168 = vld [vmem:[#allocation2 + $0x88] sm:$0xff]
        %v7169 = vld [vmem:[#allocation2 + $0x90] sm:$0xff]
        %v7170 = vld [vmem:[#allocation2 + $0x98] sm:$0xff]
        %v7171 = vld [vmem:[#allocation2 + $0xa0] sm:$0xff]
        %v7172 = vld [vmem:[#allocation2 + $0xa8] sm:$0xff]
        %v7173 = vld [vmem:[#allocation2 + $0xb0] sm:$0xff]
        %v7174 = vld [vmem:[#allocation2 + $0xb8] sm:$0xff]
        %v7175 = vld [vmem:[#allocation2 + $0xc0] sm:$0xff]
        %v7176 = vld [vmem:[#allocation2 + $0xc8] sm:$0xff]
        %v7177 = vld [vmem:[#allocation2 + $0xd0] sm:$0xff]
        %v7178 = vld [vmem:[#allocation2 + $0xd8] sm:$0xff]
        %v7179 = vld [vmem:[#allocation2 + $0xe0] sm:$0xff]
        %v7180 = vld [vmem:[#allocation2 + $0xe8] sm:$0xff]
        %v7181 = vld [vmem:[#allocation2 + $0xf0] sm:$0xff]
        %v7182 = vld [vmem:[#allocation2 + $0xf8] sm:$0xff]
        %v7183 = vld [vmem:[#allocation2 + $0x100] sm:$0xff]
        %v7184 = vld [vmem:[#allocation2 + $0x108] sm:$0xff]
        %v7185 = vld [vmem:[#allocation2 + $0x110] sm:$0xff]
        %v7186 = vld [vmem:[#allocation2 + $0x118] sm:$0xff]
        %s7187 = scalar_lea.vmem %s2, 144
        %v7188 = vld [vmem:[%s7187] sm:$0xff]
        %v7189 = vld [vmem:[%s7187 + $0x8] sm:$0xff]
        %v7190 = vld [vmem:[%s7187 + $0x10] sm:$0xff]
        %v7191 = vld [vmem:[%s7187 + $0x18] sm:$0xff]
        %v7192 = vld [vmem:[%s7187 + $0x20] sm:$0xff]
        %v7193 = vld [vmem:[%s7187 + $0x28] sm:$0xff]
        %v7194 = vld [vmem:[%s7187 + $0x30] sm:$0xff]
        %v7195 = vld [vmem:[%s7187 + $0x38] sm:$0xff]
        %v7196 = vld [vmem:[%s7187 + $0x40] sm:$0xff]
        %7197 = vxpose.xlu0.b32.start [1/16] %v7151, 128
        %7198 = vxpose.xlu0.b32.cont [2/16] %v7155, 128
        %7199 = vxpose.xlu0.b32.cont [3/16] %v7159, 128
        %7200 = vxpose.xlu0.b32.cont [4/16] %v7163, 128
        %7201 = vxpose.xlu0.b32.cont [5/16] %v7167, 128
        %7202 = vxpose.xlu0.b32.cont [6/16] %v7171, 128
        %7203 = vxpose.xlu0.b32.cont [7/16] %v7175, 128
        %7204 = vxpose.xlu0.b32.cont [8/16] %v7179, 128
        %7205 = vxpose.xlu0.b32.cont [9/16] %v7183, 128
        %7206 = vxpose.xlu0.b32.cont [10/16] 0.0, 128
        %7207 = vxpose.xlu0.b32.cont [11/16] 0.0, 128
        %7208 = vxpose.xlu0.b32.cont [12/16] 0.0, 128
        %7209 = vxpose.xlu0.b32.cont [13/16] 0.0, 128
        %7210 = vxpose.xlu0.b32.cont [14/16] 0.0, 128
        %7211 = vxpose.xlu0.b32.cont [15/16] 0.0, 128
        %7212 = vxpose.xlu0.b32.end [16/16] 0.0, 128
        %v7213 = vpop.trf.xlu0
        %v7214 = vpop.trf.xlu0
        %v7215 = vpop.trf.xlu0
        %v7216 = vpop.trf.xlu0
        %v7217 = vpop.trf.xlu0
        %v7218 = vpop.trf.xlu0
        %v7219 = vpop.trf.xlu0
        %v7220 = vpop.trf.xlu0
        %v7221 = vpop.trf.xlu0
        %v7222 = vpop.trf.xlu0
        %v7223 = vpop.trf.xlu0
        %v7224 = vpop.trf.xlu0
        %v7225 = vpop.trf.xlu0
        %v7226 = vpop.trf.xlu0
        %v7227 = vpop.trf.xlu0
        %v7228 = vpop.trf.xlu0
        %7229 = vxpose.xlu0.b32.start [1/16] %v7152, 128
        %7230 = vxpose.xlu0.b32.cont [2/16] %v7156, 128
        %7231 = vxpose.xlu0.b32.cont [3/16] %v7160, 128
        %7232 = vxpose.xlu0.b32.cont [4/16] %v7164, 128
        %7233 = vxpose.xlu0.b32.cont [5/16] %v7168, 128
        %7234 = vxpose.xlu0.b32.cont [6/16] %v7172, 128
        %7235 = vxpose.xlu0.b32.cont [7/16] %v7176, 128
        %7236 = vxpose.xlu0.b32.cont [8/16] %v7180, 128
        %7237 = vxpose.xlu0.b32.cont [9/16] %v7184, 128
        %7238 = vxpose.xlu0.b32.cont [10/16] 0.0, 128
        %7239 = vxpose.xlu0.b32.cont [11/16] 0.0, 128
        %7240 = vxpose.xlu0.b32.cont [12/16] 0.0, 128
        %7241 = vxpose.xlu0.b32.cont [13/16] 0.0, 128
        %7242 = vxpose.xlu0.b32.cont [14/16] 0.0, 128
        %7243 = vxpose.xlu0.b32.cont [15/16] 0.0, 128
        %7244 = vxpose.xlu0.b32.end [16/16] 0.0, 128
        %v7245 = vpop.trf.xlu0
        %v7246 = vpop.trf.xlu0
        %v7247 = vpop.trf.xlu0
        %v7248 = vpop.trf.xlu0
        %v7249 = vpop.trf.xlu0
        %v7250 = vpop.trf.xlu0
        %v7251 = vpop.trf.xlu0
        %v7252 = vpop.trf.xlu0
        %v7253 = vpop.trf.xlu0
        %v7254 = vpop.trf.xlu0
        %v7255 = vpop.trf.xlu0
        %v7256 = vpop.trf.xlu0
        %v7257 = vpop.trf.xlu0
        %v7258 = vpop.trf.xlu0
        %v7259 = vpop.trf.xlu0
        %v7260 = vpop.trf.xlu0
        %7261 = vxpose.xlu0.b32.start [1/16] %v7153, 128
        %7262 = vxpose.xlu0.b32.cont [2/16] %v7157, 128
        %7263 = vxpose.xlu0.b32.cont [3/16] %v7161, 128
        %7264 = vxpose.xlu0.b32.cont [4/16] %v7165, 128
        %7265 = vxpose.xlu0.b32.cont [5/16] %v7169, 128
        %7266 = vxpose.xlu0.b32.cont [6/16] %v7173, 128
        %7267 = vxpose.xlu0.b32.cont [7/16] %v7177, 128
        %7268 = vxpose.xlu0.b32.cont [8/16] %v7181, 128
        %7269 = vxpose.xlu0.b32.cont [9/16] %v7185, 128
        %7270 = vxpose.xlu0.b32.cont [10/16] 0.0, 128
        %7271 = vxpose.xlu0.b32.cont [11/16] 0.0, 128
        %7272 = vxpose.xlu0.b32.cont [12/16] 0.0, 128
        %7273 = vxpose.xlu0.b32.cont [13/16] 0.0, 128
        %7274 = vxpose.xlu0.b32.cont [14/16] 0.0, 128
        %7275 = vxpose.xlu0.b32.cont [15/16] 0.0, 128
        %7276 = vxpose.xlu0.b32.end [16/16] 0.0, 128
        %v7277 = vpop.trf.xlu0
        %v7278 = vpop.trf.xlu0
        %v7279 = vpop.trf.xlu0
        %v7280 = vpop.trf.xlu0
        %v7281 = vpop.trf.xlu0
        %v7282 = vpop.trf.xlu0
        %v7283 = vpop.trf.xlu0
        %v7284 = vpop.trf.xlu0
        %v7285 = vpop.trf.xlu0
        %v7286 = vpop.trf.xlu0
        %v7287 = vpop.trf.xlu0
        %v7288 = vpop.trf.xlu0
        %v7289 = vpop.trf.xlu0
        %v7290 = vpop.trf.xlu0
        %v7291 = vpop.trf.xlu0
        %v7292 = vpop.trf.xlu0
        %7293 = vxpose.xlu0.b32.start [1/16] %v7154, 128
        %7294 = vxpose.xlu0.b32.cont [2/16] %v7158, 128
        %7295 = vxpose.xlu0.b32.cont [3/16] %v7162, 128
        %7296 = vxpose.xlu0.b32.cont [4/16] %v7166, 128
        %7297 = vxpose.xlu0.b32.cont [5/16] %v7170, 128
        %7298 = vxpose.xlu0.b32.cont [6/16] %v7174, 128
        %7299 = vxpose.xlu0.b32.cont [7/16] %v7178, 128
        %7300 = vxpose.xlu0.b32.cont [8/16] %v7182, 128
        %7301 = vxpose.xlu0.b32.cont [9/16] %v7186, 128
        %7302 = vxpose.xlu0.b32.cont [10/16] 0.0, 128
        %7303 = vxpose.xlu0.b32.cont [11/16] 0.0, 128
        %7304 = vxpose.xlu0.b32.cont [12/16] 0.0, 128
        %7305 = vxpose.xlu0.b32.cont [13/16] 0.0, 128
        %7306 = vxpose.xlu0.b32.cont [14/16] 0.0, 128
        %7307 = vxpose.xlu0.b32.cont [15/16] 0.0, 128
        %7308 = vxpose.xlu0.b32.end [16/16] 0.0, 128
        %v7309 = vpop.trf.xlu0
        %v7310 = vpop.trf.xlu0
        %v7311 = vpop.trf.xlu0
        %v7312 = vpop.trf.xlu0
        %v7313 = vpop.trf.xlu0
        %v7314 = vpop.trf.xlu0
        %v7315 = vpop.trf.xlu0
        %v7316 = vpop.trf.xlu0
        %v7317 = vpop.trf.xlu0
        %v7318 = vpop.trf.xlu0
        %v7319 = vpop.trf.xlu0
        %v7320 = vpop.trf.xlu0
        %v7321 = vpop.trf.xlu0
        %v7322 = vpop.trf.xlu0
        %v7323 = vpop.trf.xlu0
        %v7324 = vpop.trf.xlu0
        %v7326 = vsel %vm841, %v7213, 0
        %v7329 = vsel %vm841, %v7214, 0
        %v7332 = vsel %vm841, %v7215, 0
        %v7335 = vsel %vm841, %v7216, 0
        %v7338 = vsel %vm841, %v7217, 0
        %v7341 = vsel %vm841, %v7218, 0
        %v7344 = vsel %vm841, %v7219, 0
        %v7347 = vsel %vm841, %v7220, 0
        %v7350 = vsel %vm841, %v7221, 0
        %v7353 = vsel %vm841, %v7222, 0
        %v7356 = vsel %vm841, %v7223, 0
        %v7359 = vsel %vm841, %v7224, 0
        %v7362 = vsel %vm841, %v7225, 0
        %v7365 = vsel %vm841, %v7226, 0
        %v7368 = vsel %vm841, %v7227, 0
        %v7371 = vsel %vm841, %v7228, 0
        %v7374 = vsel %vm841, %v7245, 0
        %v7377 = vsel %vm841, %v7246, 0
        %v7380 = vsel %vm841, %v7247, 0
        %v7383 = vsel %vm841, %v7248, 0
        %v7386 = vsel %vm841, %v7249, 0
        %v7389 = vsel %vm841, %v7250, 0
        %v7392 = vsel %vm841, %v7251, 0
        %v7395 = vsel %vm841, %v7252, 0
        %v7398 = vsel %vm841, %v7253, 0
        %v7401 = vsel %vm841, %v7254, 0
        %v7404 = vsel %vm841, %v7255, 0
        %v7407 = vsel %vm841, %v7256, 0
        %v7410 = vsel %vm841, %v7257, 0
        %v7413 = vsel %vm841, %v7258, 0
        %v7416 = vsel %vm841, %v7259, 0
        %v7419 = vsel %vm841, %v7260, 0
        %v7422 = vsel %vm841, %v7277, 0
        %v7425 = vsel %vm841, %v7278, 0
        %v7428 = vsel %vm841, %v7279, 0
        %v7431 = vsel %vm841, %v7280, 0
        %v7434 = vsel %vm841, %v7281, 0
        %v7437 = vsel %vm841, %v7282, 0
        %v7440 = vsel %vm841, %v7283, 0
        %v7443 = vsel %vm841, %v7284, 0
        %v7446 = vsel %vm841, %v7285, 0
        %v7449 = vsel %vm841, %v7286, 0
        %v7452 = vsel %vm841, %v7287, 0
        %v7455 = vsel %vm841, %v7288, 0
        %v7458 = vsel %vm841, %v7289, 0
        %v7461 = vsel %vm841, %v7290, 0
        %v7464 = vsel %vm841, %v7291, 0
        %v7467 = vsel %vm841, %v7292, 0
        %v7470 = vsel %vm841, %v7309, 0
        %v7473 = vsel %vm841, %v7310, 0
        %v7476 = vsel %vm841, %v7311, 0
        %v7479 = vsel %vm841, %v7312, 0
        %v7482 = vsel %vm841, %v7313, 0
        %v7485 = vsel %vm841, %v7314, 0
        %v7488 = vsel %vm841, %v7315, 0
        %v7491 = vsel %vm841, %v7316, 0
        %v7494 = vsel %vm841, %v7317, 0
        %v7497 = vsel %vm841, %v7318, 0
        %v7500 = vsel %vm841, %v7319, 0
        %v7503 = vsel %vm841, %v7320, 0
        %v7506 = vsel %vm841, %v7321, 0
        %v7509 = vsel %vm841, %v7322, 0
        %v7512 = vsel %vm841, %v7323, 0
        %v7515 = vsel %vm841, %v7324, 0
        %7517 = vmatprep.subr.mxu0 0.0
        %7518 = vmatpush1.msra.mxu0 0.0
        %7519 = vmatprep.subr.mxu0 0.0
        %7520 = vmatpush1.msra.mxu0 0.0
        %7521 = vmatprep.subr.mxu0 0.0
        %7522 = vmatpush1.msra.mxu0 0.0
        %7523 = vmatprep.subr.mxu0 0.0
        %7524 = vmatpush1.msra.mxu0 0.0
        %7525 = vmatprep.subr.mxu0 0.0
        %7526 = vmatpush1.msra.mxu0 0.0
        %7527 = vmatprep.subr.mxu0 0.0
        %7528 = vmatpush1.msra.mxu0 0.0
        %7529 = vmatprep.subr.mxu0 0.0
        %7530 = vmatpush1.msra.mxu0 0.0
        %7531 = vmatprep.subr.mxu0 0.0
        %7532 = vmatpush1.msra.mxu0 %v7196
        %7533 = vmatprep.subr.mxu0 0.0
        %7534 = vmatpush1.msra.mxu0 %v7195
        %7535 = vmatprep.subr.mxu0 0.0
        %7536 = vmatpush1.msra.mxu0 %v7194
        %7537 = vmatprep.subr.mxu0 0.0
        %7538 = vmatpush1.msra.mxu0 %v7193
        %7539 = vmatprep.subr.mxu0 0.0
        %7540 = vmatpush1.msra.mxu0 %v7192
        %7541 = vmatprep.subr.mxu0 0.0
        %7542 = vmatpush1.msra.mxu0 %v7191
        %7543 = vmatprep.subr.mxu0 0.0
        %7544 = vmatpush1.msra.mxu0 %v7190
        %7545 = vmatprep.subr.mxu0 0.0
        %7546 = vmatpush1.msra.mxu0 %v7189
        %7547 = vmatprep.subr.mxu0 0.0
        %7548 = vmatpush1.msra.mxu0 %v7188
        %7549 = vmatprep.subr.mxu0 0.0
        %7550 = vmatpush2.msra.mxu0 0.0
        %7551 = vmatprep.subr.mxu0 0.0
        %7552 = vmatpush2.msra.mxu0 0.0
        %7553 = vmatprep.subr.mxu0 0.0
        %7554 = vmatpush2.msra.mxu0 0.0
        %7555 = vmatprep.subr.mxu0 0.0
        %7556 = vmatpush2.msra.mxu0 0.0
        %7557 = vmatprep.subr.mxu0 0.0
        %7558 = vmatpush2.msra.mxu0 0.0
        %7559 = vmatprep.subr.mxu0 0.0
        %7560 = vmatpush2.msra.mxu0 0.0
        %7561 = vmatprep.subr.mxu0 0.0
        %7562 = vmatpush2.msra.mxu0 0.0
        %7563 = vmatprep.subr.mxu0 0.0
        %7564 = vmatpush2.msra.mxu0 0.0
        %7565 = vmatprep.subr.mxu0 0.0
        %7566 = vmatpush2.msra.mxu0 0.0
        %7567 = vmatprep.subr.mxu0 0.0
        %7568 = vmatpush2.msra.mxu0 0.0
        %7569 = vmatprep.subr.mxu0 0.0
        %7570 = vmatpush2.msra.mxu0 0.0
        %7571 = vmatprep.subr.mxu0 0.0
        %7572 = vmatpush2.msra.mxu0 0.0
        %7573 = vmatprep.subr.mxu0 0.0
        %7574 = vmatpush2.msra.mxu0 0.0
        %7575 = vmatprep.subr.mxu0 0.0
        %7576 = vmatpush2.msra.mxu0 0.0
        %7577 = vmatprep.subr.mxu0 0.0
        %7578 = vmatpush2.msra.mxu0 0.0
        %7579 = vmatprep.subr.mxu0 0.0
        %7580 = vmatpush2.msra.mxu0 0.0
        %7581 = vmatprep.mubr.f32.mxu0 0.0
        %7582 = vmatmul.mubr.f32.gmra.mxu0 %v7326
        %v7583 = vpop.f32.mrf.mxu0
        %v7584 = vadd.f32 0.0, %v7583
        %v7585 = vpop.f32.mrf.mxu0
        %7586 = vmatprep.mubr.f32.mxu0 0.0
        %7587 = vmatmul.mubr.f32.gmra.mxu0 %v7329
        %v7588 = vpop.f32.mrf.mxu0
        %v7589 = vadd.f32 0.0, %v7588
        %v7590 = vpop.f32.mrf.mxu0
        %7591 = vmatprep.mubr.f32.mxu0 0.0
        %7592 = vmatmul.mubr.f32.gmra.mxu0 %v7332
        %v7593 = vpop.f32.mrf.mxu0
        %v7594 = vadd.f32 0.0, %v7593
        %v7595 = vpop.f32.mrf.mxu0
        %7596 = vmatprep.mubr.f32.mxu0 0.0
        %7597 = vmatmul.mubr.f32.gmra.mxu0 %v7335
        %v7598 = vpop.f32.mrf.mxu0
        %v7599 = vadd.f32 0.0, %v7598
        %v7600 = vpop.f32.mrf.mxu0
        %7601 = vmatprep.mubr.f32.mxu0 0.0
        %7602 = vmatmul.mubr.f32.gmra.mxu0 %v7338
        %v7603 = vpop.f32.mrf.mxu0
        %v7604 = vadd.f32 0.0, %v7603
        %v7605 = vpop.f32.mrf.mxu0
        %7606 = vmatprep.mubr.f32.mxu0 0.0
        %7607 = vmatmul.mubr.f32.gmra.mxu0 %v7341
        %v7608 = vpop.f32.mrf.mxu0
        %v7609 = vadd.f32 0.0, %v7608
        %v7610 = vpop.f32.mrf.mxu0
        %7611 = vmatprep.mubr.f32.mxu0 0.0
        %7612 = vmatmul.mubr.f32.gmra.mxu0 %v7344
        %v7613 = vpop.f32.mrf.mxu0
        %v7614 = vadd.f32 0.0, %v7613
        %v7615 = vpop.f32.mrf.mxu0
        %7616 = vmatprep.mubr.f32.mxu0 0.0
        %7617 = vmatmul.mubr.f32.gmra.mxu0 %v7347
        %v7618 = vpop.f32.mrf.mxu0
        %v7619 = vadd.f32 0.0, %v7618
        %v7620 = vpop.f32.mrf.mxu0
        %7621 = vmatprep.mubr.f32.mxu0 0.0
        %7622 = vmatmul.mubr.f32.gmra.mxu0 %v7350
        %v7623 = vpop.f32.mrf.mxu0
        %v7624 = vadd.f32 0.0, %v7623
        %v7625 = vpop.f32.mrf.mxu0
        %7626 = vmatprep.mubr.f32.mxu0 0.0
        %7627 = vmatmul.mubr.f32.gmra.mxu0 %v7353
        %v7628 = vpop.f32.mrf.mxu0
        %v7629 = vadd.f32 0.0, %v7628
        %v7630 = vpop.f32.mrf.mxu0
        %7631 = vmatprep.mubr.f32.mxu0 0.0
        %7632 = vmatmul.mubr.f32.gmra.mxu0 %v7356
        %v7633 = vpop.f32.mrf.mxu0
        %v7634 = vadd.f32 0.0, %v7633
        %v7635 = vpop.f32.mrf.mxu0
        %7636 = vmatprep.mubr.f32.mxu0 0.0
        %7637 = vmatmul.mubr.f32.gmra.mxu0 %v7359
        %v7638 = vpop.f32.mrf.mxu0
        %v7639 = vadd.f32 0.0, %v7638
        %v7640 = vpop.f32.mrf.mxu0
        %7641 = vmatprep.mubr.f32.mxu0 0.0
        %7642 = vmatmul.mubr.f32.gmra.mxu0 %v7362
        %v7643 = vpop.f32.mrf.mxu0
        %v7644 = vadd.f32 0.0, %v7643
        %v7645 = vpop.f32.mrf.mxu0
        %7646 = vmatprep.mubr.f32.mxu0 0.0
        %7647 = vmatmul.mubr.f32.gmra.mxu0 %v7365
        %v7648 = vpop.f32.mrf.mxu0
        %v7649 = vadd.f32 0.0, %v7648
        %v7650 = vpop.f32.mrf.mxu0
        %7651 = vmatprep.mubr.f32.mxu0 0.0
        %7652 = vmatmul.mubr.f32.gmra.mxu0 %v7368
        %v7653 = vpop.f32.mrf.mxu0
        %v7654 = vadd.f32 0.0, %v7653
        %v7655 = vpop.f32.mrf.mxu0
        %7656 = vmatprep.mubr.f32.mxu0 0.0
        %7657 = vmatmul.mubr.f32.gmra.mxu0 %v7371
        %v7658 = vpop.f32.mrf.mxu0
        %v7659 = vadd.f32 0.0, %v7658
        %v7660 = vpop.f32.mrf.mxu0
        %7661 = vmatprep.mubr.f32.mxu0 0.0
        %7662 = vmatmul.mubr.f32.gmra.mxu0 %v7374
        %v7663 = vpop.f32.mrf.mxu0
        %v7664 = vadd.f32 0.0, %v7663
        %v7665 = vpop.f32.mrf.mxu0
        %7666 = vmatprep.mubr.f32.mxu0 0.0
        %7667 = vmatmul.mubr.f32.gmra.mxu0 %v7377
        %v7668 = vpop.f32.mrf.mxu0
        %v7669 = vadd.f32 0.0, %v7668
        %v7670 = vpop.f32.mrf.mxu0
        %7671 = vmatprep.mubr.f32.mxu0 0.0
        %7672 = vmatmul.mubr.f32.gmra.mxu0 %v7380
        %v7673 = vpop.f32.mrf.mxu0
        %v7674 = vadd.f32 0.0, %v7673
        %v7675 = vpop.f32.mrf.mxu0
        %7676 = vmatprep.mubr.f32.mxu0 0.0
        %7677 = vmatmul.mubr.f32.gmra.mxu0 %v7383
        %v7678 = vpop.f32.mrf.mxu0
        %v7679 = vadd.f32 0.0, %v7678
        %v7680 = vpop.f32.mrf.mxu0
        %7681 = vmatprep.mubr.f32.mxu0 0.0
        %7682 = vmatmul.mubr.f32.gmra.mxu0 %v7386
        %v7683 = vpop.f32.mrf.mxu0
        %v7684 = vadd.f32 0.0, %v7683
        %v7685 = vpop.f32.mrf.mxu0
        %7686 = vmatprep.mubr.f32.mxu0 0.0
        %7687 = vmatmul.mubr.f32.gmra.mxu0 %v7389
        %v7688 = vpop.f32.mrf.mxu0
        %v7689 = vadd.f32 0.0, %v7688
        %v7690 = vpop.f32.mrf.mxu0
        %7691 = vmatprep.mubr.f32.mxu0 0.0
        %7692 = vmatmul.mubr.f32.gmra.mxu0 %v7392
        %v7693 = vpop.f32.mrf.mxu0
        %v7694 = vadd.f32 0.0, %v7693
        %v7695 = vpop.f32.mrf.mxu0
        %7696 = vmatprep.mubr.f32.mxu0 0.0
        %7697 = vmatmul.mubr.f32.gmra.mxu0 %v7395
        %v7698 = vpop.f32.mrf.mxu0
        %v7699 = vadd.f32 0.0, %v7698
        %v7700 = vpop.f32.mrf.mxu0
        %7701 = vmatprep.mubr.f32.mxu0 0.0
        %7702 = vmatmul.mubr.f32.gmra.mxu0 %v7398
        %v7703 = vpop.f32.mrf.mxu0
        %v7704 = vadd.f32 0.0, %v7703
        %v7705 = vpop.f32.mrf.mxu0
        %7706 = vmatprep.mubr.f32.mxu0 0.0
        %7707 = vmatmul.mubr.f32.gmra.mxu0 %v7401
        %v7708 = vpop.f32.mrf.mxu0
        %v7709 = vadd.f32 0.0, %v7708
        %v7710 = vpop.f32.mrf.mxu0
        %7711 = vmatprep.mubr.f32.mxu0 0.0
        %7712 = vmatmul.mubr.f32.gmra.mxu0 %v7404
        %v7713 = vpop.f32.mrf.mxu0
        %v7714 = vadd.f32 0.0, %v7713
        %v7715 = vpop.f32.mrf.mxu0
        %7716 = vmatprep.mubr.f32.mxu0 0.0
        %7717 = vmatmul.mubr.f32.gmra.mxu0 %v7407
        %v7718 = vpop.f32.mrf.mxu0
        %v7719 = vadd.f32 0.0, %v7718
        %v7720 = vpop.f32.mrf.mxu0
        %7721 = vmatprep.mubr.f32.mxu0 0.0
        %7722 = vmatmul.mubr.f32.gmra.mxu0 %v7410
        %v7723 = vpop.f32.mrf.mxu0
        %v7724 = vadd.f32 0.0, %v7723
        %v7725 = vpop.f32.mrf.mxu0
        %7726 = vmatprep.mubr.f32.mxu0 0.0
        %7727 = vmatmul.mubr.f32.gmra.mxu0 %v7413
        %v7728 = vpop.f32.mrf.mxu0
        %v7729 = vadd.f32 0.0, %v7728
        %v7730 = vpop.f32.mrf.mxu0
        %7731 = vmatprep.mubr.f32.mxu0 0.0
        %7732 = vmatmul.mubr.f32.gmra.mxu0 %v7416
        %v7733 = vpop.f32.mrf.mxu0
        %v7734 = vadd.f32 0.0, %v7733
        %v7735 = vpop.f32.mrf.mxu0
        %7736 = vmatprep.mubr.f32.mxu0 0.0
        %7737 = vmatmul.mubr.f32.gmra.mxu0 %v7419
        %v7738 = vpop.f32.mrf.mxu0
        %v7739 = vadd.f32 0.0, %v7738
        %v7740 = vpop.f32.mrf.mxu0
        %7741 = vmatprep.mubr.f32.mxu0 0.0
        %7742 = vmatmul.mubr.f32.gmra.mxu0 %v7422
        %v7743 = vpop.f32.mrf.mxu0
        %v7744 = vadd.f32 0.0, %v7743
        %v7745 = vpop.f32.mrf.mxu0
        %7746 = vmatprep.mubr.f32.mxu0 0.0
        %7747 = vmatmul.mubr.f32.gmra.mxu0 %v7425
        %v7748 = vpop.f32.mrf.mxu0
        %v7749 = vadd.f32 0.0, %v7748
        %v7750 = vpop.f32.mrf.mxu0
        %7751 = vmatprep.mubr.f32.mxu0 0.0
        %7752 = vmatmul.mubr.f32.gmra.mxu0 %v7428
        %v7753 = vpop.f32.mrf.mxu0
        %v7754 = vadd.f32 0.0, %v7753
        %v7755 = vpop.f32.mrf.mxu0
        %7756 = vmatprep.mubr.f32.mxu0 0.0
        %7757 = vmatmul.mubr.f32.gmra.mxu0 %v7431
        %v7758 = vpop.f32.mrf.mxu0
        %v7759 = vadd.f32 0.0, %v7758
        %v7760 = vpop.f32.mrf.mxu0
        %7761 = vmatprep.mubr.f32.mxu0 0.0
        %7762 = vmatmul.mubr.f32.gmra.mxu0 %v7434
        %v7763 = vpop.f32.mrf.mxu0
        %v7764 = vadd.f32 0.0, %v7763
        %v7765 = vpop.f32.mrf.mxu0
        %7766 = vmatprep.mubr.f32.mxu0 0.0
        %7767 = vmatmul.mubr.f32.gmra.mxu0 %v7437
        %v7768 = vpop.f32.mrf.mxu0
        %v7769 = vadd.f32 0.0, %v7768
        %v7770 = vpop.f32.mrf.mxu0
        %7771 = vmatprep.mubr.f32.mxu0 0.0
        %7772 = vmatmul.mubr.f32.gmra.mxu0 %v7440
        %v7773 = vpop.f32.mrf.mxu0
        %v7774 = vadd.f32 0.0, %v7773
        %v7775 = vpop.f32.mrf.mxu0
        %7776 = vmatprep.mubr.f32.mxu0 0.0
        %7777 = vmatmul.mubr.f32.gmra.mxu0 %v7443
        %v7778 = vpop.f32.mrf.mxu0
        %v7779 = vadd.f32 0.0, %v7778
        %v7780 = vpop.f32.mrf.mxu0
        %7781 = vmatprep.mubr.f32.mxu0 0.0
        %7782 = vmatmul.mubr.f32.gmra.mxu0 %v7446
        %v7783 = vpop.f32.mrf.mxu0
        %v7784 = vadd.f32 0.0, %v7783
        %v7785 = vpop.f32.mrf.mxu0
        %7786 = vmatprep.mubr.f32.mxu0 0.0
        %7787 = vmatmul.mubr.f32.gmra.mxu0 %v7449
        %v7788 = vpop.f32.mrf.mxu0
        %v7789 = vadd.f32 0.0, %v7788
        %v7790 = vpop.f32.mrf.mxu0
        %7791 = vmatprep.mubr.f32.mxu0 0.0
        %7792 = vmatmul.mubr.f32.gmra.mxu0 %v7452
        %v7793 = vpop.f32.mrf.mxu0
        %v7794 = vadd.f32 0.0, %v7793
        %v7795 = vpop.f32.mrf.mxu0
        %7796 = vmatprep.mubr.f32.mxu0 0.0
        %7797 = vmatmul.mubr.f32.gmra.mxu0 %v7455
        %v7798 = vpop.f32.mrf.mxu0
        %v7799 = vadd.f32 0.0, %v7798
        %v7800 = vpop.f32.mrf.mxu0
        %7801 = vmatprep.mubr.f32.mxu0 0.0
        %7802 = vmatmul.mubr.f32.gmra.mxu0 %v7458
        %v7803 = vpop.f32.mrf.mxu0
        %v7804 = vadd.f32 0.0, %v7803
        %v7805 = vpop.f32.mrf.mxu0
        %7806 = vmatprep.mubr.f32.mxu0 0.0
        %7807 = vmatmul.mubr.f32.gmra.mxu0 %v7461
        %v7808 = vpop.f32.mrf.mxu0
        %v7809 = vadd.f32 0.0, %v7808
        %v7810 = vpop.f32.mrf.mxu0
        %7811 = vmatprep.mubr.f32.mxu0 0.0
        %7812 = vmatmul.mubr.f32.gmra.mxu0 %v7464
        %v7813 = vpop.f32.mrf.mxu0
        %v7814 = vadd.f32 0.0, %v7813
        %v7815 = vpop.f32.mrf.mxu0
        %7816 = vmatprep.mubr.f32.mxu0 0.0
        %7817 = vmatmul.mubr.f32.gmra.mxu0 %v7467
        %v7818 = vpop.f32.mrf.mxu0
        %v7819 = vadd.f32 0.0, %v7818
        %v7820 = vpop.f32.mrf.mxu0
        %7821 = vmatprep.mubr.f32.mxu0 0.0
        %7822 = vmatmul.mubr.f32.gmra.mxu0 %v7470
        %v7823 = vpop.f32.mrf.mxu0
        %v7824 = vadd.f32 0.0, %v7823
        %v7825 = vpop.f32.mrf.mxu0
        %7826 = vmatprep.mubr.f32.mxu0 0.0
        %7827 = vmatmul.mubr.f32.gmra.mxu0 %v7473
        %v7828 = vpop.f32.mrf.mxu0
        %v7829 = vadd.f32 0.0, %v7828
        %v7830 = vpop.f32.mrf.mxu0
        %7831 = vmatprep.mubr.f32.mxu0 0.0
        %7832 = vmatmul.mubr.f32.gmra.mxu0 %v7476
        %v7833 = vpop.f32.mrf.mxu0
        %v7834 = vadd.f32 0.0, %v7833
        %v7835 = vpop.f32.mrf.mxu0
        %7836 = vmatprep.mubr.f32.mxu0 0.0
        %7837 = vmatmul.mubr.f32.gmra.mxu0 %v7479
        %v7838 = vpop.f32.mrf.mxu0
        %v7839 = vadd.f32 0.0, %v7838
        %v7840 = vpop.f32.mrf.mxu0
        %7841 = vmatprep.mubr.f32.mxu0 0.0
        %7842 = vmatmul.mubr.f32.gmra.mxu0 %v7482
        %v7843 = vpop.f32.mrf.mxu0
        %v7844 = vadd.f32 0.0, %v7843
        %v7845 = vpop.f32.mrf.mxu0
        %7846 = vmatprep.mubr.f32.mxu0 0.0
        %7847 = vmatmul.mubr.f32.gmra.mxu0 %v7485
        %v7848 = vpop.f32.mrf.mxu0
        %v7849 = vadd.f32 0.0, %v7848
        %v7850 = vpop.f32.mrf.mxu0
        %7851 = vmatprep.mubr.f32.mxu0 0.0
        %7852 = vmatmul.mubr.f32.gmra.mxu0 %v7488
        %v7853 = vpop.f32.mrf.mxu0
        %v7854 = vadd.f32 0.0, %v7853
        %v7855 = vpop.f32.mrf.mxu0
        %7856 = vmatprep.mubr.f32.mxu0 0.0
        %7857 = vmatmul.mubr.f32.gmra.mxu0 %v7491
        %v7858 = vpop.f32.mrf.mxu0
        %v7859 = vadd.f32 0.0, %v7858
        %v7860 = vpop.f32.mrf.mxu0
        %7861 = vmatprep.mubr.f32.mxu0 0.0
        %7862 = vmatmul.mubr.f32.gmra.mxu0 %v7494
        %v7863 = vpop.f32.mrf.mxu0
        %v7864 = vadd.f32 0.0, %v7863
        %v7865 = vpop.f32.mrf.mxu0
        %7866 = vmatprep.mubr.f32.mxu0 0.0
        %7867 = vmatmul.mubr.f32.gmra.mxu0 %v7497
        %v7868 = vpop.f32.mrf.mxu0
        %v7869 = vadd.f32 0.0, %v7868
        %v7870 = vpop.f32.mrf.mxu0
        %7871 = vmatprep.mubr.f32.mxu0 0.0
        %7872 = vmatmul.mubr.f32.gmra.mxu0 %v7500
        %v7873 = vpop.f32.mrf.mxu0
        %v7874 = vadd.f32 0.0, %v7873
        %v7875 = vpop.f32.mrf.mxu0
        %7876 = vmatprep.mubr.f32.mxu0 0.0
        %7877 = vmatmul.mubr.f32.gmra.mxu0 %v7503
        %v7878 = vpop.f32.mrf.mxu0
        %v7879 = vadd.f32 0.0, %v7878
        %v7880 = vpop.f32.mrf.mxu0
        %7881 = vmatprep.mubr.f32.mxu0 0.0
        %7882 = vmatmul.mubr.f32.gmra.mxu0 %v7506
        %v7883 = vpop.f32.mrf.mxu0
        %v7884 = vadd.f32 0.0, %v7883
        %v7885 = vpop.f32.mrf.mxu0
        %7886 = vmatprep.mubr.f32.mxu0 0.0
        %7887 = vmatmul.mubr.f32.gmra.mxu0 %v7509
        %v7888 = vpop.f32.mrf.mxu0
        %v7889 = vadd.f32 0.0, %v7888
        %v7890 = vpop.f32.mrf.mxu0
        %7891 = vmatprep.mubr.f32.mxu0 0.0
        %7892 = vmatmul.mubr.f32.gmra.mxu0 %v7512
        %v7893 = vpop.f32.mrf.mxu0
        %v7894 = vadd.f32 0.0, %v7893
        %v7895 = vpop.f32.mrf.mxu0
        %7896 = vmatprep.mubr.f32.mxu0 0.0
        %7897 = vmatmul.mubr.f32.gmra.mxu0 %v7515
        %v7898 = vpop.f32.mrf.mxu0
        %v7899 = vadd.f32 0.0, %v7898
        %v7900 = vpop.f32.mrf.mxu0
        %7901 = vdwg.mxu0
        %7902 = vxpose.xlu0.b32.start [1/16] %v7584, 128
        %7903 = vxpose.xlu0.b32.cont [2/16] %v7589, 128
        %7904 = vxpose.xlu0.b32.cont [3/16] %v7594, 128
        %7905 = vxpose.xlu0.b32.cont [4/16] %v7599, 128
        %7906 = vxpose.xlu0.b32.cont [5/16] %v7604, 128
        %7907 = vxpose.xlu0.b32.cont [6/16] %v7609, 128
        %7908 = vxpose.xlu0.b32.cont [7/16] %v7614, 128
        %7909 = vxpose.xlu0.b32.cont [8/16] %v7619, 128
        %7910 = vxpose.xlu0.b32.cont [9/16] %v7624, 128
        %7911 = vxpose.xlu0.b32.cont [10/16] %v7629, 128
        %7912 = vxpose.xlu0.b32.cont [11/16] %v7634, 128
        %7913 = vxpose.xlu0.b32.cont [12/16] %v7639, 128
        %7914 = vxpose.xlu0.b32.cont [13/16] %v7644, 128
        %7915 = vxpose.xlu0.b32.cont [14/16] %v7649, 128
        %7916 = vxpose.xlu0.b32.cont [15/16] %v7654, 128
        %7917 = vxpose.xlu0.b32.end [16/16] %v7659, 128
        %v7918 = vpop.trf.xlu0
        %v7919 = vpop.trf.xlu0
        %v7920 = vpop.trf.xlu0
        %v7921 = vpop.trf.xlu0
        %v7922 = vpop.trf.xlu0
        %v7923 = vpop.trf.xlu0
        %v7924 = vpop.trf.xlu0
        %v7925 = vpop.trf.xlu0
        %v7926 = vpop.trf.xlu0
        %v7927 = vpop.trf.xlu0
        %v7928 = vpop.trf.xlu0
        %v7929 = vpop.trf.xlu0
        %v7930 = vpop.trf.xlu0
        %v7931 = vpop.trf.xlu0
        %v7932 = vpop.trf.xlu0
        %v7933 = vpop.trf.xlu0
        %7934 = vxpose.xlu0.b32.start [1/16] %v7664, 128
        %7935 = vxpose.xlu0.b32.cont [2/16] %v7669, 128
        %7936 = vxpose.xlu0.b32.cont [3/16] %v7674, 128
        %7937 = vxpose.xlu0.b32.cont [4/16] %v7679, 128
        %7938 = vxpose.xlu0.b32.cont [5/16] %v7684, 128
        %7939 = vxpose.xlu0.b32.cont [6/16] %v7689, 128
        %7940 = vxpose.xlu0.b32.cont [7/16] %v7694, 128
        %7941 = vxpose.xlu0.b32.cont [8/16] %v7699, 128
        %7942 = vxpose.xlu0.b32.cont [9/16] %v7704, 128
        %7943 = vxpose.xlu0.b32.cont [10/16] %v7709, 128
        %7944 = vxpose.xlu0.b32.cont [11/16] %v7714, 128
        %7945 = vxpose.xlu0.b32.cont [12/16] %v7719, 128
        %7946 = vxpose.xlu0.b32.cont [13/16] %v7724, 128
        %7947 = vxpose.xlu0.b32.cont [14/16] %v7729, 128
        %7948 = vxpose.xlu0.b32.cont [15/16] %v7734, 128
        %7949 = vxpose.xlu0.b32.end [16/16] %v7739, 128
        %v7950 = vpop.trf.xlu0
        %v7951 = vpop.trf.xlu0
        %v7952 = vpop.trf.xlu0
        %v7953 = vpop.trf.xlu0
        %v7954 = vpop.trf.xlu0
        %v7955 = vpop.trf.xlu0
        %v7956 = vpop.trf.xlu0
        %v7957 = vpop.trf.xlu0
        %v7958 = vpop.trf.xlu0
        %v7959 = vpop.trf.xlu0
        %v7960 = vpop.trf.xlu0
        %v7961 = vpop.trf.xlu0
        %v7962 = vpop.trf.xlu0
        %v7963 = vpop.trf.xlu0
        %v7964 = vpop.trf.xlu0
        %v7965 = vpop.trf.xlu0
        %7966 = vxpose.xlu0.b32.start [1/16] %v7744, 128
        %7967 = vxpose.xlu0.b32.cont [2/16] %v7749, 128
        %7968 = vxpose.xlu0.b32.cont [3/16] %v7754, 128
        %7969 = vxpose.xlu0.b32.cont [4/16] %v7759, 128
        %7970 = vxpose.xlu0.b32.cont [5/16] %v7764, 128
        %7971 = vxpose.xlu0.b32.cont [6/16] %v7769, 128
        %7972 = vxpose.xlu0.b32.cont [7/16] %v7774, 128
        %7973 = vxpose.xlu0.b32.cont [8/16] %v7779, 128
        %7974 = vxpose.xlu0.b32.cont [9/16] %v7784, 128
        %7975 = vxpose.xlu0.b32.cont [10/16] %v7789, 128
        %7976 = vxpose.xlu0.b32.cont [11/16] %v7794, 128
        %7977 = vxpose.xlu0.b32.cont [12/16] %v7799, 128
        %7978 = vxpose.xlu0.b32.cont [13/16] %v7804, 128
        %7979 = vxpose.xlu0.b32.cont [14/16] %v7809, 128
        %7980 = vxpose.xlu0.b32.cont [15/16] %v7814, 128
        %7981 = vxpose.xlu0.b32.end [16/16] %v7819, 128
        %v7982 = vpop.trf.xlu0
        %v7983 = vpop.trf.xlu0
        %v7984 = vpop.trf.xlu0
        %v7985 = vpop.trf.xlu0
        %v7986 = vpop.trf.xlu0
        %v7987 = vpop.trf.xlu0
        %v7988 = vpop.trf.xlu0
        %v7989 = vpop.trf.xlu0
        %v7990 = vpop.trf.xlu0
        %v7991 = vpop.trf.xlu0
        %v7992 = vpop.trf.xlu0
        %v7993 = vpop.trf.xlu0
        %v7994 = vpop.trf.xlu0
        %v7995 = vpop.trf.xlu0
        %v7996 = vpop.trf.xlu0
        %v7997 = vpop.trf.xlu0
        %7998 = vxpose.xlu0.b32.start [1/16] %v7824, 128
        %7999 = vxpose.xlu0.b32.cont [2/16] %v7829, 128
        %8000 = vxpose.xlu0.b32.cont [3/16] %v7834, 128
        %8001 = vxpose.xlu0.b32.cont [4/16] %v7839, 128
        %8002 = vxpose.xlu0.b32.cont [5/16] %v7844, 128
        %8003 = vxpose.xlu0.b32.cont [6/16] %v7849, 128
        %8004 = vxpose.xlu0.b32.cont [7/16] %v7854, 128
        %8005 = vxpose.xlu0.b32.cont [8/16] %v7859, 128
        %8006 = vxpose.xlu0.b32.cont [9/16] %v7864, 128
        %8007 = vxpose.xlu0.b32.cont [10/16] %v7869, 128
        %8008 = vxpose.xlu0.b32.cont [11/16] %v7874, 128
        %8009 = vxpose.xlu0.b32.cont [12/16] %v7879, 128
        %8010 = vxpose.xlu0.b32.cont [13/16] %v7884, 128
        %8011 = vxpose.xlu0.b32.cont [14/16] %v7889, 128
        %8012 = vxpose.xlu0.b32.cont [15/16] %v7894, 128
        %8013 = vxpose.xlu0.b32.end [16/16] %v7899, 128
        %v8014 = vpop.trf.xlu0
        %v8015 = vpop.trf.xlu0
        %v8016 = vpop.trf.xlu0
        %v8017 = vpop.trf.xlu0
        %v8018 = vpop.trf.xlu0
        %v8019 = vpop.trf.xlu0
        %v8020 = vpop.trf.xlu0
        %v8021 = vpop.trf.xlu0
        %v8022 = vpop.trf.xlu0
        %v8023 = vpop.trf.xlu0
        %v8024 = vpop.trf.xlu0
        %v8025 = vpop.trf.xlu0
        %v8026 = vpop.trf.xlu0
        %v8027 = vpop.trf.xlu0
        %v8028 = vpop.trf.xlu0
        %v8029 = vpop.trf.xlu0
        %v8030 = vadd.f32 %v6800, %v7918
        %v8031 = vadd.f32 %v6801, %v7950
        %v8032 = vadd.f32 %v6802, %v7982
        %v8033 = vadd.f32 %v6803, %v8014
        %v8034 = vadd.f32 %v8030, %v8031
        %v8035 = vadd.f32 %v8034, %v8032
        %v8036 = vadd.f32 %v8035, %v8033
        %8037 = vadd.xlane.f32.xlu0 %v8036
        %v8038 = vpop.xlane.xlu0 %8037
        %v8039 = vmul.f32 %v8038, 0.001953125
        %v8040 = vmul.f32 %v8030, %v8030
        %v8041 = vmul.f32 %v8031, %v8031
        %v8042 = vmul.f32 %v8032, %v8032
        %v8043 = vmul.f32 %v8033, %v8033
        %v8044 = vadd.f32 %v8040, %v8041
        %v8045 = vadd.f32 %v8044, %v8042
        %v8046 = vadd.f32 %v8045, %v8043
        %8047 = vadd.xlane.f32.xlu0 %v8046
        %v8048 = vpop.xlane.xlu0 %8047
        %v8049 = vmul.f32 %v8048, 0.001953125
        %v8050 = vmul.f32 %v8039, %v8039
        %v8051 = vsub.f32 %v8049, %v8050
        %v8052 = vsub.f32 %v8030, %v8039
        %v8053 = vsub.f32 %v8031, %v8039
        %v8054 = vsub.f32 %v8032, %v8039
        %v8055 = vsub.f32 %v8033, %v8039
        %v8056 = vadd.f32 %v8051, 1e-05
        %v8057 = vrsqrt.pop %v8056
        %v8058 = vmul.f32 %v8052, %v8057
        %v8059 = vmul.f32 %v8053, %v8057
        %v8060 = vmul.f32 %v8054, %v8057
        %v8061 = vmul.f32 %v8055, %v8057
        %v8062 = vmul.f32 %v8058, 0.01
        %v8063 = vmul.f32 %v8059, 0.01
        %v8064 = vmul.f32 %v8060, 0.01
        %v8065 = vmul.f32 %v8061, 0.01
        %v8066 = vmax.f32 %v8058, %v8062
        %v8067 = vmax.f32 %v8059, %v8063
        %v8068 = vmax.f32 %v8060, %v8064
        %v8069 = vmax.f32 %v8061, %v8065
        %v8070 = vld [vmem:[%s195] sm:$0xff]
        %v8071 = vld [vmem:[%s195 + $0x8] sm:$0xff]
        %v8072 = vld [vmem:[%s195 + $0x10] sm:$0xff]
        %v8073 = vld [vmem:[%s195 + $0x18] sm:$0xff]
        %v8074 = vadd.f32 %v8066, %v8070
        %v8075 = vadd.f32 %v8067, %v8071
        %v8076 = vadd.f32 %v8068, %v8072
        %v8077 = vadd.f32 %v8069, %v8073
        %8078 = vst [vmem:[%s190] sm:$0xff] %v8074
        %8079 = vst [vmem:[%s190 + $0x8] sm:$0xff] %v8075
        %8080 = vst [vmem:[%s190 + $0x10] sm:$0xff] %v8076
        %8081 = vst [vmem:[%s190 + $0x18] sm:$0xff] %v8077
        %s8082 = sand.u32 %s115, 1
        %s8083 = scalar_lea.sflag [#allocation4], %s8082
        %s8084 = sand.u32 %s115, 1
        %s8085 = smul.addr %s8084, 32
        %s8086 = scalar_lea.vmem [#allocation3], %s8085
        // Predicated region
        $region37: #{tpu_custom_call.1} parent=35 // pred_check
          %p8087 = pneg %p125
        $region38: #{tpu_custom_call.1} parent=35 // pred_check_branch
          %8089 = sbr.rel (%p8087) target = $region40
        $region39: #{tpu_custom_call.1} parent=35 // pred_region
          %s8091 = ssub.s32 512, 512
          %8092 = vsyncadd %s8083, %s8091
          %s8093 = smul.addr %s18, 4
          %s8094 = smul.addr %s8093, 128
          %s8095 = scalar_lea.hbm %s4, %s8094
          %s8097 = sshll.u32 %s8086, 4
          %s8098 = int_to_ptr.vmem [resolvable:$true] %s8097
          %8100 = dma.vmem_to_hbm [thread:$0]  %s8098, 512, %s8095, %s8083
        $region40: #{tpu_custom_call.1} parent=35 // pred_fallthru
          _
      $region36: #{tpu_custom_call.1} parent=5 // pred_fallthru
        _
      %p8101 = scmp.le.s32.totalorder 2, %s13
      // Predicated region
      $region41: #{tpu_custom_call.1} parent=5 // pred_check
        %p8102 = pneg %p8101
      $region42: #{tpu_custom_call.1} parent=5 // pred_check_branch
        %8104 = sbr.rel (%p8102) target = $region44
      $region43: #{tpu_custom_call.1} parent=5 // pred_region
        %s8105 = ssub.s32 %s13, 2
        // Predicated region
        $region45: #{tpu_custom_call.1} parent=43 // pred_check
          %p8106 = pneg %p131
        $region46: #{tpu_custom_call.1} parent=43 // pred_check_branch
          %8108 = sbr.rel (%p8106) target = $region48
        $region47: #{tpu_custom_call.1} parent=43 // pred_region
          %s8109 = sand.u32 %s116, 1
          %s8110 = scalar_lea.sflag [#allocation4], %s8109
          %s8111 = sand.u32 %s116, 1
          %s8112 = smul.addr %s8111, 32
          %s8113 = scalar_lea.vmem [#allocation3], %s8112
          %8114 = dma.done %s8110, 512
        $region48: #{tpu_custom_call.1} parent=43 // pred_fallthru
          _
      $region44: #{tpu_custom_call.1} parent=5 // pred_fallthru
        _
    $region6: #{tpu_custom_call.1} parent=1 // loop_footer
      %s17 = sadd.s32 1, %s13
    $region7: #{tpu_custom_call.1} parent=1 // loop_footer_branch
      %12 = sbr.rel target = $region3
    $region8: #{tpu_custom_call.1} parent=1 // loop_exit
      _
    %8115 = vsyncpa [#allocation4], 1
    %s8116 = scalar_lea.sflag [#allocation4], 1
    %8117 = vsyncpa %s8116, 1

</llo_original>
